<compile_context>
chip_gen: v7x
topology: tpu7x:2x2x1
jax: 0.10.0
libtpu: 0.0.40
codegen_flags: <defaults>
</compile_context>

<pallas_src>
import functools

import jax
import jax.numpy as jnp
from jax.experimental import pallas as pl
from jax.experimental.pallas import tpu as pltpu

HIDDEN_DIM = 256
NUM_HEADS = 8
NUM_LAYERS = 3
DIM_FFN = 1024
LN_EPS = 1e-5

# ---------------------------------------------------------------------------
# Column offsets into the per-layer packed slabs (all 128-lane aligned).
# ---------------------------------------------------------------------------
_C = HIDDEN_DIM
_W_CX_WQ = (0, _C)
_W_CX_WKV = (_C, 3 * _C)
_W_CX_WO = (3 * _C, 4 * _C)
_W_SA_WQKV = (4 * _C, 7 * _C)
_W_SA_WO = (7 * _C, 8 * _C)
_W_FF_W1 = (8 * _C, 8 * _C + DIM_FFN)
_W_COLS = 8 * _C + DIM_FFN                      # 3072

_V_CX_BQ = (0, _C)
_V_CX_BKV = (_C, 3 * _C)
_V_CX_BO = (3 * _C, 4 * _C)
_V_CX_G = (4 * _C, 5 * _C)
_V_CX_BT = (5 * _C, 6 * _C)
_V_SA_BQKV = (6 * _C, 9 * _C)
_V_SA_BO = (9 * _C, 10 * _C)
_V_SA_G = (10 * _C, 11 * _C)
_V_SA_BT = (11 * _C, 12 * _C)
_V_FF_B1 = (12 * _C, 12 * _C + DIM_FFN)
_V_FF_B2 = (12 * _C + DIM_FFN, 13 * _C + DIM_FFN)
_V_FF_G = (13 * _C + DIM_FFN, 14 * _C + DIM_FFN)
_V_FF_BT = (14 * _C + DIM_FFN, 15 * _C + DIM_FFN)
_V_COLS = 15 * _C + DIM_FFN                     # 4864


def _layer_norm(x, gamma, beta):
    mean = jnp.mean(x, axis=-1, keepdims=True)
    xc = x - mean
    var = jnp.mean(xc * xc, axis=-1, keepdims=True)
    return xc * jax.lax.rsqrt(var + LN_EPS) * gamma + beta


# ---------------------------------------------------------------------------
# Fused Pallas kernel: one grid step == one Tracker layer (cross-attn, self-
# attn, FFN, each with residual + post-LayerNorm).
# ---------------------------------------------------------------------------
def _tracker_kernel(qf_ref, ref_ref, w_ref, w2_ref, vec_ref, o_ref, x_ref,
                    *, batch, seq):
    C = HIDDEN_DIM
    H = NUM_HEADS
    dh = C // H
    scale = dh ** -0.5

    @pl.when(pl.program_id(0) == 0)
    def _():
        # Noiser eval path (activate=False): noised_init == query_features.
        x_ref[...] = qf_ref[...]

    qf_b = qf_ref[...].astype(jnp.bfloat16)     # key/value source (constant)
    rq_b = ref_ref[...].astype(jnp.bfloat16)    # cross-attention query source

    def wcol(r):                                # bf16 weight slab column slice
        return w_ref[:, r[0]:r[1]]

    def vcol(r):                                # f32 bias / LN-param slice
        return vec_ref[:, r[0]:r[1]]

    def mm(x_b, w_b):                           # bf16 x bf16 -> f32 MXU matmul
        return jnp.dot(x_b, w_b, preferred_element_type=jnp.float32)

    def attend(q, k, v):
        # q/k/v: (B*Q, C) f32.  Per-head attention, batched over B with one
        # einsum per head; head outputs re-assembled lane-dense -> (B*Q, C).
        q3 = q.astype(jnp.bfloat16).reshape(batch, seq, C)
        k3 = k.astype(jnp.bfloat16).reshape(batch, seq, C)
        v3 = v.astype(jnp.bfloat16).reshape(batch, seq, C)
        heads = []
        for h in range(H):
            c = slice(h * dh, (h + 1) * dh)
            s = jnp.einsum('bqd,bkd->bqk', q3[:, :, c], k3[:, :, c],
                           preferred_element_type=jnp.float32)
            s = s - jnp.max(s, axis=-1, keepdims=True)
            p = jnp.exp(s)
            p = p / jnp.sum(p, axis=-1, keepdims=True)
            heads.append(jnp.einsum('bqk,bkd->bqd', p.astype(jnp.bfloat16),
                                    v3[:, :, c],
                                    preferred_element_type=jnp.float32))
        return jnp.concatenate(heads, axis=-1).reshape(batch * seq, C)

    x = x_ref[...]

    # --- ReferringCrossAttention: q = ref, k = v = query_features, resid = x.
    q = (mm(rq_b, wcol(_W_CX_WQ)) + vcol(_V_CX_BQ)) * scale
    kv = mm(qf_b, wcol(_W_CX_WKV)) + vcol(_V_CX_BKV)        # fused K|V proj
    o = attend(q, kv[:, :C], kv[:, C:])
    o = mm(o.astype(jnp.bfloat16), wcol(_W_CX_WO)) + vcol(_V_CX_BO)
    x = _layer_norm(x + o, vcol(_V_CX_G), vcol(_V_CX_BT))

    # --- SelfAttention: q = k = v = residual = x (fused QKV projection).
    qkv = mm(x.astype(jnp.bfloat16), wcol(_W_SA_WQKV)) + vcol(_V_SA_BQKV)
    o = attend(qkv[:, :C] * scale, qkv[:, C:2 * C], qkv[:, 2 * C:])
    o = mm(o.astype(jnp.bfloat16), wcol(_W_SA_WO)) + vcol(_V_SA_BO)
    x = _layer_norm(x + o, vcol(_V_SA_G), vcol(_V_SA_BT))

    # --- FFN: LN(x + linear2(relu(linear1(x)))).
    hdn = jnp.maximum(mm(x.astype(jnp.bfloat16), wcol(_W_FF_W1)) + vcol(_V_FF_B1), 0.0)
    y = mm(hdn.astype(jnp.bfloat16), w2_ref[...]) + vcol(_V_FF_B2)
    x = _layer_norm(x + y, vcol(_V_FF_G), vcol(_V_FF_BT))

    x_ref[...] = x

    @pl.when(pl.program_id(0) == pl.num_programs(0) - 1)
    def _():
        o_ref[...] = x


# ---------------------------------------------------------------------------
# Tracker forward (eval semantics) -- one fused pallas_call, grid over layers.
# ---------------------------------------------------------------------------
def tracker_forward(packed, query_features, last_query=None, last_embed=None):
    # query_features: (Q, B, C) seq-first; last_query/last_embed: (B, Q, C).
    Q, B, C = query_features.shape
    M = B * Q
    qf = jnp.transpose(query_features, (1, 0, 2)).reshape(M, C)
    # Noiser eval path: activate=False -> indices=None, noised_init == qf.
    # TODO(synk): training-time Noiser hard-noise query shuffle not implemented
    # (last_query is only consumed by the active Noiser and is unused here).
    indices = None
    ref = last_embed.reshape(M, C) if last_embed is not None else qf

    w_slab, w2_slab, vec_slab = packed['w'], packed['w2'], packed['vec']
    L = w_slab.shape[0]
    operands = (qf, ref, w_slab, w2_slab, vec_slab)

    H, dh, F = NUM_HEADS, C // NUM_HEADS, DIM_FFN
    mults_per_layer = M * C * (8 * C + 2 * F) + 4 * B * H * Q * Q * dh
    cost = pl.CostEstimate(
        flops=2 * L * mults_per_layer,
        transcendentals=L * (2 * B * H * Q * Q + 3 * M),
        bytes_accessed=int(sum(a.size * a.dtype.itemsize for a in operands)) + M * C * 4,
    )

    out = pl.pallas_call(
        functools.partial(_tracker_kernel, batch=B, seq=Q),
        out_shape=jax.ShapeDtypeStruct((M, C), jnp.float32),
        grid=(L,),
        in_specs=[
            pl.BlockSpec((M, C), lambda l: (0, 0)),                       # qf (resident)
            pl.BlockSpec((M, C), lambda l: (0, 0)),                       # ref (resident)
            pl.BlockSpec((None,) + w_slab.shape[1:], lambda l: (l, 0, 0)),   # per-layer W
            pl.BlockSpec((None,) + w2_slab.shape[1:], lambda l: (l, 0, 0)),  # per-layer W2
            pl.BlockSpec((None,) + vec_slab.shape[1:], lambda l: (l, 0, 0)), # per-layer vecs
        ],
        out_specs=pl.BlockSpec((M, C), lambda l: (0, 0)),
        scratch_shapes=[pltpu.VMEM((M, C), jnp.float32)],                 # residual carry
        compiler_params=pltpu.CompilerParams(
            dimension_semantics=("arbitrary",),
            vmem_limit_bytes=32 * 1024 * 1024),
        cost_estimate=cost,
    )(*operands)

    return indices, jnp.transpose(out.reshape(B, Q, C), (1, 0, 2))        # (Q, B, C)


# ---------------------------------------------------------------------------
# Deterministic parameter init (PyTorch layout) + packing for the fused kernel.
# ---------------------------------------------------------------------------
def _bf16r(x):
    # Round to bf16-representable f32 so kernel bf16 weights and the reference
    # use exactly the same values.
    return x.astype(jnp.bfloat16).astype(jnp.float32)


def _attn_params(key, C):
    ks = jax.random.split(key, 10)
    s = 0.05
    nrm = lambda k, shape: jax.random.normal(k, shape, jnp.float32) * s
    return dict(
        wq=_bf16r(nrm(ks[0], (C, C))), wk=_bf16r(nrm(ks[1], (C, C))),
        wv=_bf16r(nrm(ks[2], (C, C))), wo=_bf16r(nrm(ks[3], (C, C))),
        bq=nrm(ks[4], (1, C)), bk=nrm(ks[5], (1, C)),
        bv=nrm(ks[6], (1, C)), bo=nrm(ks[7], (1, C)),
        gamma=1.0 + nrm(ks[8], (1, C)), beta=nrm(ks[9], (1, C)))


def _ffn_params(key, C, F):
    ks = jax.random.split(key, 6)
    s = 0.05
    nrm = lambda k, shape: jax.random.normal(k, shape, jnp.float32) * s
    return dict(
        w1=_bf16r(nrm(ks[0], (F, C))), b1=nrm(ks[1], (1, F)),
        w2=_bf16r(nrm(ks[2], (C, F))), b2=nrm(ks[3], (1, C)),
        gamma=1.0 + nrm(ks[4], (1, C)), beta=nrm(ks[5], (1, C)))


def init_params(key):
    params = []
    for _ in range(NUM_LAYERS):
        key, k1, k2, k3 = jax.random.split(key, 4)
        params.append(dict(cross=_attn_params(k1, HIDDEN_DIM),
                           self=_attn_params(k2, HIDDEN_DIM),
                           ffn=_ffn_params(k3, HIDDEN_DIM, DIM_FFN)))
    return params


def pack_params(params):
    """PyTorch-layout per-layer params -> three layer-stacked slabs:
       w   (L, 256, 3072) bf16  : [cx_wq | cx_wk | cx_wv | cx_wo | sa_wq | sa_wk | sa_wv | sa_wo | ff_w1]^T
       w2  (L, 1024, 256) bf16  : ff_w2^T
       vec (L, 1, 4864)   f32   : biases + LayerNorm gamma/beta, 128-lane aligned."""
    def bfT(w):
        return jnp.transpose(w).astype(jnp.bfloat16)      # (out,in) -> (in,out)

    w_l, w2_l, v_l = [], [], []
    for lp in params:
        cx, sa, ff = lp['cross'], lp['self'], lp['ffn']
        w_l.append(jnp.concatenate(
            [bfT(cx['wq']), bfT(cx['wk']), bfT(cx['wv']), bfT(cx['wo']),
             bfT(sa['wq']), bfT(sa['wk']), bfT(sa['wv']), bfT(sa['wo']),
             bfT(ff['w1'])], axis=1))
        w2_l.append(bfT(ff['w2']))
        v_l.append(jnp.concatenate(
            [cx['bq'], cx['bk'], cx['bv'], cx['bo'], cx['gamma'], cx['beta'],
             sa['bq'], sa['bk'], sa['bv'], sa['bo'], sa['gamma'], sa['beta'],
             ff['b1'], ff['b2'], ff['gamma'], ff['beta']], axis=1))
    packed = dict(w=jnp.stack(w_l, axis=0), w2=jnp.stack(w2_l, axis=0),
                  vec=jnp.stack(v_l, axis=0)[:, None, :].reshape(len(params), 1, _V_COLS))
    assert packed['w'].shape[-1] == _W_COLS and packed['vec'].shape[-1] == _V_COLS
    return packed


# ---------------------------------------------------------------------------
# Pure-JAX reference: PyTorch eval-mode semantics with the kernel's exact
# bf16-operand / f32-accumulate matmul recipe.
# ---------------------------------------------------------------------------
def _linear(x, w, b):
    # x: (..., in) f32, w: (out, in) bf16-representable f32, b: (1, out) f32.
    y = jax.lax.dot_general(x.astype(jnp.bfloat16), w.astype(jnp.bfloat16),
                            (((x.ndim - 1,), (1,)), ((), ())),
                            preferred_element_type=jnp.float32)
    return y + b


def _mha_ref(q_in, k_in, v_in, resid, p, H):
    B, Q, C = q_in.shape
    dh = C // H
    q = _linear(q_in, p['wq'], p['bq']) * (dh ** -0.5)
    k = _linear(k_in, p['wk'], p['bk'])
    v = _linear(v_in, p['wv'], p['bv'])
    q = q.reshape(B, Q, H, dh).astype(jnp.bfloat16)
    k = k.reshape(B, Q, H, dh).astype(jnp.bfloat16)
    v = v.reshape(B, Q, H, dh).astype(jnp.bfloat16)
    s = jnp.einsum('bqhd,bkhd->bhqk', q, k, preferred_element_type=jnp.float32)
    s = s - jnp.max(s, axis=-1, keepdims=True)
    a = jnp.exp(s)
    a = a / jnp.sum(a, axis=-1, keepdims=True)
    o = jnp.einsum('bhqk,bkhd->bqhd', a.astype(jnp.bfloat16), v,
                   preferred_element_type=jnp.float32).reshape(B, Q, C)
    o = _linear(o, p['wo'], p['bo'])
    return _layer_norm(resid + o, p['gamma'], p['beta'])


def _ffn_ref(x, p):
    h = jnp.maximum(_linear(x, p['w1'], p['b1']), 0.0)
    y = _linear(h, p['w2'], p['b2'])
    return _layer_norm(x + y, p['gamma'], p['beta'])


def tracker_forward_ref(params, query_features, last_query=None, last_embed=None):
    qf = jnp.transpose(query_features, (1, 0, 2))          # (B, Q, C)
    ref = last_embed if last_embed is not None else qf
    output = qf                                            # Noiser eval: noised_init == qf
    for j in range(NUM_LAYERS):
        resid = qf if j == 0 else output
        output = _mha_ref(ref, qf, qf, resid, params[j]['cross'], NUM_HEADS)
        output = _mha_ref(output, output, output, output, params[j]['self'], NUM_HEADS)
        output = _ffn_ref(output, params[j]['ffn'])
    return None, jnp.transpose(output, (1, 0, 2))


if __name__ == "__main__":
    key = jax.random.PRNGKey(0)
    kp, kq, kl, ke = jax.random.split(key, 4)
    params = init_params(kp)
    packed = pack_params(params)

    Q, B, C = 8, 2, HIDDEN_DIM
    query_features = jax.random.normal(kq, (Q, B, C), jnp.float32)   # (Q, B, C)
    last_query = jax.random.normal(kl, (B, Q, C), jnp.float32)       # (B, Q, C)
    last_embed = jax.random.normal(ke, (B, Q, C), jnp.float32)       # (B, Q, C)

    fwd = jax.jit(tracker_forward)
    indices, out = fwd(packed, query_features, last_query, last_embed)
    out = jax.block_until_ready(out)

    _, out_ref = tracker_forward_ref(params, query_features, last_query, last_embed)
    assert out.shape == (Q, B, C)
    err = float(jnp.max(jnp.abs(out - out_ref)))
    assert err < 2e-3, f"max abs err={err}"
    print("KERNEL_OK")
</pallas_src>

<mosaic_0001>
module attributes {stable_mosaic.version = 11 : i64} {
  func.func @_tracker_kernel(%arg0: i32, %arg1: memref<16x256xf32, #tpu.memory_space<vmem>>, %arg2: memref<16x256xf32, #tpu.memory_space<vmem>>, %arg3: memref<1x256x3072xbf16, #tpu.memory_space<vmem>>, %arg4: memref<1x1024x256xbf16, #tpu.memory_space<vmem>>, %arg5: memref<1x1x4864xf32, #tpu.memory_space<vmem>>, %arg6: memref<16x256xf32, #tpu.memory_space<vmem>>, %arg7: memref<16x256xf32, #tpu.memory_space<vmem>>) attributes {dimension_semantics = [#tpu.dimension_semantics<arbitrary>], iteration_bounds = array<i64: 3>, scalar_prefetch = 0 : i64, scratch_operands = 1 : i64, tpu.core_type = #tpu.core_type<tc>, window_params = [{pipeline_mode = #tpu.pipeline_mode<synchronous>, transform_indices = @transform_0, window_bounds = array<i64: 16, 256>}, {pipeline_mode = #tpu.pipeline_mode<synchronous>, transform_indices = @transform_1, window_bounds = array<i64: 16, 256>}, {transform_indices = @transform_2, window_bounds = array<i64: 1, 256, 3072>}, {transform_indices = @transform_3, window_bounds = array<i64: 1, 1024, 256>}, {transform_indices = @transform_4, window_bounds = array<i64: 1, 1, 4864>}, {pipeline_mode = #tpu.pipeline_mode<synchronous>, transform_indices = @transform_5, window_bounds = array<i64: 16, 256>}]} {
    %c0_i32 = arith.constant 0 : i32
    %0 = arith.cmpi eq, %arg0, %c0_i32 : i32
    %1 = arith.extui %0 : i1 to i32
    %c0_i32_0 = arith.constant 0 : i32
    %2 = arith.cmpi ne, %1, %c0_i32_0 : i32
    scf.if %2 {
      %c0_143 = arith.constant 0 : index
      %c0_144 = arith.constant 0 : index
      %408 = vector.load %arg1[%c0_143, %c0_144] : memref<16x256xf32, #tpu.memory_space<vmem>>, vector<16x256xf32>
      %c0_145 = arith.constant 0 : index
      %c0_146 = arith.constant 0 : index
      %409 = vector.load %arg7[%c0_145, %c0_146] : memref<16x256xf32, #tpu.memory_space<vmem>>, vector<16x256xf32>
      tpu.vector_store %arg7[%c0_145, %c0_146], %408 {strides = array<i32>} : memref<16x256xf32, #tpu.memory_space<vmem>>, vector<16x256xf32>,
    } else {
    }
    %c0 = arith.constant 0 : index
    %c0_1 = arith.constant 0 : index
    %3 = vector.load %arg1[%c0, %c0_1] : memref<16x256xf32, #tpu.memory_space<vmem>>, vector<16x256xf32>
    %4 = arith.truncf %3 : vector<16x256xf32> to vector<16x256xbf16>
    %c0_2 = arith.constant 0 : index
    %c0_3 = arith.constant 0 : index
    %5 = vector.load %arg2[%c0_2, %c0_3] : memref<16x256xf32, #tpu.memory_space<vmem>>, vector<16x256xf32>
    %6 = arith.truncf %5 : vector<16x256xf32> to vector<16x256xbf16>
    %c0_4 = arith.constant 0 : index
    %c0_5 = arith.constant 0 : index
    %7 = vector.load %arg7[%c0_4, %c0_5] : memref<16x256xf32, #tpu.memory_space<vmem>>, vector<16x256xf32>
    %c0_6 = arith.constant 0 : index
    %c0_7 = arith.constant 0 : index
    %c0_8 = arith.constant 0 : index
    %8 = vector.load %arg3[%c0_6, %c0_7, %c0_8] : memref<1x256x3072xbf16, #tpu.memory_space<vmem>>, vector<1x256x256xbf16>
    %9 = vector.shape_cast %8 : vector<1x256x256xbf16> to vector<256x256xbf16>
    %cst = arith.constant dense<0.000000e+00> : vector<16x256xf32>
    %10 = tpu.matmul %6, %9, %cst {dimension_numbers = #tpu.dot_dimension_numbers<[1], [0], [0], [1], [0, 0, 1, 1], [], []>} : vector<16x256xbf16>, vector<256x256xbf16>, vector<16x256xf32> -> vector<16x256xf32>
    %c0_9 = arith.constant 0 : index
    %c0_10 = arith.constant 0 : index
    %c0_11 = arith.constant 0 : index
    %11 = vector.load %arg5[%c0_9, %c0_10, %c0_11] : memref<1x1x4864xf32, #tpu.memory_space<vmem>>, vector<1x1x256xf32>
    %12 = vector.shape_cast %11 : vector<1x1x256xf32> to vector<1x256xf32>
    %13 = vector.broadcast %12 : vector<1x256xf32> to vector<16x256xf32>
    %14 = arith.addf %10, %13 : vector<16x256xf32>
    %cst_12 = arith.constant 0.176776692 : f32
    %15 = vector.broadcast %cst_12 : f32 to vector<16x256xf32>
    %16 = arith.mulf %14, %15 : vector<16x256xf32>
    %c0_13 = arith.constant 0 : index
    %c0_14 = arith.constant 0 : index
    %c256 = arith.constant 256 : index
    %17 = vector.load %arg3[%c0_13, %c0_14, %c256] : memref<1x256x3072xbf16, #tpu.memory_space<vmem>>, vector<1x256x512xbf16>
    %18 = vector.shape_cast %17 : vector<1x256x512xbf16> to vector<256x512xbf16>
    %cst_15 = arith.constant dense<0.000000e+00> : vector<16x512xf32>
    %19 = tpu.matmul %4, %18, %cst_15 {dimension_numbers = #tpu.dot_dimension_numbers<[1], [0], [0], [1], [0, 0, 1, 1], [], []>} : vector<16x256xbf16>, vector<256x512xbf16>, vector<16x512xf32> -> vector<16x512xf32>
    %c0_16 = arith.constant 0 : index
    %c0_17 = arith.constant 0 : index
    %c256_18 = arith.constant 256 : index
    %20 = vector.load %arg5[%c0_16, %c0_17, %c256_18] : memref<1x1x4864xf32, #tpu.memory_space<vmem>>, vector<1x1x512xf32>
    %21 = vector.shape_cast %20 : vector<1x1x512xf32> to vector<1x512xf32>
    %22 = vector.broadcast %21 : vector<1x512xf32> to vector<16x512xf32>
    %23 = arith.addf %19, %22 : vector<16x512xf32>
    %24 = vector.extract_strided_slice %23 {offsets = [0, 0], sizes = [16, 256], strides = [1, 1]} : vector<16x512xf32> to vector<16x256xf32>
    %25 = vector.extract_strided_slice %23 {offsets = [0, 256], sizes = [16, 256], strides = [1, 1]} : vector<16x512xf32> to vector<16x256xf32>
    %26 = arith.truncf %16 : vector<16x256xf32> to vector<16x256xbf16>
    %27 = vector.shape_cast %26 : vector<16x256xbf16> to vector<2x8x256xbf16>
    %28 = arith.truncf %24 : vector<16x256xf32> to vector<16x256xbf16>
    %29 = vector.shape_cast %28 : vector<16x256xbf16> to vector<2x8x256xbf16>
    %30 = arith.truncf %25 : vector<16x256xf32> to vector<16x256xbf16>
    %31 = vector.shape_cast %30 : vector<16x256xbf16> to vector<2x8x256xbf16>
    %32 = vector.extract_strided_slice %27 {offsets = [0, 0, 0], sizes = [2, 8, 32], strides = [1, 1, 1]} : vector<2x8x256xbf16> to vector<2x8x32xbf16>
    %33 = vector.extract_strided_slice %29 {offsets = [0, 0, 0], sizes = [2, 8, 32], strides = [1, 1, 1]} : vector<2x8x256xbf16> to vector<2x8x32xbf16>
    "tpu.trace_start"() <{level = 10 : i32, message = "bqd,bkd->bqk"}> : () -> ()
    %cst_19 = arith.constant dense<0.000000e+00> : vector<2x8x8xf32>
    %34 = tpu.matmul %32, %33, %cst_19 {dimension_numbers = #tpu.dot_dimension_numbers<[2], [2], [1], [1], [0, 0, 0, 1, 1, 1], [0], [0]>} : vector<2x8x32xbf16>, vector<2x8x32xbf16>, vector<2x8x8xf32> -> vector<2x8x8xf32>
    "tpu.trace_stop"() : () -> ()
    %cst_20 = arith.constant dense<0xFF800000> : vector<2x8xf32>
    %35 = vector.multi_reduction <maximumf>, %34, %cst_20 [2] : vector<2x8x8xf32> to vector<2x8xf32>
    %36 = vector.shape_cast %35 : vector<2x8xf32> to vector<2x8x1xf32>
    %37 = vector.broadcast %36 : vector<2x8x1xf32> to vector<2x8x8xf32>
    %38 = arith.subf %34, %37 : vector<2x8x8xf32>
    %39 = math.exp %38 : vector<2x8x8xf32>
    %cst_21 = arith.constant dense<0.000000e+00> : vector<2x8xf32>
    %40 = vector.multi_reduction <add>, %39, %cst_21 [2] : vector<2x8x8xf32> to vector<2x8xf32>
    %41 = vector.shape_cast %40 : vector<2x8xf32> to vector<2x8x1xf32>
    %42 = vector.broadcast %41 : vector<2x8x1xf32> to vector<2x8x8xf32>
    %43 = arith.divf %39, %42 : vector<2x8x8xf32>
    %44 = arith.truncf %43 : vector<2x8x8xf32> to vector<2x8x8xbf16>
    %45 = vector.extract_strided_slice %31 {offsets = [0, 0, 0], sizes = [2, 8, 32], strides = [1, 1, 1]} : vector<2x8x256xbf16> to vector<2x8x32xbf16>
    "tpu.trace_start"() <{level = 10 : i32, message = "bqk,bkd->bqd"}> : () -> ()
    %cst_22 = arith.constant dense<0.000000e+00> : vector<2x8x32xf32>
    %46 = tpu.matmul %44, %45, %cst_22 {dimension_numbers = #tpu.dot_dimension_numbers<[2], [1], [1], [2], [0, 0, 0, 1, 1, 2], [0], [0]>} : vector<2x8x8xbf16>, vector<2x8x32xbf16>, vector<2x8x32xf32> -> vector<2x8x32xf32>
    "tpu.trace_stop"() : () -> ()
    %47 = vector.extract_strided_slice %27 {offsets = [0, 0, 32], sizes = [2, 8, 32], strides = [1, 1, 1]} : vector<2x8x256xbf16> to vector<2x8x32xbf16>
    %48 = vector.extract_strided_slice %29 {offsets = [0, 0, 32], sizes = [2, 8, 32], strides = [1, 1, 1]} : vector<2x8x256xbf16> to vector<2x8x32xbf16>
    "tpu.trace_start"() <{level = 10 : i32, message = "bqd,bkd->bqk"}> : () -> ()
    %cst_23 = arith.constant dense<0.000000e+00> : vector<2x8x8xf32>
    %49 = tpu.matmul %47, %48, %cst_23 {dimension_numbers = #tpu.dot_dimension_numbers<[2], [2], [1], [1], [0, 0, 0, 1, 1, 1], [0], [0]>} : vector<2x8x32xbf16>, vector<2x8x32xbf16>, vector<2x8x8xf32> -> vector<2x8x8xf32>
    "tpu.trace_stop"() : () -> ()
    %cst_24 = arith.constant dense<0xFF800000> : vector<2x8xf32>
    %50 = vector.multi_reduction <maximumf>, %49, %cst_24 [2] : vector<2x8x8xf32> to vector<2x8xf32>
    %51 = vector.shape_cast %50 : vector<2x8xf32> to vector<2x8x1xf32>
    %52 = vector.broadcast %51 : vector<2x8x1xf32> to vector<2x8x8xf32>
    %53 = arith.subf %49, %52 : vector<2x8x8xf32>
    %54 = math.exp %53 : vector<2x8x8xf32>
    %cst_25 = arith.constant dense<0.000000e+00> : vector<2x8xf32>
    %55 = vector.multi_reduction <add>, %54, %cst_25 [2] : vector<2x8x8xf32> to vector<2x8xf32>
    %56 = vector.shape_cast %55 : vector<2x8xf32> to vector<2x8x1xf32>
    %57 = vector.broadcast %56 : vector<2x8x1xf32> to vector<2x8x8xf32>
    %58 = arith.divf %54, %57 : vector<2x8x8xf32>
    %59 = arith.truncf %58 : vector<2x8x8xf32> to vector<2x8x8xbf16>
    %60 = vector.extract_strided_slice %31 {offsets = [0, 0, 32], sizes = [2, 8, 32], strides = [1, 1, 1]} : vector<2x8x256xbf16> to vector<2x8x32xbf16>
    "tpu.trace_start"() <{level = 10 : i32, message = "bqk,bkd->bqd"}> : () -> ()
    %cst_26 = arith.constant dense<0.000000e+00> : vector<2x8x32xf32>
    %61 = tpu.matmul %59, %60, %cst_26 {dimension_numbers = #tpu.dot_dimension_numbers<[2], [1], [1], [2], [0, 0, 0, 1, 1, 2], [0], [0]>} : vector<2x8x8xbf16>, vector<2x8x32xbf16>, vector<2x8x32xf32> -> vector<2x8x32xf32>
    "tpu.trace_stop"() : () -> ()
    %62 = vector.extract_strided_slice %27 {offsets = [0, 0, 64], sizes = [2, 8, 32], strides = [1, 1, 1]} : vector<2x8x256xbf16> to vector<2x8x32xbf16>
    %63 = vector.extract_strided_slice %29 {offsets = [0, 0, 64], sizes = [2, 8, 32], strides = [1, 1, 1]} : vector<2x8x256xbf16> to vector<2x8x32xbf16>
    "tpu.trace_start"() <{level = 10 : i32, message = "bqd,bkd->bqk"}> : () -> ()
    %cst_27 = arith.constant dense<0.000000e+00> : vector<2x8x8xf32>
    %64 = tpu.matmul %62, %63, %cst_27 {dimension_numbers = #tpu.dot_dimension_numbers<[2], [2], [1], [1], [0, 0, 0, 1, 1, 1], [0], [0]>} : vector<2x8x32xbf16>, vector<2x8x32xbf16>, vector<2x8x8xf32> -> vector<2x8x8xf32>
    "tpu.trace_stop"() : () -> ()
    %cst_28 = arith.constant dense<0xFF800000> : vector<2x8xf32>
    %65 = vector.multi_reduction <maximumf>, %64, %cst_28 [2] : vector<2x8x8xf32> to vector<2x8xf32>
    %66 = vector.shape_cast %65 : vector<2x8xf32> to vector<2x8x1xf32>
    %67 = vector.broadcast %66 : vector<2x8x1xf32> to vector<2x8x8xf32>
    %68 = arith.subf %64, %67 : vector<2x8x8xf32>
    %69 = math.exp %68 : vector<2x8x8xf32>
    %cst_29 = arith.constant dense<0.000000e+00> : vector<2x8xf32>
    %70 = vector.multi_reduction <add>, %69, %cst_29 [2] : vector<2x8x8xf32> to vector<2x8xf32>
    %71 = vector.shape_cast %70 : vector<2x8xf32> to vector<2x8x1xf32>
    %72 = vector.broadcast %71 : vector<2x8x1xf32> to vector<2x8x8xf32>
    %73 = arith.divf %69, %72 : vector<2x8x8xf32>
    %74 = arith.truncf %73 : vector<2x8x8xf32> to vector<2x8x8xbf16>
    %75 = vector.extract_strided_slice %31 {offsets = [0, 0, 64], sizes = [2, 8, 32], strides = [1, 1, 1]} : vector<2x8x256xbf16> to vector<2x8x32xbf16>
    "tpu.trace_start"() <{level = 10 : i32, message = "bqk,bkd->bqd"}> : () -> ()
    %cst_30 = arith.constant dense<0.000000e+00> : vector<2x8x32xf32>
    %76 = tpu.matmul %74, %75, %cst_30 {dimension_numbers = #tpu.dot_dimension_numbers<[2], [1], [1], [2], [0, 0, 0, 1, 1, 2], [0], [0]>} : vector<2x8x8xbf16>, vector<2x8x32xbf16>, vector<2x8x32xf32> -> vector<2x8x32xf32>
    "tpu.trace_stop"() : () -> ()
    %77 = vector.extract_strided_slice %27 {offsets = [0, 0, 96], sizes = [2, 8, 32], strides = [1, 1, 1]} : vector<2x8x256xbf16> to vector<2x8x32xbf16>
    %78 = vector.extract_strided_slice %29 {offsets = [0, 0, 96], sizes = [2, 8, 32], strides = [1, 1, 1]} : vector<2x8x256xbf16> to vector<2x8x32xbf16>
    "tpu.trace_start"() <{level = 10 : i32, message = "bqd,bkd->bqk"}> : () -> ()
    %cst_31 = arith.constant dense<0.000000e+00> : vector<2x8x8xf32>
    %79 = tpu.matmul %77, %78, %cst_31 {dimension_numbers = #tpu.dot_dimension_numbers<[2], [2], [1], [1], [0, 0, 0, 1, 1, 1], [0], [0]>} : vector<2x8x32xbf16>, vector<2x8x32xbf16>, vector<2x8x8xf32> -> vector<2x8x8xf32>
    "tpu.trace_stop"() : () -> ()
    %cst_32 = arith.constant dense<0xFF800000> : vector<2x8xf32>
    %80 = vector.multi_reduction <maximumf>, %79, %cst_32 [2] : vector<2x8x8xf32> to vector<2x8xf32>
    %81 = vector.shape_cast %80 : vector<2x8xf32> to vector<2x8x1xf32>
    %82 = vector.broadcast %81 : vector<2x8x1xf32> to vector<2x8x8xf32>
    %83 = arith.subf %79, %82 : vector<2x8x8xf32>
    %84 = math.exp %83 : vector<2x8x8xf32>
    %cst_33 = arith.constant dense<0.000000e+00> : vector<2x8xf32>
    %85 = vector.multi_reduction <add>, %84, %cst_33 [2] : vector<2x8x8xf32> to vector<2x8xf32>
    %86 = vector.shape_cast %85 : vector<2x8xf32> to vector<2x8x1xf32>
    %87 = vector.broadcast %86 : vector<2x8x1xf32> to vector<2x8x8xf32>
    %88 = arith.divf %84, %87 : vector<2x8x8xf32>
    %89 = arith.truncf %88 : vector<2x8x8xf32> to vector<2x8x8xbf16>
    %90 = vector.extract_strided_slice %31 {offsets = [0, 0, 96], sizes = [2, 8, 32], strides = [1, 1, 1]} : vector<2x8x256xbf16> to vector<2x8x32xbf16>
    "tpu.trace_start"() <{level = 10 : i32, message = "bqk,bkd->bqd"}> : () -> ()
    %cst_34 = arith.constant dense<0.000000e+00> : vector<2x8x32xf32>
    %91 = tpu.matmul %89, %90, %cst_34 {dimension_numbers = #tpu.dot_dimension_numbers<[2], [1], [1], [2], [0, 0, 0, 1, 1, 2], [0], [0]>} : vector<2x8x8xbf16>, vector<2x8x32xbf16>, vector<2x8x32xf32> -> vector<2x8x32xf32>
    "tpu.trace_stop"() : () -> ()
    %92 = vector.extract_strided_slice %27 {offsets = [0, 0, 128], sizes = [2, 8, 32], strides = [1, 1, 1]} : vector<2x8x256xbf16> to vector<2x8x32xbf16>
    %93 = vector.extract_strided_slice %29 {offsets = [0, 0, 128], sizes = [2, 8, 32], strides = [1, 1, 1]} : vector<2x8x256xbf16> to vector<2x8x32xbf16>
    "tpu.trace_start"() <{level = 10 : i32, message = "bqd,bkd->bqk"}> : () -> ()
    %cst_35 = arith.constant dense<0.000000e+00> : vector<2x8x8xf32>
    %94 = tpu.matmul %92, %93, %cst_35 {dimension_numbers = #tpu.dot_dimension_numbers<[2], [2], [1], [1], [0, 0, 0, 1, 1, 1], [0], [0]>} : vector<2x8x32xbf16>, vector<2x8x32xbf16>, vector<2x8x8xf32> -> vector<2x8x8xf32>
    "tpu.trace_stop"() : () -> ()
    %cst_36 = arith.constant dense<0xFF800000> : vector<2x8xf32>
    %95 = vector.multi_reduction <maximumf>, %94, %cst_36 [2] : vector<2x8x8xf32> to vector<2x8xf32>
    %96 = vector.shape_cast %95 : vector<2x8xf32> to vector<2x8x1xf32>
    %97 = vector.broadcast %96 : vector<2x8x1xf32> to vector<2x8x8xf32>
    %98 = arith.subf %94, %97 : vector<2x8x8xf32>
    %99 = math.exp %98 : vector<2x8x8xf32>
    %cst_37 = arith.constant dense<0.000000e+00> : vector<2x8xf32>
    %100 = vector.multi_reduction <add>, %99, %cst_37 [2] : vector<2x8x8xf32> to vector<2x8xf32>
    %101 = vector.shape_cast %100 : vector<2x8xf32> to vector<2x8x1xf32>
    %102 = vector.broadcast %101 : vector<2x8x1xf32> to vector<2x8x8xf32>
    %103 = arith.divf %99, %102 : vector<2x8x8xf32>
    %104 = arith.truncf %103 : vector<2x8x8xf32> to vector<2x8x8xbf16>
    %105 = vector.extract_strided_slice %31 {offsets = [0, 0, 128], sizes = [2, 8, 32], strides = [1, 1, 1]} : vector<2x8x256xbf16> to vector<2x8x32xbf16>
    "tpu.trace_start"() <{level = 10 : i32, message = "bqk,bkd->bqd"}> : () -> ()
    %cst_38 = arith.constant dense<0.000000e+00> : vector<2x8x32xf32>
    %106 = tpu.matmul %104, %105, %cst_38 {dimension_numbers = #tpu.dot_dimension_numbers<[2], [1], [1], [2], [0, 0, 0, 1, 1, 2], [0], [0]>} : vector<2x8x8xbf16>, vector<2x8x32xbf16>, vector<2x8x32xf32> -> vector<2x8x32xf32>
    "tpu.trace_stop"() : () -> ()
    %107 = vector.extract_strided_slice %27 {offsets = [0, 0, 160], sizes = [2, 8, 32], strides = [1, 1, 1]} : vector<2x8x256xbf16> to vector<2x8x32xbf16>
    %108 = vector.extract_strided_slice %29 {offsets = [0, 0, 160], sizes = [2, 8, 32], strides = [1, 1, 1]} : vector<2x8x256xbf16> to vector<2x8x32xbf16>
    "tpu.trace_start"() <{level = 10 : i32, message = "bqd,bkd->bqk"}> : () -> ()
    %cst_39 = arith.constant dense<0.000000e+00> : vector<2x8x8xf32>
    %109 = tpu.matmul %107, %108, %cst_39 {dimension_numbers = #tpu.dot_dimension_numbers<[2], [2], [1], [1], [0, 0, 0, 1, 1, 1], [0], [0]>} : vector<2x8x32xbf16>, vector<2x8x32xbf16>, vector<2x8x8xf32> -> vector<2x8x8xf32>
    "tpu.trace_stop"() : () -> ()
    %cst_40 = arith.constant dense<0xFF800000> : vector<2x8xf32>
    %110 = vector.multi_reduction <maximumf>, %109, %cst_40 [2] : vector<2x8x8xf32> to vector<2x8xf32>
    %111 = vector.shape_cast %110 : vector<2x8xf32> to vector<2x8x1xf32>
    %112 = vector.broadcast %111 : vector<2x8x1xf32> to vector<2x8x8xf32>
    %113 = arith.subf %109, %112 : vector<2x8x8xf32>
    %114 = math.exp %113 : vector<2x8x8xf32>
    %cst_41 = arith.constant dense<0.000000e+00> : vector<2x8xf32>
    %115 = vector.multi_reduction <add>, %114, %cst_41 [2] : vector<2x8x8xf32> to vector<2x8xf32>
    %116 = vector.shape_cast %115 : vector<2x8xf32> to vector<2x8x1xf32>
    %117 = vector.broadcast %116 : vector<2x8x1xf32> to vector<2x8x8xf32>
    %118 = arith.divf %114, %117 : vector<2x8x8xf32>
    %119 = arith.truncf %118 : vector<2x8x8xf32> to vector<2x8x8xbf16>
    %120 = vector.extract_strided_slice %31 {offsets = [0, 0, 160], sizes = [2, 8, 32], strides = [1, 1, 1]} : vector<2x8x256xbf16> to vector<2x8x32xbf16>
    "tpu.trace_start"() <{level = 10 : i32, message = "bqk,bkd->bqd"}> : () -> ()
    %cst_42 = arith.constant dense<0.000000e+00> : vector<2x8x32xf32>
    %121 = tpu.matmul %119, %120, %cst_42 {dimension_numbers = #tpu.dot_dimension_numbers<[2], [1], [1], [2], [0, 0, 0, 1, 1, 2], [0], [0]>} : vector<2x8x8xbf16>, vector<2x8x32xbf16>, vector<2x8x32xf32> -> vector<2x8x32xf32>
    "tpu.trace_stop"() : () -> ()
    %122 = vector.extract_strided_slice %27 {offsets = [0, 0, 192], sizes = [2, 8, 32], strides = [1, 1, 1]} : vector<2x8x256xbf16> to vector<2x8x32xbf16>
    %123 = vector.extract_strided_slice %29 {offsets = [0, 0, 192], sizes = [2, 8, 32], strides = [1, 1, 1]} : vector<2x8x256xbf16> to vector<2x8x32xbf16>
    "tpu.trace_start"() <{level = 10 : i32, message = "bqd,bkd->bqk"}> : () -> ()
    %cst_43 = arith.constant dense<0.000000e+00> : vector<2x8x8xf32>
    %124 = tpu.matmul %122, %123, %cst_43 {dimension_numbers = #tpu.dot_dimension_numbers<[2], [2], [1], [1], [0, 0, 0, 1, 1, 1], [0], [0]>} : vector<2x8x32xbf16>, vector<2x8x32xbf16>, vector<2x8x8xf32> -> vector<2x8x8xf32>
    "tpu.trace_stop"() : () -> ()
    %cst_44 = arith.constant dense<0xFF800000> : vector<2x8xf32>
    %125 = vector.multi_reduction <maximumf>, %124, %cst_44 [2] : vector<2x8x8xf32> to vector<2x8xf32>
    %126 = vector.shape_cast %125 : vector<2x8xf32> to vector<2x8x1xf32>
    %127 = vector.broadcast %126 : vector<2x8x1xf32> to vector<2x8x8xf32>
    %128 = arith.subf %124, %127 : vector<2x8x8xf32>
    %129 = math.exp %128 : vector<2x8x8xf32>
    %cst_45 = arith.constant dense<0.000000e+00> : vector<2x8xf32>
    %130 = vector.multi_reduction <add>, %129, %cst_45 [2] : vector<2x8x8xf32> to vector<2x8xf32>
    %131 = vector.shape_cast %130 : vector<2x8xf32> to vector<2x8x1xf32>
    %132 = vector.broadcast %131 : vector<2x8x1xf32> to vector<2x8x8xf32>
    %133 = arith.divf %129, %132 : vector<2x8x8xf32>
    %134 = arith.truncf %133 : vector<2x8x8xf32> to vector<2x8x8xbf16>
    %135 = vector.extract_strided_slice %31 {offsets = [0, 0, 192], sizes = [2, 8, 32], strides = [1, 1, 1]} : vector<2x8x256xbf16> to vector<2x8x32xbf16>
    "tpu.trace_start"() <{level = 10 : i32, message = "bqk,bkd->bqd"}> : () -> ()
    %cst_46 = arith.constant dense<0.000000e+00> : vector<2x8x32xf32>
    %136 = tpu.matmul %134, %135, %cst_46 {dimension_numbers = #tpu.dot_dimension_numbers<[2], [1], [1], [2], [0, 0, 0, 1, 1, 2], [0], [0]>} : vector<2x8x8xbf16>, vector<2x8x32xbf16>, vector<2x8x32xf32> -> vector<2x8x32xf32>
    "tpu.trace_stop"() : () -> ()
    %137 = vector.extract_strided_slice %27 {offsets = [0, 0, 224], sizes = [2, 8, 32], strides = [1, 1, 1]} : vector<2x8x256xbf16> to vector<2x8x32xbf16>
    %138 = vector.extract_strided_slice %29 {offsets = [0, 0, 224], sizes = [2, 8, 32], strides = [1, 1, 1]} : vector<2x8x256xbf16> to vector<2x8x32xbf16>
    "tpu.trace_start"() <{level = 10 : i32, message = "bqd,bkd->bqk"}> : () -> ()
    %cst_47 = arith.constant dense<0.000000e+00> : vector<2x8x8xf32>
    %139 = tpu.matmul %137, %138, %cst_47 {dimension_numbers = #tpu.dot_dimension_numbers<[2], [2], [1], [1], [0, 0, 0, 1, 1, 1], [0], [0]>} : vector<2x8x32xbf16>, vector<2x8x32xbf16>, vector<2x8x8xf32> -> vector<2x8x8xf32>
    "tpu.trace_stop"() : () -> ()
    %cst_48 = arith.constant dense<0xFF800000> : vector<2x8xf32>
    %140 = vector.multi_reduction <maximumf>, %139, %cst_48 [2] : vector<2x8x8xf32> to vector<2x8xf32>
    %141 = vector.shape_cast %140 : vector<2x8xf32> to vector<2x8x1xf32>
    %142 = vector.broadcast %141 : vector<2x8x1xf32> to vector<2x8x8xf32>
    %143 = arith.subf %139, %142 : vector<2x8x8xf32>
    %144 = math.exp %143 : vector<2x8x8xf32>
    %cst_49 = arith.constant dense<0.000000e+00> : vector<2x8xf32>
    %145 = vector.multi_reduction <add>, %144, %cst_49 [2] : vector<2x8x8xf32> to vector<2x8xf32>
    %146 = vector.shape_cast %145 : vector<2x8xf32> to vector<2x8x1xf32>
    %147 = vector.broadcast %146 : vector<2x8x1xf32> to vector<2x8x8xf32>
    %148 = arith.divf %144, %147 : vector<2x8x8xf32>
    %149 = arith.truncf %148 : vector<2x8x8xf32> to vector<2x8x8xbf16>
    %150 = vector.extract_strided_slice %31 {offsets = [0, 0, 224], sizes = [2, 8, 32], strides = [1, 1, 1]} : vector<2x8x256xbf16> to vector<2x8x32xbf16>
    "tpu.trace_start"() <{level = 10 : i32, message = "bqk,bkd->bqd"}> : () -> ()
    %cst_50 = arith.constant dense<0.000000e+00> : vector<2x8x32xf32>
    %151 = tpu.matmul %149, %150, %cst_50 {dimension_numbers = #tpu.dot_dimension_numbers<[2], [1], [1], [2], [0, 0, 0, 1, 1, 2], [0], [0]>} : vector<2x8x8xbf16>, vector<2x8x32xbf16>, vector<2x8x32xf32> -> vector<2x8x32xf32>
    "tpu.trace_stop"() : () -> ()
    %152 = tpu.concatenate %46, %61, %76, %91, %106, %121, %136, %151 in 2 : vector<2x8x32xf32>, vector<2x8x32xf32>, vector<2x8x32xf32>, vector<2x8x32xf32>, vector<2x8x32xf32>, vector<2x8x32xf32>, vector<2x8x32xf32>, vector<2x8x32xf32> -> vector<2x8x256xf32>
    %153 = vector.shape_cast %152 : vector<2x8x256xf32> to vector<16x256xf32>
    %154 = arith.truncf %153 : vector<16x256xf32> to vector<16x256xbf16>
    %c0_51 = arith.constant 0 : index
    %c0_52 = arith.constant 0 : index
    %c768 = arith.constant 768 : index
    %155 = vector.load %arg3[%c0_51, %c0_52, %c768] : memref<1x256x3072xbf16, #tpu.memory_space<vmem>>, vector<1x256x256xbf16>
    %156 = vector.shape_cast %155 : vector<1x256x256xbf16> to vector<256x256xbf16>
    %cst_53 = arith.constant dense<0.000000e+00> : vector<16x256xf32>
    %157 = tpu.matmul %154, %156, %cst_53 {dimension_numbers = #tpu.dot_dimension_numbers<[1], [0], [0], [1], [0, 0, 1, 1], [], []>} : vector<16x256xbf16>, vector<256x256xbf16>, vector<16x256xf32> -> vector<16x256xf32>
    %c0_54 = arith.constant 0 : index
    %c0_55 = arith.constant 0 : index
    %c768_56 = arith.constant 768 : index
    %158 = vector.load %arg5[%c0_54, %c0_55, %c768_56] : memref<1x1x4864xf32, #tpu.memory_space<vmem>>, vector<1x1x256xf32>
    %159 = vector.shape_cast %158 : vector<1x1x256xf32> to vector<1x256xf32>
    %160 = vector.broadcast %159 : vector<1x256xf32> to vector<16x256xf32>
    %161 = arith.addf %157, %160 : vector<16x256xf32>
    %162 = arith.addf %7, %161 : vector<16x256xf32>
    %c0_57 = arith.constant 0 : index
    %c0_58 = arith.constant 0 : index
    %c1024 = arith.constant 1024 : index
    %163 = vector.load %arg5[%c0_57, %c0_58, %c1024] : memref<1x1x4864xf32, #tpu.memory_space<vmem>>, vector<1x1x256xf32>
    %164 = vector.shape_cast %163 : vector<1x1x256xf32> to vector<1x256xf32>
    %c0_59 = arith.constant 0 : index
    %c0_60 = arith.constant 0 : index
    %c1280 = arith.constant 1280 : index
    %165 = vector.load %arg5[%c0_59, %c0_60, %c1280] : memref<1x1x4864xf32, #tpu.memory_space<vmem>>, vector<1x1x256xf32>
    %166 = vector.shape_cast %165 : vector<1x1x256xf32> to vector<1x256xf32>
    %cst_61 = arith.constant dense<0.000000e+00> : vector<16xf32>
    %167 = vector.multi_reduction <add>, %162, %cst_61 [1] : vector<16x256xf32> to vector<16xf32>
    %168 = vector.shape_cast %167 : vector<16xf32> to vector<16x1xf32>
    %cst_62 = arith.constant 2.560000e+02 : f32
    %169 = vector.broadcast %cst_62 : f32 to vector<16x1xf32>
    %170 = arith.divf %168, %169 : vector<16x1xf32>
    %171 = vector.broadcast %170 : vector<16x1xf32> to vector<16x256xf32>
    %172 = arith.subf %162, %171 : vector<16x256xf32>
    %173 = arith.mulf %172, %172 : vector<16x256xf32>
    %cst_63 = arith.constant dense<0.000000e+00> : vector<16xf32>
    %174 = vector.multi_reduction <add>, %173, %cst_63 [1] : vector<16x256xf32> to vector<16xf32>
    %175 = vector.shape_cast %174 : vector<16xf32> to vector<16x1xf32>
    %cst_64 = arith.constant 2.560000e+02 : f32
    %176 = vector.broadcast %cst_64 : f32 to vector<16x1xf32>
    %177 = arith.divf %175, %176 : vector<16x1xf32>
    %cst_65 = arith.constant 9.99999974E-6 : f32
    %178 = vector.broadcast %cst_65 : f32 to vector<16x1xf32>
    %179 = arith.addf %177, %178 : vector<16x1xf32>
    %180 = math.rsqrt %179 : vector<16x1xf32>
    %181 = vector.broadcast %180 : vector<16x1xf32> to vector<16x256xf32>
    %182 = arith.mulf %172, %181 : vector<16x256xf32>
    %183 = vector.broadcast %164 : vector<1x256xf32> to vector<16x256xf32>
    %184 = arith.mulf %182, %183 : vector<16x256xf32>
    %185 = vector.broadcast %166 : vector<1x256xf32> to vector<16x256xf32>
    %186 = arith.addf %184, %185 : vector<16x256xf32>
    %187 = arith.truncf %186 : vector<16x256xf32> to vector<16x256xbf16>
    %c0_66 = arith.constant 0 : index
    %c0_67 = arith.constant 0 : index
    %c1024_68 = arith.constant 1024 : index
    %188 = vector.load %arg3[%c0_66, %c0_67, %c1024_68] : memref<1x256x3072xbf16, #tpu.memory_space<vmem>>, vector<1x256x768xbf16>
    %189 = vector.shape_cast %188 : vector<1x256x768xbf16> to vector<256x768xbf16>
    %cst_69 = arith.constant dense<0.000000e+00> : vector<16x768xf32>
    %190 = tpu.matmul %187, %189, %cst_69 {dimension_numbers = #tpu.dot_dimension_numbers<[1], [0], [0], [1], [0, 0, 1, 1], [], []>} : vector<16x256xbf16>, vector<256x768xbf16>, vector<16x768xf32> -> vector<16x768xf32>
    %c0_70 = arith.constant 0 : index
    %c0_71 = arith.constant 0 : index
    %c1536 = arith.constant 1536 : index
    %191 = vector.load %arg5[%c0_70, %c0_71, %c1536] : memref<1x1x4864xf32, #tpu.memory_space<vmem>>, vector<1x1x768xf32>
    %192 = vector.shape_cast %191 : vector<1x1x768xf32> to vector<1x768xf32>
    %193 = vector.broadcast %192 : vector<1x768xf32> to vector<16x768xf32>
    %194 = arith.addf %190, %193 : vector<16x768xf32>
    %195 = vector.extract_strided_slice %194 {offsets = [0, 0], sizes = [16, 256], strides = [1, 1]} : vector<16x768xf32> to vector<16x256xf32>
    %cst_72 = arith.constant 0.176776692 : f32
    %196 = vector.broadcast %cst_72 : f32 to vector<16x256xf32>
    %197 = arith.mulf %195, %196 : vector<16x256xf32>
    %198 = vector.extract_strided_slice %194 {offsets = [0, 256], sizes = [16, 256], strides = [1, 1]} : vector<16x768xf32> to vector<16x256xf32>
    %199 = vector.extract_strided_slice %194 {offsets = [0, 512], sizes = [16, 256], strides = [1, 1]} : vector<16x768xf32> to vector<16x256xf32>
    %200 = arith.truncf %197 : vector<16x256xf32> to vector<16x256xbf16>
    %201 = vector.shape_cast %200 : vector<16x256xbf16> to vector<2x8x256xbf16>
    %202 = arith.truncf %198 : vector<16x256xf32> to vector<16x256xbf16>
    %203 = vector.shape_cast %202 : vector<16x256xbf16> to vector<2x8x256xbf16>
    %204 = arith.truncf %199 : vector<16x256xf32> to vector<16x256xbf16>
    %205 = vector.shape_cast %204 : vector<16x256xbf16> to vector<2x8x256xbf16>
    %206 = vector.extract_strided_slice %201 {offsets = [0, 0, 0], sizes = [2, 8, 32], strides = [1, 1, 1]} : vector<2x8x256xbf16> to vector<2x8x32xbf16>
    %207 = vector.extract_strided_slice %203 {offsets = [0, 0, 0], sizes = [2, 8, 32], strides = [1, 1, 1]} : vector<2x8x256xbf16> to vector<2x8x32xbf16>
    "tpu.trace_start"() <{level = 10 : i32, message = "bqd,bkd->bqk"}> : () -> ()
    %cst_73 = arith.constant dense<0.000000e+00> : vector<2x8x8xf32>
    %208 = tpu.matmul %206, %207, %cst_73 {dimension_numbers = #tpu.dot_dimension_numbers<[2], [2], [1], [1], [0, 0, 0, 1, 1, 1], [0], [0]>} : vector<2x8x32xbf16>, vector<2x8x32xbf16>, vector<2x8x8xf32> -> vector<2x8x8xf32>
    "tpu.trace_stop"() : () -> ()
    %cst_74 = arith.constant dense<0xFF800000> : vector<2x8xf32>
    %209 = vector.multi_reduction <maximumf>, %208, %cst_74 [2] : vector<2x8x8xf32> to vector<2x8xf32>
    %210 = vector.shape_cast %209 : vector<2x8xf32> to vector<2x8x1xf32>
    %211 = vector.broadcast %210 : vector<2x8x1xf32> to vector<2x8x8xf32>
    %212 = arith.subf %208, %211 : vector<2x8x8xf32>
    %213 = math.exp %212 : vector<2x8x8xf32>
    %cst_75 = arith.constant dense<0.000000e+00> : vector<2x8xf32>
    %214 = vector.multi_reduction <add>, %213, %cst_75 [2] : vector<2x8x8xf32> to vector<2x8xf32>
    %215 = vector.shape_cast %214 : vector<2x8xf32> to vector<2x8x1xf32>
    %216 = vector.broadcast %215 : vector<2x8x1xf32> to vector<2x8x8xf32>
    %217 = arith.divf %213, %216 : vector<2x8x8xf32>
    %218 = arith.truncf %217 : vector<2x8x8xf32> to vector<2x8x8xbf16>
    %219 = vector.extract_strided_slice %205 {offsets = [0, 0, 0], sizes = [2, 8, 32], strides = [1, 1, 1]} : vector<2x8x256xbf16> to vector<2x8x32xbf16>
    "tpu.trace_start"() <{level = 10 : i32, message = "bqk,bkd->bqd"}> : () -> ()
    %cst_76 = arith.constant dense<0.000000e+00> : vector<2x8x32xf32>
    %220 = tpu.matmul %218, %219, %cst_76 {dimension_numbers = #tpu.dot_dimension_numbers<[2], [1], [1], [2], [0, 0, 0, 1, 1, 2], [0], [0]>} : vector<2x8x8xbf16>, vector<2x8x32xbf16>, vector<2x8x32xf32> -> vector<2x8x32xf32>
    "tpu.trace_stop"() : () -> ()
    %221 = vector.extract_strided_slice %201 {offsets = [0, 0, 32], sizes = [2, 8, 32], strides = [1, 1, 1]} : vector<2x8x256xbf16> to vector<2x8x32xbf16>
    %222 = vector.extract_strided_slice %203 {offsets = [0, 0, 32], sizes = [2, 8, 32], strides = [1, 1, 1]} : vector<2x8x256xbf16> to vector<2x8x32xbf16>
    "tpu.trace_start"() <{level = 10 : i32, message = "bqd,bkd->bqk"}> : () -> ()
    %cst_77 = arith.constant dense<0.000000e+00> : vector<2x8x8xf32>
    %223 = tpu.matmul %221, %222, %cst_77 {dimension_numbers = #tpu.dot_dimension_numbers<[2], [2], [1], [1], [0, 0, 0, 1, 1, 1], [0], [0]>} : vector<2x8x32xbf16>, vector<2x8x32xbf16>, vector<2x8x8xf32> -> vector<2x8x8xf32>
    "tpu.trace_stop"() : () -> ()
    %cst_78 = arith.constant dense<0xFF800000> : vector<2x8xf32>
    %224 = vector.multi_reduction <maximumf>, %223, %cst_78 [2] : vector<2x8x8xf32> to vector<2x8xf32>
    %225 = vector.shape_cast %224 : vector<2x8xf32> to vector<2x8x1xf32>
    %226 = vector.broadcast %225 : vector<2x8x1xf32> to vector<2x8x8xf32>
    %227 = arith.subf %223, %226 : vector<2x8x8xf32>
    %228 = math.exp %227 : vector<2x8x8xf32>
    %cst_79 = arith.constant dense<0.000000e+00> : vector<2x8xf32>
    %229 = vector.multi_reduction <add>, %228, %cst_79 [2] : vector<2x8x8xf32> to vector<2x8xf32>
    %230 = vector.shape_cast %229 : vector<2x8xf32> to vector<2x8x1xf32>
    %231 = vector.broadcast %230 : vector<2x8x1xf32> to vector<2x8x8xf32>
    %232 = arith.divf %228, %231 : vector<2x8x8xf32>
    %233 = arith.truncf %232 : vector<2x8x8xf32> to vector<2x8x8xbf16>
    %234 = vector.extract_strided_slice %205 {offsets = [0, 0, 32], sizes = [2, 8, 32], strides = [1, 1, 1]} : vector<2x8x256xbf16> to vector<2x8x32xbf16>
    "tpu.trace_start"() <{level = 10 : i32, message = "bqk,bkd->bqd"}> : () -> ()
    %cst_80 = arith.constant dense<0.000000e+00> : vector<2x8x32xf32>
    %235 = tpu.matmul %233, %234, %cst_80 {dimension_numbers = #tpu.dot_dimension_numbers<[2], [1], [1], [2], [0, 0, 0, 1, 1, 2], [0], [0]>} : vector<2x8x8xbf16>, vector<2x8x32xbf16>, vector<2x8x32xf32> -> vector<2x8x32xf32>
    "tpu.trace_stop"() : () -> ()
    %236 = vector.extract_strided_slice %201 {offsets = [0, 0, 64], sizes = [2, 8, 32], strides = [1, 1, 1]} : vector<2x8x256xbf16> to vector<2x8x32xbf16>
    %237 = vector.extract_strided_slice %203 {offsets = [0, 0, 64], sizes = [2, 8, 32], strides = [1, 1, 1]} : vector<2x8x256xbf16> to vector<2x8x32xbf16>
    "tpu.trace_start"() <{level = 10 : i32, message = "bqd,bkd->bqk"}> : () -> ()
    %cst_81 = arith.constant dense<0.000000e+00> : vector<2x8x8xf32>
    %238 = tpu.matmul %236, %237, %cst_81 {dimension_numbers = #tpu.dot_dimension_numbers<[2], [2], [1], [1], [0, 0, 0, 1, 1, 1], [0], [0]>} : vector<2x8x32xbf16>, vector<2x8x32xbf16>, vector<2x8x8xf32> -> vector<2x8x8xf32>
    "tpu.trace_stop"() : () -> ()
    %cst_82 = arith.constant dense<0xFF800000> : vector<2x8xf32>
    %239 = vector.multi_reduction <maximumf>, %238, %cst_82 [2] : vector<2x8x8xf32> to vector<2x8xf32>
    %240 = vector.shape_cast %239 : vector<2x8xf32> to vector<2x8x1xf32>
    %241 = vector.broadcast %240 : vector<2x8x1xf32> to vector<2x8x8xf32>
    %242 = arith.subf %238, %241 : vector<2x8x8xf32>
    %243 = math.exp %242 : vector<2x8x8xf32>
    %cst_83 = arith.constant dense<0.000000e+00> : vector<2x8xf32>
    %244 = vector.multi_reduction <add>, %243, %cst_83 [2] : vector<2x8x8xf32> to vector<2x8xf32>
    %245 = vector.shape_cast %244 : vector<2x8xf32> to vector<2x8x1xf32>
    %246 = vector.broadcast %245 : vector<2x8x1xf32> to vector<2x8x8xf32>
    %247 = arith.divf %243, %246 : vector<2x8x8xf32>
    %248 = arith.truncf %247 : vector<2x8x8xf32> to vector<2x8x8xbf16>
    %249 = vector.extract_strided_slice %205 {offsets = [0, 0, 64], sizes = [2, 8, 32], strides = [1, 1, 1]} : vector<2x8x256xbf16> to vector<2x8x32xbf16>
    "tpu.trace_start"() <{level = 10 : i32, message = "bqk,bkd->bqd"}> : () -> ()
    %cst_84 = arith.constant dense<0.000000e+00> : vector<2x8x32xf32>
    %250 = tpu.matmul %248, %249, %cst_84 {dimension_numbers = #tpu.dot_dimension_numbers<[2], [1], [1], [2], [0, 0, 0, 1, 1, 2], [0], [0]>} : vector<2x8x8xbf16>, vector<2x8x32xbf16>, vector<2x8x32xf32> -> vector<2x8x32xf32>
    "tpu.trace_stop"() : () -> ()
    %251 = vector.extract_strided_slice %201 {offsets = [0, 0, 96], sizes = [2, 8, 32], strides = [1, 1, 1]} : vector<2x8x256xbf16> to vector<2x8x32xbf16>
    %252 = vector.extract_strided_slice %203 {offsets = [0, 0, 96], sizes = [2, 8, 32], strides = [1, 1, 1]} : vector<2x8x256xbf16> to vector<2x8x32xbf16>
    "tpu.trace_start"() <{level = 10 : i32, message = "bqd,bkd->bqk"}> : () -> ()
    %cst_85 = arith.constant dense<0.000000e+00> : vector<2x8x8xf32>
    %253 = tpu.matmul %251, %252, %cst_85 {dimension_numbers = #tpu.dot_dimension_numbers<[2], [2], [1], [1], [0, 0, 0, 1, 1, 1], [0], [0]>} : vector<2x8x32xbf16>, vector<2x8x32xbf16>, vector<2x8x8xf32> -> vector<2x8x8xf32>
    "tpu.trace_stop"() : () -> ()
    %cst_86 = arith.constant dense<0xFF800000> : vector<2x8xf32>
    %254 = vector.multi_reduction <maximumf>, %253, %cst_86 [2] : vector<2x8x8xf32> to vector<2x8xf32>
    %255 = vector.shape_cast %254 : vector<2x8xf32> to vector<2x8x1xf32>
    %256 = vector.broadcast %255 : vector<2x8x1xf32> to vector<2x8x8xf32>
    %257 = arith.subf %253, %256 : vector<2x8x8xf32>
    %258 = math.exp %257 : vector<2x8x8xf32>
    %cst_87 = arith.constant dense<0.000000e+00> : vector<2x8xf32>
    %259 = vector.multi_reduction <add>, %258, %cst_87 [2] : vector<2x8x8xf32> to vector<2x8xf32>
    %260 = vector.shape_cast %259 : vector<2x8xf32> to vector<2x8x1xf32>
    %261 = vector.broadcast %260 : vector<2x8x1xf32> to vector<2x8x8xf32>
    %262 = arith.divf %258, %261 : vector<2x8x8xf32>
    %263 = arith.truncf %262 : vector<2x8x8xf32> to vector<2x8x8xbf16>
    %264 = vector.extract_strided_slice %205 {offsets = [0, 0, 96], sizes = [2, 8, 32], strides = [1, 1, 1]} : vector<2x8x256xbf16> to vector<2x8x32xbf16>
    "tpu.trace_start"() <{level = 10 : i32, message = "bqk,bkd->bqd"}> : () -> ()
    %cst_88 = arith.constant dense<0.000000e+00> : vector<2x8x32xf32>
    %265 = tpu.matmul %263, %264, %cst_88 {dimension_numbers = #tpu.dot_dimension_numbers<[2], [1], [1], [2], [0, 0, 0, 1, 1, 2], [0], [0]>} : vector<2x8x8xbf16>, vector<2x8x32xbf16>, vector<2x8x32xf32> -> vector<2x8x32xf32>
    "tpu.trace_stop"() : () -> ()
    %266 = vector.extract_strided_slice %201 {offsets = [0, 0, 128], sizes = [2, 8, 32], strides = [1, 1, 1]} : vector<2x8x256xbf16> to vector<2x8x32xbf16>
    %267 = vector.extract_strided_slice %203 {offsets = [0, 0, 128], sizes = [2, 8, 32], strides = [1, 1, 1]} : vector<2x8x256xbf16> to vector<2x8x32xbf16>
    "tpu.trace_start"() <{level = 10 : i32, message = "bqd,bkd->bqk"}> : () -> ()
    %cst_89 = arith.constant dense<0.000000e+00> : vector<2x8x8xf32>
    %268 = tpu.matmul %266, %267, %cst_89 {dimension_numbers = #tpu.dot_dimension_numbers<[2], [2], [1], [1], [0, 0, 0, 1, 1, 1], [0], [0]>} : vector<2x8x32xbf16>, vector<2x8x32xbf16>, vector<2x8x8xf32> -> vector<2x8x8xf32>
    "tpu.trace_stop"() : () -> ()
    %cst_90 = arith.constant dense<0xFF800000> : vector<2x8xf32>
    %269 = vector.multi_reduction <maximumf>, %268, %cst_90 [2] : vector<2x8x8xf32> to vector<2x8xf32>
    %270 = vector.shape_cast %269 : vector<2x8xf32> to vector<2x8x1xf32>
    %271 = vector.broadcast %270 : vector<2x8x1xf32> to vector<2x8x8xf32>
    %272 = arith.subf %268, %271 : vector<2x8x8xf32>
    %273 = math.exp %272 : vector<2x8x8xf32>
    %cst_91 = arith.constant dense<0.000000e+00> : vector<2x8xf32>
    %274 = vector.multi_reduction <add>, %273, %cst_91 [2] : vector<2x8x8xf32> to vector<2x8xf32>
    %275 = vector.shape_cast %274 : vector<2x8xf32> to vector<2x8x1xf32>
    %276 = vector.broadcast %275 : vector<2x8x1xf32> to vector<2x8x8xf32>
    %277 = arith.divf %273, %276 : vector<2x8x8xf32>
    %278 = arith.truncf %277 : vector<2x8x8xf32> to vector<2x8x8xbf16>
    %279 = vector.extract_strided_slice %205 {offsets = [0, 0, 128], sizes = [2, 8, 32], strides = [1, 1, 1]} : vector<2x8x256xbf16> to vector<2x8x32xbf16>
    "tpu.trace_start"() <{level = 10 : i32, message = "bqk,bkd->bqd"}> : () -> ()
    %cst_92 = arith.constant dense<0.000000e+00> : vector<2x8x32xf32>
    %280 = tpu.matmul %278, %279, %cst_92 {dimension_numbers = #tpu.dot_dimension_numbers<[2], [1], [1], [2], [0, 0, 0, 1, 1, 2], [0], [0]>} : vector<2x8x8xbf16>, vector<2x8x32xbf16>, vector<2x8x32xf32> -> vector<2x8x32xf32>
    "tpu.trace_stop"() : () -> ()
    %281 = vector.extract_strided_slice %201 {offsets = [0, 0, 160], sizes = [2, 8, 32], strides = [1, 1, 1]} : vector<2x8x256xbf16> to vector<2x8x32xbf16>
    %282 = vector.extract_strided_slice %203 {offsets = [0, 0, 160], sizes = [2, 8, 32], strides = [1, 1, 1]} : vector<2x8x256xbf16> to vector<2x8x32xbf16>
    "tpu.trace_start"() <{level = 10 : i32, message = "bqd,bkd->bqk"}> : () -> ()
    %cst_93 = arith.constant dense<0.000000e+00> : vector<2x8x8xf32>
    %283 = tpu.matmul %281, %282, %cst_93 {dimension_numbers = #tpu.dot_dimension_numbers<[2], [2], [1], [1], [0, 0, 0, 1, 1, 1], [0], [0]>} : vector<2x8x32xbf16>, vector<2x8x32xbf16>, vector<2x8x8xf32> -> vector<2x8x8xf32>
    "tpu.trace_stop"() : () -> ()
    %cst_94 = arith.constant dense<0xFF800000> : vector<2x8xf32>
    %284 = vector.multi_reduction <maximumf>, %283, %cst_94 [2] : vector<2x8x8xf32> to vector<2x8xf32>
    %285 = vector.shape_cast %284 : vector<2x8xf32> to vector<2x8x1xf32>
    %286 = vector.broadcast %285 : vector<2x8x1xf32> to vector<2x8x8xf32>
    %287 = arith.subf %283, %286 : vector<2x8x8xf32>
    %288 = math.exp %287 : vector<2x8x8xf32>
    %cst_95 = arith.constant dense<0.000000e+00> : vector<2x8xf32>
    %289 = vector.multi_reduction <add>, %288, %cst_95 [2] : vector<2x8x8xf32> to vector<2x8xf32>
    %290 = vector.shape_cast %289 : vector<2x8xf32> to vector<2x8x1xf32>
    %291 = vector.broadcast %290 : vector<2x8x1xf32> to vector<2x8x8xf32>
    %292 = arith.divf %288, %291 : vector<2x8x8xf32>
    %293 = arith.truncf %292 : vector<2x8x8xf32> to vector<2x8x8xbf16>
    %294 = vector.extract_strided_slice %205 {offsets = [0, 0, 160], sizes = [2, 8, 32], strides = [1, 1, 1]} : vector<2x8x256xbf16> to vector<2x8x32xbf16>
    "tpu.trace_start"() <{level = 10 : i32, message = "bqk,bkd->bqd"}> : () -> ()
    %cst_96 = arith.constant dense<0.000000e+00> : vector<2x8x32xf32>
    %295 = tpu.matmul %293, %294, %cst_96 {dimension_numbers = #tpu.dot_dimension_numbers<[2], [1], [1], [2], [0, 0, 0, 1, 1, 2], [0], [0]>} : vector<2x8x8xbf16>, vector<2x8x32xbf16>, vector<2x8x32xf32> -> vector<2x8x32xf32>
    "tpu.trace_stop"() : () -> ()
    %296 = vector.extract_strided_slice %201 {offsets = [0, 0, 192], sizes = [2, 8, 32], strides = [1, 1, 1]} : vector<2x8x256xbf16> to vector<2x8x32xbf16>
    %297 = vector.extract_strided_slice %203 {offsets = [0, 0, 192], sizes = [2, 8, 32], strides = [1, 1, 1]} : vector<2x8x256xbf16> to vector<2x8x32xbf16>
    "tpu.trace_start"() <{level = 10 : i32, message = "bqd,bkd->bqk"}> : () -> ()
    %cst_97 = arith.constant dense<0.000000e+00> : vector<2x8x8xf32>
    %298 = tpu.matmul %296, %297, %cst_97 {dimension_numbers = #tpu.dot_dimension_numbers<[2], [2], [1], [1], [0, 0, 0, 1, 1, 1], [0], [0]>} : vector<2x8x32xbf16>, vector<2x8x32xbf16>, vector<2x8x8xf32> -> vector<2x8x8xf32>
    "tpu.trace_stop"() : () -> ()
    %cst_98 = arith.constant dense<0xFF800000> : vector<2x8xf32>
    %299 = vector.multi_reduction <maximumf>, %298, %cst_98 [2] : vector<2x8x8xf32> to vector<2x8xf32>
    %300 = vector.shape_cast %299 : vector<2x8xf32> to vector<2x8x1xf32>
    %301 = vector.broadcast %300 : vector<2x8x1xf32> to vector<2x8x8xf32>
    %302 = arith.subf %298, %301 : vector<2x8x8xf32>
    %303 = math.exp %302 : vector<2x8x8xf32>
    %cst_99 = arith.constant dense<0.000000e+00> : vector<2x8xf32>
    %304 = vector.multi_reduction <add>, %303, %cst_99 [2] : vector<2x8x8xf32> to vector<2x8xf32>
    %305 = vector.shape_cast %304 : vector<2x8xf32> to vector<2x8x1xf32>
    %306 = vector.broadcast %305 : vector<2x8x1xf32> to vector<2x8x8xf32>
    %307 = arith.divf %303, %306 : vector<2x8x8xf32>
    %308 = arith.truncf %307 : vector<2x8x8xf32> to vector<2x8x8xbf16>
    %309 = vector.extract_strided_slice %205 {offsets = [0, 0, 192], sizes = [2, 8, 32], strides = [1, 1, 1]} : vector<2x8x256xbf16> to vector<2x8x32xbf16>
    "tpu.trace_start"() <{level = 10 : i32, message = "bqk,bkd->bqd"}> : () -> ()
    %cst_100 = arith.constant dense<0.000000e+00> : vector<2x8x32xf32>
    %310 = tpu.matmul %308, %309, %cst_100 {dimension_numbers = #tpu.dot_dimension_numbers<[2], [1], [1], [2], [0, 0, 0, 1, 1, 2], [0], [0]>} : vector<2x8x8xbf16>, vector<2x8x32xbf16>, vector<2x8x32xf32> -> vector<2x8x32xf32>
    "tpu.trace_stop"() : () -> ()
    %311 = vector.extract_strided_slice %201 {offsets = [0, 0, 224], sizes = [2, 8, 32], strides = [1, 1, 1]} : vector<2x8x256xbf16> to vector<2x8x32xbf16>
    %312 = vector.extract_strided_slice %203 {offsets = [0, 0, 224], sizes = [2, 8, 32], strides = [1, 1, 1]} : vector<2x8x256xbf16> to vector<2x8x32xbf16>
    "tpu.trace_start"() <{level = 10 : i32, message = "bqd,bkd->bqk"}> : () -> ()
    %cst_101 = arith.constant dense<0.000000e+00> : vector<2x8x8xf32>
    %313 = tpu.matmul %311, %312, %cst_101 {dimension_numbers = #tpu.dot_dimension_numbers<[2], [2], [1], [1], [0, 0, 0, 1, 1, 1], [0], [0]>} : vector<2x8x32xbf16>, vector<2x8x32xbf16>, vector<2x8x8xf32> -> vector<2x8x8xf32>
    "tpu.trace_stop"() : () -> ()
    %cst_102 = arith.constant dense<0xFF800000> : vector<2x8xf32>
    %314 = vector.multi_reduction <maximumf>, %313, %cst_102 [2] : vector<2x8x8xf32> to vector<2x8xf32>
    %315 = vector.shape_cast %314 : vector<2x8xf32> to vector<2x8x1xf32>
    %316 = vector.broadcast %315 : vector<2x8x1xf32> to vector<2x8x8xf32>
    %317 = arith.subf %313, %316 : vector<2x8x8xf32>
    %318 = math.exp %317 : vector<2x8x8xf32>
    %cst_103 = arith.constant dense<0.000000e+00> : vector<2x8xf32>
    %319 = vector.multi_reduction <add>, %318, %cst_103 [2] : vector<2x8x8xf32> to vector<2x8xf32>
    %320 = vector.shape_cast %319 : vector<2x8xf32> to vector<2x8x1xf32>
    %321 = vector.broadcast %320 : vector<2x8x1xf32> to vector<2x8x8xf32>
    %322 = arith.divf %318, %321 : vector<2x8x8xf32>
    %323 = arith.truncf %322 : vector<2x8x8xf32> to vector<2x8x8xbf16>
    %324 = vector.extract_strided_slice %205 {offsets = [0, 0, 224], sizes = [2, 8, 32], strides = [1, 1, 1]} : vector<2x8x256xbf16> to vector<2x8x32xbf16>
    "tpu.trace_start"() <{level = 10 : i32, message = "bqk,bkd->bqd"}> : () -> ()
    %cst_104 = arith.constant dense<0.000000e+00> : vector<2x8x32xf32>
    %325 = tpu.matmul %323, %324, %cst_104 {dimension_numbers = #tpu.dot_dimension_numbers<[2], [1], [1], [2], [0, 0, 0, 1, 1, 2], [0], [0]>} : vector<2x8x8xbf16>, vector<2x8x32xbf16>, vector<2x8x32xf32> -> vector<2x8x32xf32>
    "tpu.trace_stop"() : () -> ()
    %326 = tpu.concatenate %220, %235, %250, %265, %280, %295, %310, %325 in 2 : vector<2x8x32xf32>, vector<2x8x32xf32>, vector<2x8x32xf32>, vector<2x8x32xf32>, vector<2x8x32xf32>, vector<2x8x32xf32>, vector<2x8x32xf32>, vector<2x8x32xf32> -> vector<2x8x256xf32>
    %327 = vector.shape_cast %326 : vector<2x8x256xf32> to vector<16x256xf32>
    %328 = arith.truncf %327 : vector<16x256xf32> to vector<16x256xbf16>
    %c0_105 = arith.constant 0 : index
    %c0_106 = arith.constant 0 : index
    %c1792 = arith.constant 1792 : index
    %329 = vector.load %arg3[%c0_105, %c0_106, %c1792] : memref<1x256x3072xbf16, #tpu.memory_space<vmem>>, vector<1x256x256xbf16>
    %330 = vector.shape_cast %329 : vector<1x256x256xbf16> to vector<256x256xbf16>
    %cst_107 = arith.constant dense<0.000000e+00> : vector<16x256xf32>
    %331 = tpu.matmul %328, %330, %cst_107 {dimension_numbers = #tpu.dot_dimension_numbers<[1], [0], [0], [1], [0, 0, 1, 1], [], []>} : vector<16x256xbf16>, vector<256x256xbf16>, vector<16x256xf32> -> vector<16x256xf32>
    %c0_108 = arith.constant 0 : index
    %c0_109 = arith.constant 0 : index
    %c2304 = arith.constant 2304 : index
    %332 = vector.load %arg5[%c0_108, %c0_109, %c2304] : memref<1x1x4864xf32, #tpu.memory_space<vmem>>, vector<1x1x256xf32>
    %333 = vector.shape_cast %332 : vector<1x1x256xf32> to vector<1x256xf32>
    %334 = vector.broadcast %333 : vector<1x256xf32> to vector<16x256xf32>
    %335 = arith.addf %331, %334 : vector<16x256xf32>
    %336 = arith.addf %186, %335 : vector<16x256xf32>
    %c0_110 = arith.constant 0 : index
    %c0_111 = arith.constant 0 : index
    %c2560 = arith.constant 2560 : index
    %337 = vector.load %arg5[%c0_110, %c0_111, %c2560] : memref<1x1x4864xf32, #tpu.memory_space<vmem>>, vector<1x1x256xf32>
    %338 = vector.shape_cast %337 : vector<1x1x256xf32> to vector<1x256xf32>
    %c0_112 = arith.constant 0 : index
    %c0_113 = arith.constant 0 : index
    %c2816 = arith.constant 2816 : index
    %339 = vector.load %arg5[%c0_112, %c0_113, %c2816] : memref<1x1x4864xf32, #tpu.memory_space<vmem>>, vector<1x1x256xf32>
    %340 = vector.shape_cast %339 : vector<1x1x256xf32> to vector<1x256xf32>
    %cst_114 = arith.constant dense<0.000000e+00> : vector<16xf32>
    %341 = vector.multi_reduction <add>, %336, %cst_114 [1] : vector<16x256xf32> to vector<16xf32>
    %342 = vector.shape_cast %341 : vector<16xf32> to vector<16x1xf32>
    %cst_115 = arith.constant 2.560000e+02 : f32
    %343 = vector.broadcast %cst_115 : f32 to vector<16x1xf32>
    %344 = arith.divf %342, %343 : vector<16x1xf32>
    %345 = vector.broadcast %344 : vector<16x1xf32> to vector<16x256xf32>
    %346 = arith.subf %336, %345 : vector<16x256xf32>
    %347 = arith.mulf %346, %346 : vector<16x256xf32>
    %cst_116 = arith.constant dense<0.000000e+00> : vector<16xf32>
    %348 = vector.multi_reduction <add>, %347, %cst_116 [1] : vector<16x256xf32> to vector<16xf32>
    %349 = vector.shape_cast %348 : vector<16xf32> to vector<16x1xf32>
    %cst_117 = arith.constant 2.560000e+02 : f32
    %350 = vector.broadcast %cst_117 : f32 to vector<16x1xf32>
    %351 = arith.divf %349, %350 : vector<16x1xf32>
    %cst_118 = arith.constant 9.99999974E-6 : f32
    %352 = vector.broadcast %cst_118 : f32 to vector<16x1xf32>
    %353 = arith.addf %351, %352 : vector<16x1xf32>
    %354 = math.rsqrt %353 : vector<16x1xf32>
    %355 = vector.broadcast %354 : vector<16x1xf32> to vector<16x256xf32>
    %356 = arith.mulf %346, %355 : vector<16x256xf32>
    %357 = vector.broadcast %338 : vector<1x256xf32> to vector<16x256xf32>
    %358 = arith.mulf %356, %357 : vector<16x256xf32>
    %359 = vector.broadcast %340 : vector<1x256xf32> to vector<16x256xf32>
    %360 = arith.addf %358, %359 : vector<16x256xf32>
    %361 = arith.truncf %360 : vector<16x256xf32> to vector<16x256xbf16>
    %c0_119 = arith.constant 0 : index
    %c0_120 = arith.constant 0 : index
    %c2048 = arith.constant 2048 : index
    %362 = vector.load %arg3[%c0_119, %c0_120, %c2048] : memref<1x256x3072xbf16, #tpu.memory_space<vmem>>, vector<1x256x1024xbf16>
    %363 = vector.shape_cast %362 : vector<1x256x1024xbf16> to vector<256x1024xbf16>
    %cst_121 = arith.constant dense<0.000000e+00> : vector<16x1024xf32>
    %364 = tpu.matmul %361, %363, %cst_121 {dimension_numbers = #tpu.dot_dimension_numbers<[1], [0], [0], [1], [0, 0, 1, 1], [], []>} : vector<16x256xbf16>, vector<256x1024xbf16>, vector<16x1024xf32> -> vector<16x1024xf32>
    %c0_122 = arith.constant 0 : index
    %c0_123 = arith.constant 0 : index
    %c3072 = arith.constant 3072 : index
    %365 = vector.load %arg5[%c0_122, %c0_123, %c3072] : memref<1x1x4864xf32, #tpu.memory_space<vmem>>, vector<1x1x1024xf32>
    %366 = vector.shape_cast %365 : vector<1x1x1024xf32> to vector<1x1024xf32>
    %367 = vector.broadcast %366 : vector<1x1024xf32> to vector<16x1024xf32>
    %368 = arith.addf %364, %367 : vector<16x1024xf32>
    %cst_124 = arith.constant 0.000000e+00 : f32
    %369 = vector.broadcast %cst_124 : f32 to vector<16x1024xf32>
    %370 = arith.maximumf %368, %369 : vector<16x1024xf32>
    %371 = arith.truncf %370 : vector<16x1024xf32> to vector<16x1024xbf16>
    %c0_125 = arith.constant 0 : index
    %c0_126 = arith.constant 0 : index
    %c0_127 = arith.constant 0 : index
    %372 = vector.load %arg4[%c0_125, %c0_126, %c0_127] : memref<1x1024x256xbf16, #tpu.memory_space<vmem>>, vector<1x1024x256xbf16>
    %373 = vector.shape_cast %372 : vector<1x1024x256xbf16> to vector<1024x256xbf16>
    %cst_128 = arith.constant dense<0.000000e+00> : vector<16x256xf32>
    %374 = tpu.matmul %371, %373, %cst_128 {dimension_numbers = #tpu.dot_dimension_numbers<[1], [0], [0], [1], [0, 0, 1, 1], [], []>} : vector<16x1024xbf16>, vector<1024x256xbf16>, vector<16x256xf32> -> vector<16x256xf32>
    %c0_129 = arith.constant 0 : index
    %c0_130 = arith.constant 0 : index
    %c4096 = arith.constant 4096 : index
    %375 = vector.load %arg5[%c0_129, %c0_130, %c4096] : memref<1x1x4864xf32, #tpu.memory_space<vmem>>, vector<1x1x256xf32>
    %376 = vector.shape_cast %375 : vector<1x1x256xf32> to vector<1x256xf32>
    %377 = vector.broadcast %376 : vector<1x256xf32> to vector<16x256xf32>
    %378 = arith.addf %374, %377 : vector<16x256xf32>
    %379 = arith.addf %360, %378 : vector<16x256xf32>
    %c0_131 = arith.constant 0 : index
    %c0_132 = arith.constant 0 : index
    %c4352 = arith.constant 4352 : index
    %380 = vector.load %arg5[%c0_131, %c0_132, %c4352] : memref<1x1x4864xf32, #tpu.memory_space<vmem>>, vector<1x1x256xf32>
    %381 = vector.shape_cast %380 : vector<1x1x256xf32> to vector<1x256xf32>
    %c0_133 = arith.constant 0 : index
    %c0_134 = arith.constant 0 : index
    %c4608 = arith.constant 4608 : index
    %382 = vector.load %arg5[%c0_133, %c0_134, %c4608] : memref<1x1x4864xf32, #tpu.memory_space<vmem>>, vector<1x1x256xf32>
    %383 = vector.shape_cast %382 : vector<1x1x256xf32> to vector<1x256xf32>
    %cst_135 = arith.constant dense<0.000000e+00> : vector<16xf32>
    %384 = vector.multi_reduction <add>, %379, %cst_135 [1] : vector<16x256xf32> to vector<16xf32>
    %385 = vector.shape_cast %384 : vector<16xf32> to vector<16x1xf32>
    %cst_136 = arith.constant 2.560000e+02 : f32
    %386 = vector.broadcast %cst_136 : f32 to vector<16x1xf32>
    %387 = arith.divf %385, %386 : vector<16x1xf32>
    %388 = vector.broadcast %387 : vector<16x1xf32> to vector<16x256xf32>
    %389 = arith.subf %379, %388 : vector<16x256xf32>
    %390 = arith.mulf %389, %389 : vector<16x256xf32>
    %cst_137 = arith.constant dense<0.000000e+00> : vector<16xf32>
    %391 = vector.multi_reduction <add>, %390, %cst_137 [1] : vector<16x256xf32> to vector<16xf32>
    %392 = vector.shape_cast %391 : vector<16xf32> to vector<16x1xf32>
    %cst_138 = arith.constant 2.560000e+02 : f32
    %393 = vector.broadcast %cst_138 : f32 to vector<16x1xf32>
    %394 = arith.divf %392, %393 : vector<16x1xf32>
    %cst_139 = arith.constant 9.99999974E-6 : f32
    %395 = vector.broadcast %cst_139 : f32 to vector<16x1xf32>
    %396 = arith.addf %394, %395 : vector<16x1xf32>
    %397 = math.rsqrt %396 : vector<16x1xf32>
    %398 = vector.broadcast %397 : vector<16x1xf32> to vector<16x256xf32>
    %399 = arith.mulf %389, %398 : vector<16x256xf32>
    %400 = vector.broadcast %381 : vector<1x256xf32> to vector<16x256xf32>
    %401 = arith.mulf %399, %400 : vector<16x256xf32>
    %402 = vector.broadcast %383 : vector<1x256xf32> to vector<16x256xf32>
    %403 = arith.addf %401, %402 : vector<16x256xf32>
    %c0_140 = arith.constant 0 : index
    %c0_141 = arith.constant 0 : index
    %404 = vector.load %arg7[%c0_140, %c0_141] : memref<16x256xf32, #tpu.memory_space<vmem>>, vector<16x256xf32>
    tpu.vector_store %arg7[%c0_140, %c0_141], %403 {strides = array<i32>} : memref<16x256xf32, #tpu.memory_space<vmem>>, vector<16x256xf32>,
    %c2_i32 = arith.constant 2 : i32
    %405 = arith.cmpi eq, %arg0, %c2_i32 : i32
    %406 = arith.extui %405 : i1 to i32
    %c0_i32_142 = arith.constant 0 : i32
    %407 = arith.cmpi ne, %406, %c0_i32_142 : i32
    scf.if %407 {
      %c0_143 = arith.constant 0 : index
      %c0_144 = arith.constant 0 : index
      %408 = vector.load %arg6[%c0_143, %c0_144] : memref<16x256xf32, #tpu.memory_space<vmem>>, vector<16x256xf32>
      tpu.vector_store %arg6[%c0_143, %c0_144], %403 {strides = array<i32>} : memref<16x256xf32, #tpu.memory_space<vmem>>, vector<16x256xf32>,
    } else {
    }
    return
  }
  func.func @transform_0(%arg0: i32) -> (i32, i32) {
    %c0_i32 = arith.constant 0 : i32
    %c0_i32_0 = arith.constant 0 : i32
    %c0_i32_1 = arith.constant 0 : i32
    return %c0_i32, %c0_i32_0 : i32, i32
  }
  func.func @transform_1(%arg0: i32) -> (i32, i32) {
    %c0_i32 = arith.constant 0 : i32
    %c0_i32_0 = arith.constant 0 : i32
    %c0_i32_1 = arith.constant 0 : i32
    return %c0_i32, %c0_i32_0 : i32, i32
  }
  func.func @transform_2(%arg0: i32) -> (i32, i32, i32) {
    %c0_i32 = arith.constant 0 : i32
    %c0_i32_0 = arith.constant 0 : i32
    %c0_i32_1 = arith.constant 0 : i32
    return %arg0, %c0_i32, %c0_i32_0 : i32, i32, i32
  }
  func.func @transform_3(%arg0: i32) -> (i32, i32, i32) {
    %c0_i32 = arith.constant 0 : i32
    %c0_i32_0 = arith.constant 0 : i32
    %c0_i32_1 = arith.constant 0 : i32
    return %arg0, %c0_i32, %c0_i32_0 : i32, i32, i32
  }
  func.func @transform_4(%arg0: i32) -> (i32, i32, i32) {
    %c0_i32 = arith.constant 0 : i32
    %c0_i32_0 = arith.constant 0 : i32
    %c0_i32_1 = arith.constant 0 : i32
    return %arg0, %c0_i32, %c0_i32_0 : i32, i32, i32
  }
  func.func @transform_5(%arg0: i32) -> (i32, i32) {
    %c0_i32 = arith.constant 0 : i32
    %c0_i32_0 = arith.constant 0 : i32
    %c0_i32_1 = arith.constant 0 : i32
    return %c0_i32, %c0_i32_0 : i32, i32
  }
}

</mosaic_0001>

<llo_original>
// kernel: tracker_forward.1
$region0: #{tracker_forward.1}
  #allocation0 [shape = 'u32[]', space=smem, size = 0x4, offset = 0x4, fixed_abs, tag = 'smem constant byte address 0x4 - core index']
  #allocation1 [shape = 'u32[144,128]{1,0:T(1,128)}', space=vmem, size = 0x12000, scoped, tag = 'internal scratch']
  #allocation2 [shape = 'f32[16,256]{1,0:T(8,128)}', space=vmem, size = 0x4000, scoped, tag = 'scratch operand']
  %s0 = inlined_call_operand.vmem [shape: f32[16,256], index: 0, kind: input, shape index: {}]
  %s1 = inlined_call_operand.hbm [shape: f32[16,256], index: 1, kind: input, shape index: {}]
  %s2 = inlined_call_operand.hbm [shape: bf16[3,256,3072], index: 2, kind: input, shape index: {}]
  %s3 = inlined_call_operand.hbm [shape: bf16[3,1024,256], index: 3, kind: input, shape index: {}]
  %s4 = inlined_call_operand.hbm [shape: f32[3,1,4864], index: 4, kind: input, shape index: {}]
  %s5 = inlined_call_operand.vmem [shape: f32[16,256], index: 5, kind: output, shape index: {}]
  %s6 = sld [smem:[#allocation0]]
  $region77: #{tracker_forward.1} parent=0
    _
  %s8 = ssub.s32 1, %s6
  %s9 = scalar_select 0, %s8, %s6
  $region1: #{tracker_forward.1} parent=0
    #allocation3 [shape = 'u8[16384]{0}', space=vmem, size = 0x4000, scoped, tag = 'input window, operand 1, single buffered']
    #allocation4 [shape = 's32[2]{0}', space=sflag, size = 0x8, scoped, tag = 'scoped memory for tracker_forward.1']
    #allocation5 [shape = 'u8[3145728]{0}', space=vmem, size = 0x300000, scoped, tag = 'input window, operand 2']
    #allocation6 [shape = 's32[2]{0}', space=sflag, size = 0x8, scoped, tag = 'scoped memory for tracker_forward.1']
    #allocation7 [shape = 'u8[1048576]{0}', space=vmem, size = 0x100000, scoped, tag = 'input window, operand 3']
    #allocation8 [shape = 'u8[38912]{0}', space=vmem, size = 0x9800, scoped, tag = 'input window, operand 4']
    #allocation9 [shape = 's32[2]{0}', space=sflag, size = 0x8, scoped, tag = 'scoped memory for tracker_forward.1']
    %10 = vsyncpa [#allocation4], 0
    %11 = vsyncpa [#allocation6], 0
    %s12 = scalar_lea.sflag [#allocation6], 1
    %13 = vsyncpa %s12, 0
    %14 = vsyncpa [#allocation9], 0
    %s15 = scalar_lea.sflag [#allocation9], 1
    %16 = vsyncpa %s15, 0
    loop: start=0, step=1, limit=5
    $region2: #{tracker_forward.1} parent=1 // loop_pre_header
      _
    $region3: #{tracker_forward.1} parent=1 // loop_header
      %s18 = sphi 0, %s22
      %p19 = scmp.ge.s32.totalorder %s18, 5
      %s26 = sphi 0, %s26
      %s28 = sphi 0, %s26
      %s29 = sphi 0, %s28
      %s43 = sphi 0, %s29
      %s47 = sphi 0, %s47
      %s49 = sphi 0, %s47
      %s50 = sphi 0, %s49
      %s64 = sphi 0, %s50
      %s70 = sphi 0, %s72
      %s73 = sphi 0, %s70
      %s74 = sphi 0, %s73
      %s90 = sphi 0, %s74
      %s96 = sphi 0, %s98
      %s99 = sphi 0, %s96
      %s100 = sphi 0, %s99
      %s116 = sphi 0, %s100
      %s122 = sphi 0, %s124
      %s125 = sphi 0, %s122
      %s126 = sphi 0, %s125
      %s142 = sphi 0, %s126
      %s146 = sphi 0, %s146
      %s148 = sphi 0, %s146
      %s149 = sphi 0, %s148
      %s163 = sphi 0, %s149
    $region4: #{tracker_forward.1} parent=1 // loop_header_branch
      %21 = sbr.rel (%p19) target = $region8
    $region5: #{tracker_forward.1} parent=1 // loop_body
      %s23 = ssub.s32 %s18, 1
      %s24 = ssub.s32 %s18, 2
      %s25 = sadd.s32 %s18, 1
      %s27 = sadd.s32 %s26, 1
      %p30 = scmp.eq.s32.totalorder %s18, 2
      %p31 = scmp.ne.s32.totalorder %s26, %s28
      %p32 = scmp.eq.s32.totalorder %s18, 0
      %p33 = por %p31, %p32
      %p34 = scmp.ne.s32.totalorder %s26, %s28
      %p35 = scmp.eq.s32.totalorder %s23, 2
      %p36 = por %p34, %p35
      %p37 = scmp.ne.s32.totalorder %s28, %s29
      %p38 = scmp.eq.s32.totalorder %s23, 0
      %p39 = por %p37, %p38
      %p40 = scmp.ne.s32.totalorder %s28, %s29
      %p41 = scmp.eq.s32.totalorder %s24, 2
      %p42 = por %p40, %p41
      %p44 = scmp.ne.s32.totalorder %s29, %s43
      %p45 = scmp.eq.s32.totalorder %s24, 0
      %p46 = por %p44, %p45
      %s48 = sadd.s32 %s47, 1
      %p51 = scmp.eq.s32.totalorder %s18, 2
      %p52 = scmp.ne.s32.totalorder %s47, %s49
      %p53 = scmp.eq.s32.totalorder %s18, 0
      %p54 = por %p52, %p53
      %p55 = scmp.ne.s32.totalorder %s47, %s49
      %p56 = scmp.eq.s32.totalorder %s23, 2
      %p57 = por %p55, %p56
      %p58 = scmp.ne.s32.totalorder %s49, %s50
      %p59 = scmp.eq.s32.totalorder %s23, 0
      %p60 = por %p58, %p59
      %p61 = scmp.ne.s32.totalorder %s49, %s50
      %p62 = scmp.eq.s32.totalorder %s24, 2
      %p63 = por %p61, %p62
      %p65 = scmp.ne.s32.totalorder %s50, %s64
      %p66 = scmp.eq.s32.totalorder %s24, 0
      %p67 = por %p65, %p66
      %s68 = ssub.s32 %s18, %s25
      %p69 = scmp.eq.s32.totalorder %s68, 0
      %s71 = sadd.s32 %s70, 1
      %s72 = scalar_select %p69, %s70, %s71
      %p75 = pneg %p69
      %p76 = scmp.eq.s32.totalorder %s18, 2
      %p77 = por %p75, %p76
      %p78 = scmp.ne.s32.totalorder %s70, %s73
      %p79 = scmp.eq.s32.totalorder %s18, 0
      %p80 = por %p78, %p79
      %p81 = scmp.ne.s32.totalorder %s70, %s73
      %p82 = scmp.eq.s32.totalorder %s23, 2
      %p83 = por %p81, %p82
      %p84 = scmp.ne.s32.totalorder %s73, %s74
      %p85 = scmp.eq.s32.totalorder %s23, 0
      %p86 = por %p84, %p85
      %p87 = scmp.ne.s32.totalorder %s73, %s74
      %p88 = scmp.eq.s32.totalorder %s24, 2
      %p89 = por %p87, %p88
      %p91 = scmp.ne.s32.totalorder %s74, %s90
      %p92 = scmp.eq.s32.totalorder %s24, 0
      %p93 = por %p91, %p92
      %s94 = ssub.s32 %s18, %s25
      %p95 = scmp.eq.s32.totalorder %s94, 0
      %s97 = sadd.s32 %s96, 1
      %s98 = scalar_select %p95, %s96, %s97
      %p101 = pneg %p95
      %p102 = scmp.eq.s32.totalorder %s18, 2
      %p103 = por %p101, %p102
      %p104 = scmp.ne.s32.totalorder %s96, %s99
      %p105 = scmp.eq.s32.totalorder %s18, 0
      %p106 = por %p104, %p105
      %p107 = scmp.ne.s32.totalorder %s96, %s99
      %p108 = scmp.eq.s32.totalorder %s23, 2
      %p109 = por %p107, %p108
      %p110 = scmp.ne.s32.totalorder %s99, %s100
      %p111 = scmp.eq.s32.totalorder %s23, 0
      %p112 = por %p110, %p111
      %p113 = scmp.ne.s32.totalorder %s99, %s100
      %p114 = scmp.eq.s32.totalorder %s24, 2
      %p115 = por %p113, %p114
      %p117 = scmp.ne.s32.totalorder %s100, %s116
      %p118 = scmp.eq.s32.totalorder %s24, 0
      %p119 = por %p117, %p118
      %s120 = ssub.s32 %s18, %s25
      %p121 = scmp.eq.s32.totalorder %s120, 0
      %s123 = sadd.s32 %s122, 1
      %s124 = scalar_select %p121, %s122, %s123
      %p127 = pneg %p121
      %p128 = scmp.eq.s32.totalorder %s18, 2
      %p129 = por %p127, %p128
      %p130 = scmp.ne.s32.totalorder %s122, %s125
      %p131 = scmp.eq.s32.totalorder %s18, 0
      %p132 = por %p130, %p131
      %p133 = scmp.ne.s32.totalorder %s122, %s125
      %p134 = scmp.eq.s32.totalorder %s23, 2
      %p135 = por %p133, %p134
      %p136 = scmp.ne.s32.totalorder %s125, %s126
      %p137 = scmp.eq.s32.totalorder %s23, 0
      %p138 = por %p136, %p137
      %p139 = scmp.ne.s32.totalorder %s125, %s126
      %p140 = scmp.eq.s32.totalorder %s24, 2
      %p141 = por %p139, %p140
      %p143 = scmp.ne.s32.totalorder %s126, %s142
      %p144 = scmp.eq.s32.totalorder %s24, 0
      %p145 = por %p143, %p144
      %s147 = sadd.s32 %s146, 1
      %p150 = scmp.eq.s32.totalorder %s18, 2
      %p151 = scmp.ne.s32.totalorder %s146, %s148
      %p152 = scmp.eq.s32.totalorder %s18, 0
      %p153 = por %p151, %p152
      %p154 = scmp.ne.s32.totalorder %s146, %s148
      %p155 = scmp.eq.s32.totalorder %s23, 2
      %p156 = por %p154, %p155
      %p157 = scmp.ne.s32.totalorder %s148, %s149
      %p158 = scmp.eq.s32.totalorder %s23, 0
      %p159 = por %p157, %p158
      %p160 = scmp.ne.s32.totalorder %s148, %s149
      %p161 = scmp.eq.s32.totalorder %s24, 2
      %p162 = por %p160, %p161
      %p164 = scmp.ne.s32.totalorder %s149, %s163
      %p165 = scmp.eq.s32.totalorder %s24, 0
      %p166 = por %p164, %p165
      %p167 = scmp.le.s32.totalorder 1, %s18
      %p168 = scmp.lt.s32.totalorder %s18, 4
      %p169 = pnand %p167, %p168
      %p170 = pneg %p169
      // Predicated region
      $region9: #{tracker_forward.1} parent=5 // pred_check
        _
      $region10: #{tracker_forward.1} parent=5 // pred_check_branch
        %172 = sbr.rel (%p169) target = $region12
      $region11: #{tracker_forward.1} parent=5 // pred_region
        %s173 = ssub.s32 %s18, 1
        // Predicated region
        $region13: #{tracker_forward.1} parent=11 // pred_check
          %p174 = pneg %p39
        $region14: #{tracker_forward.1} parent=11 // pred_check_branch
          %176 = sbr.rel (%p174) target = $region16
        $region15: #{tracker_forward.1} parent=11 // pred_region
          _
        $region16: #{tracker_forward.1} parent=11 // pred_fallthru
          _
        // Predicated region
        $region17: #{tracker_forward.1} parent=11 // pred_check
          %p177 = pneg %p60
        $region18: #{tracker_forward.1} parent=11 // pred_check_branch
          %179 = sbr.rel (%p177) target = $region20
        $region19: #{tracker_forward.1} parent=11 // pred_region
          %s181 = ssub.s32 512, 512
          %182 = vsyncadd [#allocation4], %s181
          %s183 = sshll.u32 [#allocation3], 4
          %s184 = int_to_ptr.vmem [resolvable:$true] %s183
          %189 = dma.hbm_to_vmem [thread:$0]  %s1, 512, %s184, [#allocation4], 256, 256, 16
        $region20: #{tracker_forward.1} parent=11 // pred_fallthru
          _
      $region12: #{tracker_forward.1} parent=5 // pred_fallthru
        _
      %p190 = scmp.lt.s32.totalorder %s18, 3
      // Predicated region
      $region21: #{tracker_forward.1} parent=5 // pred_check
        %p191 = pneg %p190
      $region22: #{tracker_forward.1} parent=5 // pred_check_branch
        %193 = sbr.rel (%p191) target = $region24
      $region23: #{tracker_forward.1} parent=5 // pred_region
        // Predicated region
        $region25: #{tracker_forward.1} parent=23 // pred_check
          %p194 = pneg %p80
        $region26: #{tracker_forward.1} parent=23 // pred_check_branch
          %196 = sbr.rel (%p194) target = $region28
        $region27: #{tracker_forward.1} parent=23 // pred_region
          %s197 = sand.u32 %s18, 1
          %s198 = scalar_lea.sflag [#allocation6], %s197
          %s199 = sand.u32 %s70, 1
          %s200 = smul.addr %s199, 3072
          %s201 = scalar_lea.vmem [#allocation5], %s200
          %s203 = ssub.s32 49152, 49152
          %204 = vsyncadd %s198, %s203
          %s205 = smul.addr %s18, 768
          %s206 = smul.addr %s205, 64
          %s207 = scalar_lea.hbm %s2, %s206
          %s208 = sshll.u32 %s201, 4
          %s209 = int_to_ptr.vmem [resolvable:$true] %s208
          %214 = dma.hbm_to_vmem [thread:$0]  %s207, 49152, %s209, %s198, 1536, 1536, 96
        $region28: #{tracker_forward.1} parent=23 // pred_fallthru
          _
        // Predicated region
        $region29: #{tracker_forward.1} parent=23 // pred_check
          %p215 = pneg %p106
        $region30: #{tracker_forward.1} parent=23 // pred_check_branch
          %217 = sbr.rel (%p215) target = $region32
        $region31: #{tracker_forward.1} parent=23 // pred_region
          %s218 = sand.u32 %s18, 1
          %s219 = scalar_lea.sflag [#allocation6], %s218
          %s220 = sand.u32 %s96, 1
          %s221 = smul.addr %s220, 1024
          %s222 = scalar_lea.vmem [#allocation7], %s221
          %s224 = ssub.s32 16384, 16384
          %225 = vsyncadd %s219, %s224
          %s226 = smul.addr %s18, 256
          %s227 = smul.addr %s226, 64
          %s228 = scalar_lea.hbm %s3, %s227
          %s229 = sshll.u32 %s222, 4
          %s230 = int_to_ptr.vmem [resolvable:$true] %s229
          %235 = dma.hbm_to_vmem [thread:$0]  %s228, 16384, %s230, %s219, 128, 128, 8
        $region32: #{tracker_forward.1} parent=23 // pred_fallthru
          _
        // Predicated region
        $region33: #{tracker_forward.1} parent=23 // pred_check
          %p236 = pneg %p132
        $region34: #{tracker_forward.1} parent=23 // pred_check_branch
          %238 = sbr.rel (%p236) target = $region36
        $region35: #{tracker_forward.1} parent=23 // pred_region
          %s239 = sand.u32 %s122, 1
          %s240 = scalar_lea.sflag [#allocation9], %s239
          %s241 = sand.u32 %s122, 1
          %s242 = smul.addr %s241, 38
          %s243 = scalar_lea.vmem [#allocation8], %s242
          %s245 = ssub.s32 608, 608
          %246 = vsyncadd %s240, %s245
          %s247 = smul.addr %s18, 38
          %s248 = smul.addr %s247, 16
          %s249 = scalar_lea.hbm %s4, %s248
          %s251 = sshll.u32 %s243, 4
          %s252 = int_to_ptr.vmem [resolvable:$true] %s251
          %254 = dma.hbm_to_vmem [thread:$0]  %s249, 608, %s252, %s240
        $region36: #{tracker_forward.1} parent=23 // pred_fallthru
          _
      $region24: #{tracker_forward.1} parent=5 // pred_fallthru
        _
      %p255 = scmp.le.s32.totalorder 1, %s18
      %p256 = scmp.lt.s32.totalorder %s18, 4
      %p257 = pnand %p255, %p256
      %p258 = pneg %p257
      // Predicated region
      $region37: #{tracker_forward.1} parent=5 // pred_check
        _
      $region38: #{tracker_forward.1} parent=5 // pred_check_branch
        %260 = sbr.rel (%p257) target = $region40
      $region39: #{tracker_forward.1} parent=5 // pred_region
        %s261 = ssub.s32 %s18, 1
        // Predicated region
        $region41: #{tracker_forward.1} parent=39 // pred_check
          %p262 = pneg %p60
        $region42: #{tracker_forward.1} parent=39 // pred_check_branch
          %264 = sbr.rel (%p262) target = $region44
        $region43: #{tracker_forward.1} parent=39 // pred_region
          %265 = dma.done [#allocation4], 512
        $region44: #{tracker_forward.1} parent=39 // pred_fallthru
          _
        %s266 = sand.u32 %s23, 1
        %s267 = scalar_lea.sflag [#allocation6], %s266
        %s268 = sand.u32 %s73, 1
        %s269 = smul.addr %s268, 3072
        %s270 = scalar_lea.vmem [#allocation5], %s269
        // Predicated region
        $region45: #{tracker_forward.1} parent=39 // pred_check
          %p271 = pneg %p86
        $region46: #{tracker_forward.1} parent=39 // pred_check_branch
          %273 = sbr.rel (%p271) target = $region48
        $region47: #{tracker_forward.1} parent=39 // pred_region
          %274 = dma.done %s267, 49152
        $region48: #{tracker_forward.1} parent=39 // pred_fallthru
          _
        %s275 = sand.u32 %s23, 1
        %s276 = scalar_lea.sflag [#allocation6], %s275
        %s277 = sand.u32 %s99, 1
        %s278 = smul.addr %s277, 1024
        %s279 = scalar_lea.vmem [#allocation7], %s278
        // Predicated region
        $region49: #{tracker_forward.1} parent=39 // pred_check
          %p280 = pneg %p112
        $region50: #{tracker_forward.1} parent=39 // pred_check_branch
          %282 = sbr.rel (%p280) target = $region52
        $region51: #{tracker_forward.1} parent=39 // pred_region
          %283 = dma.done %s276, 16384
        $region52: #{tracker_forward.1} parent=39 // pred_fallthru
          _
        %s284 = sand.u32 %s125, 1
        %s285 = scalar_lea.sflag [#allocation9], %s284
        %s286 = sand.u32 %s125, 1
        %s287 = smul.addr %s286, 38
        %s288 = scalar_lea.vmem [#allocation8], %s287
        // Predicated region
        $region53: #{tracker_forward.1} parent=39 // pred_check
          %p289 = pneg %p138
        $region54: #{tracker_forward.1} parent=39 // pred_check_branch
          %291 = sbr.rel (%p289) target = $region56
        $region55: #{tracker_forward.1} parent=39 // pred_region
          %292 = dma.done %s285, 608
        $region56: #{tracker_forward.1} parent=39 // pred_fallthru
          _
        %p293 = pneg %p39
        %p294 = pneg %p36
        %p295 = pneg %p60
        %p296 = pneg %p57
        %s297 = sand.u32 %s23, 1
        %s298 = scalar_lea.sflag [#allocation6], %s297
        %s299 = sand.u32 %s73, 1
        %s300 = smul.addr %s299, 3072
        %s301 = scalar_lea.vmem [#allocation5], %s300
        %p302 = pneg %p86
        %p303 = pneg %p83
        %s304 = sand.u32 %s23, 1
        %s305 = scalar_lea.sflag [#allocation6], %s304
        %s306 = sand.u32 %s99, 1
        %s307 = smul.addr %s306, 1024
        %s308 = scalar_lea.vmem [#allocation7], %s307
        %p309 = pneg %p112
        %p310 = pneg %p109
        %s311 = sand.u32 %s125, 1
        %s312 = scalar_lea.sflag [#allocation9], %s311
        %s313 = sand.u32 %s125, 1
        %s314 = smul.addr %s313, 38
        %s315 = scalar_lea.vmem [#allocation8], %s314
        %p316 = pneg %p138
        %p317 = pneg %p135
        %p318 = pneg %p159
        %p319 = pneg %p156
        %p321 = scmp.eq.s32.totalorder %s23, 0
        // Predicated region
        $region57: #{tracker_forward.1} parent=39 // pred_check
          %p322 = pneg %p321
        $region58: #{tracker_forward.1} parent=39 // pred_check_branch
          %324 = sbr.rel (%p322) target = $region60
        $region59: #{tracker_forward.1} parent=39 // pred_region
          %v325 = vld [vmem:[%s0] sm:$0xff]
          %v326 = vld [vmem:[%s0 + $0x8] sm:$0xff]
          %v327 = vld [vmem:[%s0 + $0x10] sm:$0xff]
          %v328 = vld [vmem:[%s0 + $0x18] sm:$0xff]
          %329 = vst [vmem:[#allocation2] sm:$0xff] %v325
          %330 = vst [vmem:[#allocation2 + $0x8] sm:$0xff] %v326
          %331 = vst [vmem:[#allocation2 + $0x10] sm:$0xff] %v327
          %332 = vst [vmem:[#allocation2 + $0x18] sm:$0xff] %v328
        $region60: #{tracker_forward.1} parent=39 // pred_fallthru
          _
        %v333 = vld [vmem:[%s0] sm:$0xff]
        %v334 = vld [vmem:[%s0 + $0x8] sm:$0xff]
        %v335 = vld [vmem:[%s0 + $0x10] sm:$0xff]
        %v336 = vld [vmem:[%s0 + $0x18] sm:$0xff]
        %v337 = vpack.c.bf16 %v335, %v333
        %v338 = vpack.c.bf16 %v336, %v334
        %v339 = vld [vmem:[#allocation3] sm:$0xff]
        %v340 = vld [vmem:[#allocation3 + $0x8] sm:$0xff]
        %v341 = vld [vmem:[#allocation3 + $0x10] sm:$0xff]
        %v342 = vld [vmem:[#allocation3 + $0x18] sm:$0xff]
        %v343 = vpack.c.bf16 %v341, %v339
        %v344 = vpack.c.bf16 %v342, %v340
        %v345 = vld [vmem:[#allocation2] sm:$0xff]
        %v346 = vld [vmem:[#allocation2 + $0x8] sm:$0xff]
        %v347 = vld [vmem:[#allocation2 + $0x10] sm:$0xff]
        %v348 = vld [vmem:[#allocation2 + $0x18] sm:$0xff]
        %v349 = vld [vmem:[%s270] sm:$0xff]
        %v350 = vld [vmem:[%s270 + $0x60] sm:$0xff]
        %v351 = vld [vmem:[%s270 + $0xc0] sm:$0xff]
        %v352 = vld [vmem:[%s270 + $0x120] sm:$0xff]
        %v353 = vld [vmem:[%s270 + $0x180] sm:$0xff]
        %v354 = vld [vmem:[%s270 + $0x1e0] sm:$0xff]
        %v355 = vld [vmem:[%s270 + $0x240] sm:$0xff]
        %v356 = vld [vmem:[%s270 + $0x2a0] sm:$0xff]
        %v357 = vld [vmem:[%s270 + $0x300] sm:$0xff]
        %v358 = vld [vmem:[%s270 + $0x360] sm:$0xff]
        %v359 = vld [vmem:[%s270 + $0x3c0] sm:$0xff]
        %v360 = vld [vmem:[%s270 + $0x420] sm:$0xff]
        %v361 = vld [vmem:[%s270 + $0x480] sm:$0xff]
        %v362 = vld [vmem:[%s270 + $0x4e0] sm:$0xff]
        %v363 = vld [vmem:[%s270 + $0x540] sm:$0xff]
        %v364 = vld [vmem:[%s270 + $0x5a0] sm:$0xff]
        %v365 = vld [vmem:[%s270 + $0x600] sm:$0xff]
        %v366 = vld [vmem:[%s270 + $0x660] sm:$0xff]
        %v367 = vld [vmem:[%s270 + $0x6c0] sm:$0xff]
        %v368 = vld [vmem:[%s270 + $0x720] sm:$0xff]
        %v369 = vld [vmem:[%s270 + $0x780] sm:$0xff]
        %v370 = vld [vmem:[%s270 + $0x7e0] sm:$0xff]
        %v371 = vld [vmem:[%s270 + $0x840] sm:$0xff]
        %v372 = vld [vmem:[%s270 + $0x8a0] sm:$0xff]
        %v373 = vld [vmem:[%s270 + $0x900] sm:$0xff]
        %v374 = vld [vmem:[%s270 + $0x960] sm:$0xff]
        %v375 = vld [vmem:[%s270 + $0x9c0] sm:$0xff]
        %v376 = vld [vmem:[%s270 + $0xa20] sm:$0xff]
        %v377 = vld [vmem:[%s270 + $0xa80] sm:$0xff]
        %v378 = vld [vmem:[%s270 + $0xae0] sm:$0xff]
        %v379 = vld [vmem:[%s270 + $0xb40] sm:$0xff]
        %v380 = vld [vmem:[%s270 + $0xba0] sm:$0xff]
        %v381 = vld [vmem:[%s288] sm:$0x3]
        %v383 = vlaneseq
        %v384 = vshrl.u32 %v383, 7
        %v385 = vsub.s32 0, %v384
        %v386 = vrot.slane %v381, %v385
        %v387 = vlaneseq
        %v388 = vshrl.u32 %v387, 7
        %v389 = vsub.s32 1, %v388
        %v390 = vrot.slane %v381, %v389
        %v425 = vunpack.c.l.b16 %v349
        %v426 = vunpack.c.h.b16 %v349
        %v427 = vunpack.c.l.b16 %v350
        %v428 = vunpack.c.h.b16 %v350
        %v429 = vunpack.c.l.b16 %v351
        %v430 = vunpack.c.h.b16 %v351
        %v431 = vunpack.c.l.b16 %v352
        %v432 = vunpack.c.h.b16 %v352
        %v433 = vunpack.c.l.b16 %v353
        %v434 = vunpack.c.h.b16 %v353
        %v435 = vunpack.c.l.b16 %v354
        %v436 = vunpack.c.h.b16 %v354
        %v437 = vunpack.c.l.b16 %v355
        %v438 = vunpack.c.h.b16 %v355
        %v439 = vunpack.c.l.b16 %v356
        %v440 = vunpack.c.h.b16 %v356
        %v441 = vunpack.c.l.b16 %v357
        %v442 = vunpack.c.h.b16 %v357
        %v443 = vunpack.c.l.b16 %v358
        %v444 = vunpack.c.h.b16 %v358
        %v445 = vunpack.c.l.b16 %v359
        %v446 = vunpack.c.h.b16 %v359
        %v447 = vunpack.c.l.b16 %v360
        %v448 = vunpack.c.h.b16 %v360
        %v449 = vunpack.c.l.b16 %v361
        %v450 = vunpack.c.h.b16 %v361
        %v451 = vunpack.c.l.b16 %v362
        %v452 = vunpack.c.h.b16 %v362
        %v453 = vunpack.c.l.b16 %v363
        %v454 = vunpack.c.h.b16 %v363
        %v455 = vunpack.c.l.b16 %v364
        %v456 = vunpack.c.h.b16 %v364
        %v457 = vunpack.c.l.b16 %v365
        %v458 = vunpack.c.h.b16 %v365
        %v459 = vunpack.c.l.b16 %v366
        %v460 = vunpack.c.h.b16 %v366
        %v461 = vunpack.c.l.b16 %v367
        %v462 = vunpack.c.h.b16 %v367
        %v463 = vunpack.c.l.b16 %v368
        %v464 = vunpack.c.h.b16 %v368
        %v465 = vunpack.c.l.b16 %v369
        %v466 = vunpack.c.h.b16 %v369
        %v467 = vunpack.c.l.b16 %v370
        %v468 = vunpack.c.h.b16 %v370
        %v469 = vunpack.c.l.b16 %v371
        %v470 = vunpack.c.h.b16 %v371
        %v471 = vunpack.c.l.b16 %v372
        %v472 = vunpack.c.h.b16 %v372
        %v473 = vunpack.c.l.b16 %v373
        %v474 = vunpack.c.h.b16 %v373
        %v475 = vunpack.c.l.b16 %v374
        %v476 = vunpack.c.h.b16 %v374
        %v477 = vunpack.c.l.b16 %v375
        %v478 = vunpack.c.h.b16 %v375
        %v479 = vunpack.c.l.b16 %v376
        %v480 = vunpack.c.h.b16 %v376
        %v481 = vunpack.c.l.b16 %v377
        %v482 = vunpack.c.h.b16 %v377
        %v483 = vunpack.c.l.b16 %v378
        %v484 = vunpack.c.h.b16 %v378
        %v485 = vunpack.c.l.b16 %v379
        %v486 = vunpack.c.h.b16 %v379
        %v487 = vunpack.c.l.b16 %v380
        %v488 = vunpack.c.h.b16 %v380
        %v489 = vpack.c.b16 %v427, %v425
        %v490 = vpack.c.b16 %v428, %v426
        %v491 = vpack.c.b16 %v431, %v429
        %v492 = vpack.c.b16 %v432, %v430
        %v493 = vpack.c.b16 %v435, %v433
        %v494 = vpack.c.b16 %v436, %v434
        %v495 = vpack.c.b16 %v439, %v437
        %v496 = vpack.c.b16 %v440, %v438
        %v497 = vpack.c.b16 %v443, %v441
        %v498 = vpack.c.b16 %v444, %v442
        %v499 = vpack.c.b16 %v447, %v445
        %v500 = vpack.c.b16 %v448, %v446
        %v501 = vpack.c.b16 %v451, %v449
        %v502 = vpack.c.b16 %v452, %v450
        %v503 = vpack.c.b16 %v455, %v453
        %v504 = vpack.c.b16 %v456, %v454
        %v505 = vpack.c.b16 %v459, %v457
        %v506 = vpack.c.b16 %v460, %v458
        %v507 = vpack.c.b16 %v463, %v461
        %v508 = vpack.c.b16 %v464, %v462
        %v509 = vpack.c.b16 %v467, %v465
        %v510 = vpack.c.b16 %v468, %v466
        %v511 = vpack.c.b16 %v471, %v469
        %v512 = vpack.c.b16 %v472, %v470
        %v513 = vpack.c.b16 %v475, %v473
        %v514 = vpack.c.b16 %v476, %v474
        %v515 = vpack.c.b16 %v479, %v477
        %v516 = vpack.c.b16 %v480, %v478
        %v517 = vpack.c.b16 %v483, %v481
        %v518 = vpack.c.b16 %v484, %v482
        %v519 = vpack.c.b16 %v487, %v485
        %v520 = vpack.c.b16 %v488, %v486
        %553 = vmatprep.subr.bf16.mxu0 %v490
        %554 = vmatpush1.bf16.msra.mxu0 %v489
        %555 = vmatprep.subr.bf16.mxu0 %v492
        %556 = vmatpush1.bf16.msra.mxu0 %v491
        %557 = vmatprep.subr.bf16.mxu0 %v494
        %558 = vmatpush1.bf16.msra.mxu0 %v493
        %559 = vmatprep.subr.bf16.mxu0 %v496
        %560 = vmatpush1.bf16.msra.mxu0 %v495
        %561 = vmatprep.subr.bf16.mxu0 %v498
        %562 = vmatpush1.bf16.msra.mxu0 %v497
        %563 = vmatprep.subr.bf16.mxu0 %v500
        %564 = vmatpush1.bf16.msra.mxu0 %v499
        %565 = vmatprep.subr.bf16.mxu0 %v502
        %566 = vmatpush1.bf16.msra.mxu0 %v501
        %567 = vmatprep.subr.bf16.mxu0 %v504
        %568 = vmatpush1.bf16.msra.mxu0 %v503
        %569 = vmatprep.subr.bf16.mxu0 %v506
        %570 = vmatpush1.bf16.msra.mxu0 %v505
        %571 = vmatprep.subr.bf16.mxu0 %v508
        %572 = vmatpush1.bf16.msra.mxu0 %v507
        %573 = vmatprep.subr.bf16.mxu0 %v510
        %574 = vmatpush1.bf16.msra.mxu0 %v509
        %575 = vmatprep.subr.bf16.mxu0 %v512
        %576 = vmatpush1.bf16.msra.mxu0 %v511
        %577 = vmatprep.subr.bf16.mxu0 %v514
        %578 = vmatpush1.bf16.msra.mxu0 %v513
        %579 = vmatprep.subr.bf16.mxu0 %v516
        %580 = vmatpush1.bf16.msra.mxu0 %v515
        %581 = vmatprep.subr.bf16.mxu0 %v518
        %582 = vmatpush1.bf16.msra.mxu0 %v517
        %583 = vmatprep.subr.bf16.mxu0 %v520
        %584 = vmatpush1.bf16.msra.mxu0 %v519
        %585 = vmatprep.mubr.bf16.mxu0 %v344
        %586 = vmatmul.mubr.bf16.gmra.mrb[0].mxu0 %v343
        %v587 = vpop.f32.mrb[0].mxu0
        %v588 = vadd.f32 %v386, %v587
        %v589 = vpop.f32.mrb[0].mxu0
        %v590 = vadd.f32 %v390, %v589
        %v591 = vpop.f32.mrb[0].mxu0
        %v592 = vadd.f32 %v386, %v591
        %v593 = vpop.f32.mrb[0].mxu0
        %v594 = vadd.f32 %v390, %v593
        %595 = vdwg.mxu0
        %v596 = vmul.f32 %v588, 0.17677669
        %v597 = vmul.f32 %v590, 0.17677669
        %v598 = vmul.f32 %v592, 0.17677669
        %v599 = vmul.f32 %v594, 0.17677669
        %v600 = vld [vmem:[%s270 + $0x8] sm:$0xff]
        %v601 = vld [vmem:[%s270 + $0x10] sm:$0xff]
        %v602 = vld [vmem:[%s270 + $0x68] sm:$0xff]
        %v603 = vld [vmem:[%s270 + $0x70] sm:$0xff]
        %v604 = vld [vmem:[%s270 + $0xc8] sm:$0xff]
        %v605 = vld [vmem:[%s270 + $0xd0] sm:$0xff]
        %v606 = vld [vmem:[%s270 + $0x128] sm:$0xff]
        %v607 = vld [vmem:[%s270 + $0x130] sm:$0xff]
        %v608 = vld [vmem:[%s270 + $0x188] sm:$0xff]
        %v609 = vld [vmem:[%s270 + $0x190] sm:$0xff]
        %v610 = vld [vmem:[%s270 + $0x1e8] sm:$0xff]
        %v611 = vld [vmem:[%s270 + $0x1f0] sm:$0xff]
        %v612 = vld [vmem:[%s270 + $0x248] sm:$0xff]
        %v613 = vld [vmem:[%s270 + $0x250] sm:$0xff]
        %v614 = vld [vmem:[%s270 + $0x2a8] sm:$0xff]
        %v615 = vld [vmem:[%s270 + $0x2b0] sm:$0xff]
        %v616 = vld [vmem:[%s270 + $0x308] sm:$0xff]
        %v617 = vld [vmem:[%s270 + $0x310] sm:$0xff]
        %v618 = vld [vmem:[%s270 + $0x368] sm:$0xff]
        %v619 = vld [vmem:[%s270 + $0x370] sm:$0xff]
        %v620 = vld [vmem:[%s270 + $0x3c8] sm:$0xff]
        %v621 = vld [vmem:[%s270 + $0x3d0] sm:$0xff]
        %v622 = vld [vmem:[%s270 + $0x428] sm:$0xff]
        %v623 = vld [vmem:[%s270 + $0x430] sm:$0xff]
        %v624 = vld [vmem:[%s270 + $0x488] sm:$0xff]
        %v625 = vld [vmem:[%s270 + $0x490] sm:$0xff]
        %v626 = vld [vmem:[%s270 + $0x4e8] sm:$0xff]
        %v627 = vld [vmem:[%s270 + $0x4f0] sm:$0xff]
        %v628 = vld [vmem:[%s270 + $0x548] sm:$0xff]
        %v629 = vld [vmem:[%s270 + $0x550] sm:$0xff]
        %v630 = vld [vmem:[%s270 + $0x5a8] sm:$0xff]
        %v631 = vld [vmem:[%s270 + $0x5b0] sm:$0xff]
        %v632 = vld [vmem:[%s270 + $0x608] sm:$0xff]
        %v633 = vld [vmem:[%s270 + $0x610] sm:$0xff]
        %v634 = vld [vmem:[%s270 + $0x668] sm:$0xff]
        %v635 = vld [vmem:[%s270 + $0x670] sm:$0xff]
        %v636 = vld [vmem:[%s270 + $0x6c8] sm:$0xff]
        %v637 = vld [vmem:[%s270 + $0x6d0] sm:$0xff]
        %v638 = vld [vmem:[%s270 + $0x728] sm:$0xff]
        %v639 = vld [vmem:[%s270 + $0x730] sm:$0xff]
        %v640 = vld [vmem:[%s270 + $0x788] sm:$0xff]
        %v641 = vld [vmem:[%s270 + $0x790] sm:$0xff]
        %v642 = vld [vmem:[%s270 + $0x7e8] sm:$0xff]
        %v643 = vld [vmem:[%s270 + $0x7f0] sm:$0xff]
        %v644 = vld [vmem:[%s270 + $0x848] sm:$0xff]
        %v645 = vld [vmem:[%s270 + $0x850] sm:$0xff]
        %v646 = vld [vmem:[%s270 + $0x8a8] sm:$0xff]
        %v647 = vld [vmem:[%s270 + $0x8b0] sm:$0xff]
        %v648 = vld [vmem:[%s270 + $0x908] sm:$0xff]
        %v649 = vld [vmem:[%s270 + $0x910] sm:$0xff]
        %v650 = vld [vmem:[%s270 + $0x968] sm:$0xff]
        %v651 = vld [vmem:[%s270 + $0x970] sm:$0xff]
        %v652 = vld [vmem:[%s270 + $0x9c8] sm:$0xff]
        %v653 = vld [vmem:[%s270 + $0x9d0] sm:$0xff]
        %v654 = vld [vmem:[%s270 + $0xa28] sm:$0xff]
        %v655 = vld [vmem:[%s270 + $0xa30] sm:$0xff]
        %v656 = vld [vmem:[%s270 + $0xa88] sm:$0xff]
        %v657 = vld [vmem:[%s270 + $0xa90] sm:$0xff]
        %v658 = vld [vmem:[%s270 + $0xae8] sm:$0xff]
        %v659 = vld [vmem:[%s270 + $0xaf0] sm:$0xff]
        %v660 = vld [vmem:[%s270 + $0xb48] sm:$0xff]
        %v661 = vld [vmem:[%s270 + $0xb50] sm:$0xff]
        %v662 = vld [vmem:[%s270 + $0xba8] sm:$0xff]
        %v663 = vld [vmem:[%s270 + $0xbb0] sm:$0xff]
        %v664 = vld [vmem:[%s288 + $0x2] sm:$0xf]
        %v666 = vlaneseq
        %v667 = vshrl.u32 %v666, 7
        %v668 = vsub.s32 0, %v667
        %v669 = vrot.slane %v664, %v668
        %v670 = vlaneseq
        %v671 = vshrl.u32 %v670, 7
        %v672 = vsub.s32 1, %v671
        %v673 = vrot.slane %v664, %v672
        %v674 = vlaneseq
        %v675 = vshrl.u32 %v674, 7
        %v676 = vsub.s32 2, %v675
        %v677 = vrot.slane %v664, %v676
        %v678 = vlaneseq
        %v679 = vshrl.u32 %v678, 7
        %v680 = vsub.s32 3, %v679
        %v681 = vrot.slane %v664, %v680
        %v750 = vunpack.c.l.b16 %v600
        %v751 = vunpack.c.h.b16 %v600
        %v752 = vunpack.c.l.b16 %v601
        %v753 = vunpack.c.h.b16 %v601
        %v754 = vunpack.c.l.b16 %v602
        %v755 = vunpack.c.h.b16 %v602
        %v756 = vunpack.c.l.b16 %v603
        %v757 = vunpack.c.h.b16 %v603
        %v758 = vunpack.c.l.b16 %v604
        %v759 = vunpack.c.h.b16 %v604
        %v760 = vunpack.c.l.b16 %v605
        %v761 = vunpack.c.h.b16 %v605
        %v762 = vunpack.c.l.b16 %v606
        %v763 = vunpack.c.h.b16 %v606
        %v764 = vunpack.c.l.b16 %v607
        %v765 = vunpack.c.h.b16 %v607
        %v766 = vunpack.c.l.b16 %v608
        %v767 = vunpack.c.h.b16 %v608
        %v768 = vunpack.c.l.b16 %v609
        %v769 = vunpack.c.h.b16 %v609
        %v770 = vunpack.c.l.b16 %v610
        %v771 = vunpack.c.h.b16 %v610
        %v772 = vunpack.c.l.b16 %v611
        %v773 = vunpack.c.h.b16 %v611
        %v774 = vunpack.c.l.b16 %v612
        %v775 = vunpack.c.h.b16 %v612
        %v776 = vunpack.c.l.b16 %v613
        %v777 = vunpack.c.h.b16 %v613
        %v778 = vunpack.c.l.b16 %v614
        %v779 = vunpack.c.h.b16 %v614
        %v780 = vunpack.c.l.b16 %v615
        %v781 = vunpack.c.h.b16 %v615
        %v782 = vunpack.c.l.b16 %v616
        %v783 = vunpack.c.h.b16 %v616
        %v784 = vunpack.c.l.b16 %v617
        %v785 = vunpack.c.h.b16 %v617
        %v786 = vunpack.c.l.b16 %v618
        %v787 = vunpack.c.h.b16 %v618
        %v788 = vunpack.c.l.b16 %v619
        %v789 = vunpack.c.h.b16 %v619
        %v790 = vunpack.c.l.b16 %v620
        %v791 = vunpack.c.h.b16 %v620
        %v792 = vunpack.c.l.b16 %v621
        %v793 = vunpack.c.h.b16 %v621
        %v794 = vunpack.c.l.b16 %v622
        %v795 = vunpack.c.h.b16 %v622
        %v796 = vunpack.c.l.b16 %v623
        %v797 = vunpack.c.h.b16 %v623
        %v798 = vunpack.c.l.b16 %v624
        %v799 = vunpack.c.h.b16 %v624
        %v800 = vunpack.c.l.b16 %v625
        %v801 = vunpack.c.h.b16 %v625
        %v802 = vunpack.c.l.b16 %v626
        %v803 = vunpack.c.h.b16 %v626
        %v804 = vunpack.c.l.b16 %v627
        %v805 = vunpack.c.h.b16 %v627
        %v806 = vunpack.c.l.b16 %v628
        %v807 = vunpack.c.h.b16 %v628
        %v808 = vunpack.c.l.b16 %v629
        %v809 = vunpack.c.h.b16 %v629
        %v810 = vunpack.c.l.b16 %v630
        %v811 = vunpack.c.h.b16 %v630
        %v812 = vunpack.c.l.b16 %v631
        %v813 = vunpack.c.h.b16 %v631
        %v814 = vunpack.c.l.b16 %v632
        %v815 = vunpack.c.h.b16 %v632
        %v816 = vunpack.c.l.b16 %v633
        %v817 = vunpack.c.h.b16 %v633
        %v818 = vunpack.c.l.b16 %v634
        %v819 = vunpack.c.h.b16 %v634
        %v820 = vunpack.c.l.b16 %v635
        %v821 = vunpack.c.h.b16 %v635
        %v822 = vunpack.c.l.b16 %v636
        %v823 = vunpack.c.h.b16 %v636
        %v824 = vunpack.c.l.b16 %v637
        %v825 = vunpack.c.h.b16 %v637
        %v826 = vunpack.c.l.b16 %v638
        %v827 = vunpack.c.h.b16 %v638
        %v828 = vunpack.c.l.b16 %v639
        %v829 = vunpack.c.h.b16 %v639
        %v830 = vunpack.c.l.b16 %v640
        %v831 = vunpack.c.h.b16 %v640
        %v832 = vunpack.c.l.b16 %v641
        %v833 = vunpack.c.h.b16 %v641
        %v834 = vunpack.c.l.b16 %v642
        %v835 = vunpack.c.h.b16 %v642
        %v836 = vunpack.c.l.b16 %v643
        %v837 = vunpack.c.h.b16 %v643
        %v838 = vunpack.c.l.b16 %v644
        %v839 = vunpack.c.h.b16 %v644
        %v840 = vunpack.c.l.b16 %v645
        %v841 = vunpack.c.h.b16 %v645
        %v842 = vunpack.c.l.b16 %v646
        %v843 = vunpack.c.h.b16 %v646
        %v844 = vunpack.c.l.b16 %v647
        %v845 = vunpack.c.h.b16 %v647
        %v846 = vunpack.c.l.b16 %v648
        %v847 = vunpack.c.h.b16 %v648
        %v848 = vunpack.c.l.b16 %v649
        %v849 = vunpack.c.h.b16 %v649
        %v850 = vunpack.c.l.b16 %v650
        %v851 = vunpack.c.h.b16 %v650
        %v852 = vunpack.c.l.b16 %v651
        %v853 = vunpack.c.h.b16 %v651
        %v854 = vunpack.c.l.b16 %v652
        %v855 = vunpack.c.h.b16 %v652
        %v856 = vunpack.c.l.b16 %v653
        %v857 = vunpack.c.h.b16 %v653
        %v858 = vunpack.c.l.b16 %v654
        %v859 = vunpack.c.h.b16 %v654
        %v860 = vunpack.c.l.b16 %v655
        %v861 = vunpack.c.h.b16 %v655
        %v862 = vunpack.c.l.b16 %v656
        %v863 = vunpack.c.h.b16 %v656
        %v864 = vunpack.c.l.b16 %v657
        %v865 = vunpack.c.h.b16 %v657
        %v866 = vunpack.c.l.b16 %v658
        %v867 = vunpack.c.h.b16 %v658
        %v868 = vunpack.c.l.b16 %v659
        %v869 = vunpack.c.h.b16 %v659
        %v870 = vunpack.c.l.b16 %v660
        %v871 = vunpack.c.h.b16 %v660
        %v872 = vunpack.c.l.b16 %v661
        %v873 = vunpack.c.h.b16 %v661
        %v874 = vunpack.c.l.b16 %v662
        %v875 = vunpack.c.h.b16 %v662
        %v876 = vunpack.c.l.b16 %v663
        %v877 = vunpack.c.h.b16 %v663
        %v878 = vpack.c.b16 %v754, %v750
        %v879 = vpack.c.b16 %v755, %v751
        %v880 = vpack.c.b16 %v756, %v752
        %v881 = vpack.c.b16 %v757, %v753
        %v882 = vpack.c.b16 %v762, %v758
        %v883 = vpack.c.b16 %v763, %v759
        %v884 = vpack.c.b16 %v764, %v760
        %v885 = vpack.c.b16 %v765, %v761
        %v886 = vpack.c.b16 %v770, %v766
        %v887 = vpack.c.b16 %v771, %v767
        %v888 = vpack.c.b16 %v772, %v768
        %v889 = vpack.c.b16 %v773, %v769
        %v890 = vpack.c.b16 %v778, %v774
        %v891 = vpack.c.b16 %v779, %v775
        %v892 = vpack.c.b16 %v780, %v776
        %v893 = vpack.c.b16 %v781, %v777
        %v894 = vpack.c.b16 %v786, %v782
        %v895 = vpack.c.b16 %v787, %v783
        %v896 = vpack.c.b16 %v788, %v784
        %v897 = vpack.c.b16 %v789, %v785
        %v898 = vpack.c.b16 %v794, %v790
        %v899 = vpack.c.b16 %v795, %v791
        %v900 = vpack.c.b16 %v796, %v792
        %v901 = vpack.c.b16 %v797, %v793
        %v902 = vpack.c.b16 %v802, %v798
        %v903 = vpack.c.b16 %v803, %v799
        %v904 = vpack.c.b16 %v804, %v800
        %v905 = vpack.c.b16 %v805, %v801
        %v906 = vpack.c.b16 %v810, %v806
        %v907 = vpack.c.b16 %v811, %v807
        %v908 = vpack.c.b16 %v812, %v808
        %v909 = vpack.c.b16 %v813, %v809
        %v910 = vpack.c.b16 %v818, %v814
        %v911 = vpack.c.b16 %v819, %v815
        %v912 = vpack.c.b16 %v820, %v816
        %v913 = vpack.c.b16 %v821, %v817
        %v914 = vpack.c.b16 %v826, %v822
        %v915 = vpack.c.b16 %v827, %v823
        %v916 = vpack.c.b16 %v828, %v824
        %v917 = vpack.c.b16 %v829, %v825
        %v918 = vpack.c.b16 %v834, %v830
        %v919 = vpack.c.b16 %v835, %v831
        %v920 = vpack.c.b16 %v836, %v832
        %v921 = vpack.c.b16 %v837, %v833
        %v922 = vpack.c.b16 %v842, %v838
        %v923 = vpack.c.b16 %v843, %v839
        %v924 = vpack.c.b16 %v844, %v840
        %v925 = vpack.c.b16 %v845, %v841
        %v926 = vpack.c.b16 %v850, %v846
        %v927 = vpack.c.b16 %v851, %v847
        %v928 = vpack.c.b16 %v852, %v848
        %v929 = vpack.c.b16 %v853, %v849
        %v930 = vpack.c.b16 %v858, %v854
        %v931 = vpack.c.b16 %v859, %v855
        %v932 = vpack.c.b16 %v860, %v856
        %v933 = vpack.c.b16 %v861, %v857
        %v934 = vpack.c.b16 %v866, %v862
        %v935 = vpack.c.b16 %v867, %v863
        %v936 = vpack.c.b16 %v868, %v864
        %v937 = vpack.c.b16 %v869, %v865
        %v938 = vpack.c.b16 %v874, %v870
        %v939 = vpack.c.b16 %v875, %v871
        %v940 = vpack.c.b16 %v876, %v872
        %v941 = vpack.c.b16 %v877, %v873
        %1006 = vmatprep.subr.bf16.mxu0 %v879
        %1007 = vmatpush1.bf16.msra.mxu0 %v878
        %1008 = vmatprep.subr.bf16.mxu0 %v883
        %1009 = vmatpush1.bf16.msra.mxu0 %v882
        %1010 = vmatprep.subr.bf16.mxu0 %v887
        %1011 = vmatpush1.bf16.msra.mxu0 %v886
        %1012 = vmatprep.subr.bf16.mxu0 %v891
        %1013 = vmatpush1.bf16.msra.mxu0 %v890
        %1014 = vmatprep.subr.bf16.mxu0 %v895
        %1015 = vmatpush1.bf16.msra.mxu0 %v894
        %1016 = vmatprep.subr.bf16.mxu0 %v899
        %1017 = vmatpush1.bf16.msra.mxu0 %v898
        %1018 = vmatprep.subr.bf16.mxu0 %v903
        %1019 = vmatpush1.bf16.msra.mxu0 %v902
        %1020 = vmatprep.subr.bf16.mxu0 %v907
        %1021 = vmatpush1.bf16.msra.mxu0 %v906
        %1022 = vmatprep.subr.bf16.mxu0 %v911
        %1023 = vmatpush1.bf16.msra.mxu0 %v910
        %1024 = vmatprep.subr.bf16.mxu0 %v915
        %1025 = vmatpush1.bf16.msra.mxu0 %v914
        %1026 = vmatprep.subr.bf16.mxu0 %v919
        %1027 = vmatpush1.bf16.msra.mxu0 %v918
        %1028 = vmatprep.subr.bf16.mxu0 %v923
        %1029 = vmatpush1.bf16.msra.mxu0 %v922
        %1030 = vmatprep.subr.bf16.mxu0 %v927
        %1031 = vmatpush1.bf16.msra.mxu0 %v926
        %1032 = vmatprep.subr.bf16.mxu0 %v931
        %1033 = vmatpush1.bf16.msra.mxu0 %v930
        %1034 = vmatprep.subr.bf16.mxu0 %v935
        %1035 = vmatpush1.bf16.msra.mxu0 %v934
        %1036 = vmatprep.subr.bf16.mxu0 %v939
        %1037 = vmatpush1.bf16.msra.mxu0 %v938
        %1038 = vmatprep.mubr.bf16.mxu0 %v338
        %1039 = vmatmul.mubr.bf16.gmra.mrb[0].mxu0 %v337
        %v1040 = vpop.f32.mrb[0].mxu0
        %v1041 = vadd.f32 %v669, %v1040
        %v1042 = vpop.f32.mrb[0].mxu0
        %v1043 = vadd.f32 %v673, %v1042
        %v1044 = vpop.f32.mrb[0].mxu0
        %v1045 = vadd.f32 %v669, %v1044
        %v1046 = vpop.f32.mrb[0].mxu0
        %v1047 = vadd.f32 %v673, %v1046
        %1048 = vdwg.mxu0
        %1049 = vmatprep.subr.bf16.mxu0 %v881
        %1050 = vmatpush1.bf16.msra.mxu0 %v880
        %1051 = vmatprep.subr.bf16.mxu0 %v885
        %1052 = vmatpush1.bf16.msra.mxu0 %v884
        %1053 = vmatprep.subr.bf16.mxu0 %v889
        %1054 = vmatpush1.bf16.msra.mxu0 %v888
        %1055 = vmatprep.subr.bf16.mxu0 %v893
        %1056 = vmatpush1.bf16.msra.mxu0 %v892
        %1057 = vmatprep.subr.bf16.mxu0 %v897
        %1058 = vmatpush1.bf16.msra.mxu0 %v896
        %1059 = vmatprep.subr.bf16.mxu0 %v901
        %1060 = vmatpush1.bf16.msra.mxu0 %v900
        %1061 = vmatprep.subr.bf16.mxu0 %v905
        %1062 = vmatpush1.bf16.msra.mxu0 %v904
        %1063 = vmatprep.subr.bf16.mxu0 %v909
        %1064 = vmatpush1.bf16.msra.mxu0 %v908
        %1065 = vmatprep.subr.bf16.mxu0 %v913
        %1066 = vmatpush1.bf16.msra.mxu0 %v912
        %1067 = vmatprep.subr.bf16.mxu0 %v917
        %1068 = vmatpush1.bf16.msra.mxu0 %v916
        %1069 = vmatprep.subr.bf16.mxu0 %v921
        %1070 = vmatpush1.bf16.msra.mxu0 %v920
        %1071 = vmatprep.subr.bf16.mxu0 %v925
        %1072 = vmatpush1.bf16.msra.mxu0 %v924
        %1073 = vmatprep.subr.bf16.mxu0 %v929
        %1074 = vmatpush1.bf16.msra.mxu0 %v928
        %1075 = vmatprep.subr.bf16.mxu0 %v933
        %1076 = vmatpush1.bf16.msra.mxu0 %v932
        %1077 = vmatprep.subr.bf16.mxu0 %v937
        %1078 = vmatpush1.bf16.msra.mxu0 %v936
        %1079 = vmatprep.subr.bf16.mxu0 %v941
        %1080 = vmatpush1.bf16.msra.mxu0 %v940
        %1081 = vmatprep.mubr.bf16.mxu0 %v338
        %1082 = vmatmul.mubr.bf16.gmra.mrb[0].mxu0 %v337
        %v1083 = vpop.f32.mrb[0].mxu0
        %v1084 = vadd.f32 %v677, %v1083
        %v1085 = vpop.f32.mrb[0].mxu0
        %v1086 = vadd.f32 %v681, %v1085
        %v1087 = vpop.f32.mrb[0].mxu0
        %v1088 = vadd.f32 %v677, %v1087
        %v1089 = vpop.f32.mrb[0].mxu0
        %v1090 = vadd.f32 %v681, %v1089
        %1091 = vdwg.mxu0
        %v1092 = vpack.c.bf16 %v598, %v596
        %v1093 = vpack.c.bf16 %v599, %v597
        %v1096 = vunpack.c.l.b16 %v1092
        %v1097 = vunpack.c.l.b16 %v1093
        %v1098 = vunpack.c.h.b16 %v1092
        %v1099 = vunpack.c.h.b16 %v1093
        %v1100 = vpack.c.b16 %v1097, %v1096
        %v1101 = vpack.c.b16 %v1099, %v1098
        %v1102 = vpack.c.bf16 %v1045, %v1041
        %v1103 = vpack.c.bf16 %v1047, %v1043
        %v1106 = vunpack.c.l.b16 %v1102
        %v1107 = vunpack.c.l.b16 %v1103
        %v1108 = vunpack.c.h.b16 %v1102
        %v1109 = vunpack.c.h.b16 %v1103
        %v1110 = vpack.c.b16 %v1107, %v1106
        %v1111 = vpack.c.b16 %v1109, %v1108
        %v1112 = vpack.c.bf16 %v1088, %v1084
        %v1113 = vpack.c.bf16 %v1090, %v1086
        %v1116 = vunpack.c.l.b16 %v1112
        %v1117 = vunpack.c.l.b16 %v1113
        %v1118 = vunpack.c.h.b16 %v1112
        %v1119 = vunpack.c.h.b16 %v1113
        %v1120 = vpack.c.b16 %v1117, %v1116
        %v1121 = vpack.c.b16 %v1119, %v1118
        %vm1122 = vcmask 261120
        %v1124 = vsel %vm1122, %v1100, 0
        %v1127 = vsel %vm1122, %v1110, 0
        %1129 = vmatprep.subr.bf16.mxu0 0
        %1130 = vmatpush1.bf16.xpose.msra.mxu0 %v1127
        %1131 = vmatprep.subr.bf16.mxu0 0
        %1132 = vmatpush1.bf16.xpose.msra.mxu0 0
        %1133 = vmatprep.subr.bf16.mxu0 0
        %1134 = vmatpush1.bf16.xpose.msra.mxu0 0
        %1135 = vmatprep.subr.bf16.mxu0 0
        %1136 = vmatpush1.bf16.xpose.msra.mxu0 0
        %1137 = vmatprep.subr.bf16.mxu0 0
        %1138 = vmatpush1.bf16.xpose.msra.mxu0 0
        %1139 = vmatprep.subr.bf16.mxu0 0
        %1140 = vmatpush1.bf16.xpose.msra.mxu0 0
        %1141 = vmatprep.subr.bf16.mxu0 0
        %1142 = vmatpush1.bf16.xpose.msra.mxu0 0
        %1143 = vmatprep.subr.bf16.mxu0 0
        %1144 = vmatpush1.bf16.xpose.msra.mxu0 0
        %1145 = vmatprep.subr.bf16.mxu0 0
        %1146 = vmatpush1.bf16.xpose.msra.mxu0 0
        %1147 = vmatprep.subr.bf16.mxu0 0
        %1148 = vmatpush1.bf16.xpose.msra.mxu0 0
        %1149 = vmatprep.subr.bf16.mxu0 0
        %1150 = vmatpush1.bf16.xpose.msra.mxu0 0
        %1151 = vmatprep.subr.bf16.mxu0 0
        %1152 = vmatpush1.bf16.xpose.msra.mxu0 0
        %1153 = vmatprep.subr.bf16.mxu0 0
        %1154 = vmatpush1.bf16.xpose.msra.mxu0 0
        %1155 = vmatprep.subr.bf16.mxu0 0
        %1156 = vmatpush1.bf16.xpose.msra.mxu0 0
        %1157 = vmatprep.subr.bf16.mxu0 0
        %1158 = vmatpush1.bf16.xpose.msra.mxu0 0
        %1159 = vmatprep.subr.bf16.mxu0 0
        %1160 = vmatpush1.bf16.xpose.msra.mxu0 0
        %1161 = vmatprep.mubr.bf16.mxu0 0
        %1162 = vmatmul.mubr.bf16.gmra.mrb[0].mxu0 %v1124
        %v1163 = vpop.f32.mrb[0].mxu0
        %v1164 = vadd.f32 0.0, %v1163
        %v1165 = vpop.f32.mrb[0].mxu0
        %v1166 = vpop.f32.mrb[0].mxu0
        %v1167 = vpop.f32.mrb[0].mxu0
        %1168 = vdwg.mxu0
        %v1170 = vsel %vm1122, %v1101, 0
        %v1173 = vsel %vm1122, %v1111, 0
        %1175 = vmatprep.subr.bf16.mxu0 0
        %1176 = vmatpush1.bf16.xpose.msra.mxu0 %v1173
        %1177 = vmatprep.subr.bf16.mxu0 0
        %1178 = vmatpush1.bf16.xpose.msra.mxu0 0
        %1179 = vmatprep.subr.bf16.mxu0 0
        %1180 = vmatpush1.bf16.xpose.msra.mxu0 0
        %1181 = vmatprep.subr.bf16.mxu0 0
        %1182 = vmatpush1.bf16.xpose.msra.mxu0 0
        %1183 = vmatprep.subr.bf16.mxu0 0
        %1184 = vmatpush1.bf16.xpose.msra.mxu0 0
        %1185 = vmatprep.subr.bf16.mxu0 0
        %1186 = vmatpush1.bf16.xpose.msra.mxu0 0
        %1187 = vmatprep.subr.bf16.mxu0 0
        %1188 = vmatpush1.bf16.xpose.msra.mxu0 0
        %1189 = vmatprep.subr.bf16.mxu0 0
        %1190 = vmatpush1.bf16.xpose.msra.mxu0 0
        %1191 = vmatprep.subr.bf16.mxu0 0
        %1192 = vmatpush1.bf16.xpose.msra.mxu0 0
        %1193 = vmatprep.subr.bf16.mxu0 0
        %1194 = vmatpush1.bf16.xpose.msra.mxu0 0
        %1195 = vmatprep.subr.bf16.mxu0 0
        %1196 = vmatpush1.bf16.xpose.msra.mxu0 0
        %1197 = vmatprep.subr.bf16.mxu0 0
        %1198 = vmatpush1.bf16.xpose.msra.mxu0 0
        %1199 = vmatprep.subr.bf16.mxu0 0
        %1200 = vmatpush1.bf16.xpose.msra.mxu0 0
        %1201 = vmatprep.subr.bf16.mxu0 0
        %1202 = vmatpush1.bf16.xpose.msra.mxu0 0
        %1203 = vmatprep.subr.bf16.mxu0 0
        %1204 = vmatpush1.bf16.xpose.msra.mxu0 0
        %1205 = vmatprep.subr.bf16.mxu0 0
        %1206 = vmatpush1.bf16.xpose.msra.mxu0 0
        %1207 = vmatprep.mubr.bf16.mxu0 0
        %1208 = vmatmul.mubr.bf16.gmra.mrb[0].mxu0 %v1170
        %v1209 = vpop.f32.mrb[0].mxu0
        %v1210 = vadd.f32 0.0, %v1209
        %v1211 = vpop.f32.mrb[0].mxu0
        %v1212 = vpop.f32.mrb[0].mxu0
        %v1213 = vpop.f32.mrb[0].mxu0
        %1214 = vdwg.mxu0
        %vm1215 = vcmask 64512
        %v1216 = vsel %vm1215, %v1164, -inf
        %1217 = vmax.xlane.f32.xlu0 %v1216
        %v1218 = vpop.xlane.xlu0 %1217
        %v1219 = vsel %vm1215, %v1210, -inf
        %1220 = vmax.xlane.f32.xlu0 %v1219
        %v1221 = vpop.xlane.xlu0 %1220
        %v1222 = vsub.f32 %v1164, %v1218
        %v1223 = vsub.f32 %v1210, %v1221
        %v1224 = vmul.f32 %v1222, 1.442695
        %v1225 = vpow.pop %v1224
        %v1226 = vmul.f32 %v1223, 1.442695
        %v1227 = vpow.pop %v1226
        %v1228 = vsel %vm1215, %v1225, 0.0
        %1229 = vadd.xlane.f32.xlu0 %v1228
        %v1230 = vpop.xlane.xlu0 %1229
        %v1231 = vsel %vm1215, %v1227, 0.0
        %1232 = vadd.xlane.f32.xlu0 %v1231
        %v1233 = vpop.xlane.xlu0 %1232
        %v1234 = vrcp.pop %v1230
        %v1235 = vmul.f32 %v1225, %v1234
        %v1236 = vrcp.pop %v1233
        %v1237 = vmul.f32 %v1227, %v1236
        %v1238 = vpack.c.bf16 %v1235, %v1235
        %v1239 = vpack.c.bf16 %v1237, %v1237
        %v1241 = vsel %vm1215, %v1238, 0
        %vm1243 = vcmask 1043456
        %v1245 = vsel %vm1243, %v1120, 0
        %1247 = vmatprep.subr.bf16.mxu0 0
        %1248 = vmatpush1.bf16.msra.mxu0 %v1245
        %1249 = vmatprep.subr.bf16.mxu0 0
        %1250 = vmatpush1.bf16.msra.mxu0 0
        %1251 = vmatprep.subr.bf16.mxu0 0
        %1252 = vmatpush1.bf16.msra.mxu0 0
        %1253 = vmatprep.subr.bf16.mxu0 0
        %1254 = vmatpush1.bf16.msra.mxu0 0
        %1255 = vmatprep.subr.bf16.mxu0 0
        %1256 = vmatpush1.bf16.msra.mxu0 0
        %1257 = vmatprep.subr.bf16.mxu0 0
        %1258 = vmatpush1.bf16.msra.mxu0 0
        %1259 = vmatprep.subr.bf16.mxu0 0
        %1260 = vmatpush1.bf16.msra.mxu0 0
        %1261 = vmatprep.subr.bf16.mxu0 0
        %1262 = vmatpush1.bf16.msra.mxu0 0
        %1263 = vmatprep.subr.bf16.mxu0 0
        %1264 = vmatpush1.bf16.msra.mxu0 0
        %1265 = vmatprep.subr.bf16.mxu0 0
        %1266 = vmatpush1.bf16.msra.mxu0 0
        %1267 = vmatprep.subr.bf16.mxu0 0
        %1268 = vmatpush1.bf16.msra.mxu0 0
        %1269 = vmatprep.subr.bf16.mxu0 0
        %1270 = vmatpush1.bf16.msra.mxu0 0
        %1271 = vmatprep.subr.bf16.mxu0 0
        %1272 = vmatpush1.bf16.msra.mxu0 0
        %1273 = vmatprep.subr.bf16.mxu0 0
        %1274 = vmatpush1.bf16.msra.mxu0 0
        %1275 = vmatprep.subr.bf16.mxu0 0
        %1276 = vmatpush1.bf16.msra.mxu0 0
        %1277 = vmatprep.subr.bf16.mxu0 0
        %1278 = vmatpush1.bf16.msra.mxu0 0
        %1279 = vmatprep.mubr.bf16.mxu0 0
        %1280 = vmatmul.mubr.bf16.gmra.mrb[0].mxu0 %v1241
        %v1281 = vpop.f32.mrb[0].mxu0
        %v1282 = vadd.f32 0.0, %v1281
        %v1283 = vpop.f32.mrb[0].mxu0
        %v1284 = vpop.f32.mrb[0].mxu0
        %v1285 = vpop.f32.mrb[0].mxu0
        %1286 = vdwg.mxu0
        %v1288 = vsel %vm1215, %v1239, 0
        %v1291 = vsel %vm1243, %v1121, 0
        %1293 = vmatprep.subr.bf16.mxu0 0
        %1294 = vmatpush1.bf16.msra.mxu0 %v1291
        %1295 = vmatprep.subr.bf16.mxu0 0
        %1296 = vmatpush1.bf16.msra.mxu0 0
        %1297 = vmatprep.subr.bf16.mxu0 0
        %1298 = vmatpush1.bf16.msra.mxu0 0
        %1299 = vmatprep.subr.bf16.mxu0 0
        %1300 = vmatpush1.bf16.msra.mxu0 0
        %1301 = vmatprep.subr.bf16.mxu0 0
        %1302 = vmatpush1.bf16.msra.mxu0 0
        %1303 = vmatprep.subr.bf16.mxu0 0
        %1304 = vmatpush1.bf16.msra.mxu0 0
        %1305 = vmatprep.subr.bf16.mxu0 0
        %1306 = vmatpush1.bf16.msra.mxu0 0
        %1307 = vmatprep.subr.bf16.mxu0 0
        %1308 = vmatpush1.bf16.msra.mxu0 0
        %1309 = vmatprep.subr.bf16.mxu0 0
        %1310 = vmatpush1.bf16.msra.mxu0 0
        %1311 = vmatprep.subr.bf16.mxu0 0
        %1312 = vmatpush1.bf16.msra.mxu0 0
        %1313 = vmatprep.subr.bf16.mxu0 0
        %1314 = vmatpush1.bf16.msra.mxu0 0
        %1315 = vmatprep.subr.bf16.mxu0 0
        %1316 = vmatpush1.bf16.msra.mxu0 0
        %1317 = vmatprep.subr.bf16.mxu0 0
        %1318 = vmatpush1.bf16.msra.mxu0 0
        %1319 = vmatprep.subr.bf16.mxu0 0
        %1320 = vmatpush1.bf16.msra.mxu0 0
        %1321 = vmatprep.subr.bf16.mxu0 0
        %1322 = vmatpush1.bf16.msra.mxu0 0
        %1323 = vmatprep.subr.bf16.mxu0 0
        %1324 = vmatpush1.bf16.msra.mxu0 0
        %1325 = vmatprep.mubr.bf16.mxu0 0
        %1326 = vmatmul.mubr.bf16.gmra.mrb[0].mxu0 %v1288
        %v1327 = vpop.f32.mrb[0].mxu0
        %v1328 = vadd.f32 0.0, %v1327
        %v1329 = vpop.f32.mrb[0].mxu0
        %v1330 = vpop.f32.mrb[0].mxu0
        %v1331 = vpop.f32.mrb[0].mxu0
        %1332 = vdwg.mxu0
        %v1333 = vpack.c.b16 %v1096, %v1096
        %1334 = vrot.lane.b32.xlu0 %v1333, 96
        %v1335 = vpop.permute.xlu0 %1334
        %v1336 = vpack.c.b16 %v1106, %v1106
        %1337 = vrot.lane.b32.xlu0 %v1336, 96
        %v1338 = vpop.permute.xlu0 %1337
        %v1340 = vsel %vm1122, %v1335, 0
        %v1343 = vsel %vm1122, %v1338, 0
        %1345 = vmatprep.subr.bf16.mxu0 0
        %1346 = vmatpush1.bf16.xpose.msra.mxu0 %v1343
        %1347 = vmatprep.subr.bf16.mxu0 0
        %1348 = vmatpush1.bf16.xpose.msra.mxu0 0
        %1349 = vmatprep.subr.bf16.mxu0 0
        %1350 = vmatpush1.bf16.xpose.msra.mxu0 0
        %1351 = vmatprep.subr.bf16.mxu0 0
        %1352 = vmatpush1.bf16.xpose.msra.mxu0 0
        %1353 = vmatprep.subr.bf16.mxu0 0
        %1354 = vmatpush1.bf16.xpose.msra.mxu0 0
        %1355 = vmatprep.subr.bf16.mxu0 0
        %1356 = vmatpush1.bf16.xpose.msra.mxu0 0
        %1357 = vmatprep.subr.bf16.mxu0 0
        %1358 = vmatpush1.bf16.xpose.msra.mxu0 0
        %1359 = vmatprep.subr.bf16.mxu0 0
        %1360 = vmatpush1.bf16.xpose.msra.mxu0 0
        %1361 = vmatprep.subr.bf16.mxu0 0
        %1362 = vmatpush1.bf16.xpose.msra.mxu0 0
        %1363 = vmatprep.subr.bf16.mxu0 0
        %1364 = vmatpush1.bf16.xpose.msra.mxu0 0
        %1365 = vmatprep.subr.bf16.mxu0 0
        %1366 = vmatpush1.bf16.xpose.msra.mxu0 0
        %1367 = vmatprep.subr.bf16.mxu0 0
        %1368 = vmatpush1.bf16.xpose.msra.mxu0 0
        %1369 = vmatprep.subr.bf16.mxu0 0
        %1370 = vmatpush1.bf16.xpose.msra.mxu0 0
        %1371 = vmatprep.subr.bf16.mxu0 0
        %1372 = vmatpush1.bf16.xpose.msra.mxu0 0
        %1373 = vmatprep.subr.bf16.mxu0 0
        %1374 = vmatpush1.bf16.xpose.msra.mxu0 0
        %1375 = vmatprep.subr.bf16.mxu0 0
        %1376 = vmatpush1.bf16.xpose.msra.mxu0 0
        %1377 = vmatprep.mubr.bf16.mxu0 0
        %1378 = vmatmul.mubr.bf16.gmra.mrb[0].mxu0 %v1340
        %v1379 = vpop.f32.mrb[0].mxu0
        %v1380 = vadd.f32 0.0, %v1379
        %v1381 = vpop.f32.mrb[0].mxu0
        %v1382 = vpop.f32.mrb[0].mxu0
        %v1383 = vpop.f32.mrb[0].mxu0
        %1384 = vdwg.mxu0
        %v1385 = vpack.c.b16 %v1098, %v1098
        %1386 = vrot.lane.b32.xlu0 %v1385, 96
        %v1387 = vpop.permute.xlu0 %1386
        %v1388 = vpack.c.b16 %v1108, %v1108
        %1389 = vrot.lane.b32.xlu0 %v1388, 96
        %v1390 = vpop.permute.xlu0 %1389
        %v1392 = vsel %vm1122, %v1387, 0
        %v1395 = vsel %vm1122, %v1390, 0
        %1397 = vmatprep.subr.bf16.mxu0 0
        %1398 = vmatpush1.bf16.xpose.msra.mxu0 %v1395
        %1399 = vmatprep.subr.bf16.mxu0 0
        %1400 = vmatpush1.bf16.xpose.msra.mxu0 0
        %1401 = vmatprep.subr.bf16.mxu0 0
        %1402 = vmatpush1.bf16.xpose.msra.mxu0 0
        %1403 = vmatprep.subr.bf16.mxu0 0
        %1404 = vmatpush1.bf16.xpose.msra.mxu0 0
        %1405 = vmatprep.subr.bf16.mxu0 0
        %1406 = vmatpush1.bf16.xpose.msra.mxu0 0
        %1407 = vmatprep.subr.bf16.mxu0 0
        %1408 = vmatpush1.bf16.xpose.msra.mxu0 0
        %1409 = vmatprep.subr.bf16.mxu0 0
        %1410 = vmatpush1.bf16.xpose.msra.mxu0 0
        %1411 = vmatprep.subr.bf16.mxu0 0
        %1412 = vmatpush1.bf16.xpose.msra.mxu0 0
        %1413 = vmatprep.subr.bf16.mxu0 0
        %1414 = vmatpush1.bf16.xpose.msra.mxu0 0
        %1415 = vmatprep.subr.bf16.mxu0 0
        %1416 = vmatpush1.bf16.xpose.msra.mxu0 0
        %1417 = vmatprep.subr.bf16.mxu0 0
        %1418 = vmatpush1.bf16.xpose.msra.mxu0 0
        %1419 = vmatprep.subr.bf16.mxu0 0
        %1420 = vmatpush1.bf16.xpose.msra.mxu0 0
        %1421 = vmatprep.subr.bf16.mxu0 0
        %1422 = vmatpush1.bf16.xpose.msra.mxu0 0
        %1423 = vmatprep.subr.bf16.mxu0 0
        %1424 = vmatpush1.bf16.xpose.msra.mxu0 0
        %1425 = vmatprep.subr.bf16.mxu0 0
        %1426 = vmatpush1.bf16.xpose.msra.mxu0 0
        %1427 = vmatprep.subr.bf16.mxu0 0
        %1428 = vmatpush1.bf16.xpose.msra.mxu0 0
        %1429 = vmatprep.mubr.bf16.mxu0 0
        %1430 = vmatmul.mubr.bf16.gmra.mrb[0].mxu0 %v1392
        %v1431 = vpop.f32.mrb[0].mxu0
        %v1432 = vadd.f32 0.0, %v1431
        %v1433 = vpop.f32.mrb[0].mxu0
        %v1434 = vpop.f32.mrb[0].mxu0
        %v1435 = vpop.f32.mrb[0].mxu0
        %1436 = vdwg.mxu0
        %v1437 = vsel %vm1215, %v1380, -inf
        %1438 = vmax.xlane.f32.xlu0 %v1437
        %v1439 = vpop.xlane.xlu0 %1438
        %v1440 = vsel %vm1215, %v1432, -inf
        %1441 = vmax.xlane.f32.xlu0 %v1440
        %v1442 = vpop.xlane.xlu0 %1441
        %v1443 = vsub.f32 %v1380, %v1439
        %v1444 = vsub.f32 %v1432, %v1442
        %v1445 = vmul.f32 %v1443, 1.442695
        %v1446 = vpow.pop %v1445
        %v1447 = vmul.f32 %v1444, 1.442695
        %v1448 = vpow.pop %v1447
        %v1449 = vsel %vm1215, %v1446, 0.0
        %1450 = vadd.xlane.f32.xlu0 %v1449
        %v1451 = vpop.xlane.xlu0 %1450
        %v1452 = vsel %vm1215, %v1448, 0.0
        %1453 = vadd.xlane.f32.xlu0 %v1452
        %v1454 = vpop.xlane.xlu0 %1453
        %v1455 = vrcp.pop %v1451
        %v1456 = vmul.f32 %v1446, %v1455
        %v1457 = vrcp.pop %v1454
        %v1458 = vmul.f32 %v1448, %v1457
        %v1459 = vpack.c.bf16 %v1456, %v1456
        %v1460 = vpack.c.bf16 %v1458, %v1458
        %v1461 = vpack.c.b16 %v1116, %v1116
        %1462 = vrot.lane.b32.xlu0 %v1461, 96
        %v1463 = vpop.permute.xlu0 %1462
        %v1465 = vsel %vm1215, %v1459, 0
        %v1468 = vsel %vm1243, %v1463, 0
        %1470 = vmatprep.subr.bf16.mxu0 0
        %1471 = vmatpush1.bf16.msra.mxu0 %v1468
        %1472 = vmatprep.subr.bf16.mxu0 0
        %1473 = vmatpush1.bf16.msra.mxu0 0
        %1474 = vmatprep.subr.bf16.mxu0 0
        %1475 = vmatpush1.bf16.msra.mxu0 0
        %1476 = vmatprep.subr.bf16.mxu0 0
        %1477 = vmatpush1.bf16.msra.mxu0 0
        %1478 = vmatprep.subr.bf16.mxu0 0
        %1479 = vmatpush1.bf16.msra.mxu0 0
        %1480 = vmatprep.subr.bf16.mxu0 0
        %1481 = vmatpush1.bf16.msra.mxu0 0
        %1482 = vmatprep.subr.bf16.mxu0 0
        %1483 = vmatpush1.bf16.msra.mxu0 0
        %1484 = vmatprep.subr.bf16.mxu0 0
        %1485 = vmatpush1.bf16.msra.mxu0 0
        %1486 = vmatprep.subr.bf16.mxu0 0
        %1487 = vmatpush1.bf16.msra.mxu0 0
        %1488 = vmatprep.subr.bf16.mxu0 0
        %1489 = vmatpush1.bf16.msra.mxu0 0
        %1490 = vmatprep.subr.bf16.mxu0 0
        %1491 = vmatpush1.bf16.msra.mxu0 0
        %1492 = vmatprep.subr.bf16.mxu0 0
        %1493 = vmatpush1.bf16.msra.mxu0 0
        %1494 = vmatprep.subr.bf16.mxu0 0
        %1495 = vmatpush1.bf16.msra.mxu0 0
        %1496 = vmatprep.subr.bf16.mxu0 0
        %1497 = vmatpush1.bf16.msra.mxu0 0
        %1498 = vmatprep.subr.bf16.mxu0 0
        %1499 = vmatpush1.bf16.msra.mxu0 0
        %1500 = vmatprep.subr.bf16.mxu0 0
        %1501 = vmatpush1.bf16.msra.mxu0 0
        %1502 = vmatprep.mubr.bf16.mxu0 0
        %1503 = vmatmul.mubr.bf16.gmra.mrb[0].mxu0 %v1465
        %v1504 = vpop.f32.mrb[0].mxu0
        %v1505 = vadd.f32 0.0, %v1504
        %v1506 = vpop.f32.mrb[0].mxu0
        %v1507 = vpop.f32.mrb[0].mxu0
        %v1508 = vpop.f32.mrb[0].mxu0
        %1509 = vdwg.mxu0
        %v1510 = vpack.c.b16 %v1118, %v1118
        %1511 = vrot.lane.b32.xlu0 %v1510, 96
        %v1512 = vpop.permute.xlu0 %1511
        %v1514 = vsel %vm1215, %v1460, 0
        %v1517 = vsel %vm1243, %v1512, 0
        %1519 = vmatprep.subr.bf16.mxu0 0
        %1520 = vmatpush1.bf16.msra.mxu0 %v1517
        %1521 = vmatprep.subr.bf16.mxu0 0
        %1522 = vmatpush1.bf16.msra.mxu0 0
        %1523 = vmatprep.subr.bf16.mxu0 0
        %1524 = vmatpush1.bf16.msra.mxu0 0
        %1525 = vmatprep.subr.bf16.mxu0 0
        %1526 = vmatpush1.bf16.msra.mxu0 0
        %1527 = vmatprep.subr.bf16.mxu0 0
        %1528 = vmatpush1.bf16.msra.mxu0 0
        %1529 = vmatprep.subr.bf16.mxu0 0
        %1530 = vmatpush1.bf16.msra.mxu0 0
        %1531 = vmatprep.subr.bf16.mxu0 0
        %1532 = vmatpush1.bf16.msra.mxu0 0
        %1533 = vmatprep.subr.bf16.mxu0 0
        %1534 = vmatpush1.bf16.msra.mxu0 0
        %1535 = vmatprep.subr.bf16.mxu0 0
        %1536 = vmatpush1.bf16.msra.mxu0 0
        %1537 = vmatprep.subr.bf16.mxu0 0
        %1538 = vmatpush1.bf16.msra.mxu0 0
        %1539 = vmatprep.subr.bf16.mxu0 0
        %1540 = vmatpush1.bf16.msra.mxu0 0
        %1541 = vmatprep.subr.bf16.mxu0 0
        %1542 = vmatpush1.bf16.msra.mxu0 0
        %1543 = vmatprep.subr.bf16.mxu0 0
        %1544 = vmatpush1.bf16.msra.mxu0 0
        %1545 = vmatprep.subr.bf16.mxu0 0
        %1546 = vmatpush1.bf16.msra.mxu0 0
        %1547 = vmatprep.subr.bf16.mxu0 0
        %1548 = vmatpush1.bf16.msra.mxu0 0
        %1549 = vmatprep.subr.bf16.mxu0 0
        %1550 = vmatpush1.bf16.msra.mxu0 0
        %1551 = vmatprep.mubr.bf16.mxu0 0
        %1552 = vmatmul.mubr.bf16.gmra.mrb[0].mxu0 %v1514
        %v1553 = vpop.f32.mrb[0].mxu0
        %v1554 = vadd.f32 0.0, %v1553
        %v1555 = vpop.f32.mrb[0].mxu0
        %v1556 = vpop.f32.mrb[0].mxu0
        %v1557 = vpop.f32.mrb[0].mxu0
        %1558 = vdwg.mxu0
        %1559 = vrot.lane.b32.xlu0 %v1333, 64
        %v1560 = vpop.permute.xlu0 %1559
        %1561 = vrot.lane.b32.xlu0 %v1336, 64
        %v1562 = vpop.permute.xlu0 %1561
        %v1564 = vsel %vm1122, %v1560, 0
        %v1567 = vsel %vm1122, %v1562, 0
        %1569 = vmatprep.subr.bf16.mxu0 0
        %1570 = vmatpush1.bf16.xpose.msra.mxu0 %v1567
        %1571 = vmatprep.subr.bf16.mxu0 0
        %1572 = vmatpush1.bf16.xpose.msra.mxu0 0
        %1573 = vmatprep.subr.bf16.mxu0 0
        %1574 = vmatpush1.bf16.xpose.msra.mxu0 0
        %1575 = vmatprep.subr.bf16.mxu0 0
        %1576 = vmatpush1.bf16.xpose.msra.mxu0 0
        %1577 = vmatprep.subr.bf16.mxu0 0
        %1578 = vmatpush1.bf16.xpose.msra.mxu0 0
        %1579 = vmatprep.subr.bf16.mxu0 0
        %1580 = vmatpush1.bf16.xpose.msra.mxu0 0
        %1581 = vmatprep.subr.bf16.mxu0 0
        %1582 = vmatpush1.bf16.xpose.msra.mxu0 0
        %1583 = vmatprep.subr.bf16.mxu0 0
        %1584 = vmatpush1.bf16.xpose.msra.mxu0 0
        %1585 = vmatprep.subr.bf16.mxu0 0
        %1586 = vmatpush1.bf16.xpose.msra.mxu0 0
        %1587 = vmatprep.subr.bf16.mxu0 0
        %1588 = vmatpush1.bf16.xpose.msra.mxu0 0
        %1589 = vmatprep.subr.bf16.mxu0 0
        %1590 = vmatpush1.bf16.xpose.msra.mxu0 0
        %1591 = vmatprep.subr.bf16.mxu0 0
        %1592 = vmatpush1.bf16.xpose.msra.mxu0 0
        %1593 = vmatprep.subr.bf16.mxu0 0
        %1594 = vmatpush1.bf16.xpose.msra.mxu0 0
        %1595 = vmatprep.subr.bf16.mxu0 0
        %1596 = vmatpush1.bf16.xpose.msra.mxu0 0
        %1597 = vmatprep.subr.bf16.mxu0 0
        %1598 = vmatpush1.bf16.xpose.msra.mxu0 0
        %1599 = vmatprep.subr.bf16.mxu0 0
        %1600 = vmatpush1.bf16.xpose.msra.mxu0 0
        %1601 = vmatprep.mubr.bf16.mxu0 0
        %1602 = vmatmul.mubr.bf16.gmra.mrb[0].mxu0 %v1564
        %v1603 = vpop.f32.mrb[0].mxu0
        %v1604 = vadd.f32 0.0, %v1603
        %v1605 = vpop.f32.mrb[0].mxu0
        %v1606 = vpop.f32.mrb[0].mxu0
        %v1607 = vpop.f32.mrb[0].mxu0
        %1608 = vdwg.mxu0
        %1609 = vrot.lane.b32.xlu0 %v1385, 64
        %v1610 = vpop.permute.xlu0 %1609
        %1611 = vrot.lane.b32.xlu0 %v1388, 64
        %v1612 = vpop.permute.xlu0 %1611
        %v1614 = vsel %vm1122, %v1610, 0
        %v1617 = vsel %vm1122, %v1612, 0
        %1619 = vmatprep.subr.bf16.mxu0 0
        %1620 = vmatpush1.bf16.xpose.msra.mxu0 %v1617
        %1621 = vmatprep.subr.bf16.mxu0 0
        %1622 = vmatpush1.bf16.xpose.msra.mxu0 0
        %1623 = vmatprep.subr.bf16.mxu0 0
        %1624 = vmatpush1.bf16.xpose.msra.mxu0 0
        %1625 = vmatprep.subr.bf16.mxu0 0
        %1626 = vmatpush1.bf16.xpose.msra.mxu0 0
        %1627 = vmatprep.subr.bf16.mxu0 0
        %1628 = vmatpush1.bf16.xpose.msra.mxu0 0
        %1629 = vmatprep.subr.bf16.mxu0 0
        %1630 = vmatpush1.bf16.xpose.msra.mxu0 0
        %1631 = vmatprep.subr.bf16.mxu0 0
        %1632 = vmatpush1.bf16.xpose.msra.mxu0 0
        %1633 = vmatprep.subr.bf16.mxu0 0
        %1634 = vmatpush1.bf16.xpose.msra.mxu0 0
        %1635 = vmatprep.subr.bf16.mxu0 0
        %1636 = vmatpush1.bf16.xpose.msra.mxu0 0
        %1637 = vmatprep.subr.bf16.mxu0 0
        %1638 = vmatpush1.bf16.xpose.msra.mxu0 0
        %1639 = vmatprep.subr.bf16.mxu0 0
        %1640 = vmatpush1.bf16.xpose.msra.mxu0 0
        %1641 = vmatprep.subr.bf16.mxu0 0
        %1642 = vmatpush1.bf16.xpose.msra.mxu0 0
        %1643 = vmatprep.subr.bf16.mxu0 0
        %1644 = vmatpush1.bf16.xpose.msra.mxu0 0
        %1645 = vmatprep.subr.bf16.mxu0 0
        %1646 = vmatpush1.bf16.xpose.msra.mxu0 0
        %1647 = vmatprep.subr.bf16.mxu0 0
        %1648 = vmatpush1.bf16.xpose.msra.mxu0 0
        %1649 = vmatprep.subr.bf16.mxu0 0
        %1650 = vmatpush1.bf16.xpose.msra.mxu0 0
        %1651 = vmatprep.mubr.bf16.mxu0 0
        %1652 = vmatmul.mubr.bf16.gmra.mrb[0].mxu0 %v1614
        %v1653 = vpop.f32.mrb[0].mxu0
        %v1654 = vadd.f32 0.0, %v1653
        %v1655 = vpop.f32.mrb[0].mxu0
        %v1656 = vpop.f32.mrb[0].mxu0
        %v1657 = vpop.f32.mrb[0].mxu0
        %1658 = vdwg.mxu0
        %v1659 = vsel %vm1215, %v1604, -inf
        %1660 = vmax.xlane.f32.xlu0 %v1659
        %v1661 = vpop.xlane.xlu0 %1660
        %v1662 = vsel %vm1215, %v1654, -inf
        %1663 = vmax.xlane.f32.xlu0 %v1662
        %v1664 = vpop.xlane.xlu0 %1663
        %v1665 = vsub.f32 %v1604, %v1661
        %v1666 = vsub.f32 %v1654, %v1664
        %v1667 = vmul.f32 %v1665, 1.442695
        %v1668 = vpow.pop %v1667
        %v1669 = vmul.f32 %v1666, 1.442695
        %v1670 = vpow.pop %v1669
        %v1671 = vsel %vm1215, %v1668, 0.0
        %1672 = vadd.xlane.f32.xlu0 %v1671
        %v1673 = vpop.xlane.xlu0 %1672
        %v1674 = vsel %vm1215, %v1670, 0.0
        %1675 = vadd.xlane.f32.xlu0 %v1674
        %v1676 = vpop.xlane.xlu0 %1675
        %v1677 = vrcp.pop %v1673
        %v1678 = vmul.f32 %v1668, %v1677
        %v1679 = vrcp.pop %v1676
        %v1680 = vmul.f32 %v1670, %v1679
        %v1681 = vpack.c.bf16 %v1678, %v1678
        %v1682 = vpack.c.bf16 %v1680, %v1680
        %1683 = vrot.lane.b32.xlu0 %v1461, 64
        %v1684 = vpop.permute.xlu0 %1683
        %v1686 = vsel %vm1215, %v1681, 0
        %v1689 = vsel %vm1243, %v1684, 0
        %1691 = vmatprep.subr.bf16.mxu0 0
        %1692 = vmatpush1.bf16.msra.mxu0 %v1689
        %1693 = vmatprep.subr.bf16.mxu0 0
        %1694 = vmatpush1.bf16.msra.mxu0 0
        %1695 = vmatprep.subr.bf16.mxu0 0
        %1696 = vmatpush1.bf16.msra.mxu0 0
        %1697 = vmatprep.subr.bf16.mxu0 0
        %1698 = vmatpush1.bf16.msra.mxu0 0
        %1699 = vmatprep.subr.bf16.mxu0 0
        %1700 = vmatpush1.bf16.msra.mxu0 0
        %1701 = vmatprep.subr.bf16.mxu0 0
        %1702 = vmatpush1.bf16.msra.mxu0 0
        %1703 = vmatprep.subr.bf16.mxu0 0
        %1704 = vmatpush1.bf16.msra.mxu0 0
        %1705 = vmatprep.subr.bf16.mxu0 0
        %1706 = vmatpush1.bf16.msra.mxu0 0
        %1707 = vmatprep.subr.bf16.mxu0 0
        %1708 = vmatpush1.bf16.msra.mxu0 0
        %1709 = vmatprep.subr.bf16.mxu0 0
        %1710 = vmatpush1.bf16.msra.mxu0 0
        %1711 = vmatprep.subr.bf16.mxu0 0
        %1712 = vmatpush1.bf16.msra.mxu0 0
        %1713 = vmatprep.subr.bf16.mxu0 0
        %1714 = vmatpush1.bf16.msra.mxu0 0
        %1715 = vmatprep.subr.bf16.mxu0 0
        %1716 = vmatpush1.bf16.msra.mxu0 0
        %1717 = vmatprep.subr.bf16.mxu0 0
        %1718 = vmatpush1.bf16.msra.mxu0 0
        %1719 = vmatprep.subr.bf16.mxu0 0
        %1720 = vmatpush1.bf16.msra.mxu0 0
        %1721 = vmatprep.subr.bf16.mxu0 0
        %1722 = vmatpush1.bf16.msra.mxu0 0
        %1723 = vmatprep.mubr.bf16.mxu0 0
        %1724 = vmatmul.mubr.bf16.gmra.mrb[0].mxu0 %v1686
        %v1725 = vpop.f32.mrb[0].mxu0
        %v1726 = vadd.f32 0.0, %v1725
        %v1727 = vpop.f32.mrb[0].mxu0
        %v1728 = vpop.f32.mrb[0].mxu0
        %v1729 = vpop.f32.mrb[0].mxu0
        %1730 = vdwg.mxu0
        %1731 = vrot.lane.b32.xlu0 %v1510, 64
        %v1732 = vpop.permute.xlu0 %1731
        %v1734 = vsel %vm1215, %v1682, 0
        %v1737 = vsel %vm1243, %v1732, 0
        %1739 = vmatprep.subr.bf16.mxu0 0
        %1740 = vmatpush1.bf16.msra.mxu0 %v1737
        %1741 = vmatprep.subr.bf16.mxu0 0
        %1742 = vmatpush1.bf16.msra.mxu0 0
        %1743 = vmatprep.subr.bf16.mxu0 0
        %1744 = vmatpush1.bf16.msra.mxu0 0
        %1745 = vmatprep.subr.bf16.mxu0 0
        %1746 = vmatpush1.bf16.msra.mxu0 0
        %1747 = vmatprep.subr.bf16.mxu0 0
        %1748 = vmatpush1.bf16.msra.mxu0 0
        %1749 = vmatprep.subr.bf16.mxu0 0
        %1750 = vmatpush1.bf16.msra.mxu0 0
        %1751 = vmatprep.subr.bf16.mxu0 0
        %1752 = vmatpush1.bf16.msra.mxu0 0
        %1753 = vmatprep.subr.bf16.mxu0 0
        %1754 = vmatpush1.bf16.msra.mxu0 0
        %1755 = vmatprep.subr.bf16.mxu0 0
        %1756 = vmatpush1.bf16.msra.mxu0 0
        %1757 = vmatprep.subr.bf16.mxu0 0
        %1758 = vmatpush1.bf16.msra.mxu0 0
        %1759 = vmatprep.subr.bf16.mxu0 0
        %1760 = vmatpush1.bf16.msra.mxu0 0
        %1761 = vmatprep.subr.bf16.mxu0 0
        %1762 = vmatpush1.bf16.msra.mxu0 0
        %1763 = vmatprep.subr.bf16.mxu0 0
        %1764 = vmatpush1.bf16.msra.mxu0 0
        %1765 = vmatprep.subr.bf16.mxu0 0
        %1766 = vmatpush1.bf16.msra.mxu0 0
        %1767 = vmatprep.subr.bf16.mxu0 0
        %1768 = vmatpush1.bf16.msra.mxu0 0
        %1769 = vmatprep.subr.bf16.mxu0 0
        %1770 = vmatpush1.bf16.msra.mxu0 0
        %1771 = vmatprep.mubr.bf16.mxu0 0
        %1772 = vmatmul.mubr.bf16.gmra.mrb[0].mxu0 %v1734
        %v1773 = vpop.f32.mrb[0].mxu0
        %v1774 = vadd.f32 0.0, %v1773
        %v1775 = vpop.f32.mrb[0].mxu0
        %v1776 = vpop.f32.mrb[0].mxu0
        %v1777 = vpop.f32.mrb[0].mxu0
        %1778 = vdwg.mxu0
        %1779 = vrot.lane.b32.xlu0 %v1333, 32
        %v1780 = vpop.permute.xlu0 %1779
        %1781 = vrot.lane.b32.xlu0 %v1336, 32
        %v1782 = vpop.permute.xlu0 %1781
        %v1784 = vsel %vm1122, %v1780, 0
        %v1787 = vsel %vm1122, %v1782, 0
        %1789 = vmatprep.subr.bf16.mxu0 0
        %1790 = vmatpush1.bf16.xpose.msra.mxu0 %v1787
        %1791 = vmatprep.subr.bf16.mxu0 0
        %1792 = vmatpush1.bf16.xpose.msra.mxu0 0
        %1793 = vmatprep.subr.bf16.mxu0 0
        %1794 = vmatpush1.bf16.xpose.msra.mxu0 0
        %1795 = vmatprep.subr.bf16.mxu0 0
        %1796 = vmatpush1.bf16.xpose.msra.mxu0 0
        %1797 = vmatprep.subr.bf16.mxu0 0
        %1798 = vmatpush1.bf16.xpose.msra.mxu0 0
        %1799 = vmatprep.subr.bf16.mxu0 0
        %1800 = vmatpush1.bf16.xpose.msra.mxu0 0
        %1801 = vmatprep.subr.bf16.mxu0 0
        %1802 = vmatpush1.bf16.xpose.msra.mxu0 0
        %1803 = vmatprep.subr.bf16.mxu0 0
        %1804 = vmatpush1.bf16.xpose.msra.mxu0 0
        %1805 = vmatprep.subr.bf16.mxu0 0
        %1806 = vmatpush1.bf16.xpose.msra.mxu0 0
        %1807 = vmatprep.subr.bf16.mxu0 0
        %1808 = vmatpush1.bf16.xpose.msra.mxu0 0
        %1809 = vmatprep.subr.bf16.mxu0 0
        %1810 = vmatpush1.bf16.xpose.msra.mxu0 0
        %1811 = vmatprep.subr.bf16.mxu0 0
        %1812 = vmatpush1.bf16.xpose.msra.mxu0 0
        %1813 = vmatprep.subr.bf16.mxu0 0
        %1814 = vmatpush1.bf16.xpose.msra.mxu0 0
        %1815 = vmatprep.subr.bf16.mxu0 0
        %1816 = vmatpush1.bf16.xpose.msra.mxu0 0
        %1817 = vmatprep.subr.bf16.mxu0 0
        %1818 = vmatpush1.bf16.xpose.msra.mxu0 0
        %1819 = vmatprep.subr.bf16.mxu0 0
        %1820 = vmatpush1.bf16.xpose.msra.mxu0 0
        %1821 = vmatprep.mubr.bf16.mxu0 0
        %1822 = vmatmul.mubr.bf16.gmra.mrb[0].mxu0 %v1784
        %v1823 = vpop.f32.mrb[0].mxu0
        %v1824 = vadd.f32 0.0, %v1823
        %v1825 = vpop.f32.mrb[0].mxu0
        %v1826 = vpop.f32.mrb[0].mxu0
        %v1827 = vpop.f32.mrb[0].mxu0
        %1828 = vdwg.mxu0
        %1829 = vrot.lane.b32.xlu0 %v1385, 32
        %v1830 = vpop.permute.xlu0 %1829
        %1831 = vrot.lane.b32.xlu0 %v1388, 32
        %v1832 = vpop.permute.xlu0 %1831
        %v1834 = vsel %vm1122, %v1830, 0
        %v1837 = vsel %vm1122, %v1832, 0
        %1839 = vmatprep.subr.bf16.mxu0 0
        %1840 = vmatpush1.bf16.xpose.msra.mxu0 %v1837
        %1841 = vmatprep.subr.bf16.mxu0 0
        %1842 = vmatpush1.bf16.xpose.msra.mxu0 0
        %1843 = vmatprep.subr.bf16.mxu0 0
        %1844 = vmatpush1.bf16.xpose.msra.mxu0 0
        %1845 = vmatprep.subr.bf16.mxu0 0
        %1846 = vmatpush1.bf16.xpose.msra.mxu0 0
        %1847 = vmatprep.subr.bf16.mxu0 0
        %1848 = vmatpush1.bf16.xpose.msra.mxu0 0
        %1849 = vmatprep.subr.bf16.mxu0 0
        %1850 = vmatpush1.bf16.xpose.msra.mxu0 0
        %1851 = vmatprep.subr.bf16.mxu0 0
        %1852 = vmatpush1.bf16.xpose.msra.mxu0 0
        %1853 = vmatprep.subr.bf16.mxu0 0
        %1854 = vmatpush1.bf16.xpose.msra.mxu0 0
        %1855 = vmatprep.subr.bf16.mxu0 0
        %1856 = vmatpush1.bf16.xpose.msra.mxu0 0
        %1857 = vmatprep.subr.bf16.mxu0 0
        %1858 = vmatpush1.bf16.xpose.msra.mxu0 0
        %1859 = vmatprep.subr.bf16.mxu0 0
        %1860 = vmatpush1.bf16.xpose.msra.mxu0 0
        %1861 = vmatprep.subr.bf16.mxu0 0
        %1862 = vmatpush1.bf16.xpose.msra.mxu0 0
        %1863 = vmatprep.subr.bf16.mxu0 0
        %1864 = vmatpush1.bf16.xpose.msra.mxu0 0
        %1865 = vmatprep.subr.bf16.mxu0 0
        %1866 = vmatpush1.bf16.xpose.msra.mxu0 0
        %1867 = vmatprep.subr.bf16.mxu0 0
        %1868 = vmatpush1.bf16.xpose.msra.mxu0 0
        %1869 = vmatprep.subr.bf16.mxu0 0
        %1870 = vmatpush1.bf16.xpose.msra.mxu0 0
        %1871 = vmatprep.mubr.bf16.mxu0 0
        %1872 = vmatmul.mubr.bf16.gmra.mrb[0].mxu0 %v1834
        %v1873 = vpop.f32.mrb[0].mxu0
        %v1874 = vadd.f32 0.0, %v1873
        %v1875 = vpop.f32.mrb[0].mxu0
        %v1876 = vpop.f32.mrb[0].mxu0
        %v1877 = vpop.f32.mrb[0].mxu0
        %1878 = vdwg.mxu0
        %v1879 = vsel %vm1215, %v1824, -inf
        %1880 = vmax.xlane.f32.xlu0 %v1879
        %v1881 = vpop.xlane.xlu0 %1880
        %v1882 = vsel %vm1215, %v1874, -inf
        %1883 = vmax.xlane.f32.xlu0 %v1882
        %v1884 = vpop.xlane.xlu0 %1883
        %v1885 = vsub.f32 %v1824, %v1881
        %v1886 = vsub.f32 %v1874, %v1884
        %v1887 = vmul.f32 %v1885, 1.442695
        %v1888 = vpow.pop %v1887
        %v1889 = vmul.f32 %v1886, 1.442695
        %v1890 = vpow.pop %v1889
        %v1891 = vsel %vm1215, %v1888, 0.0
        %1892 = vadd.xlane.f32.xlu0 %v1891
        %v1893 = vpop.xlane.xlu0 %1892
        %v1894 = vsel %vm1215, %v1890, 0.0
        %1895 = vadd.xlane.f32.xlu0 %v1894
        %v1896 = vpop.xlane.xlu0 %1895
        %v1897 = vrcp.pop %v1893
        %v1898 = vmul.f32 %v1888, %v1897
        %v1899 = vrcp.pop %v1896
        %v1900 = vmul.f32 %v1890, %v1899
        %v1901 = vpack.c.bf16 %v1898, %v1898
        %v1902 = vpack.c.bf16 %v1900, %v1900
        %1903 = vrot.lane.b32.xlu0 %v1461, 32
        %v1904 = vpop.permute.xlu0 %1903
        %v1906 = vsel %vm1215, %v1901, 0
        %v1909 = vsel %vm1243, %v1904, 0
        %1911 = vmatprep.subr.bf16.mxu0 0
        %1912 = vmatpush1.bf16.msra.mxu0 %v1909
        %1913 = vmatprep.subr.bf16.mxu0 0
        %1914 = vmatpush1.bf16.msra.mxu0 0
        %1915 = vmatprep.subr.bf16.mxu0 0
        %1916 = vmatpush1.bf16.msra.mxu0 0
        %1917 = vmatprep.subr.bf16.mxu0 0
        %1918 = vmatpush1.bf16.msra.mxu0 0
        %1919 = vmatprep.subr.bf16.mxu0 0
        %1920 = vmatpush1.bf16.msra.mxu0 0
        %1921 = vmatprep.subr.bf16.mxu0 0
        %1922 = vmatpush1.bf16.msra.mxu0 0
        %1923 = vmatprep.subr.bf16.mxu0 0
        %1924 = vmatpush1.bf16.msra.mxu0 0
        %1925 = vmatprep.subr.bf16.mxu0 0
        %1926 = vmatpush1.bf16.msra.mxu0 0
        %1927 = vmatprep.subr.bf16.mxu0 0
        %1928 = vmatpush1.bf16.msra.mxu0 0
        %1929 = vmatprep.subr.bf16.mxu0 0
        %1930 = vmatpush1.bf16.msra.mxu0 0
        %1931 = vmatprep.subr.bf16.mxu0 0
        %1932 = vmatpush1.bf16.msra.mxu0 0
        %1933 = vmatprep.subr.bf16.mxu0 0
        %1934 = vmatpush1.bf16.msra.mxu0 0
        %1935 = vmatprep.subr.bf16.mxu0 0
        %1936 = vmatpush1.bf16.msra.mxu0 0
        %1937 = vmatprep.subr.bf16.mxu0 0
        %1938 = vmatpush1.bf16.msra.mxu0 0
        %1939 = vmatprep.subr.bf16.mxu0 0
        %1940 = vmatpush1.bf16.msra.mxu0 0
        %1941 = vmatprep.subr.bf16.mxu0 0
        %1942 = vmatpush1.bf16.msra.mxu0 0
        %1943 = vmatprep.mubr.bf16.mxu0 0
        %1944 = vmatmul.mubr.bf16.gmra.mrb[0].mxu0 %v1906
        %v1945 = vpop.f32.mrb[0].mxu0
        %v1946 = vadd.f32 0.0, %v1945
        %v1947 = vpop.f32.mrb[0].mxu0
        %v1948 = vpop.f32.mrb[0].mxu0
        %v1949 = vpop.f32.mrb[0].mxu0
        %1950 = vdwg.mxu0
        %1951 = vrot.lane.b32.xlu0 %v1510, 32
        %v1952 = vpop.permute.xlu0 %1951
        %v1954 = vsel %vm1215, %v1902, 0
        %v1957 = vsel %vm1243, %v1952, 0
        %1959 = vmatprep.subr.bf16.mxu0 0
        %1960 = vmatpush1.bf16.msra.mxu0 %v1957
        %1961 = vmatprep.subr.bf16.mxu0 0
        %1962 = vmatpush1.bf16.msra.mxu0 0
        %1963 = vmatprep.subr.bf16.mxu0 0
        %1964 = vmatpush1.bf16.msra.mxu0 0
        %1965 = vmatprep.subr.bf16.mxu0 0
        %1966 = vmatpush1.bf16.msra.mxu0 0
        %1967 = vmatprep.subr.bf16.mxu0 0
        %1968 = vmatpush1.bf16.msra.mxu0 0
        %1969 = vmatprep.subr.bf16.mxu0 0
        %1970 = vmatpush1.bf16.msra.mxu0 0
        %1971 = vmatprep.subr.bf16.mxu0 0
        %1972 = vmatpush1.bf16.msra.mxu0 0
        %1973 = vmatprep.subr.bf16.mxu0 0
        %1974 = vmatpush1.bf16.msra.mxu0 0
        %1975 = vmatprep.subr.bf16.mxu0 0
        %1976 = vmatpush1.bf16.msra.mxu0 0
        %1977 = vmatprep.subr.bf16.mxu0 0
        %1978 = vmatpush1.bf16.msra.mxu0 0
        %1979 = vmatprep.subr.bf16.mxu0 0
        %1980 = vmatpush1.bf16.msra.mxu0 0
        %1981 = vmatprep.subr.bf16.mxu0 0
        %1982 = vmatpush1.bf16.msra.mxu0 0
        %1983 = vmatprep.subr.bf16.mxu0 0
        %1984 = vmatpush1.bf16.msra.mxu0 0
        %1985 = vmatprep.subr.bf16.mxu0 0
        %1986 = vmatpush1.bf16.msra.mxu0 0
        %1987 = vmatprep.subr.bf16.mxu0 0
        %1988 = vmatpush1.bf16.msra.mxu0 0
        %1989 = vmatprep.subr.bf16.mxu0 0
        %1990 = vmatpush1.bf16.msra.mxu0 0
        %1991 = vmatprep.mubr.bf16.mxu0 0
        %1992 = vmatmul.mubr.bf16.gmra.mrb[0].mxu0 %v1954
        %v1993 = vpop.f32.mrb[0].mxu0
        %v1994 = vadd.f32 0.0, %v1993
        %v1995 = vpop.f32.mrb[0].mxu0
        %v1996 = vpop.f32.mrb[0].mxu0
        %v1997 = vpop.f32.mrb[0].mxu0
        %1998 = vdwg.mxu0
        %v1999 = vrot.slane %v1100, 4
        %v2000 = vrot.slane %v1110, 4
        %v2002 = vsel %vm1122, %v1999, 0
        %v2005 = vsel %vm1122, %v2000, 0
        %2007 = vmatprep.subr.bf16.mxu0 0
        %2008 = vmatpush1.bf16.xpose.msra.mxu0 %v2005
        %2009 = vmatprep.subr.bf16.mxu0 0
        %2010 = vmatpush1.bf16.xpose.msra.mxu0 0
        %2011 = vmatprep.subr.bf16.mxu0 0
        %2012 = vmatpush1.bf16.xpose.msra.mxu0 0
        %2013 = vmatprep.subr.bf16.mxu0 0
        %2014 = vmatpush1.bf16.xpose.msra.mxu0 0
        %2015 = vmatprep.subr.bf16.mxu0 0
        %2016 = vmatpush1.bf16.xpose.msra.mxu0 0
        %2017 = vmatprep.subr.bf16.mxu0 0
        %2018 = vmatpush1.bf16.xpose.msra.mxu0 0
        %2019 = vmatprep.subr.bf16.mxu0 0
        %2020 = vmatpush1.bf16.xpose.msra.mxu0 0
        %2021 = vmatprep.subr.bf16.mxu0 0
        %2022 = vmatpush1.bf16.xpose.msra.mxu0 0
        %2023 = vmatprep.subr.bf16.mxu0 0
        %2024 = vmatpush1.bf16.xpose.msra.mxu0 0
        %2025 = vmatprep.subr.bf16.mxu0 0
        %2026 = vmatpush1.bf16.xpose.msra.mxu0 0
        %2027 = vmatprep.subr.bf16.mxu0 0
        %2028 = vmatpush1.bf16.xpose.msra.mxu0 0
        %2029 = vmatprep.subr.bf16.mxu0 0
        %2030 = vmatpush1.bf16.xpose.msra.mxu0 0
        %2031 = vmatprep.subr.bf16.mxu0 0
        %2032 = vmatpush1.bf16.xpose.msra.mxu0 0
        %2033 = vmatprep.subr.bf16.mxu0 0
        %2034 = vmatpush1.bf16.xpose.msra.mxu0 0
        %2035 = vmatprep.subr.bf16.mxu0 0
        %2036 = vmatpush1.bf16.xpose.msra.mxu0 0
        %2037 = vmatprep.subr.bf16.mxu0 0
        %2038 = vmatpush1.bf16.xpose.msra.mxu0 0
        %2039 = vmatprep.mubr.bf16.mxu0 0
        %2040 = vmatmul.mubr.bf16.gmra.mrb[0].mxu0 %v2002
        %v2041 = vpop.f32.mrb[0].mxu0
        %v2042 = vadd.f32 0.0, %v2041
        %v2043 = vpop.f32.mrb[0].mxu0
        %v2044 = vpop.f32.mrb[0].mxu0
        %v2045 = vpop.f32.mrb[0].mxu0
        %2046 = vdwg.mxu0
        %v2047 = vrot.slane %v1101, 4
        %v2048 = vrot.slane %v1111, 4
        %v2050 = vsel %vm1122, %v2047, 0
        %v2053 = vsel %vm1122, %v2048, 0
        %2055 = vmatprep.subr.bf16.mxu0 0
        %2056 = vmatpush1.bf16.xpose.msra.mxu0 %v2053
        %2057 = vmatprep.subr.bf16.mxu0 0
        %2058 = vmatpush1.bf16.xpose.msra.mxu0 0
        %2059 = vmatprep.subr.bf16.mxu0 0
        %2060 = vmatpush1.bf16.xpose.msra.mxu0 0
        %2061 = vmatprep.subr.bf16.mxu0 0
        %2062 = vmatpush1.bf16.xpose.msra.mxu0 0
        %2063 = vmatprep.subr.bf16.mxu0 0
        %2064 = vmatpush1.bf16.xpose.msra.mxu0 0
        %2065 = vmatprep.subr.bf16.mxu0 0
        %2066 = vmatpush1.bf16.xpose.msra.mxu0 0
        %2067 = vmatprep.subr.bf16.mxu0 0
        %2068 = vmatpush1.bf16.xpose.msra.mxu0 0
        %2069 = vmatprep.subr.bf16.mxu0 0
        %2070 = vmatpush1.bf16.xpose.msra.mxu0 0
        %2071 = vmatprep.subr.bf16.mxu0 0
        %2072 = vmatpush1.bf16.xpose.msra.mxu0 0
        %2073 = vmatprep.subr.bf16.mxu0 0
        %2074 = vmatpush1.bf16.xpose.msra.mxu0 0
        %2075 = vmatprep.subr.bf16.mxu0 0
        %2076 = vmatpush1.bf16.xpose.msra.mxu0 0
        %2077 = vmatprep.subr.bf16.mxu0 0
        %2078 = vmatpush1.bf16.xpose.msra.mxu0 0
        %2079 = vmatprep.subr.bf16.mxu0 0
        %2080 = vmatpush1.bf16.xpose.msra.mxu0 0
        %2081 = vmatprep.subr.bf16.mxu0 0
        %2082 = vmatpush1.bf16.xpose.msra.mxu0 0
        %2083 = vmatprep.subr.bf16.mxu0 0
        %2084 = vmatpush1.bf16.xpose.msra.mxu0 0
        %2085 = vmatprep.subr.bf16.mxu0 0
        %2086 = vmatpush1.bf16.xpose.msra.mxu0 0
        %2087 = vmatprep.mubr.bf16.mxu0 0
        %2088 = vmatmul.mubr.bf16.gmra.mrb[0].mxu0 %v2050
        %v2089 = vpop.f32.mrb[0].mxu0
        %v2090 = vadd.f32 0.0, %v2089
        %v2091 = vpop.f32.mrb[0].mxu0
        %v2092 = vpop.f32.mrb[0].mxu0
        %v2093 = vpop.f32.mrb[0].mxu0
        %2094 = vdwg.mxu0
        %v2095 = vsel %vm1215, %v2042, -inf
        %2096 = vmax.xlane.f32.xlu0 %v2095
        %v2097 = vpop.xlane.xlu0 %2096
        %v2098 = vsel %vm1215, %v2090, -inf
        %2099 = vmax.xlane.f32.xlu0 %v2098
        %v2100 = vpop.xlane.xlu0 %2099
        %v2101 = vsub.f32 %v2042, %v2097
        %v2102 = vsub.f32 %v2090, %v2100
        %v2103 = vmul.f32 %v2101, 1.442695
        %v2104 = vpow.pop %v2103
        %v2105 = vmul.f32 %v2102, 1.442695
        %v2106 = vpow.pop %v2105
        %v2107 = vsel %vm1215, %v2104, 0.0
        %2108 = vadd.xlane.f32.xlu0 %v2107
        %v2109 = vpop.xlane.xlu0 %2108
        %v2110 = vsel %vm1215, %v2106, 0.0
        %2111 = vadd.xlane.f32.xlu0 %v2110
        %v2112 = vpop.xlane.xlu0 %2111
        %v2113 = vrcp.pop %v2109
        %v2114 = vmul.f32 %v2104, %v2113
        %v2115 = vrcp.pop %v2112
        %v2116 = vmul.f32 %v2106, %v2115
        %v2117 = vpack.c.bf16 %v2114, %v2114
        %v2118 = vpack.c.bf16 %v2116, %v2116
        %v2119 = vrot.slane %v1120, 4
        %v2121 = vsel %vm1215, %v2117, 0
        %v2124 = vsel %vm1243, %v2119, 0
        %2126 = vmatprep.subr.bf16.mxu0 0
        %2127 = vmatpush1.bf16.msra.mxu0 %v2124
        %2128 = vmatprep.subr.bf16.mxu0 0
        %2129 = vmatpush1.bf16.msra.mxu0 0
        %2130 = vmatprep.subr.bf16.mxu0 0
        %2131 = vmatpush1.bf16.msra.mxu0 0
        %2132 = vmatprep.subr.bf16.mxu0 0
        %2133 = vmatpush1.bf16.msra.mxu0 0
        %2134 = vmatprep.subr.bf16.mxu0 0
        %2135 = vmatpush1.bf16.msra.mxu0 0
        %2136 = vmatprep.subr.bf16.mxu0 0
        %2137 = vmatpush1.bf16.msra.mxu0 0
        %2138 = vmatprep.subr.bf16.mxu0 0
        %2139 = vmatpush1.bf16.msra.mxu0 0
        %2140 = vmatprep.subr.bf16.mxu0 0
        %2141 = vmatpush1.bf16.msra.mxu0 0
        %2142 = vmatprep.subr.bf16.mxu0 0
        %2143 = vmatpush1.bf16.msra.mxu0 0
        %2144 = vmatprep.subr.bf16.mxu0 0
        %2145 = vmatpush1.bf16.msra.mxu0 0
        %2146 = vmatprep.subr.bf16.mxu0 0
        %2147 = vmatpush1.bf16.msra.mxu0 0
        %2148 = vmatprep.subr.bf16.mxu0 0
        %2149 = vmatpush1.bf16.msra.mxu0 0
        %2150 = vmatprep.subr.bf16.mxu0 0
        %2151 = vmatpush1.bf16.msra.mxu0 0
        %2152 = vmatprep.subr.bf16.mxu0 0
        %2153 = vmatpush1.bf16.msra.mxu0 0
        %2154 = vmatprep.subr.bf16.mxu0 0
        %2155 = vmatpush1.bf16.msra.mxu0 0
        %2156 = vmatprep.subr.bf16.mxu0 0
        %2157 = vmatpush1.bf16.msra.mxu0 0
        %2158 = vmatprep.mubr.bf16.mxu0 0
        %2159 = vmatmul.mubr.bf16.gmra.mrb[0].mxu0 %v2121
        %v2160 = vpop.f32.mrb[0].mxu0
        %v2161 = vadd.f32 0.0, %v2160
        %v2162 = vpop.f32.mrb[0].mxu0
        %v2163 = vpop.f32.mrb[0].mxu0
        %v2164 = vpop.f32.mrb[0].mxu0
        %2165 = vdwg.mxu0
        %v2166 = vrot.slane %v1121, 4
        %v2168 = vsel %vm1215, %v2118, 0
        %v2171 = vsel %vm1243, %v2166, 0
        %2173 = vmatprep.subr.bf16.mxu0 0
        %2174 = vmatpush1.bf16.msra.mxu0 %v2171
        %2175 = vmatprep.subr.bf16.mxu0 0
        %2176 = vmatpush1.bf16.msra.mxu0 0
        %2177 = vmatprep.subr.bf16.mxu0 0
        %2178 = vmatpush1.bf16.msra.mxu0 0
        %2179 = vmatprep.subr.bf16.mxu0 0
        %2180 = vmatpush1.bf16.msra.mxu0 0
        %2181 = vmatprep.subr.bf16.mxu0 0
        %2182 = vmatpush1.bf16.msra.mxu0 0
        %2183 = vmatprep.subr.bf16.mxu0 0
        %2184 = vmatpush1.bf16.msra.mxu0 0
        %2185 = vmatprep.subr.bf16.mxu0 0
        %2186 = vmatpush1.bf16.msra.mxu0 0
        %2187 = vmatprep.subr.bf16.mxu0 0
        %2188 = vmatpush1.bf16.msra.mxu0 0
        %2189 = vmatprep.subr.bf16.mxu0 0
        %2190 = vmatpush1.bf16.msra.mxu0 0
        %2191 = vmatprep.subr.bf16.mxu0 0
        %2192 = vmatpush1.bf16.msra.mxu0 0
        %2193 = vmatprep.subr.bf16.mxu0 0
        %2194 = vmatpush1.bf16.msra.mxu0 0
        %2195 = vmatprep.subr.bf16.mxu0 0
        %2196 = vmatpush1.bf16.msra.mxu0 0
        %2197 = vmatprep.subr.bf16.mxu0 0
        %2198 = vmatpush1.bf16.msra.mxu0 0
        %2199 = vmatprep.subr.bf16.mxu0 0
        %2200 = vmatpush1.bf16.msra.mxu0 0
        %2201 = vmatprep.subr.bf16.mxu0 0
        %2202 = vmatpush1.bf16.msra.mxu0 0
        %2203 = vmatprep.subr.bf16.mxu0 0
        %2204 = vmatpush1.bf16.msra.mxu0 0
        %2205 = vmatprep.mubr.bf16.mxu0 0
        %2206 = vmatmul.mubr.bf16.gmra.mrb[0].mxu0 %v2168
        %v2207 = vpop.f32.mrb[0].mxu0
        %v2208 = vadd.f32 0.0, %v2207
        %v2209 = vpop.f32.mrb[0].mxu0
        %v2210 = vpop.f32.mrb[0].mxu0
        %v2211 = vpop.f32.mrb[0].mxu0
        %2212 = vdwg.mxu0
        %2213 = vrot.lane.b32.xlu0 %v1100, 96
        %v2214 = vpop.permute.xlu0 %2213
        %v2215 = vrot.slane %v2214, 4
        %2216 = vrot.lane.b32.xlu0 %v1110, 96
        %v2217 = vpop.permute.xlu0 %2216
        %v2218 = vrot.slane %v2217, 4
        %v2220 = vsel %vm1122, %v2215, 0
        %v2223 = vsel %vm1122, %v2218, 0
        %2225 = vmatprep.subr.bf16.mxu0 0
        %2226 = vmatpush1.bf16.xpose.msra.mxu0 %v2223
        %2227 = vmatprep.subr.bf16.mxu0 0
        %2228 = vmatpush1.bf16.xpose.msra.mxu0 0
        %2229 = vmatprep.subr.bf16.mxu0 0
        %2230 = vmatpush1.bf16.xpose.msra.mxu0 0
        %2231 = vmatprep.subr.bf16.mxu0 0
        %2232 = vmatpush1.bf16.xpose.msra.mxu0 0
        %2233 = vmatprep.subr.bf16.mxu0 0
        %2234 = vmatpush1.bf16.xpose.msra.mxu0 0
        %2235 = vmatprep.subr.bf16.mxu0 0
        %2236 = vmatpush1.bf16.xpose.msra.mxu0 0
        %2237 = vmatprep.subr.bf16.mxu0 0
        %2238 = vmatpush1.bf16.xpose.msra.mxu0 0
        %2239 = vmatprep.subr.bf16.mxu0 0
        %2240 = vmatpush1.bf16.xpose.msra.mxu0 0
        %2241 = vmatprep.subr.bf16.mxu0 0
        %2242 = vmatpush1.bf16.xpose.msra.mxu0 0
        %2243 = vmatprep.subr.bf16.mxu0 0
        %2244 = vmatpush1.bf16.xpose.msra.mxu0 0
        %2245 = vmatprep.subr.bf16.mxu0 0
        %2246 = vmatpush1.bf16.xpose.msra.mxu0 0
        %2247 = vmatprep.subr.bf16.mxu0 0
        %2248 = vmatpush1.bf16.xpose.msra.mxu0 0
        %2249 = vmatprep.subr.bf16.mxu0 0
        %2250 = vmatpush1.bf16.xpose.msra.mxu0 0
        %2251 = vmatprep.subr.bf16.mxu0 0
        %2252 = vmatpush1.bf16.xpose.msra.mxu0 0
        %2253 = vmatprep.subr.bf16.mxu0 0
        %2254 = vmatpush1.bf16.xpose.msra.mxu0 0
        %2255 = vmatprep.subr.bf16.mxu0 0
        %2256 = vmatpush1.bf16.xpose.msra.mxu0 0
        %2257 = vmatprep.mubr.bf16.mxu0 0
        %2258 = vmatmul.mubr.bf16.gmra.mrb[0].mxu0 %v2220
        %v2259 = vpop.f32.mrb[0].mxu0
        %v2260 = vadd.f32 0.0, %v2259
        %v2261 = vpop.f32.mrb[0].mxu0
        %v2262 = vpop.f32.mrb[0].mxu0
        %v2263 = vpop.f32.mrb[0].mxu0
        %2264 = vdwg.mxu0
        %2265 = vrot.lane.b32.xlu0 %v1101, 96
        %v2266 = vpop.permute.xlu0 %2265
        %v2267 = vrot.slane %v2266, 4
        %2268 = vrot.lane.b32.xlu0 %v1111, 96
        %v2269 = vpop.permute.xlu0 %2268
        %v2270 = vrot.slane %v2269, 4
        %v2272 = vsel %vm1122, %v2267, 0
        %v2275 = vsel %vm1122, %v2270, 0
        %2277 = vmatprep.subr.bf16.mxu0 0
        %2278 = vmatpush1.bf16.xpose.msra.mxu0 %v2275
        %2279 = vmatprep.subr.bf16.mxu0 0
        %2280 = vmatpush1.bf16.xpose.msra.mxu0 0
        %2281 = vmatprep.subr.bf16.mxu0 0
        %2282 = vmatpush1.bf16.xpose.msra.mxu0 0
        %2283 = vmatprep.subr.bf16.mxu0 0
        %2284 = vmatpush1.bf16.xpose.msra.mxu0 0
        %2285 = vmatprep.subr.bf16.mxu0 0
        %2286 = vmatpush1.bf16.xpose.msra.mxu0 0
        %2287 = vmatprep.subr.bf16.mxu0 0
        %2288 = vmatpush1.bf16.xpose.msra.mxu0 0
        %2289 = vmatprep.subr.bf16.mxu0 0
        %2290 = vmatpush1.bf16.xpose.msra.mxu0 0
        %2291 = vmatprep.subr.bf16.mxu0 0
        %2292 = vmatpush1.bf16.xpose.msra.mxu0 0
        %2293 = vmatprep.subr.bf16.mxu0 0
        %2294 = vmatpush1.bf16.xpose.msra.mxu0 0
        %2295 = vmatprep.subr.bf16.mxu0 0
        %2296 = vmatpush1.bf16.xpose.msra.mxu0 0
        %2297 = vmatprep.subr.bf16.mxu0 0
        %2298 = vmatpush1.bf16.xpose.msra.mxu0 0
        %2299 = vmatprep.subr.bf16.mxu0 0
        %2300 = vmatpush1.bf16.xpose.msra.mxu0 0
        %2301 = vmatprep.subr.bf16.mxu0 0
        %2302 = vmatpush1.bf16.xpose.msra.mxu0 0
        %2303 = vmatprep.subr.bf16.mxu0 0
        %2304 = vmatpush1.bf16.xpose.msra.mxu0 0
        %2305 = vmatprep.subr.bf16.mxu0 0
        %2306 = vmatpush1.bf16.xpose.msra.mxu0 0
        %2307 = vmatprep.subr.bf16.mxu0 0
        %2308 = vmatpush1.bf16.xpose.msra.mxu0 0
        %2309 = vmatprep.mubr.bf16.mxu0 0
        %2310 = vmatmul.mubr.bf16.gmra.mrb[0].mxu0 %v2272
        %v2311 = vpop.f32.mrb[0].mxu0
        %v2312 = vadd.f32 0.0, %v2311
        %v2313 = vpop.f32.mrb[0].mxu0
        %v2314 = vpop.f32.mrb[0].mxu0
        %v2315 = vpop.f32.mrb[0].mxu0
        %2316 = vdwg.mxu0
        %v2317 = vsel %vm1215, %v2260, -inf
        %2318 = vmax.xlane.f32.xlu0 %v2317
        %v2319 = vpop.xlane.xlu0 %2318
        %v2320 = vsel %vm1215, %v2312, -inf
        %2321 = vmax.xlane.f32.xlu0 %v2320
        %v2322 = vpop.xlane.xlu0 %2321
        %v2323 = vsub.f32 %v2260, %v2319
        %v2324 = vsub.f32 %v2312, %v2322
        %v2325 = vmul.f32 %v2323, 1.442695
        %v2326 = vpow.pop %v2325
        %v2327 = vmul.f32 %v2324, 1.442695
        %v2328 = vpow.pop %v2327
        %v2329 = vsel %vm1215, %v2326, 0.0
        %2330 = vadd.xlane.f32.xlu0 %v2329
        %v2331 = vpop.xlane.xlu0 %2330
        %v2332 = vsel %vm1215, %v2328, 0.0
        %2333 = vadd.xlane.f32.xlu0 %v2332
        %v2334 = vpop.xlane.xlu0 %2333
        %v2335 = vrcp.pop %v2331
        %v2336 = vmul.f32 %v2326, %v2335
        %v2337 = vrcp.pop %v2334
        %v2338 = vmul.f32 %v2328, %v2337
        %v2339 = vpack.c.bf16 %v2336, %v2336
        %v2340 = vpack.c.bf16 %v2338, %v2338
        %2341 = vrot.lane.b32.xlu0 %v1120, 96
        %v2342 = vpop.permute.xlu0 %2341
        %v2343 = vrot.slane %v2342, 4
        %v2345 = vsel %vm1215, %v2339, 0
        %v2348 = vsel %vm1243, %v2343, 0
        %2350 = vmatprep.subr.bf16.mxu0 0
        %2351 = vmatpush1.bf16.msra.mxu0 %v2348
        %2352 = vmatprep.subr.bf16.mxu0 0
        %2353 = vmatpush1.bf16.msra.mxu0 0
        %2354 = vmatprep.subr.bf16.mxu0 0
        %2355 = vmatpush1.bf16.msra.mxu0 0
        %2356 = vmatprep.subr.bf16.mxu0 0
        %2357 = vmatpush1.bf16.msra.mxu0 0
        %2358 = vmatprep.subr.bf16.mxu0 0
        %2359 = vmatpush1.bf16.msra.mxu0 0
        %2360 = vmatprep.subr.bf16.mxu0 0
        %2361 = vmatpush1.bf16.msra.mxu0 0
        %2362 = vmatprep.subr.bf16.mxu0 0
        %2363 = vmatpush1.bf16.msra.mxu0 0
        %2364 = vmatprep.subr.bf16.mxu0 0
        %2365 = vmatpush1.bf16.msra.mxu0 0
        %2366 = vmatprep.subr.bf16.mxu0 0
        %2367 = vmatpush1.bf16.msra.mxu0 0
        %2368 = vmatprep.subr.bf16.mxu0 0
        %2369 = vmatpush1.bf16.msra.mxu0 0
        %2370 = vmatprep.subr.bf16.mxu0 0
        %2371 = vmatpush1.bf16.msra.mxu0 0
        %2372 = vmatprep.subr.bf16.mxu0 0
        %2373 = vmatpush1.bf16.msra.mxu0 0
        %2374 = vmatprep.subr.bf16.mxu0 0
        %2375 = vmatpush1.bf16.msra.mxu0 0
        %2376 = vmatprep.subr.bf16.mxu0 0
        %2377 = vmatpush1.bf16.msra.mxu0 0
        %2378 = vmatprep.subr.bf16.mxu0 0
        %2379 = vmatpush1.bf16.msra.mxu0 0
        %2380 = vmatprep.subr.bf16.mxu0 0
        %2381 = vmatpush1.bf16.msra.mxu0 0
        %2382 = vmatprep.mubr.bf16.mxu0 0
        %2383 = vmatmul.mubr.bf16.gmra.mrb[0].mxu0 %v2345
        %v2384 = vpop.f32.mrb[0].mxu0
        %v2385 = vadd.f32 0.0, %v2384
        %v2386 = vpop.f32.mrb[0].mxu0
        %v2387 = vpop.f32.mrb[0].mxu0
        %v2388 = vpop.f32.mrb[0].mxu0
        %2389 = vdwg.mxu0
        %2390 = vrot.lane.b32.xlu0 %v1121, 96
        %v2391 = vpop.permute.xlu0 %2390
        %v2392 = vrot.slane %v2391, 4
        %v2394 = vsel %vm1215, %v2340, 0
        %v2397 = vsel %vm1243, %v2392, 0
        %2399 = vmatprep.subr.bf16.mxu0 0
        %2400 = vmatpush1.bf16.msra.mxu0 %v2397
        %2401 = vmatprep.subr.bf16.mxu0 0
        %2402 = vmatpush1.bf16.msra.mxu0 0
        %2403 = vmatprep.subr.bf16.mxu0 0
        %2404 = vmatpush1.bf16.msra.mxu0 0
        %2405 = vmatprep.subr.bf16.mxu0 0
        %2406 = vmatpush1.bf16.msra.mxu0 0
        %2407 = vmatprep.subr.bf16.mxu0 0
        %2408 = vmatpush1.bf16.msra.mxu0 0
        %2409 = vmatprep.subr.bf16.mxu0 0
        %2410 = vmatpush1.bf16.msra.mxu0 0
        %2411 = vmatprep.subr.bf16.mxu0 0
        %2412 = vmatpush1.bf16.msra.mxu0 0
        %2413 = vmatprep.subr.bf16.mxu0 0
        %2414 = vmatpush1.bf16.msra.mxu0 0
        %2415 = vmatprep.subr.bf16.mxu0 0
        %2416 = vmatpush1.bf16.msra.mxu0 0
        %2417 = vmatprep.subr.bf16.mxu0 0
        %2418 = vmatpush1.bf16.msra.mxu0 0
        %2419 = vmatprep.subr.bf16.mxu0 0
        %2420 = vmatpush1.bf16.msra.mxu0 0
        %2421 = vmatprep.subr.bf16.mxu0 0
        %2422 = vmatpush1.bf16.msra.mxu0 0
        %2423 = vmatprep.subr.bf16.mxu0 0
        %2424 = vmatpush1.bf16.msra.mxu0 0
        %2425 = vmatprep.subr.bf16.mxu0 0
        %2426 = vmatpush1.bf16.msra.mxu0 0
        %2427 = vmatprep.subr.bf16.mxu0 0
        %2428 = vmatpush1.bf16.msra.mxu0 0
        %2429 = vmatprep.subr.bf16.mxu0 0
        %2430 = vmatpush1.bf16.msra.mxu0 0
        %2431 = vmatprep.mubr.bf16.mxu0 0
        %2432 = vmatmul.mubr.bf16.gmra.mrb[0].mxu0 %v2394
        %v2433 = vpop.f32.mrb[0].mxu0
        %v2434 = vadd.f32 0.0, %v2433
        %v2435 = vpop.f32.mrb[0].mxu0
        %v2436 = vpop.f32.mrb[0].mxu0
        %v2437 = vpop.f32.mrb[0].mxu0
        %2438 = vdwg.mxu0
        %2439 = vrot.lane.b32.xlu0 %v1100, 64
        %v2440 = vpop.permute.xlu0 %2439
        %v2441 = vrot.slane %v2440, 4
        %2442 = vrot.lane.b32.xlu0 %v1110, 64
        %v2443 = vpop.permute.xlu0 %2442
        %v2444 = vrot.slane %v2443, 4
        %v2446 = vsel %vm1122, %v2441, 0
        %v2449 = vsel %vm1122, %v2444, 0
        %2451 = vmatprep.subr.bf16.mxu0 0
        %2452 = vmatpush1.bf16.xpose.msra.mxu0 %v2449
        %2453 = vmatprep.subr.bf16.mxu0 0
        %2454 = vmatpush1.bf16.xpose.msra.mxu0 0
        %2455 = vmatprep.subr.bf16.mxu0 0
        %2456 = vmatpush1.bf16.xpose.msra.mxu0 0
        %2457 = vmatprep.subr.bf16.mxu0 0
        %2458 = vmatpush1.bf16.xpose.msra.mxu0 0
        %2459 = vmatprep.subr.bf16.mxu0 0
        %2460 = vmatpush1.bf16.xpose.msra.mxu0 0
        %2461 = vmatprep.subr.bf16.mxu0 0
        %2462 = vmatpush1.bf16.xpose.msra.mxu0 0
        %2463 = vmatprep.subr.bf16.mxu0 0
        %2464 = vmatpush1.bf16.xpose.msra.mxu0 0
        %2465 = vmatprep.subr.bf16.mxu0 0
        %2466 = vmatpush1.bf16.xpose.msra.mxu0 0
        %2467 = vmatprep.subr.bf16.mxu0 0
        %2468 = vmatpush1.bf16.xpose.msra.mxu0 0
        %2469 = vmatprep.subr.bf16.mxu0 0
        %2470 = vmatpush1.bf16.xpose.msra.mxu0 0
        %2471 = vmatprep.subr.bf16.mxu0 0
        %2472 = vmatpush1.bf16.xpose.msra.mxu0 0
        %2473 = vmatprep.subr.bf16.mxu0 0
        %2474 = vmatpush1.bf16.xpose.msra.mxu0 0
        %2475 = vmatprep.subr.bf16.mxu0 0
        %2476 = vmatpush1.bf16.xpose.msra.mxu0 0
        %2477 = vmatprep.subr.bf16.mxu0 0
        %2478 = vmatpush1.bf16.xpose.msra.mxu0 0
        %2479 = vmatprep.subr.bf16.mxu0 0
        %2480 = vmatpush1.bf16.xpose.msra.mxu0 0
        %2481 = vmatprep.subr.bf16.mxu0 0
        %2482 = vmatpush1.bf16.xpose.msra.mxu0 0
        %2483 = vmatprep.mubr.bf16.mxu0 0
        %2484 = vmatmul.mubr.bf16.gmra.mrb[0].mxu0 %v2446
        %v2485 = vpop.f32.mrb[0].mxu0
        %v2486 = vadd.f32 0.0, %v2485
        %v2487 = vpop.f32.mrb[0].mxu0
        %v2488 = vpop.f32.mrb[0].mxu0
        %v2489 = vpop.f32.mrb[0].mxu0
        %2490 = vdwg.mxu0
        %2491 = vrot.lane.b32.xlu0 %v1101, 64
        %v2492 = vpop.permute.xlu0 %2491
        %v2493 = vrot.slane %v2492, 4
        %2494 = vrot.lane.b32.xlu0 %v1111, 64
        %v2495 = vpop.permute.xlu0 %2494
        %v2496 = vrot.slane %v2495, 4
        %v2498 = vsel %vm1122, %v2493, 0
        %v2501 = vsel %vm1122, %v2496, 0
        %2503 = vmatprep.subr.bf16.mxu0 0
        %2504 = vmatpush1.bf16.xpose.msra.mxu0 %v2501
        %2505 = vmatprep.subr.bf16.mxu0 0
        %2506 = vmatpush1.bf16.xpose.msra.mxu0 0
        %2507 = vmatprep.subr.bf16.mxu0 0
        %2508 = vmatpush1.bf16.xpose.msra.mxu0 0
        %2509 = vmatprep.subr.bf16.mxu0 0
        %2510 = vmatpush1.bf16.xpose.msra.mxu0 0
        %2511 = vmatprep.subr.bf16.mxu0 0
        %2512 = vmatpush1.bf16.xpose.msra.mxu0 0
        %2513 = vmatprep.subr.bf16.mxu0 0
        %2514 = vmatpush1.bf16.xpose.msra.mxu0 0
        %2515 = vmatprep.subr.bf16.mxu0 0
        %2516 = vmatpush1.bf16.xpose.msra.mxu0 0
        %2517 = vmatprep.subr.bf16.mxu0 0
        %2518 = vmatpush1.bf16.xpose.msra.mxu0 0
        %2519 = vmatprep.subr.bf16.mxu0 0
        %2520 = vmatpush1.bf16.xpose.msra.mxu0 0
        %2521 = vmatprep.subr.bf16.mxu0 0
        %2522 = vmatpush1.bf16.xpose.msra.mxu0 0
        %2523 = vmatprep.subr.bf16.mxu0 0
        %2524 = vmatpush1.bf16.xpose.msra.mxu0 0
        %2525 = vmatprep.subr.bf16.mxu0 0
        %2526 = vmatpush1.bf16.xpose.msra.mxu0 0
        %2527 = vmatprep.subr.bf16.mxu0 0
        %2528 = vmatpush1.bf16.xpose.msra.mxu0 0
        %2529 = vmatprep.subr.bf16.mxu0 0
        %2530 = vmatpush1.bf16.xpose.msra.mxu0 0
        %2531 = vmatprep.subr.bf16.mxu0 0
        %2532 = vmatpush1.bf16.xpose.msra.mxu0 0
        %2533 = vmatprep.subr.bf16.mxu0 0
        %2534 = vmatpush1.bf16.xpose.msra.mxu0 0
        %2535 = vmatprep.mubr.bf16.mxu0 0
        %2536 = vmatmul.mubr.bf16.gmra.mrb[0].mxu0 %v2498
        %v2537 = vpop.f32.mrb[0].mxu0
        %v2538 = vadd.f32 0.0, %v2537
        %v2539 = vpop.f32.mrb[0].mxu0
        %v2540 = vpop.f32.mrb[0].mxu0
        %v2541 = vpop.f32.mrb[0].mxu0
        %2542 = vdwg.mxu0
        %v2543 = vsel %vm1215, %v2486, -inf
        %2544 = vmax.xlane.f32.xlu0 %v2543
        %v2545 = vpop.xlane.xlu0 %2544
        %v2546 = vsel %vm1215, %v2538, -inf
        %2547 = vmax.xlane.f32.xlu0 %v2546
        %v2548 = vpop.xlane.xlu0 %2547
        %v2549 = vsub.f32 %v2486, %v2545
        %v2550 = vsub.f32 %v2538, %v2548
        %v2551 = vmul.f32 %v2549, 1.442695
        %v2552 = vpow.pop %v2551
        %v2553 = vmul.f32 %v2550, 1.442695
        %v2554 = vpow.pop %v2553
        %v2555 = vsel %vm1215, %v2552, 0.0
        %2556 = vadd.xlane.f32.xlu0 %v2555
        %v2557 = vpop.xlane.xlu0 %2556
        %v2558 = vsel %vm1215, %v2554, 0.0
        %2559 = vadd.xlane.f32.xlu0 %v2558
        %v2560 = vpop.xlane.xlu0 %2559
        %v2561 = vrcp.pop %v2557
        %v2562 = vmul.f32 %v2552, %v2561
        %v2563 = vrcp.pop %v2560
        %v2564 = vmul.f32 %v2554, %v2563
        %v2565 = vpack.c.bf16 %v2562, %v2562
        %v2566 = vpack.c.bf16 %v2564, %v2564
        %2567 = vrot.lane.b32.xlu0 %v1120, 64
        %v2568 = vpop.permute.xlu0 %2567
        %v2569 = vrot.slane %v2568, 4
        %v2571 = vsel %vm1215, %v2565, 0
        %v2574 = vsel %vm1243, %v2569, 0
        %2576 = vmatprep.subr.bf16.mxu0 0
        %2577 = vmatpush1.bf16.msra.mxu0 %v2574
        %2578 = vmatprep.subr.bf16.mxu0 0
        %2579 = vmatpush1.bf16.msra.mxu0 0
        %2580 = vmatprep.subr.bf16.mxu0 0
        %2581 = vmatpush1.bf16.msra.mxu0 0
        %2582 = vmatprep.subr.bf16.mxu0 0
        %2583 = vmatpush1.bf16.msra.mxu0 0
        %2584 = vmatprep.subr.bf16.mxu0 0
        %2585 = vmatpush1.bf16.msra.mxu0 0
        %2586 = vmatprep.subr.bf16.mxu0 0
        %2587 = vmatpush1.bf16.msra.mxu0 0
        %2588 = vmatprep.subr.bf16.mxu0 0
        %2589 = vmatpush1.bf16.msra.mxu0 0
        %2590 = vmatprep.subr.bf16.mxu0 0
        %2591 = vmatpush1.bf16.msra.mxu0 0
        %2592 = vmatprep.subr.bf16.mxu0 0
        %2593 = vmatpush1.bf16.msra.mxu0 0
        %2594 = vmatprep.subr.bf16.mxu0 0
        %2595 = vmatpush1.bf16.msra.mxu0 0
        %2596 = vmatprep.subr.bf16.mxu0 0
        %2597 = vmatpush1.bf16.msra.mxu0 0
        %2598 = vmatprep.subr.bf16.mxu0 0
        %2599 = vmatpush1.bf16.msra.mxu0 0
        %2600 = vmatprep.subr.bf16.mxu0 0
        %2601 = vmatpush1.bf16.msra.mxu0 0
        %2602 = vmatprep.subr.bf16.mxu0 0
        %2603 = vmatpush1.bf16.msra.mxu0 0
        %2604 = vmatprep.subr.bf16.mxu0 0
        %2605 = vmatpush1.bf16.msra.mxu0 0
        %2606 = vmatprep.subr.bf16.mxu0 0
        %2607 = vmatpush1.bf16.msra.mxu0 0
        %2608 = vmatprep.mubr.bf16.mxu0 0
        %2609 = vmatmul.mubr.bf16.gmra.mrb[0].mxu0 %v2571
        %v2610 = vpop.f32.mrb[0].mxu0
        %v2611 = vadd.f32 0.0, %v2610
        %v2612 = vpop.f32.mrb[0].mxu0
        %v2613 = vpop.f32.mrb[0].mxu0
        %v2614 = vpop.f32.mrb[0].mxu0
        %2615 = vdwg.mxu0
        %2616 = vrot.lane.b32.xlu0 %v1121, 64
        %v2617 = vpop.permute.xlu0 %2616
        %v2618 = vrot.slane %v2617, 4
        %v2620 = vsel %vm1215, %v2566, 0
        %v2623 = vsel %vm1243, %v2618, 0
        %2625 = vmatprep.subr.bf16.mxu0 0
        %2626 = vmatpush1.bf16.msra.mxu0 %v2623
        %2627 = vmatprep.subr.bf16.mxu0 0
        %2628 = vmatpush1.bf16.msra.mxu0 0
        %2629 = vmatprep.subr.bf16.mxu0 0
        %2630 = vmatpush1.bf16.msra.mxu0 0
        %2631 = vmatprep.subr.bf16.mxu0 0
        %2632 = vmatpush1.bf16.msra.mxu0 0
        %2633 = vmatprep.subr.bf16.mxu0 0
        %2634 = vmatpush1.bf16.msra.mxu0 0
        %2635 = vmatprep.subr.bf16.mxu0 0
        %2636 = vmatpush1.bf16.msra.mxu0 0
        %2637 = vmatprep.subr.bf16.mxu0 0
        %2638 = vmatpush1.bf16.msra.mxu0 0
        %2639 = vmatprep.subr.bf16.mxu0 0
        %2640 = vmatpush1.bf16.msra.mxu0 0
        %2641 = vmatprep.subr.bf16.mxu0 0
        %2642 = vmatpush1.bf16.msra.mxu0 0
        %2643 = vmatprep.subr.bf16.mxu0 0
        %2644 = vmatpush1.bf16.msra.mxu0 0
        %2645 = vmatprep.subr.bf16.mxu0 0
        %2646 = vmatpush1.bf16.msra.mxu0 0
        %2647 = vmatprep.subr.bf16.mxu0 0
        %2648 = vmatpush1.bf16.msra.mxu0 0
        %2649 = vmatprep.subr.bf16.mxu0 0
        %2650 = vmatpush1.bf16.msra.mxu0 0
        %2651 = vmatprep.subr.bf16.mxu0 0
        %2652 = vmatpush1.bf16.msra.mxu0 0
        %2653 = vmatprep.subr.bf16.mxu0 0
        %2654 = vmatpush1.bf16.msra.mxu0 0
        %2655 = vmatprep.subr.bf16.mxu0 0
        %2656 = vmatpush1.bf16.msra.mxu0 0
        %2657 = vmatprep.mubr.bf16.mxu0 0
        %2658 = vmatmul.mubr.bf16.gmra.mrb[0].mxu0 %v2620
        %v2659 = vpop.f32.mrb[0].mxu0
        %v2660 = vadd.f32 0.0, %v2659
        %v2661 = vpop.f32.mrb[0].mxu0
        %v2662 = vpop.f32.mrb[0].mxu0
        %v2663 = vpop.f32.mrb[0].mxu0
        %2664 = vdwg.mxu0
        %2665 = vrot.lane.b32.xlu0 %v1100, 32
        %v2666 = vpop.permute.xlu0 %2665
        %v2667 = vrot.slane %v2666, 4
        %2668 = vrot.lane.b32.xlu0 %v1110, 32
        %v2669 = vpop.permute.xlu0 %2668
        %v2670 = vrot.slane %v2669, 4
        %v2672 = vsel %vm1122, %v2667, 0
        %v2675 = vsel %vm1122, %v2670, 0
        %2677 = vmatprep.subr.bf16.mxu0 0
        %2678 = vmatpush1.bf16.xpose.msra.mxu0 %v2675
        %2679 = vmatprep.subr.bf16.mxu0 0
        %2680 = vmatpush1.bf16.xpose.msra.mxu0 0
        %2681 = vmatprep.subr.bf16.mxu0 0
        %2682 = vmatpush1.bf16.xpose.msra.mxu0 0
        %2683 = vmatprep.subr.bf16.mxu0 0
        %2684 = vmatpush1.bf16.xpose.msra.mxu0 0
        %2685 = vmatprep.subr.bf16.mxu0 0
        %2686 = vmatpush1.bf16.xpose.msra.mxu0 0
        %2687 = vmatprep.subr.bf16.mxu0 0
        %2688 = vmatpush1.bf16.xpose.msra.mxu0 0
        %2689 = vmatprep.subr.bf16.mxu0 0
        %2690 = vmatpush1.bf16.xpose.msra.mxu0 0
        %2691 = vmatprep.subr.bf16.mxu0 0
        %2692 = vmatpush1.bf16.xpose.msra.mxu0 0
        %2693 = vmatprep.subr.bf16.mxu0 0
        %2694 = vmatpush1.bf16.xpose.msra.mxu0 0
        %2695 = vmatprep.subr.bf16.mxu0 0
        %2696 = vmatpush1.bf16.xpose.msra.mxu0 0
        %2697 = vmatprep.subr.bf16.mxu0 0
        %2698 = vmatpush1.bf16.xpose.msra.mxu0 0
        %2699 = vmatprep.subr.bf16.mxu0 0
        %2700 = vmatpush1.bf16.xpose.msra.mxu0 0
        %2701 = vmatprep.subr.bf16.mxu0 0
        %2702 = vmatpush1.bf16.xpose.msra.mxu0 0
        %2703 = vmatprep.subr.bf16.mxu0 0
        %2704 = vmatpush1.bf16.xpose.msra.mxu0 0
        %2705 = vmatprep.subr.bf16.mxu0 0
        %2706 = vmatpush1.bf16.xpose.msra.mxu0 0
        %2707 = vmatprep.subr.bf16.mxu0 0
        %2708 = vmatpush1.bf16.xpose.msra.mxu0 0
        %2709 = vmatprep.mubr.bf16.mxu0 0
        %2710 = vmatmul.mubr.bf16.gmra.mrb[0].mxu0 %v2672
        %v2711 = vpop.f32.mrb[0].mxu0
        %v2712 = vadd.f32 0.0, %v2711
        %v2713 = vpop.f32.mrb[0].mxu0
        %v2714 = vpop.f32.mrb[0].mxu0
        %v2715 = vpop.f32.mrb[0].mxu0
        %2716 = vdwg.mxu0
        %2717 = vrot.lane.b32.xlu0 %v1101, 32
        %v2718 = vpop.permute.xlu0 %2717
        %v2719 = vrot.slane %v2718, 4
        %2720 = vrot.lane.b32.xlu0 %v1111, 32
        %v2721 = vpop.permute.xlu0 %2720
        %v2722 = vrot.slane %v2721, 4
        %v2724 = vsel %vm1122, %v2719, 0
        %v2727 = vsel %vm1122, %v2722, 0
        %2729 = vmatprep.subr.bf16.mxu0 0
        %2730 = vmatpush1.bf16.xpose.msra.mxu0 %v2727
        %2731 = vmatprep.subr.bf16.mxu0 0
        %2732 = vmatpush1.bf16.xpose.msra.mxu0 0
        %2733 = vmatprep.subr.bf16.mxu0 0
        %2734 = vmatpush1.bf16.xpose.msra.mxu0 0
        %2735 = vmatprep.subr.bf16.mxu0 0
        %2736 = vmatpush1.bf16.xpose.msra.mxu0 0
        %2737 = vmatprep.subr.bf16.mxu0 0
        %2738 = vmatpush1.bf16.xpose.msra.mxu0 0
        %2739 = vmatprep.subr.bf16.mxu0 0
        %2740 = vmatpush1.bf16.xpose.msra.mxu0 0
        %2741 = vmatprep.subr.bf16.mxu0 0
        %2742 = vmatpush1.bf16.xpose.msra.mxu0 0
        %2743 = vmatprep.subr.bf16.mxu0 0
        %2744 = vmatpush1.bf16.xpose.msra.mxu0 0
        %2745 = vmatprep.subr.bf16.mxu0 0
        %2746 = vmatpush1.bf16.xpose.msra.mxu0 0
        %2747 = vmatprep.subr.bf16.mxu0 0
        %2748 = vmatpush1.bf16.xpose.msra.mxu0 0
        %2749 = vmatprep.subr.bf16.mxu0 0
        %2750 = vmatpush1.bf16.xpose.msra.mxu0 0
        %2751 = vmatprep.subr.bf16.mxu0 0
        %2752 = vmatpush1.bf16.xpose.msra.mxu0 0
        %2753 = vmatprep.subr.bf16.mxu0 0
        %2754 = vmatpush1.bf16.xpose.msra.mxu0 0
        %2755 = vmatprep.subr.bf16.mxu0 0
        %2756 = vmatpush1.bf16.xpose.msra.mxu0 0
        %2757 = vmatprep.subr.bf16.mxu0 0
        %2758 = vmatpush1.bf16.xpose.msra.mxu0 0
        %2759 = vmatprep.subr.bf16.mxu0 0
        %2760 = vmatpush1.bf16.xpose.msra.mxu0 0
        %2761 = vmatprep.mubr.bf16.mxu0 0
        %2762 = vmatmul.mubr.bf16.gmra.mrb[0].mxu0 %v2724
        %v2763 = vpop.f32.mrb[0].mxu0
        %v2764 = vadd.f32 0.0, %v2763
        %v2765 = vpop.f32.mrb[0].mxu0
        %v2766 = vpop.f32.mrb[0].mxu0
        %v2767 = vpop.f32.mrb[0].mxu0
        %2768 = vdwg.mxu0
        %v2769 = vsel %vm1215, %v2712, -inf
        %2770 = vmax.xlane.f32.xlu0 %v2769
        %v2771 = vpop.xlane.xlu0 %2770
        %v2772 = vsel %vm1215, %v2764, -inf
        %2773 = vmax.xlane.f32.xlu0 %v2772
        %v2774 = vpop.xlane.xlu0 %2773
        %v2775 = vsub.f32 %v2712, %v2771
        %v2776 = vsub.f32 %v2764, %v2774
        %v2777 = vmul.f32 %v2775, 1.442695
        %v2778 = vpow.pop %v2777
        %v2779 = vmul.f32 %v2776, 1.442695
        %v2780 = vpow.pop %v2779
        %v2781 = vsel %vm1215, %v2778, 0.0
        %2782 = vadd.xlane.f32.xlu0 %v2781
        %v2783 = vpop.xlane.xlu0 %2782
        %v2784 = vsel %vm1215, %v2780, 0.0
        %2785 = vadd.xlane.f32.xlu0 %v2784
        %v2786 = vpop.xlane.xlu0 %2785
        %v2787 = vrcp.pop %v2783
        %v2788 = vmul.f32 %v2778, %v2787
        %v2789 = vrcp.pop %v2786
        %v2790 = vmul.f32 %v2780, %v2789
        %v2791 = vpack.c.bf16 %v2788, %v2788
        %v2792 = vpack.c.bf16 %v2790, %v2790
        %2793 = vrot.lane.b32.xlu0 %v1120, 32
        %v2794 = vpop.permute.xlu0 %2793
        %v2795 = vrot.slane %v2794, 4
        %v2797 = vsel %vm1215, %v2791, 0
        %v2800 = vsel %vm1243, %v2795, 0
        %2802 = vmatprep.subr.bf16.mxu0 0
        %2803 = vmatpush1.bf16.msra.mxu0 %v2800
        %2804 = vmatprep.subr.bf16.mxu0 0
        %2805 = vmatpush1.bf16.msra.mxu0 0
        %2806 = vmatprep.subr.bf16.mxu0 0
        %2807 = vmatpush1.bf16.msra.mxu0 0
        %2808 = vmatprep.subr.bf16.mxu0 0
        %2809 = vmatpush1.bf16.msra.mxu0 0
        %2810 = vmatprep.subr.bf16.mxu0 0
        %2811 = vmatpush1.bf16.msra.mxu0 0
        %2812 = vmatprep.subr.bf16.mxu0 0
        %2813 = vmatpush1.bf16.msra.mxu0 0
        %2814 = vmatprep.subr.bf16.mxu0 0
        %2815 = vmatpush1.bf16.msra.mxu0 0
        %2816 = vmatprep.subr.bf16.mxu0 0
        %2817 = vmatpush1.bf16.msra.mxu0 0
        %2818 = vmatprep.subr.bf16.mxu0 0
        %2819 = vmatpush1.bf16.msra.mxu0 0
        %2820 = vmatprep.subr.bf16.mxu0 0
        %2821 = vmatpush1.bf16.msra.mxu0 0
        %2822 = vmatprep.subr.bf16.mxu0 0
        %2823 = vmatpush1.bf16.msra.mxu0 0
        %2824 = vmatprep.subr.bf16.mxu0 0
        %2825 = vmatpush1.bf16.msra.mxu0 0
        %2826 = vmatprep.subr.bf16.mxu0 0
        %2827 = vmatpush1.bf16.msra.mxu0 0
        %2828 = vmatprep.subr.bf16.mxu0 0
        %2829 = vmatpush1.bf16.msra.mxu0 0
        %2830 = vmatprep.subr.bf16.mxu0 0
        %2831 = vmatpush1.bf16.msra.mxu0 0
        %2832 = vmatprep.subr.bf16.mxu0 0
        %2833 = vmatpush1.bf16.msra.mxu0 0
        %2834 = vmatprep.mubr.bf16.mxu0 0
        %2835 = vmatmul.mubr.bf16.gmra.mrb[0].mxu0 %v2797
        %v2836 = vpop.f32.mrb[0].mxu0
        %v2837 = vadd.f32 0.0, %v2836
        %v2838 = vpop.f32.mrb[0].mxu0
        %v2839 = vpop.f32.mrb[0].mxu0
        %v2840 = vpop.f32.mrb[0].mxu0
        %2841 = vdwg.mxu0
        %2842 = vrot.lane.b32.xlu0 %v1121, 32
        %v2843 = vpop.permute.xlu0 %2842
        %v2844 = vrot.slane %v2843, 4
        %v2846 = vsel %vm1215, %v2792, 0
        %v2849 = vsel %vm1243, %v2844, 0
        %2851 = vmatprep.subr.bf16.mxu0 0
        %2852 = vmatpush1.bf16.msra.mxu0 %v2849
        %2853 = vmatprep.subr.bf16.mxu0 0
        %2854 = vmatpush1.bf16.msra.mxu0 0
        %2855 = vmatprep.subr.bf16.mxu0 0
        %2856 = vmatpush1.bf16.msra.mxu0 0
        %2857 = vmatprep.subr.bf16.mxu0 0
        %2858 = vmatpush1.bf16.msra.mxu0 0
        %2859 = vmatprep.subr.bf16.mxu0 0
        %2860 = vmatpush1.bf16.msra.mxu0 0
        %2861 = vmatprep.subr.bf16.mxu0 0
        %2862 = vmatpush1.bf16.msra.mxu0 0
        %2863 = vmatprep.subr.bf16.mxu0 0
        %2864 = vmatpush1.bf16.msra.mxu0 0
        %2865 = vmatprep.subr.bf16.mxu0 0
        %2866 = vmatpush1.bf16.msra.mxu0 0
        %2867 = vmatprep.subr.bf16.mxu0 0
        %2868 = vmatpush1.bf16.msra.mxu0 0
        %2869 = vmatprep.subr.bf16.mxu0 0
        %2870 = vmatpush1.bf16.msra.mxu0 0
        %2871 = vmatprep.subr.bf16.mxu0 0
        %2872 = vmatpush1.bf16.msra.mxu0 0
        %2873 = vmatprep.subr.bf16.mxu0 0
        %2874 = vmatpush1.bf16.msra.mxu0 0
        %2875 = vmatprep.subr.bf16.mxu0 0
        %2876 = vmatpush1.bf16.msra.mxu0 0
        %2877 = vmatprep.subr.bf16.mxu0 0
        %2878 = vmatpush1.bf16.msra.mxu0 0
        %2879 = vmatprep.subr.bf16.mxu0 0
        %2880 = vmatpush1.bf16.msra.mxu0 0
        %2881 = vmatprep.subr.bf16.mxu0 0
        %2882 = vmatpush1.bf16.msra.mxu0 0
        %2883 = vmatprep.mubr.bf16.mxu0 0
        %2884 = vmatmul.mubr.bf16.gmra.mrb[0].mxu0 %v2846
        %v2885 = vpop.f32.mrb[0].mxu0
        %v2886 = vadd.f32 0.0, %v2885
        %v2887 = vpop.f32.mrb[0].mxu0
        %v2888 = vpop.f32.mrb[0].mxu0
        %v2889 = vpop.f32.mrb[0].mxu0
        %2890 = vdwg.mxu0
        %2893 = vrot.lane.b32.xlu0 %v1505, 32
        %v2894 = vpop.permute.xlu0 %2893
        %2895 = vrot.lane.b32.xlu0 %v1554, 32
        %v2896 = vpop.permute.xlu0 %2895
        %2901 = vrot.lane.b32.xlu0 %v1726, 64
        %v2902 = vpop.permute.xlu0 %2901
        %2903 = vrot.lane.b32.xlu0 %v1774, 64
        %v2904 = vpop.permute.xlu0 %2903
        %2909 = vrot.lane.b32.xlu0 %v1946, 96
        %v2910 = vpop.permute.xlu0 %2909
        %2911 = vrot.lane.b32.xlu0 %v1994, 96
        %v2912 = vpop.permute.xlu0 %2911
        %2917 = vrot.lane.b32.xlu0 %v2385, 32
        %v2918 = vpop.permute.xlu0 %2917
        %2919 = vrot.lane.b32.xlu0 %v2434, 32
        %v2920 = vpop.permute.xlu0 %2919
        %2925 = vrot.lane.b32.xlu0 %v2611, 64
        %v2926 = vpop.permute.xlu0 %2925
        %2927 = vrot.lane.b32.xlu0 %v2660, 64
        %v2928 = vpop.permute.xlu0 %2927
        %2933 = vrot.lane.b32.xlu0 %v2837, 96
        %v2934 = vpop.permute.xlu0 %2933
        %2935 = vrot.lane.b32.xlu0 %v2886, 96
        %v2936 = vpop.permute.xlu0 %2935
        %v2939 = vsel %vm1122, %v1282, %v2894
        %v2940 = vsel %vm1122, %v1328, %v2896
        %vm2941 = vcmask 523264
        %v2942 = vsel %vm2941, %v2939, %v2902
        %v2943 = vsel %vm2941, %v2940, %v2904
        %vm2944 = vcmask 785408
        %v2945 = vsel %vm2944, %v2942, %v2910
        %v2946 = vsel %vm2944, %v2943, %v2912
        %v2947 = vsel %vm1122, %v2161, %v2918
        %v2948 = vsel %vm1122, %v2208, %v2920
        %v2949 = vsel %vm2941, %v2947, %v2926
        %v2950 = vsel %vm2941, %v2948, %v2928
        %v2951 = vsel %vm2944, %v2949, %v2934
        %v2952 = vsel %vm2944, %v2950, %v2936
        %v2953 = vpack.c.bf16 %v2946, %v2945
        %v2954 = vpack.c.bf16 %v2952, %v2951
        %v2955 = vld [vmem:[%s270 + $0x18] sm:$0xff]
        %v2956 = vld [vmem:[%s270 + $0x78] sm:$0xff]
        %v2957 = vld [vmem:[%s270 + $0xd8] sm:$0xff]
        %v2958 = vld [vmem:[%s270 + $0x138] sm:$0xff]
        %v2959 = vld [vmem:[%s270 + $0x198] sm:$0xff]
        %v2960 = vld [vmem:[%s270 + $0x1f8] sm:$0xff]
        %v2961 = vld [vmem:[%s270 + $0x258] sm:$0xff]
        %v2962 = vld [vmem:[%s270 + $0x2b8] sm:$0xff]
        %v2963 = vld [vmem:[%s270 + $0x318] sm:$0xff]
        %v2964 = vld [vmem:[%s270 + $0x378] sm:$0xff]
        %v2965 = vld [vmem:[%s270 + $0x3d8] sm:$0xff]
        %v2966 = vld [vmem:[%s270 + $0x438] sm:$0xff]
        %v2967 = vld [vmem:[%s270 + $0x498] sm:$0xff]
        %v2968 = vld [vmem:[%s270 + $0x4f8] sm:$0xff]
        %v2969 = vld [vmem:[%s270 + $0x558] sm:$0xff]
        %v2970 = vld [vmem:[%s270 + $0x5b8] sm:$0xff]
        %v2971 = vld [vmem:[%s270 + $0x618] sm:$0xff]
        %v2972 = vld [vmem:[%s270 + $0x678] sm:$0xff]
        %v2973 = vld [vmem:[%s270 + $0x6d8] sm:$0xff]
        %v2974 = vld [vmem:[%s270 + $0x738] sm:$0xff]
        %v2975 = vld [vmem:[%s270 + $0x798] sm:$0xff]
        %v2976 = vld [vmem:[%s270 + $0x7f8] sm:$0xff]
        %v2977 = vld [vmem:[%s270 + $0x858] sm:$0xff]
        %v2978 = vld [vmem:[%s270 + $0x8b8] sm:$0xff]
        %v2979 = vld [vmem:[%s270 + $0x918] sm:$0xff]
        %v2980 = vld [vmem:[%s270 + $0x978] sm:$0xff]
        %v2981 = vld [vmem:[%s270 + $0x9d8] sm:$0xff]
        %v2982 = vld [vmem:[%s270 + $0xa38] sm:$0xff]
        %v2983 = vld [vmem:[%s270 + $0xa98] sm:$0xff]
        %v2984 = vld [vmem:[%s270 + $0xaf8] sm:$0xff]
        %v2985 = vld [vmem:[%s270 + $0xb58] sm:$0xff]
        %v2986 = vld [vmem:[%s270 + $0xbb8] sm:$0xff]
        %v2987 = vld [vmem:[%s288 + $0x6] sm:$0x3]
        %v2989 = vlaneseq
        %v2990 = vshrl.u32 %v2989, 7
        %v2991 = vsub.s32 0, %v2990
        %v2992 = vrot.slane %v2987, %v2991
        %v2993 = vlaneseq
        %v2994 = vshrl.u32 %v2993, 7
        %v2995 = vsub.s32 1, %v2994
        %v2996 = vrot.slane %v2987, %v2995
        %v3031 = vunpack.c.l.b16 %v2955
        %v3032 = vunpack.c.h.b16 %v2955
        %v3033 = vunpack.c.l.b16 %v2956
        %v3034 = vunpack.c.h.b16 %v2956
        %v3035 = vunpack.c.l.b16 %v2957
        %v3036 = vunpack.c.h.b16 %v2957
        %v3037 = vunpack.c.l.b16 %v2958
        %v3038 = vunpack.c.h.b16 %v2958
        %v3039 = vunpack.c.l.b16 %v2959
        %v3040 = vunpack.c.h.b16 %v2959
        %v3041 = vunpack.c.l.b16 %v2960
        %v3042 = vunpack.c.h.b16 %v2960
        %v3043 = vunpack.c.l.b16 %v2961
        %v3044 = vunpack.c.h.b16 %v2961
        %v3045 = vunpack.c.l.b16 %v2962
        %v3046 = vunpack.c.h.b16 %v2962
        %v3047 = vunpack.c.l.b16 %v2963
        %v3048 = vunpack.c.h.b16 %v2963
        %v3049 = vunpack.c.l.b16 %v2964
        %v3050 = vunpack.c.h.b16 %v2964
        %v3051 = vunpack.c.l.b16 %v2965
        %v3052 = vunpack.c.h.b16 %v2965
        %v3053 = vunpack.c.l.b16 %v2966
        %v3054 = vunpack.c.h.b16 %v2966
        %v3055 = vunpack.c.l.b16 %v2967
        %v3056 = vunpack.c.h.b16 %v2967
        %v3057 = vunpack.c.l.b16 %v2968
        %v3058 = vunpack.c.h.b16 %v2968
        %v3059 = vunpack.c.l.b16 %v2969
        %v3060 = vunpack.c.h.b16 %v2969
        %v3061 = vunpack.c.l.b16 %v2970
        %v3062 = vunpack.c.h.b16 %v2970
        %v3063 = vunpack.c.l.b16 %v2971
        %v3064 = vunpack.c.h.b16 %v2971
        %v3065 = vunpack.c.l.b16 %v2972
        %v3066 = vunpack.c.h.b16 %v2972
        %v3067 = vunpack.c.l.b16 %v2973
        %v3068 = vunpack.c.h.b16 %v2973
        %v3069 = vunpack.c.l.b16 %v2974
        %v3070 = vunpack.c.h.b16 %v2974
        %v3071 = vunpack.c.l.b16 %v2975
        %v3072 = vunpack.c.h.b16 %v2975
        %v3073 = vunpack.c.l.b16 %v2976
        %v3074 = vunpack.c.h.b16 %v2976
        %v3075 = vunpack.c.l.b16 %v2977
        %v3076 = vunpack.c.h.b16 %v2977
        %v3077 = vunpack.c.l.b16 %v2978
        %v3078 = vunpack.c.h.b16 %v2978
        %v3079 = vunpack.c.l.b16 %v2979
        %v3080 = vunpack.c.h.b16 %v2979
        %v3081 = vunpack.c.l.b16 %v2980
        %v3082 = vunpack.c.h.b16 %v2980
        %v3083 = vunpack.c.l.b16 %v2981
        %v3084 = vunpack.c.h.b16 %v2981
        %v3085 = vunpack.c.l.b16 %v2982
        %v3086 = vunpack.c.h.b16 %v2982
        %v3087 = vunpack.c.l.b16 %v2983
        %v3088 = vunpack.c.h.b16 %v2983
        %v3089 = vunpack.c.l.b16 %v2984
        %v3090 = vunpack.c.h.b16 %v2984
        %v3091 = vunpack.c.l.b16 %v2985
        %v3092 = vunpack.c.h.b16 %v2985
        %v3093 = vunpack.c.l.b16 %v2986
        %v3094 = vunpack.c.h.b16 %v2986
        %v3095 = vpack.c.b16 %v3033, %v3031
        %v3096 = vpack.c.b16 %v3034, %v3032
        %v3097 = vpack.c.b16 %v3037, %v3035
        %v3098 = vpack.c.b16 %v3038, %v3036
        %v3099 = vpack.c.b16 %v3041, %v3039
        %v3100 = vpack.c.b16 %v3042, %v3040
        %v3101 = vpack.c.b16 %v3045, %v3043
        %v3102 = vpack.c.b16 %v3046, %v3044
        %v3103 = vpack.c.b16 %v3049, %v3047
        %v3104 = vpack.c.b16 %v3050, %v3048
        %v3105 = vpack.c.b16 %v3053, %v3051
        %v3106 = vpack.c.b16 %v3054, %v3052
        %v3107 = vpack.c.b16 %v3057, %v3055
        %v3108 = vpack.c.b16 %v3058, %v3056
        %v3109 = vpack.c.b16 %v3061, %v3059
        %v3110 = vpack.c.b16 %v3062, %v3060
        %v3111 = vpack.c.b16 %v3065, %v3063
        %v3112 = vpack.c.b16 %v3066, %v3064
        %v3113 = vpack.c.b16 %v3069, %v3067
        %v3114 = vpack.c.b16 %v3070, %v3068
        %v3115 = vpack.c.b16 %v3073, %v3071
        %v3116 = vpack.c.b16 %v3074, %v3072
        %v3117 = vpack.c.b16 %v3077, %v3075
        %v3118 = vpack.c.b16 %v3078, %v3076
        %v3119 = vpack.c.b16 %v3081, %v3079
        %v3120 = vpack.c.b16 %v3082, %v3080
        %v3121 = vpack.c.b16 %v3085, %v3083
        %v3122 = vpack.c.b16 %v3086, %v3084
        %v3123 = vpack.c.b16 %v3089, %v3087
        %v3124 = vpack.c.b16 %v3090, %v3088
        %v3125 = vpack.c.b16 %v3093, %v3091
        %v3126 = vpack.c.b16 %v3094, %v3092
        %3159 = vmatprep.subr.bf16.mxu0 %v3096
        %3160 = vmatpush1.bf16.msra.mxu0 %v3095
        %3161 = vmatprep.subr.bf16.mxu0 %v3098
        %3162 = vmatpush1.bf16.msra.mxu0 %v3097
        %3163 = vmatprep.subr.bf16.mxu0 %v3100
        %3164 = vmatpush1.bf16.msra.mxu0 %v3099
        %3165 = vmatprep.subr.bf16.mxu0 %v3102
        %3166 = vmatpush1.bf16.msra.mxu0 %v3101
        %3167 = vmatprep.subr.bf16.mxu0 %v3104
        %3168 = vmatpush1.bf16.msra.mxu0 %v3103
        %3169 = vmatprep.subr.bf16.mxu0 %v3106
        %3170 = vmatpush1.bf16.msra.mxu0 %v3105
        %3171 = vmatprep.subr.bf16.mxu0 %v3108
        %3172 = vmatpush1.bf16.msra.mxu0 %v3107
        %3173 = vmatprep.subr.bf16.mxu0 %v3110
        %3174 = vmatpush1.bf16.msra.mxu0 %v3109
        %3175 = vmatprep.subr.bf16.mxu0 %v3112
        %3176 = vmatpush1.bf16.msra.mxu0 %v3111
        %3177 = vmatprep.subr.bf16.mxu0 %v3114
        %3178 = vmatpush1.bf16.msra.mxu0 %v3113
        %3179 = vmatprep.subr.bf16.mxu0 %v3116
        %3180 = vmatpush1.bf16.msra.mxu0 %v3115
        %3181 = vmatprep.subr.bf16.mxu0 %v3118
        %3182 = vmatpush1.bf16.msra.mxu0 %v3117
        %3183 = vmatprep.subr.bf16.mxu0 %v3120
        %3184 = vmatpush1.bf16.msra.mxu0 %v3119
        %3185 = vmatprep.subr.bf16.mxu0 %v3122
        %3186 = vmatpush1.bf16.msra.mxu0 %v3121
        %3187 = vmatprep.subr.bf16.mxu0 %v3124
        %3188 = vmatpush1.bf16.msra.mxu0 %v3123
        %3189 = vmatprep.subr.bf16.mxu0 %v3126
        %3190 = vmatpush1.bf16.msra.mxu0 %v3125
        %3191 = vmatprep.mubr.bf16.mxu0 %v2954
        %3192 = vmatmul.mubr.bf16.gmra.mrb[0].mxu0 %v2953
        %v3193 = vpop.f32.mrb[0].mxu0
        %v3194 = vadd.f32 %v2992, %v3193
        %v3195 = vpop.f32.mrb[0].mxu0
        %v3196 = vadd.f32 %v2996, %v3195
        %v3197 = vpop.f32.mrb[0].mxu0
        %v3198 = vadd.f32 %v2992, %v3197
        %v3199 = vpop.f32.mrb[0].mxu0
        %v3200 = vadd.f32 %v2996, %v3199
        %3201 = vdwg.mxu0
        %v3202 = vadd.f32 %v345, %v3194
        %v3203 = vadd.f32 %v346, %v3196
        %v3204 = vadd.f32 %v347, %v3198
        %v3205 = vadd.f32 %v348, %v3200
        %v3206 = vld [vmem:[%s288 + $0x8] sm:$0x3]
        %v3207 = vld [vmem:[%s288 + $0xa] sm:$0x3]
        %v3208 = vadd.f32 %v3202, %v3203
        %3209 = vadd.xlane.f32.xlu0 %v3208
        %v3210 = vpop.xlane.xlu0 %3209
        %v3211 = vadd.f32 %v3204, %v3205
        %3212 = vadd.xlane.f32.xlu0 %v3211
        %v3213 = vpop.xlane.xlu0 %3212
        %v3214 = vrcp.pop 256.0
        %v3215 = vmul.f32 %v3210, %v3214
        %v3216 = vmul.f32 %v3213, %v3214
        %v3217 = vsub.f32 %v3202, %v3215
        %v3218 = vsub.f32 %v3203, %v3215
        %v3219 = vsub.f32 %v3204, %v3216
        %v3220 = vsub.f32 %v3205, %v3216
        %v3221 = vmul.f32 %v3217, %v3217
        %v3222 = vmul.f32 %v3218, %v3218
        %v3223 = vmul.f32 %v3219, %v3219
        %v3224 = vmul.f32 %v3220, %v3220
        %v3225 = vadd.f32 %v3221, %v3222
        %3226 = vadd.xlane.f32.xlu0 %v3225
        %v3227 = vpop.xlane.xlu0 %3226
        %v3228 = vadd.f32 %v3223, %v3224
        %3229 = vadd.xlane.f32.xlu0 %v3228
        %v3230 = vpop.xlane.xlu0 %3229
        %v3231 = vmul.f32 %v3227, %v3214
        %v3232 = vmul.f32 %v3230, %v3214
        %v3233 = vadd.f32 %v3231, 1e-05
        %v3234 = vadd.f32 %v3232, 1e-05
        %v3235 = vrsqrt.pop %v3233
        %v3236 = vrsqrt.pop %v3234
        %v3237 = vmul.f32 %v3217, %v3235
        %v3238 = vmul.f32 %v3218, %v3235
        %v3239 = vmul.f32 %v3219, %v3236
        %v3240 = vmul.f32 %v3220, %v3236
        %v3242 = vlaneseq
        %v3243 = vshrl.u32 %v3242, 7
        %v3244 = vsub.s32 0, %v3243
        %v3245 = vrot.slane %v3206, %v3244
        %v3246 = vlaneseq
        %v3247 = vshrl.u32 %v3246, 7
        %v3248 = vsub.s32 1, %v3247
        %v3249 = vrot.slane %v3206, %v3248
        %v3252 = vmul.f32 %v3237, %v3245
        %v3253 = vmul.f32 %v3238, %v3249
        %v3254 = vmul.f32 %v3239, %v3245
        %v3255 = vmul.f32 %v3240, %v3249
        %v3257 = vlaneseq
        %v3258 = vshrl.u32 %v3257, 7
        %v3259 = vsub.s32 0, %v3258
        %v3260 = vrot.slane %v3207, %v3259
        %v3261 = vlaneseq
        %v3262 = vshrl.u32 %v3261, 7
        %v3263 = vsub.s32 1, %v3262
        %v3264 = vrot.slane %v3207, %v3263
        %v3267 = vadd.f32 %v3252, %v3260
        %v3268 = vadd.f32 %v3253, %v3264
        %v3269 = vadd.f32 %v3254, %v3260
        %v3270 = vadd.f32 %v3255, %v3264
        %v3271 = vpack.c.bf16 %v3269, %v3267
        %v3272 = vpack.c.bf16 %v3270, %v3268
        %v3273 = vld [vmem:[%s270 + $0x20] sm:$0xff]
        %v3274 = vld [vmem:[%s270 + $0x28] sm:$0xff]
        %v3275 = vld [vmem:[%s270 + $0x30] sm:$0xff]
        %v3276 = vld [vmem:[%s270 + $0x80] sm:$0xff]
        %v3277 = vld [vmem:[%s270 + $0x88] sm:$0xff]
        %v3278 = vld [vmem:[%s270 + $0x90] sm:$0xff]
        %v3279 = vld [vmem:[%s270 + $0xe0] sm:$0xff]
        %v3280 = vld [vmem:[%s270 + $0xe8] sm:$0xff]
        %v3281 = vld [vmem:[%s270 + $0xf0] sm:$0xff]
        %v3282 = vld [vmem:[%s270 + $0x140] sm:$0xff]
        %v3283 = vld [vmem:[%s270 + $0x148] sm:$0xff]
        %v3284 = vld [vmem:[%s270 + $0x150] sm:$0xff]
        %v3285 = vld [vmem:[%s270 + $0x1a0] sm:$0xff]
        %v3286 = vld [vmem:[%s270 + $0x1a8] sm:$0xff]
        %v3287 = vld [vmem:[%s270 + $0x1b0] sm:$0xff]
        %v3288 = vld [vmem:[%s270 + $0x200] sm:$0xff]
        %v3289 = vld [vmem:[%s270 + $0x208] sm:$0xff]
        %v3290 = vld [vmem:[%s270 + $0x210] sm:$0xff]
        %v3291 = vld [vmem:[%s270 + $0x260] sm:$0xff]
        %v3292 = vld [vmem:[%s270 + $0x268] sm:$0xff]
        %v3293 = vld [vmem:[%s270 + $0x270] sm:$0xff]
        %v3294 = vld [vmem:[%s270 + $0x2c0] sm:$0xff]
        %v3295 = vld [vmem:[%s270 + $0x2c8] sm:$0xff]
        %v3296 = vld [vmem:[%s270 + $0x2d0] sm:$0xff]
        %v3297 = vld [vmem:[%s270 + $0x320] sm:$0xff]
        %v3298 = vld [vmem:[%s270 + $0x328] sm:$0xff]
        %v3299 = vld [vmem:[%s270 + $0x330] sm:$0xff]
        %v3300 = vld [vmem:[%s270 + $0x380] sm:$0xff]
        %v3301 = vld [vmem:[%s270 + $0x388] sm:$0xff]
        %v3302 = vld [vmem:[%s270 + $0x390] sm:$0xff]
        %v3303 = vld [vmem:[%s270 + $0x3e0] sm:$0xff]
        %v3304 = vld [vmem:[%s270 + $0x3e8] sm:$0xff]
        %v3305 = vld [vmem:[%s270 + $0x3f0] sm:$0xff]
        %v3306 = vld [vmem:[%s270 + $0x440] sm:$0xff]
        %v3307 = vld [vmem:[%s270 + $0x448] sm:$0xff]
        %v3308 = vld [vmem:[%s270 + $0x450] sm:$0xff]
        %v3309 = vld [vmem:[%s270 + $0x4a0] sm:$0xff]
        %v3310 = vld [vmem:[%s270 + $0x4a8] sm:$0xff]
        %v3311 = vld [vmem:[%s270 + $0x4b0] sm:$0xff]
        %v3312 = vld [vmem:[%s270 + $0x500] sm:$0xff]
        %v3313 = vld [vmem:[%s270 + $0x508] sm:$0xff]
        %v3314 = vld [vmem:[%s270 + $0x510] sm:$0xff]
        %v3315 = vld [vmem:[%s270 + $0x560] sm:$0xff]
        %v3316 = vld [vmem:[%s270 + $0x568] sm:$0xff]
        %v3317 = vld [vmem:[%s270 + $0x570] sm:$0xff]
        %v3318 = vld [vmem:[%s270 + $0x5c0] sm:$0xff]
        %v3319 = vld [vmem:[%s270 + $0x5c8] sm:$0xff]
        %v3320 = vld [vmem:[%s270 + $0x5d0] sm:$0xff]
        %v3321 = vld [vmem:[%s270 + $0x620] sm:$0xff]
        %v3322 = vld [vmem:[%s270 + $0x628] sm:$0xff]
        %v3323 = vld [vmem:[%s270 + $0x630] sm:$0xff]
        %v3324 = vld [vmem:[%s270 + $0x680] sm:$0xff]
        %v3325 = vld [vmem:[%s270 + $0x688] sm:$0xff]
        %v3326 = vld [vmem:[%s270 + $0x690] sm:$0xff]
        %v3327 = vld [vmem:[%s270 + $0x6e0] sm:$0xff]
        %v3328 = vld [vmem:[%s270 + $0x6e8] sm:$0xff]
        %v3329 = vld [vmem:[%s270 + $0x6f0] sm:$0xff]
        %v3330 = vld [vmem:[%s270 + $0x740] sm:$0xff]
        %v3331 = vld [vmem:[%s270 + $0x748] sm:$0xff]
        %v3332 = vld [vmem:[%s270 + $0x750] sm:$0xff]
        %v3333 = vld [vmem:[%s270 + $0x7a0] sm:$0xff]
        %v3334 = vld [vmem:[%s270 + $0x7a8] sm:$0xff]
        %v3335 = vld [vmem:[%s270 + $0x7b0] sm:$0xff]
        %v3336 = vld [vmem:[%s270 + $0x800] sm:$0xff]
        %v3337 = vld [vmem:[%s270 + $0x808] sm:$0xff]
        %v3338 = vld [vmem:[%s270 + $0x810] sm:$0xff]
        %v3339 = vld [vmem:[%s270 + $0x860] sm:$0xff]
        %v3340 = vld [vmem:[%s270 + $0x868] sm:$0xff]
        %v3341 = vld [vmem:[%s270 + $0x870] sm:$0xff]
        %v3342 = vld [vmem:[%s270 + $0x8c0] sm:$0xff]
        %v3343 = vld [vmem:[%s270 + $0x8c8] sm:$0xff]
        %v3344 = vld [vmem:[%s270 + $0x8d0] sm:$0xff]
        %v3345 = vld [vmem:[%s270 + $0x920] sm:$0xff]
        %v3346 = vld [vmem:[%s270 + $0x928] sm:$0xff]
        %v3347 = vld [vmem:[%s270 + $0x930] sm:$0xff]
        %v3348 = vld [vmem:[%s270 + $0x980] sm:$0xff]
        %v3349 = vld [vmem:[%s270 + $0x988] sm:$0xff]
        %v3350 = vld [vmem:[%s270 + $0x990] sm:$0xff]
        %v3351 = vld [vmem:[%s270 + $0x9e0] sm:$0xff]
        %v3352 = vld [vmem:[%s270 + $0x9e8] sm:$0xff]
        %v3353 = vld [vmem:[%s270 + $0x9f0] sm:$0xff]
        %v3354 = vld [vmem:[%s270 + $0xa40] sm:$0xff]
        %v3355 = vld [vmem:[%s270 + $0xa48] sm:$0xff]
        %v3356 = vld [vmem:[%s270 + $0xa50] sm:$0xff]
        %v3357 = vld [vmem:[%s270 + $0xaa0] sm:$0xff]
        %v3358 = vld [vmem:[%s270 + $0xaa8] sm:$0xff]
        %v3359 = vld [vmem:[%s270 + $0xab0] sm:$0xff]
        %v3360 = vld [vmem:[%s270 + $0xb00] sm:$0xff]
        %v3361 = vld [vmem:[%s270 + $0xb08] sm:$0xff]
        %v3362 = vld [vmem:[%s270 + $0xb10] sm:$0xff]
        %v3363 = vld [vmem:[%s270 + $0xb60] sm:$0xff]
        %v3364 = vld [vmem:[%s270 + $0xb68] sm:$0xff]
        %v3365 = vld [vmem:[%s270 + $0xb70] sm:$0xff]
        %v3366 = vld [vmem:[%s270 + $0xbc0] sm:$0xff]
        %v3367 = vld [vmem:[%s270 + $0xbc8] sm:$0xff]
        %v3368 = vld [vmem:[%s270 + $0xbd0] sm:$0xff]
        %v3369 = vld [vmem:[%s288 + $0xc] sm:$0x3f]
        %v3371 = vlaneseq
        %v3372 = vshrl.u32 %v3371, 7
        %v3373 = vsub.s32 0, %v3372
        %v3374 = vrot.slane %v3369, %v3373
        %v3375 = vlaneseq
        %v3376 = vshrl.u32 %v3375, 7
        %v3377 = vsub.s32 1, %v3376
        %v3378 = vrot.slane %v3369, %v3377
        %v3379 = vlaneseq
        %v3380 = vshrl.u32 %v3379, 7
        %v3381 = vsub.s32 2, %v3380
        %v3382 = vrot.slane %v3369, %v3381
        %v3383 = vlaneseq
        %v3384 = vshrl.u32 %v3383, 7
        %v3385 = vsub.s32 3, %v3384
        %v3386 = vrot.slane %v3369, %v3385
        %v3387 = vlaneseq
        %v3388 = vshrl.u32 %v3387, 7
        %v3389 = vsub.s32 4, %v3388
        %v3390 = vrot.slane %v3369, %v3389
        %v3391 = vlaneseq
        %v3392 = vshrl.u32 %v3391, 7
        %v3393 = vsub.s32 5, %v3392
        %v3394 = vrot.slane %v3369, %v3393
        %v3497 = vunpack.c.l.b16 %v3273
        %v3498 = vunpack.c.h.b16 %v3273
        %v3499 = vunpack.c.l.b16 %v3274
        %v3500 = vunpack.c.h.b16 %v3274
        %v3501 = vunpack.c.l.b16 %v3275
        %v3502 = vunpack.c.h.b16 %v3275
        %v3503 = vunpack.c.l.b16 %v3276
        %v3504 = vunpack.c.h.b16 %v3276
        %v3505 = vunpack.c.l.b16 %v3277
        %v3506 = vunpack.c.h.b16 %v3277
        %v3507 = vunpack.c.l.b16 %v3278
        %v3508 = vunpack.c.h.b16 %v3278
        %v3509 = vunpack.c.l.b16 %v3279
        %v3510 = vunpack.c.h.b16 %v3279
        %v3511 = vunpack.c.l.b16 %v3280
        %v3512 = vunpack.c.h.b16 %v3280
        %v3513 = vunpack.c.l.b16 %v3281
        %v3514 = vunpack.c.h.b16 %v3281
        %v3515 = vunpack.c.l.b16 %v3282
        %v3516 = vunpack.c.h.b16 %v3282
        %v3517 = vunpack.c.l.b16 %v3283
        %v3518 = vunpack.c.h.b16 %v3283
        %v3519 = vunpack.c.l.b16 %v3284
        %v3520 = vunpack.c.h.b16 %v3284
        %v3521 = vunpack.c.l.b16 %v3285
        %v3522 = vunpack.c.h.b16 %v3285
        %v3523 = vunpack.c.l.b16 %v3286
        %v3524 = vunpack.c.h.b16 %v3286
        %v3525 = vunpack.c.l.b16 %v3287
        %v3526 = vunpack.c.h.b16 %v3287
        %v3527 = vunpack.c.l.b16 %v3288
        %v3528 = vunpack.c.h.b16 %v3288
        %v3529 = vunpack.c.l.b16 %v3289
        %v3530 = vunpack.c.h.b16 %v3289
        %v3531 = vunpack.c.l.b16 %v3290
        %v3532 = vunpack.c.h.b16 %v3290
        %v3533 = vunpack.c.l.b16 %v3291
        %v3534 = vunpack.c.h.b16 %v3291
        %v3535 = vunpack.c.l.b16 %v3292
        %v3536 = vunpack.c.h.b16 %v3292
        %v3537 = vunpack.c.l.b16 %v3293
        %v3538 = vunpack.c.h.b16 %v3293
        %v3539 = vunpack.c.l.b16 %v3294
        %v3540 = vunpack.c.h.b16 %v3294
        %v3541 = vunpack.c.l.b16 %v3295
        %v3542 = vunpack.c.h.b16 %v3295
        %v3543 = vunpack.c.l.b16 %v3296
        %v3544 = vunpack.c.h.b16 %v3296
        %v3545 = vunpack.c.l.b16 %v3297
        %v3546 = vunpack.c.h.b16 %v3297
        %v3547 = vunpack.c.l.b16 %v3298
        %v3548 = vunpack.c.h.b16 %v3298
        %v3549 = vunpack.c.l.b16 %v3299
        %v3550 = vunpack.c.h.b16 %v3299
        %v3551 = vunpack.c.l.b16 %v3300
        %v3552 = vunpack.c.h.b16 %v3300
        %v3553 = vunpack.c.l.b16 %v3301
        %v3554 = vunpack.c.h.b16 %v3301
        %v3555 = vunpack.c.l.b16 %v3302
        %v3556 = vunpack.c.h.b16 %v3302
        %v3557 = vunpack.c.l.b16 %v3303
        %v3558 = vunpack.c.h.b16 %v3303
        %v3559 = vunpack.c.l.b16 %v3304
        %v3560 = vunpack.c.h.b16 %v3304
        %v3561 = vunpack.c.l.b16 %v3305
        %v3562 = vunpack.c.h.b16 %v3305
        %v3563 = vunpack.c.l.b16 %v3306
        %v3564 = vunpack.c.h.b16 %v3306
        %v3565 = vunpack.c.l.b16 %v3307
        %v3566 = vunpack.c.h.b16 %v3307
        %v3567 = vunpack.c.l.b16 %v3308
        %v3568 = vunpack.c.h.b16 %v3308
        %v3569 = vunpack.c.l.b16 %v3309
        %v3570 = vunpack.c.h.b16 %v3309
        %v3571 = vunpack.c.l.b16 %v3310
        %v3572 = vunpack.c.h.b16 %v3310
        %v3573 = vunpack.c.l.b16 %v3311
        %v3574 = vunpack.c.h.b16 %v3311
        %v3575 = vunpack.c.l.b16 %v3312
        %v3576 = vunpack.c.h.b16 %v3312
        %v3577 = vunpack.c.l.b16 %v3313
        %v3578 = vunpack.c.h.b16 %v3313
        %v3579 = vunpack.c.l.b16 %v3314
        %v3580 = vunpack.c.h.b16 %v3314
        %v3581 = vunpack.c.l.b16 %v3315
        %v3582 = vunpack.c.h.b16 %v3315
        %v3583 = vunpack.c.l.b16 %v3316
        %v3584 = vunpack.c.h.b16 %v3316
        %v3585 = vunpack.c.l.b16 %v3317
        %v3586 = vunpack.c.h.b16 %v3317
        %v3587 = vunpack.c.l.b16 %v3318
        %v3588 = vunpack.c.h.b16 %v3318
        %v3589 = vunpack.c.l.b16 %v3319
        %v3590 = vunpack.c.h.b16 %v3319
        %v3591 = vunpack.c.l.b16 %v3320
        %v3592 = vunpack.c.h.b16 %v3320
        %v3593 = vunpack.c.l.b16 %v3321
        %v3594 = vunpack.c.h.b16 %v3321
        %v3595 = vunpack.c.l.b16 %v3322
        %v3596 = vunpack.c.h.b16 %v3322
        %v3597 = vunpack.c.l.b16 %v3323
        %v3598 = vunpack.c.h.b16 %v3323
        %v3599 = vunpack.c.l.b16 %v3324
        %v3600 = vunpack.c.h.b16 %v3324
        %v3601 = vunpack.c.l.b16 %v3325
        %v3602 = vunpack.c.h.b16 %v3325
        %v3603 = vunpack.c.l.b16 %v3326
        %v3604 = vunpack.c.h.b16 %v3326
        %v3605 = vunpack.c.l.b16 %v3327
        %v3606 = vunpack.c.h.b16 %v3327
        %v3607 = vunpack.c.l.b16 %v3328
        %v3608 = vunpack.c.h.b16 %v3328
        %v3609 = vunpack.c.l.b16 %v3329
        %v3610 = vunpack.c.h.b16 %v3329
        %v3611 = vunpack.c.l.b16 %v3330
        %v3612 = vunpack.c.h.b16 %v3330
        %v3613 = vunpack.c.l.b16 %v3331
        %v3614 = vunpack.c.h.b16 %v3331
        %v3615 = vunpack.c.l.b16 %v3332
        %v3616 = vunpack.c.h.b16 %v3332
        %v3617 = vunpack.c.l.b16 %v3333
        %v3618 = vunpack.c.h.b16 %v3333
        %v3619 = vunpack.c.l.b16 %v3334
        %v3620 = vunpack.c.h.b16 %v3334
        %v3621 = vunpack.c.l.b16 %v3335
        %v3622 = vunpack.c.h.b16 %v3335
        %v3623 = vunpack.c.l.b16 %v3336
        %v3624 = vunpack.c.h.b16 %v3336
        %v3625 = vunpack.c.l.b16 %v3337
        %v3626 = vunpack.c.h.b16 %v3337
        %v3627 = vunpack.c.l.b16 %v3338
        %v3628 = vunpack.c.h.b16 %v3338
        %v3629 = vunpack.c.l.b16 %v3339
        %v3630 = vunpack.c.h.b16 %v3339
        %v3631 = vunpack.c.l.b16 %v3340
        %v3632 = vunpack.c.h.b16 %v3340
        %v3633 = vunpack.c.l.b16 %v3341
        %v3634 = vunpack.c.h.b16 %v3341
        %v3635 = vunpack.c.l.b16 %v3342
        %v3636 = vunpack.c.h.b16 %v3342
        %v3637 = vunpack.c.l.b16 %v3343
        %v3638 = vunpack.c.h.b16 %v3343
        %v3639 = vunpack.c.l.b16 %v3344
        %v3640 = vunpack.c.h.b16 %v3344
        %v3641 = vunpack.c.l.b16 %v3345
        %v3642 = vunpack.c.h.b16 %v3345
        %v3643 = vunpack.c.l.b16 %v3346
        %v3644 = vunpack.c.h.b16 %v3346
        %v3645 = vunpack.c.l.b16 %v3347
        %v3646 = vunpack.c.h.b16 %v3347
        %v3647 = vunpack.c.l.b16 %v3348
        %v3648 = vunpack.c.h.b16 %v3348
        %v3649 = vunpack.c.l.b16 %v3349
        %v3650 = vunpack.c.h.b16 %v3349
        %v3651 = vunpack.c.l.b16 %v3350
        %v3652 = vunpack.c.h.b16 %v3350
        %v3653 = vunpack.c.l.b16 %v3351
        %v3654 = vunpack.c.h.b16 %v3351
        %v3655 = vunpack.c.l.b16 %v3352
        %v3656 = vunpack.c.h.b16 %v3352
        %v3657 = vunpack.c.l.b16 %v3353
        %v3658 = vunpack.c.h.b16 %v3353
        %v3659 = vunpack.c.l.b16 %v3354
        %v3660 = vunpack.c.h.b16 %v3354
        %v3661 = vunpack.c.l.b16 %v3355
        %v3662 = vunpack.c.h.b16 %v3355
        %v3663 = vunpack.c.l.b16 %v3356
        %v3664 = vunpack.c.h.b16 %v3356
        %v3665 = vunpack.c.l.b16 %v3357
        %v3666 = vunpack.c.h.b16 %v3357
        %v3667 = vunpack.c.l.b16 %v3358
        %v3668 = vunpack.c.h.b16 %v3358
        %v3669 = vunpack.c.l.b16 %v3359
        %v3670 = vunpack.c.h.b16 %v3359
        %v3671 = vunpack.c.l.b16 %v3360
        %v3672 = vunpack.c.h.b16 %v3360
        %v3673 = vunpack.c.l.b16 %v3361
        %v3674 = vunpack.c.h.b16 %v3361
        %v3675 = vunpack.c.l.b16 %v3362
        %v3676 = vunpack.c.h.b16 %v3362
        %v3677 = vunpack.c.l.b16 %v3363
        %v3678 = vunpack.c.h.b16 %v3363
        %v3679 = vunpack.c.l.b16 %v3364
        %v3680 = vunpack.c.h.b16 %v3364
        %v3681 = vunpack.c.l.b16 %v3365
        %v3682 = vunpack.c.h.b16 %v3365
        %v3683 = vunpack.c.l.b16 %v3366
        %v3684 = vunpack.c.h.b16 %v3366
        %v3685 = vunpack.c.l.b16 %v3367
        %v3686 = vunpack.c.h.b16 %v3367
        %v3687 = vunpack.c.l.b16 %v3368
        %v3688 = vunpack.c.h.b16 %v3368
        %v3689 = vpack.c.b16 %v3503, %v3497
        %v3690 = vpack.c.b16 %v3504, %v3498
        %v3691 = vpack.c.b16 %v3505, %v3499
        %v3692 = vpack.c.b16 %v3506, %v3500
        %v3693 = vpack.c.b16 %v3507, %v3501
        %v3694 = vpack.c.b16 %v3508, %v3502
        %v3695 = vpack.c.b16 %v3515, %v3509
        %v3696 = vpack.c.b16 %v3516, %v3510
        %v3697 = vpack.c.b16 %v3517, %v3511
        %v3698 = vpack.c.b16 %v3518, %v3512
        %v3699 = vpack.c.b16 %v3519, %v3513
        %v3700 = vpack.c.b16 %v3520, %v3514
        %v3701 = vpack.c.b16 %v3527, %v3521
        %v3702 = vpack.c.b16 %v3528, %v3522
        %v3703 = vpack.c.b16 %v3529, %v3523
        %v3704 = vpack.c.b16 %v3530, %v3524
        %v3705 = vpack.c.b16 %v3531, %v3525
        %v3706 = vpack.c.b16 %v3532, %v3526
        %v3707 = vpack.c.b16 %v3539, %v3533
        %v3708 = vpack.c.b16 %v3540, %v3534
        %v3709 = vpack.c.b16 %v3541, %v3535
        %v3710 = vpack.c.b16 %v3542, %v3536
        %v3711 = vpack.c.b16 %v3543, %v3537
        %v3712 = vpack.c.b16 %v3544, %v3538
        %v3713 = vpack.c.b16 %v3551, %v3545
        %v3714 = vpack.c.b16 %v3552, %v3546
        %v3715 = vpack.c.b16 %v3553, %v3547
        %v3716 = vpack.c.b16 %v3554, %v3548
        %v3717 = vpack.c.b16 %v3555, %v3549
        %v3718 = vpack.c.b16 %v3556, %v3550
        %v3719 = vpack.c.b16 %v3563, %v3557
        %v3720 = vpack.c.b16 %v3564, %v3558
        %v3721 = vpack.c.b16 %v3565, %v3559
        %v3722 = vpack.c.b16 %v3566, %v3560
        %v3723 = vpack.c.b16 %v3567, %v3561
        %v3724 = vpack.c.b16 %v3568, %v3562
        %v3725 = vpack.c.b16 %v3575, %v3569
        %v3726 = vpack.c.b16 %v3576, %v3570
        %v3727 = vpack.c.b16 %v3577, %v3571
        %v3728 = vpack.c.b16 %v3578, %v3572
        %v3729 = vpack.c.b16 %v3579, %v3573
        %v3730 = vpack.c.b16 %v3580, %v3574
        %v3731 = vpack.c.b16 %v3587, %v3581
        %v3732 = vpack.c.b16 %v3588, %v3582
        %v3733 = vpack.c.b16 %v3589, %v3583
        %v3734 = vpack.c.b16 %v3590, %v3584
        %v3735 = vpack.c.b16 %v3591, %v3585
        %v3736 = vpack.c.b16 %v3592, %v3586
        %v3737 = vpack.c.b16 %v3599, %v3593
        %v3738 = vpack.c.b16 %v3600, %v3594
        %v3739 = vpack.c.b16 %v3601, %v3595
        %v3740 = vpack.c.b16 %v3602, %v3596
        %v3741 = vpack.c.b16 %v3603, %v3597
        %v3742 = vpack.c.b16 %v3604, %v3598
        %v3743 = vpack.c.b16 %v3611, %v3605
        %v3744 = vpack.c.b16 %v3612, %v3606
        %v3745 = vpack.c.b16 %v3613, %v3607
        %v3746 = vpack.c.b16 %v3614, %v3608
        %v3747 = vpack.c.b16 %v3615, %v3609
        %v3748 = vpack.c.b16 %v3616, %v3610
        %v3749 = vpack.c.b16 %v3623, %v3617
        %v3750 = vpack.c.b16 %v3624, %v3618
        %v3751 = vpack.c.b16 %v3625, %v3619
        %v3752 = vpack.c.b16 %v3626, %v3620
        %v3753 = vpack.c.b16 %v3627, %v3621
        %v3754 = vpack.c.b16 %v3628, %v3622
        %v3755 = vpack.c.b16 %v3635, %v3629
        %v3756 = vpack.c.b16 %v3636, %v3630
        %v3757 = vpack.c.b16 %v3637, %v3631
        %v3758 = vpack.c.b16 %v3638, %v3632
        %v3759 = vpack.c.b16 %v3639, %v3633
        %v3760 = vpack.c.b16 %v3640, %v3634
        %v3761 = vpack.c.b16 %v3647, %v3641
        %v3762 = vpack.c.b16 %v3648, %v3642
        %v3763 = vpack.c.b16 %v3649, %v3643
        %v3764 = vpack.c.b16 %v3650, %v3644
        %v3765 = vpack.c.b16 %v3651, %v3645
        %v3766 = vpack.c.b16 %v3652, %v3646
        %v3767 = vpack.c.b16 %v3659, %v3653
        %v3768 = vpack.c.b16 %v3660, %v3654
        %v3769 = vpack.c.b16 %v3661, %v3655
        %v3770 = vpack.c.b16 %v3662, %v3656
        %v3771 = vpack.c.b16 %v3663, %v3657
        %v3772 = vpack.c.b16 %v3664, %v3658
        %v3773 = vpack.c.b16 %v3671, %v3665
        %v3774 = vpack.c.b16 %v3672, %v3666
        %v3775 = vpack.c.b16 %v3673, %v3667
        %v3776 = vpack.c.b16 %v3674, %v3668
        %v3777 = vpack.c.b16 %v3675, %v3669
        %v3778 = vpack.c.b16 %v3676, %v3670
        %v3779 = vpack.c.b16 %v3683, %v3677
        %v3780 = vpack.c.b16 %v3684, %v3678
        %v3781 = vpack.c.b16 %v3685, %v3679
        %v3782 = vpack.c.b16 %v3686, %v3680
        %v3783 = vpack.c.b16 %v3687, %v3681
        %v3784 = vpack.c.b16 %v3688, %v3682
        %3881 = vmatprep.subr.bf16.mxu0 %v3690
        %3882 = vmatpush1.bf16.msra.mxu0 %v3689
        %3883 = vmatprep.subr.bf16.mxu0 %v3696
        %3884 = vmatpush1.bf16.msra.mxu0 %v3695
        %3885 = vmatprep.subr.bf16.mxu0 %v3702
        %3886 = vmatpush1.bf16.msra.mxu0 %v3701
        %3887 = vmatprep.subr.bf16.mxu0 %v3708
        %3888 = vmatpush1.bf16.msra.mxu0 %v3707
        %3889 = vmatprep.subr.bf16.mxu0 %v3714
        %3890 = vmatpush1.bf16.msra.mxu0 %v3713
        %3891 = vmatprep.subr.bf16.mxu0 %v3720
        %3892 = vmatpush1.bf16.msra.mxu0 %v3719
        %3893 = vmatprep.subr.bf16.mxu0 %v3726
        %3894 = vmatpush1.bf16.msra.mxu0 %v3725
        %3895 = vmatprep.subr.bf16.mxu0 %v3732
        %3896 = vmatpush1.bf16.msra.mxu0 %v3731
        %3897 = vmatprep.subr.bf16.mxu0 %v3738
        %3898 = vmatpush1.bf16.msra.mxu0 %v3737
        %3899 = vmatprep.subr.bf16.mxu0 %v3744
        %3900 = vmatpush1.bf16.msra.mxu0 %v3743
        %3901 = vmatprep.subr.bf16.mxu0 %v3750
        %3902 = vmatpush1.bf16.msra.mxu0 %v3749
        %3903 = vmatprep.subr.bf16.mxu0 %v3756
        %3904 = vmatpush1.bf16.msra.mxu0 %v3755
        %3905 = vmatprep.subr.bf16.mxu0 %v3762
        %3906 = vmatpush1.bf16.msra.mxu0 %v3761
        %3907 = vmatprep.subr.bf16.mxu0 %v3768
        %3908 = vmatpush1.bf16.msra.mxu0 %v3767
        %3909 = vmatprep.subr.bf16.mxu0 %v3774
        %3910 = vmatpush1.bf16.msra.mxu0 %v3773
        %3911 = vmatprep.subr.bf16.mxu0 %v3780
        %3912 = vmatpush1.bf16.msra.mxu0 %v3779
        %3913 = vmatprep.mubr.bf16.mxu0 %v3272
        %3914 = vmatmul.mubr.bf16.gmra.mrb[0].mxu0 %v3271
        %v3915 = vpop.f32.mrb[0].mxu0
        %v3916 = vadd.f32 %v3374, %v3915
        %v3917 = vpop.f32.mrb[0].mxu0
        %v3918 = vadd.f32 %v3378, %v3917
        %v3919 = vpop.f32.mrb[0].mxu0
        %v3920 = vadd.f32 %v3374, %v3919
        %v3921 = vpop.f32.mrb[0].mxu0
        %v3922 = vadd.f32 %v3378, %v3921
        %3923 = vdwg.mxu0
        %3924 = vmatprep.subr.bf16.mxu0 %v3692
        %3925 = vmatpush1.bf16.msra.mxu0 %v3691
        %3926 = vmatprep.subr.bf16.mxu0 %v3698
        %3927 = vmatpush1.bf16.msra.mxu0 %v3697
        %3928 = vmatprep.subr.bf16.mxu0 %v3704
        %3929 = vmatpush1.bf16.msra.mxu0 %v3703
        %3930 = vmatprep.subr.bf16.mxu0 %v3710
        %3931 = vmatpush1.bf16.msra.mxu0 %v3709
        %3932 = vmatprep.subr.bf16.mxu0 %v3716
        %3933 = vmatpush1.bf16.msra.mxu0 %v3715
        %3934 = vmatprep.subr.bf16.mxu0 %v3722
        %3935 = vmatpush1.bf16.msra.mxu0 %v3721
        %3936 = vmatprep.subr.bf16.mxu0 %v3728
        %3937 = vmatpush1.bf16.msra.mxu0 %v3727
        %3938 = vmatprep.subr.bf16.mxu0 %v3734
        %3939 = vmatpush1.bf16.msra.mxu0 %v3733
        %3940 = vmatprep.subr.bf16.mxu0 %v3740
        %3941 = vmatpush1.bf16.msra.mxu0 %v3739
        %3942 = vmatprep.subr.bf16.mxu0 %v3746
        %3943 = vmatpush1.bf16.msra.mxu0 %v3745
        %3944 = vmatprep.subr.bf16.mxu0 %v3752
        %3945 = vmatpush1.bf16.msra.mxu0 %v3751
        %3946 = vmatprep.subr.bf16.mxu0 %v3758
        %3947 = vmatpush1.bf16.msra.mxu0 %v3757
        %3948 = vmatprep.subr.bf16.mxu0 %v3764
        %3949 = vmatpush1.bf16.msra.mxu0 %v3763
        %3950 = vmatprep.subr.bf16.mxu0 %v3770
        %3951 = vmatpush1.bf16.msra.mxu0 %v3769
        %3952 = vmatprep.subr.bf16.mxu0 %v3776
        %3953 = vmatpush1.bf16.msra.mxu0 %v3775
        %3954 = vmatprep.subr.bf16.mxu0 %v3782
        %3955 = vmatpush1.bf16.msra.mxu0 %v3781
        %3956 = vmatprep.mubr.bf16.mxu0 %v3272
        %3957 = vmatmul.mubr.bf16.gmra.mrb[0].mxu0 %v3271
        %v3958 = vpop.f32.mrb[0].mxu0
        %v3959 = vadd.f32 %v3382, %v3958
        %v3960 = vpop.f32.mrb[0].mxu0
        %v3961 = vadd.f32 %v3386, %v3960
        %v3962 = vpop.f32.mrb[0].mxu0
        %v3963 = vadd.f32 %v3382, %v3962
        %v3964 = vpop.f32.mrb[0].mxu0
        %v3965 = vadd.f32 %v3386, %v3964
        %3966 = vdwg.mxu0
        %3967 = vmatprep.subr.bf16.mxu0 %v3694
        %3968 = vmatpush1.bf16.msra.mxu0 %v3693
        %3969 = vmatprep.subr.bf16.mxu0 %v3700
        %3970 = vmatpush1.bf16.msra.mxu0 %v3699
        %3971 = vmatprep.subr.bf16.mxu0 %v3706
        %3972 = vmatpush1.bf16.msra.mxu0 %v3705
        %3973 = vmatprep.subr.bf16.mxu0 %v3712
        %3974 = vmatpush1.bf16.msra.mxu0 %v3711
        %3975 = vmatprep.subr.bf16.mxu0 %v3718
        %3976 = vmatpush1.bf16.msra.mxu0 %v3717
        %3977 = vmatprep.subr.bf16.mxu0 %v3724
        %3978 = vmatpush1.bf16.msra.mxu0 %v3723
        %3979 = vmatprep.subr.bf16.mxu0 %v3730
        %3980 = vmatpush1.bf16.msra.mxu0 %v3729
        %3981 = vmatprep.subr.bf16.mxu0 %v3736
        %3982 = vmatpush1.bf16.msra.mxu0 %v3735
        %3983 = vmatprep.subr.bf16.mxu0 %v3742
        %3984 = vmatpush1.bf16.msra.mxu0 %v3741
        %3985 = vmatprep.subr.bf16.mxu0 %v3748
        %3986 = vmatpush1.bf16.msra.mxu0 %v3747
        %3987 = vmatprep.subr.bf16.mxu0 %v3754
        %3988 = vmatpush1.bf16.msra.mxu0 %v3753
        %3989 = vmatprep.subr.bf16.mxu0 %v3760
        %3990 = vmatpush1.bf16.msra.mxu0 %v3759
        %3991 = vmatprep.subr.bf16.mxu0 %v3766
        %3992 = vmatpush1.bf16.msra.mxu0 %v3765
        %3993 = vmatprep.subr.bf16.mxu0 %v3772
        %3994 = vmatpush1.bf16.msra.mxu0 %v3771
        %3995 = vmatprep.subr.bf16.mxu0 %v3778
        %3996 = vmatpush1.bf16.msra.mxu0 %v3777
        %3997 = vmatprep.subr.bf16.mxu0 %v3784
        %3998 = vmatpush1.bf16.msra.mxu0 %v3783
        %3999 = vmatprep.mubr.bf16.mxu0 %v3272
        %4000 = vmatmul.mubr.bf16.gmra.mrb[0].mxu0 %v3271
        %v4001 = vpop.f32.mrb[0].mxu0
        %v4002 = vadd.f32 %v3390, %v4001
        %v4003 = vpop.f32.mrb[0].mxu0
        %v4004 = vadd.f32 %v3394, %v4003
        %v4005 = vpop.f32.mrb[0].mxu0
        %v4006 = vadd.f32 %v3390, %v4005
        %v4007 = vpop.f32.mrb[0].mxu0
        %v4008 = vadd.f32 %v3394, %v4007
        %4009 = vdwg.mxu0
        %v4010 = vmul.f32 %v3916, 0.17677669
        %v4011 = vmul.f32 %v3918, 0.17677669
        %v4012 = vmul.f32 %v3920, 0.17677669
        %v4013 = vmul.f32 %v3922, 0.17677669
        %v4014 = vpack.c.bf16 %v4012, %v4010
        %v4015 = vpack.c.bf16 %v4013, %v4011
        %v4018 = vunpack.c.l.b16 %v4014
        %v4019 = vunpack.c.l.b16 %v4015
        %v4020 = vunpack.c.h.b16 %v4014
        %v4021 = vunpack.c.h.b16 %v4015
        %v4022 = vpack.c.b16 %v4019, %v4018
        %v4023 = vpack.c.b16 %v4021, %v4020
        %v4024 = vpack.c.bf16 %v3963, %v3959
        %v4025 = vpack.c.bf16 %v3965, %v3961
        %v4028 = vunpack.c.l.b16 %v4024
        %v4029 = vunpack.c.l.b16 %v4025
        %v4030 = vunpack.c.h.b16 %v4024
        %v4031 = vunpack.c.h.b16 %v4025
        %v4032 = vpack.c.b16 %v4029, %v4028
        %v4033 = vpack.c.b16 %v4031, %v4030
        %v4034 = vpack.c.bf16 %v4006, %v4002
        %v4035 = vpack.c.bf16 %v4008, %v4004
        %v4038 = vunpack.c.l.b16 %v4034
        %v4039 = vunpack.c.l.b16 %v4035
        %v4040 = vunpack.c.h.b16 %v4034
        %v4041 = vunpack.c.h.b16 %v4035
        %v4042 = vpack.c.b16 %v4039, %v4038
        %v4043 = vpack.c.b16 %v4041, %v4040
        %v4045 = vsel %vm1122, %v4022, 0
        %v4048 = vsel %vm1122, %v4032, 0
        %4050 = vmatprep.subr.bf16.mxu0 0
        %4051 = vmatpush1.bf16.xpose.msra.mxu0 %v4048
        %4052 = vmatprep.subr.bf16.mxu0 0
        %4053 = vmatpush1.bf16.xpose.msra.mxu0 0
        %4054 = vmatprep.subr.bf16.mxu0 0
        %4055 = vmatpush1.bf16.xpose.msra.mxu0 0
        %4056 = vmatprep.subr.bf16.mxu0 0
        %4057 = vmatpush1.bf16.xpose.msra.mxu0 0
        %4058 = vmatprep.subr.bf16.mxu0 0
        %4059 = vmatpush1.bf16.xpose.msra.mxu0 0
        %4060 = vmatprep.subr.bf16.mxu0 0
        %4061 = vmatpush1.bf16.xpose.msra.mxu0 0
        %4062 = vmatprep.subr.bf16.mxu0 0
        %4063 = vmatpush1.bf16.xpose.msra.mxu0 0
        %4064 = vmatprep.subr.bf16.mxu0 0
        %4065 = vmatpush1.bf16.xpose.msra.mxu0 0
        %4066 = vmatprep.subr.bf16.mxu0 0
        %4067 = vmatpush1.bf16.xpose.msra.mxu0 0
        %4068 = vmatprep.subr.bf16.mxu0 0
        %4069 = vmatpush1.bf16.xpose.msra.mxu0 0
        %4070 = vmatprep.subr.bf16.mxu0 0
        %4071 = vmatpush1.bf16.xpose.msra.mxu0 0
        %4072 = vmatprep.subr.bf16.mxu0 0
        %4073 = vmatpush1.bf16.xpose.msra.mxu0 0
        %4074 = vmatprep.subr.bf16.mxu0 0
        %4075 = vmatpush1.bf16.xpose.msra.mxu0 0
        %4076 = vmatprep.subr.bf16.mxu0 0
        %4077 = vmatpush1.bf16.xpose.msra.mxu0 0
        %4078 = vmatprep.subr.bf16.mxu0 0
        %4079 = vmatpush1.bf16.xpose.msra.mxu0 0
        %4080 = vmatprep.subr.bf16.mxu0 0
        %4081 = vmatpush1.bf16.xpose.msra.mxu0 0
        %4082 = vmatprep.mubr.bf16.mxu0 0
        %4083 = vmatmul.mubr.bf16.gmra.mrb[0].mxu0 %v4045
        %v4084 = vpop.f32.mrb[0].mxu0
        %v4085 = vadd.f32 0.0, %v4084
        %v4086 = vpop.f32.mrb[0].mxu0
        %v4087 = vpop.f32.mrb[0].mxu0
        %v4088 = vpop.f32.mrb[0].mxu0
        %4089 = vdwg.mxu0
        %v4091 = vsel %vm1122, %v4023, 0
        %v4094 = vsel %vm1122, %v4033, 0
        %4096 = vmatprep.subr.bf16.mxu0 0
        %4097 = vmatpush1.bf16.xpose.msra.mxu0 %v4094
        %4098 = vmatprep.subr.bf16.mxu0 0
        %4099 = vmatpush1.bf16.xpose.msra.mxu0 0
        %4100 = vmatprep.subr.bf16.mxu0 0
        %4101 = vmatpush1.bf16.xpose.msra.mxu0 0
        %4102 = vmatprep.subr.bf16.mxu0 0
        %4103 = vmatpush1.bf16.xpose.msra.mxu0 0
        %4104 = vmatprep.subr.bf16.mxu0 0
        %4105 = vmatpush1.bf16.xpose.msra.mxu0 0
        %4106 = vmatprep.subr.bf16.mxu0 0
        %4107 = vmatpush1.bf16.xpose.msra.mxu0 0
        %4108 = vmatprep.subr.bf16.mxu0 0
        %4109 = vmatpush1.bf16.xpose.msra.mxu0 0
        %4110 = vmatprep.subr.bf16.mxu0 0
        %4111 = vmatpush1.bf16.xpose.msra.mxu0 0
        %4112 = vmatprep.subr.bf16.mxu0 0
        %4113 = vmatpush1.bf16.xpose.msra.mxu0 0
        %4114 = vmatprep.subr.bf16.mxu0 0
        %4115 = vmatpush1.bf16.xpose.msra.mxu0 0
        %4116 = vmatprep.subr.bf16.mxu0 0
        %4117 = vmatpush1.bf16.xpose.msra.mxu0 0
        %4118 = vmatprep.subr.bf16.mxu0 0
        %4119 = vmatpush1.bf16.xpose.msra.mxu0 0
        %4120 = vmatprep.subr.bf16.mxu0 0
        %4121 = vmatpush1.bf16.xpose.msra.mxu0 0
        %4122 = vmatprep.subr.bf16.mxu0 0
        %4123 = vmatpush1.bf16.xpose.msra.mxu0 0
        %4124 = vmatprep.subr.bf16.mxu0 0
        %4125 = vmatpush1.bf16.xpose.msra.mxu0 0
        %4126 = vmatprep.subr.bf16.mxu0 0
        %4127 = vmatpush1.bf16.xpose.msra.mxu0 0
        %4128 = vmatprep.mubr.bf16.mxu0 0
        %4129 = vmatmul.mubr.bf16.gmra.mrb[0].mxu0 %v4091
        %v4130 = vpop.f32.mrb[0].mxu0
        %v4131 = vadd.f32 0.0, %v4130
        %v4132 = vpop.f32.mrb[0].mxu0
        %v4133 = vpop.f32.mrb[0].mxu0
        %v4134 = vpop.f32.mrb[0].mxu0
        %4135 = vdwg.mxu0
        %v4136 = vsel %vm1215, %v4085, -inf
        %4137 = vmax.xlane.f32.xlu0 %v4136
        %v4138 = vpop.xlane.xlu0 %4137
        %v4139 = vsel %vm1215, %v4131, -inf
        %4140 = vmax.xlane.f32.xlu0 %v4139
        %v4141 = vpop.xlane.xlu0 %4140
        %v4142 = vsub.f32 %v4085, %v4138
        %v4143 = vsub.f32 %v4131, %v4141
        %v4144 = vmul.f32 %v4142, 1.442695
        %v4145 = vpow.pop %v4144
        %v4146 = vmul.f32 %v4143, 1.442695
        %v4147 = vpow.pop %v4146
        %v4148 = vsel %vm1215, %v4145, 0.0
        %4149 = vadd.xlane.f32.xlu0 %v4148
        %v4150 = vpop.xlane.xlu0 %4149
        %v4151 = vsel %vm1215, %v4147, 0.0
        %4152 = vadd.xlane.f32.xlu0 %v4151
        %v4153 = vpop.xlane.xlu0 %4152
        %v4154 = vrcp.pop %v4150
        %v4155 = vmul.f32 %v4145, %v4154
        %v4156 = vrcp.pop %v4153
        %v4157 = vmul.f32 %v4147, %v4156
        %v4158 = vpack.c.bf16 %v4155, %v4155
        %v4159 = vpack.c.bf16 %v4157, %v4157
        %v4161 = vsel %vm1215, %v4158, 0
        %v4164 = vsel %vm1243, %v4042, 0
        %4166 = vmatprep.subr.bf16.mxu0 0
        %4167 = vmatpush1.bf16.msra.mxu0 %v4164
        %4168 = vmatprep.subr.bf16.mxu0 0
        %4169 = vmatpush1.bf16.msra.mxu0 0
        %4170 = vmatprep.subr.bf16.mxu0 0
        %4171 = vmatpush1.bf16.msra.mxu0 0
        %4172 = vmatprep.subr.bf16.mxu0 0
        %4173 = vmatpush1.bf16.msra.mxu0 0
        %4174 = vmatprep.subr.bf16.mxu0 0
        %4175 = vmatpush1.bf16.msra.mxu0 0
        %4176 = vmatprep.subr.bf16.mxu0 0
        %4177 = vmatpush1.bf16.msra.mxu0 0
        %4178 = vmatprep.subr.bf16.mxu0 0
        %4179 = vmatpush1.bf16.msra.mxu0 0
        %4180 = vmatprep.subr.bf16.mxu0 0
        %4181 = vmatpush1.bf16.msra.mxu0 0
        %4182 = vmatprep.subr.bf16.mxu0 0
        %4183 = vmatpush1.bf16.msra.mxu0 0
        %4184 = vmatprep.subr.bf16.mxu0 0
        %4185 = vmatpush1.bf16.msra.mxu0 0
        %4186 = vmatprep.subr.bf16.mxu0 0
        %4187 = vmatpush1.bf16.msra.mxu0 0
        %4188 = vmatprep.subr.bf16.mxu0 0
        %4189 = vmatpush1.bf16.msra.mxu0 0
        %4190 = vmatprep.subr.bf16.mxu0 0
        %4191 = vmatpush1.bf16.msra.mxu0 0
        %4192 = vmatprep.subr.bf16.mxu0 0
        %4193 = vmatpush1.bf16.msra.mxu0 0
        %4194 = vmatprep.subr.bf16.mxu0 0
        %4195 = vmatpush1.bf16.msra.mxu0 0
        %4196 = vmatprep.subr.bf16.mxu0 0
        %4197 = vmatpush1.bf16.msra.mxu0 0
        %4198 = vmatprep.mubr.bf16.mxu0 0
        %4199 = vmatmul.mubr.bf16.gmra.mrb[0].mxu0 %v4161
        %v4200 = vpop.f32.mrb[0].mxu0
        %v4201 = vadd.f32 0.0, %v4200
        %v4202 = vpop.f32.mrb[0].mxu0
        %v4203 = vpop.f32.mrb[0].mxu0
        %v4204 = vpop.f32.mrb[0].mxu0
        %4205 = vdwg.mxu0
        %v4207 = vsel %vm1215, %v4159, 0
        %v4210 = vsel %vm1243, %v4043, 0
        %4212 = vmatprep.subr.bf16.mxu0 0
        %4213 = vmatpush1.bf16.msra.mxu0 %v4210
        %4214 = vmatprep.subr.bf16.mxu0 0
        %4215 = vmatpush1.bf16.msra.mxu0 0
        %4216 = vmatprep.subr.bf16.mxu0 0
        %4217 = vmatpush1.bf16.msra.mxu0 0
        %4218 = vmatprep.subr.bf16.mxu0 0
        %4219 = vmatpush1.bf16.msra.mxu0 0
        %4220 = vmatprep.subr.bf16.mxu0 0
        %4221 = vmatpush1.bf16.msra.mxu0 0
        %4222 = vmatprep.subr.bf16.mxu0 0
        %4223 = vmatpush1.bf16.msra.mxu0 0
        %4224 = vmatprep.subr.bf16.mxu0 0
        %4225 = vmatpush1.bf16.msra.mxu0 0
        %4226 = vmatprep.subr.bf16.mxu0 0
        %4227 = vmatpush1.bf16.msra.mxu0 0
        %4228 = vmatprep.subr.bf16.mxu0 0
        %4229 = vmatpush1.bf16.msra.mxu0 0
        %4230 = vmatprep.subr.bf16.mxu0 0
        %4231 = vmatpush1.bf16.msra.mxu0 0
        %4232 = vmatprep.subr.bf16.mxu0 0
        %4233 = vmatpush1.bf16.msra.mxu0 0
        %4234 = vmatprep.subr.bf16.mxu0 0
        %4235 = vmatpush1.bf16.msra.mxu0 0
        %4236 = vmatprep.subr.bf16.mxu0 0
        %4237 = vmatpush1.bf16.msra.mxu0 0
        %4238 = vmatprep.subr.bf16.mxu0 0
        %4239 = vmatpush1.bf16.msra.mxu0 0
        %4240 = vmatprep.subr.bf16.mxu0 0
        %4241 = vmatpush1.bf16.msra.mxu0 0
        %4242 = vmatprep.subr.bf16.mxu0 0
        %4243 = vmatpush1.bf16.msra.mxu0 0
        %4244 = vmatprep.mubr.bf16.mxu0 0
        %4245 = vmatmul.mubr.bf16.gmra.mrb[0].mxu0 %v4207
        %v4246 = vpop.f32.mrb[0].mxu0
        %v4247 = vadd.f32 0.0, %v4246
        %v4248 = vpop.f32.mrb[0].mxu0
        %v4249 = vpop.f32.mrb[0].mxu0
        %v4250 = vpop.f32.mrb[0].mxu0
        %4251 = vdwg.mxu0
        %v4252 = vpack.c.b16 %v4018, %v4018
        %4253 = vrot.lane.b32.xlu0 %v4252, 96
        %v4254 = vpop.permute.xlu0 %4253
        %v4255 = vpack.c.b16 %v4028, %v4028
        %4256 = vrot.lane.b32.xlu0 %v4255, 96
        %v4257 = vpop.permute.xlu0 %4256
        %v4259 = vsel %vm1122, %v4254, 0
        %v4262 = vsel %vm1122, %v4257, 0
        %4264 = vmatprep.subr.bf16.mxu0 0
        %4265 = vmatpush1.bf16.xpose.msra.mxu0 %v4262
        %4266 = vmatprep.subr.bf16.mxu0 0
        %4267 = vmatpush1.bf16.xpose.msra.mxu0 0
        %4268 = vmatprep.subr.bf16.mxu0 0
        %4269 = vmatpush1.bf16.xpose.msra.mxu0 0
        %4270 = vmatprep.subr.bf16.mxu0 0
        %4271 = vmatpush1.bf16.xpose.msra.mxu0 0
        %4272 = vmatprep.subr.bf16.mxu0 0
        %4273 = vmatpush1.bf16.xpose.msra.mxu0 0
        %4274 = vmatprep.subr.bf16.mxu0 0
        %4275 = vmatpush1.bf16.xpose.msra.mxu0 0
        %4276 = vmatprep.subr.bf16.mxu0 0
        %4277 = vmatpush1.bf16.xpose.msra.mxu0 0
        %4278 = vmatprep.subr.bf16.mxu0 0
        %4279 = vmatpush1.bf16.xpose.msra.mxu0 0
        %4280 = vmatprep.subr.bf16.mxu0 0
        %4281 = vmatpush1.bf16.xpose.msra.mxu0 0
        %4282 = vmatprep.subr.bf16.mxu0 0
        %4283 = vmatpush1.bf16.xpose.msra.mxu0 0
        %4284 = vmatprep.subr.bf16.mxu0 0
        %4285 = vmatpush1.bf16.xpose.msra.mxu0 0
        %4286 = vmatprep.subr.bf16.mxu0 0
        %4287 = vmatpush1.bf16.xpose.msra.mxu0 0
        %4288 = vmatprep.subr.bf16.mxu0 0
        %4289 = vmatpush1.bf16.xpose.msra.mxu0 0
        %4290 = vmatprep.subr.bf16.mxu0 0
        %4291 = vmatpush1.bf16.xpose.msra.mxu0 0
        %4292 = vmatprep.subr.bf16.mxu0 0
        %4293 = vmatpush1.bf16.xpose.msra.mxu0 0
        %4294 = vmatprep.subr.bf16.mxu0 0
        %4295 = vmatpush1.bf16.xpose.msra.mxu0 0
        %4296 = vmatprep.mubr.bf16.mxu0 0
        %4297 = vmatmul.mubr.bf16.gmra.mrb[0].mxu0 %v4259
        %v4298 = vpop.f32.mrb[0].mxu0
        %v4299 = vadd.f32 0.0, %v4298
        %v4300 = vpop.f32.mrb[0].mxu0
        %v4301 = vpop.f32.mrb[0].mxu0
        %v4302 = vpop.f32.mrb[0].mxu0
        %4303 = vdwg.mxu0
        %v4304 = vpack.c.b16 %v4020, %v4020
        %4305 = vrot.lane.b32.xlu0 %v4304, 96
        %v4306 = vpop.permute.xlu0 %4305
        %v4307 = vpack.c.b16 %v4030, %v4030
        %4308 = vrot.lane.b32.xlu0 %v4307, 96
        %v4309 = vpop.permute.xlu0 %4308
        %v4311 = vsel %vm1122, %v4306, 0
        %v4314 = vsel %vm1122, %v4309, 0
        %4316 = vmatprep.subr.bf16.mxu0 0
        %4317 = vmatpush1.bf16.xpose.msra.mxu0 %v4314
        %4318 = vmatprep.subr.bf16.mxu0 0
        %4319 = vmatpush1.bf16.xpose.msra.mxu0 0
        %4320 = vmatprep.subr.bf16.mxu0 0
        %4321 = vmatpush1.bf16.xpose.msra.mxu0 0
        %4322 = vmatprep.subr.bf16.mxu0 0
        %4323 = vmatpush1.bf16.xpose.msra.mxu0 0
        %4324 = vmatprep.subr.bf16.mxu0 0
        %4325 = vmatpush1.bf16.xpose.msra.mxu0 0
        %4326 = vmatprep.subr.bf16.mxu0 0
        %4327 = vmatpush1.bf16.xpose.msra.mxu0 0
        %4328 = vmatprep.subr.bf16.mxu0 0
        %4329 = vmatpush1.bf16.xpose.msra.mxu0 0
        %4330 = vmatprep.subr.bf16.mxu0 0
        %4331 = vmatpush1.bf16.xpose.msra.mxu0 0
        %4332 = vmatprep.subr.bf16.mxu0 0
        %4333 = vmatpush1.bf16.xpose.msra.mxu0 0
        %4334 = vmatprep.subr.bf16.mxu0 0
        %4335 = vmatpush1.bf16.xpose.msra.mxu0 0
        %4336 = vmatprep.subr.bf16.mxu0 0
        %4337 = vmatpush1.bf16.xpose.msra.mxu0 0
        %4338 = vmatprep.subr.bf16.mxu0 0
        %4339 = vmatpush1.bf16.xpose.msra.mxu0 0
        %4340 = vmatprep.subr.bf16.mxu0 0
        %4341 = vmatpush1.bf16.xpose.msra.mxu0 0
        %4342 = vmatprep.subr.bf16.mxu0 0
        %4343 = vmatpush1.bf16.xpose.msra.mxu0 0
        %4344 = vmatprep.subr.bf16.mxu0 0
        %4345 = vmatpush1.bf16.xpose.msra.mxu0 0
        %4346 = vmatprep.subr.bf16.mxu0 0
        %4347 = vmatpush1.bf16.xpose.msra.mxu0 0
        %4348 = vmatprep.mubr.bf16.mxu0 0
        %4349 = vmatmul.mubr.bf16.gmra.mrb[0].mxu0 %v4311
        %v4350 = vpop.f32.mrb[0].mxu0
        %v4351 = vadd.f32 0.0, %v4350
        %v4352 = vpop.f32.mrb[0].mxu0
        %v4353 = vpop.f32.mrb[0].mxu0
        %v4354 = vpop.f32.mrb[0].mxu0
        %4355 = vdwg.mxu0
        %v4356 = vsel %vm1215, %v4299, -inf
        %4357 = vmax.xlane.f32.xlu0 %v4356
        %v4358 = vpop.xlane.xlu0 %4357
        %v4359 = vsel %vm1215, %v4351, -inf
        %4360 = vmax.xlane.f32.xlu0 %v4359
        %v4361 = vpop.xlane.xlu0 %4360
        %v4362 = vsub.f32 %v4299, %v4358
        %v4363 = vsub.f32 %v4351, %v4361
        %v4364 = vmul.f32 %v4362, 1.442695
        %v4365 = vpow.pop %v4364
        %v4366 = vmul.f32 %v4363, 1.442695
        %v4367 = vpow.pop %v4366
        %v4368 = vsel %vm1215, %v4365, 0.0
        %4369 = vadd.xlane.f32.xlu0 %v4368
        %v4370 = vpop.xlane.xlu0 %4369
        %v4371 = vsel %vm1215, %v4367, 0.0
        %4372 = vadd.xlane.f32.xlu0 %v4371
        %v4373 = vpop.xlane.xlu0 %4372
        %v4374 = vrcp.pop %v4370
        %v4375 = vmul.f32 %v4365, %v4374
        %v4376 = vrcp.pop %v4373
        %v4377 = vmul.f32 %v4367, %v4376
        %v4378 = vpack.c.bf16 %v4375, %v4375
        %v4379 = vpack.c.bf16 %v4377, %v4377
        %v4380 = vpack.c.b16 %v4038, %v4038
        %4381 = vrot.lane.b32.xlu0 %v4380, 96
        %v4382 = vpop.permute.xlu0 %4381
        %v4384 = vsel %vm1215, %v4378, 0
        %v4387 = vsel %vm1243, %v4382, 0
        %4389 = vmatprep.subr.bf16.mxu0 0
        %4390 = vmatpush1.bf16.msra.mxu0 %v4387
        %4391 = vmatprep.subr.bf16.mxu0 0
        %4392 = vmatpush1.bf16.msra.mxu0 0
        %4393 = vmatprep.subr.bf16.mxu0 0
        %4394 = vmatpush1.bf16.msra.mxu0 0
        %4395 = vmatprep.subr.bf16.mxu0 0
        %4396 = vmatpush1.bf16.msra.mxu0 0
        %4397 = vmatprep.subr.bf16.mxu0 0
        %4398 = vmatpush1.bf16.msra.mxu0 0
        %4399 = vmatprep.subr.bf16.mxu0 0
        %4400 = vmatpush1.bf16.msra.mxu0 0
        %4401 = vmatprep.subr.bf16.mxu0 0
        %4402 = vmatpush1.bf16.msra.mxu0 0
        %4403 = vmatprep.subr.bf16.mxu0 0
        %4404 = vmatpush1.bf16.msra.mxu0 0
        %4405 = vmatprep.subr.bf16.mxu0 0
        %4406 = vmatpush1.bf16.msra.mxu0 0
        %4407 = vmatprep.subr.bf16.mxu0 0
        %4408 = vmatpush1.bf16.msra.mxu0 0
        %4409 = vmatprep.subr.bf16.mxu0 0
        %4410 = vmatpush1.bf16.msra.mxu0 0
        %4411 = vmatprep.subr.bf16.mxu0 0
        %4412 = vmatpush1.bf16.msra.mxu0 0
        %4413 = vmatprep.subr.bf16.mxu0 0
        %4414 = vmatpush1.bf16.msra.mxu0 0
        %4415 = vmatprep.subr.bf16.mxu0 0
        %4416 = vmatpush1.bf16.msra.mxu0 0
        %4417 = vmatprep.subr.bf16.mxu0 0
        %4418 = vmatpush1.bf16.msra.mxu0 0
        %4419 = vmatprep.subr.bf16.mxu0 0
        %4420 = vmatpush1.bf16.msra.mxu0 0
        %4421 = vmatprep.mubr.bf16.mxu0 0
        %4422 = vmatmul.mubr.bf16.gmra.mrb[0].mxu0 %v4384
        %v4423 = vpop.f32.mrb[0].mxu0
        %v4424 = vadd.f32 0.0, %v4423
        %v4425 = vpop.f32.mrb[0].mxu0
        %v4426 = vpop.f32.mrb[0].mxu0
        %v4427 = vpop.f32.mrb[0].mxu0
        %4428 = vdwg.mxu0
        %v4429 = vpack.c.b16 %v4040, %v4040
        %4430 = vrot.lane.b32.xlu0 %v4429, 96
        %v4431 = vpop.permute.xlu0 %4430
        %v4433 = vsel %vm1215, %v4379, 0
        %v4436 = vsel %vm1243, %v4431, 0
        %4438 = vmatprep.subr.bf16.mxu0 0
        %4439 = vmatpush1.bf16.msra.mxu0 %v4436
        %4440 = vmatprep.subr.bf16.mxu0 0
        %4441 = vmatpush1.bf16.msra.mxu0 0
        %4442 = vmatprep.subr.bf16.mxu0 0
        %4443 = vmatpush1.bf16.msra.mxu0 0
        %4444 = vmatprep.subr.bf16.mxu0 0
        %4445 = vmatpush1.bf16.msra.mxu0 0
        %4446 = vmatprep.subr.bf16.mxu0 0
        %4447 = vmatpush1.bf16.msra.mxu0 0
        %4448 = vmatprep.subr.bf16.mxu0 0
        %4449 = vmatpush1.bf16.msra.mxu0 0
        %4450 = vmatprep.subr.bf16.mxu0 0
        %4451 = vmatpush1.bf16.msra.mxu0 0
        %4452 = vmatprep.subr.bf16.mxu0 0
        %4453 = vmatpush1.bf16.msra.mxu0 0
        %4454 = vmatprep.subr.bf16.mxu0 0
        %4455 = vmatpush1.bf16.msra.mxu0 0
        %4456 = vmatprep.subr.bf16.mxu0 0
        %4457 = vmatpush1.bf16.msra.mxu0 0
        %4458 = vmatprep.subr.bf16.mxu0 0
        %4459 = vmatpush1.bf16.msra.mxu0 0
        %4460 = vmatprep.subr.bf16.mxu0 0
        %4461 = vmatpush1.bf16.msra.mxu0 0
        %4462 = vmatprep.subr.bf16.mxu0 0
        %4463 = vmatpush1.bf16.msra.mxu0 0
        %4464 = vmatprep.subr.bf16.mxu0 0
        %4465 = vmatpush1.bf16.msra.mxu0 0
        %4466 = vmatprep.subr.bf16.mxu0 0
        %4467 = vmatpush1.bf16.msra.mxu0 0
        %4468 = vmatprep.subr.bf16.mxu0 0
        %4469 = vmatpush1.bf16.msra.mxu0 0
        %4470 = vmatprep.mubr.bf16.mxu0 0
        %4471 = vmatmul.mubr.bf16.gmra.mrb[0].mxu0 %v4433
        %v4472 = vpop.f32.mrb[0].mxu0
        %v4473 = vadd.f32 0.0, %v4472
        %v4474 = vpop.f32.mrb[0].mxu0
        %v4475 = vpop.f32.mrb[0].mxu0
        %v4476 = vpop.f32.mrb[0].mxu0
        %4477 = vdwg.mxu0
        %4478 = vrot.lane.b32.xlu0 %v4252, 64
        %v4479 = vpop.permute.xlu0 %4478
        %4480 = vrot.lane.b32.xlu0 %v4255, 64
        %v4481 = vpop.permute.xlu0 %4480
        %v4483 = vsel %vm1122, %v4479, 0
        %v4486 = vsel %vm1122, %v4481, 0
        %4488 = vmatprep.subr.bf16.mxu0 0
        %4489 = vmatpush1.bf16.xpose.msra.mxu0 %v4486
        %4490 = vmatprep.subr.bf16.mxu0 0
        %4491 = vmatpush1.bf16.xpose.msra.mxu0 0
        %4492 = vmatprep.subr.bf16.mxu0 0
        %4493 = vmatpush1.bf16.xpose.msra.mxu0 0
        %4494 = vmatprep.subr.bf16.mxu0 0
        %4495 = vmatpush1.bf16.xpose.msra.mxu0 0
        %4496 = vmatprep.subr.bf16.mxu0 0
        %4497 = vmatpush1.bf16.xpose.msra.mxu0 0
        %4498 = vmatprep.subr.bf16.mxu0 0
        %4499 = vmatpush1.bf16.xpose.msra.mxu0 0
        %4500 = vmatprep.subr.bf16.mxu0 0
        %4501 = vmatpush1.bf16.xpose.msra.mxu0 0
        %4502 = vmatprep.subr.bf16.mxu0 0
        %4503 = vmatpush1.bf16.xpose.msra.mxu0 0
        %4504 = vmatprep.subr.bf16.mxu0 0
        %4505 = vmatpush1.bf16.xpose.msra.mxu0 0
        %4506 = vmatprep.subr.bf16.mxu0 0
        %4507 = vmatpush1.bf16.xpose.msra.mxu0 0
        %4508 = vmatprep.subr.bf16.mxu0 0
        %4509 = vmatpush1.bf16.xpose.msra.mxu0 0
        %4510 = vmatprep.subr.bf16.mxu0 0
        %4511 = vmatpush1.bf16.xpose.msra.mxu0 0
        %4512 = vmatprep.subr.bf16.mxu0 0
        %4513 = vmatpush1.bf16.xpose.msra.mxu0 0
        %4514 = vmatprep.subr.bf16.mxu0 0
        %4515 = vmatpush1.bf16.xpose.msra.mxu0 0
        %4516 = vmatprep.subr.bf16.mxu0 0
        %4517 = vmatpush1.bf16.xpose.msra.mxu0 0
        %4518 = vmatprep.subr.bf16.mxu0 0
        %4519 = vmatpush1.bf16.xpose.msra.mxu0 0
        %4520 = vmatprep.mubr.bf16.mxu0 0
        %4521 = vmatmul.mubr.bf16.gmra.mrb[0].mxu0 %v4483
        %v4522 = vpop.f32.mrb[0].mxu0
        %v4523 = vadd.f32 0.0, %v4522
        %v4524 = vpop.f32.mrb[0].mxu0
        %v4525 = vpop.f32.mrb[0].mxu0
        %v4526 = vpop.f32.mrb[0].mxu0
        %4527 = vdwg.mxu0
        %4528 = vrot.lane.b32.xlu0 %v4304, 64
        %v4529 = vpop.permute.xlu0 %4528
        %4530 = vrot.lane.b32.xlu0 %v4307, 64
        %v4531 = vpop.permute.xlu0 %4530
        %v4533 = vsel %vm1122, %v4529, 0
        %v4536 = vsel %vm1122, %v4531, 0
        %4538 = vmatprep.subr.bf16.mxu0 0
        %4539 = vmatpush1.bf16.xpose.msra.mxu0 %v4536
        %4540 = vmatprep.subr.bf16.mxu0 0
        %4541 = vmatpush1.bf16.xpose.msra.mxu0 0
        %4542 = vmatprep.subr.bf16.mxu0 0
        %4543 = vmatpush1.bf16.xpose.msra.mxu0 0
        %4544 = vmatprep.subr.bf16.mxu0 0
        %4545 = vmatpush1.bf16.xpose.msra.mxu0 0
        %4546 = vmatprep.subr.bf16.mxu0 0
        %4547 = vmatpush1.bf16.xpose.msra.mxu0 0
        %4548 = vmatprep.subr.bf16.mxu0 0
        %4549 = vmatpush1.bf16.xpose.msra.mxu0 0
        %4550 = vmatprep.subr.bf16.mxu0 0
        %4551 = vmatpush1.bf16.xpose.msra.mxu0 0
        %4552 = vmatprep.subr.bf16.mxu0 0
        %4553 = vmatpush1.bf16.xpose.msra.mxu0 0
        %4554 = vmatprep.subr.bf16.mxu0 0
        %4555 = vmatpush1.bf16.xpose.msra.mxu0 0
        %4556 = vmatprep.subr.bf16.mxu0 0
        %4557 = vmatpush1.bf16.xpose.msra.mxu0 0
        %4558 = vmatprep.subr.bf16.mxu0 0
        %4559 = vmatpush1.bf16.xpose.msra.mxu0 0
        %4560 = vmatprep.subr.bf16.mxu0 0
        %4561 = vmatpush1.bf16.xpose.msra.mxu0 0
        %4562 = vmatprep.subr.bf16.mxu0 0
        %4563 = vmatpush1.bf16.xpose.msra.mxu0 0
        %4564 = vmatprep.subr.bf16.mxu0 0
        %4565 = vmatpush1.bf16.xpose.msra.mxu0 0
        %4566 = vmatprep.subr.bf16.mxu0 0
        %4567 = vmatpush1.bf16.xpose.msra.mxu0 0
        %4568 = vmatprep.subr.bf16.mxu0 0
        %4569 = vmatpush1.bf16.xpose.msra.mxu0 0
        %4570 = vmatprep.mubr.bf16.mxu0 0
        %4571 = vmatmul.mubr.bf16.gmra.mrb[0].mxu0 %v4533
        %v4572 = vpop.f32.mrb[0].mxu0
        %v4573 = vadd.f32 0.0, %v4572
        %v4574 = vpop.f32.mrb[0].mxu0
        %v4575 = vpop.f32.mrb[0].mxu0
        %v4576 = vpop.f32.mrb[0].mxu0
        %4577 = vdwg.mxu0
        %v4578 = vsel %vm1215, %v4523, -inf
        %4579 = vmax.xlane.f32.xlu0 %v4578
        %v4580 = vpop.xlane.xlu0 %4579
        %v4581 = vsel %vm1215, %v4573, -inf
        %4582 = vmax.xlane.f32.xlu0 %v4581
        %v4583 = vpop.xlane.xlu0 %4582
        %v4584 = vsub.f32 %v4523, %v4580
        %v4585 = vsub.f32 %v4573, %v4583
        %v4586 = vmul.f32 %v4584, 1.442695
        %v4587 = vpow.pop %v4586
        %v4588 = vmul.f32 %v4585, 1.442695
        %v4589 = vpow.pop %v4588
        %v4590 = vsel %vm1215, %v4587, 0.0
        %4591 = vadd.xlane.f32.xlu0 %v4590
        %v4592 = vpop.xlane.xlu0 %4591
        %v4593 = vsel %vm1215, %v4589, 0.0
        %4594 = vadd.xlane.f32.xlu0 %v4593
        %v4595 = vpop.xlane.xlu0 %4594
        %v4596 = vrcp.pop %v4592
        %v4597 = vmul.f32 %v4587, %v4596
        %v4598 = vrcp.pop %v4595
        %v4599 = vmul.f32 %v4589, %v4598
        %v4600 = vpack.c.bf16 %v4597, %v4597
        %v4601 = vpack.c.bf16 %v4599, %v4599
        %4602 = vrot.lane.b32.xlu0 %v4380, 64
        %v4603 = vpop.permute.xlu0 %4602
        %v4605 = vsel %vm1215, %v4600, 0
        %v4608 = vsel %vm1243, %v4603, 0
        %4610 = vmatprep.subr.bf16.mxu0 0
        %4611 = vmatpush1.bf16.msra.mxu0 %v4608
        %4612 = vmatprep.subr.bf16.mxu0 0
        %4613 = vmatpush1.bf16.msra.mxu0 0
        %4614 = vmatprep.subr.bf16.mxu0 0
        %4615 = vmatpush1.bf16.msra.mxu0 0
        %4616 = vmatprep.subr.bf16.mxu0 0
        %4617 = vmatpush1.bf16.msra.mxu0 0
        %4618 = vmatprep.subr.bf16.mxu0 0
        %4619 = vmatpush1.bf16.msra.mxu0 0
        %4620 = vmatprep.subr.bf16.mxu0 0
        %4621 = vmatpush1.bf16.msra.mxu0 0
        %4622 = vmatprep.subr.bf16.mxu0 0
        %4623 = vmatpush1.bf16.msra.mxu0 0
        %4624 = vmatprep.subr.bf16.mxu0 0
        %4625 = vmatpush1.bf16.msra.mxu0 0
        %4626 = vmatprep.subr.bf16.mxu0 0
        %4627 = vmatpush1.bf16.msra.mxu0 0
        %4628 = vmatprep.subr.bf16.mxu0 0
        %4629 = vmatpush1.bf16.msra.mxu0 0
        %4630 = vmatprep.subr.bf16.mxu0 0
        %4631 = vmatpush1.bf16.msra.mxu0 0
        %4632 = vmatprep.subr.bf16.mxu0 0
        %4633 = vmatpush1.bf16.msra.mxu0 0
        %4634 = vmatprep.subr.bf16.mxu0 0
        %4635 = vmatpush1.bf16.msra.mxu0 0
        %4636 = vmatprep.subr.bf16.mxu0 0
        %4637 = vmatpush1.bf16.msra.mxu0 0
        %4638 = vmatprep.subr.bf16.mxu0 0
        %4639 = vmatpush1.bf16.msra.mxu0 0
        %4640 = vmatprep.subr.bf16.mxu0 0
        %4641 = vmatpush1.bf16.msra.mxu0 0
        %4642 = vmatprep.mubr.bf16.mxu0 0
        %4643 = vmatmul.mubr.bf16.gmra.mrb[0].mxu0 %v4605
        %v4644 = vpop.f32.mrb[0].mxu0
        %v4645 = vadd.f32 0.0, %v4644
        %v4646 = vpop.f32.mrb[0].mxu0
        %v4647 = vpop.f32.mrb[0].mxu0
        %v4648 = vpop.f32.mrb[0].mxu0
        %4649 = vdwg.mxu0
        %4650 = vrot.lane.b32.xlu0 %v4429, 64
        %v4651 = vpop.permute.xlu0 %4650
        %v4653 = vsel %vm1215, %v4601, 0
        %v4656 = vsel %vm1243, %v4651, 0
        %4658 = vmatprep.subr.bf16.mxu0 0
        %4659 = vmatpush1.bf16.msra.mxu0 %v4656
        %4660 = vmatprep.subr.bf16.mxu0 0
        %4661 = vmatpush1.bf16.msra.mxu0 0
        %4662 = vmatprep.subr.bf16.mxu0 0
        %4663 = vmatpush1.bf16.msra.mxu0 0
        %4664 = vmatprep.subr.bf16.mxu0 0
        %4665 = vmatpush1.bf16.msra.mxu0 0
        %4666 = vmatprep.subr.bf16.mxu0 0
        %4667 = vmatpush1.bf16.msra.mxu0 0
        %4668 = vmatprep.subr.bf16.mxu0 0
        %4669 = vmatpush1.bf16.msra.mxu0 0
        %4670 = vmatprep.subr.bf16.mxu0 0
        %4671 = vmatpush1.bf16.msra.mxu0 0
        %4672 = vmatprep.subr.bf16.mxu0 0
        %4673 = vmatpush1.bf16.msra.mxu0 0
        %4674 = vmatprep.subr.bf16.mxu0 0
        %4675 = vmatpush1.bf16.msra.mxu0 0
        %4676 = vmatprep.subr.bf16.mxu0 0
        %4677 = vmatpush1.bf16.msra.mxu0 0
        %4678 = vmatprep.subr.bf16.mxu0 0
        %4679 = vmatpush1.bf16.msra.mxu0 0
        %4680 = vmatprep.subr.bf16.mxu0 0
        %4681 = vmatpush1.bf16.msra.mxu0 0
        %4682 = vmatprep.subr.bf16.mxu0 0
        %4683 = vmatpush1.bf16.msra.mxu0 0
        %4684 = vmatprep.subr.bf16.mxu0 0
        %4685 = vmatpush1.bf16.msra.mxu0 0
        %4686 = vmatprep.subr.bf16.mxu0 0
        %4687 = vmatpush1.bf16.msra.mxu0 0
        %4688 = vmatprep.subr.bf16.mxu0 0
        %4689 = vmatpush1.bf16.msra.mxu0 0
        %4690 = vmatprep.mubr.bf16.mxu0 0
        %4691 = vmatmul.mubr.bf16.gmra.mrb[0].mxu0 %v4653
        %v4692 = vpop.f32.mrb[0].mxu0
        %v4693 = vadd.f32 0.0, %v4692
        %v4694 = vpop.f32.mrb[0].mxu0
        %v4695 = vpop.f32.mrb[0].mxu0
        %v4696 = vpop.f32.mrb[0].mxu0
        %4697 = vdwg.mxu0
        %4698 = vrot.lane.b32.xlu0 %v4252, 32
        %v4699 = vpop.permute.xlu0 %4698
        %4700 = vrot.lane.b32.xlu0 %v4255, 32
        %v4701 = vpop.permute.xlu0 %4700
        %v4703 = vsel %vm1122, %v4699, 0
        %v4706 = vsel %vm1122, %v4701, 0
        %4708 = vmatprep.subr.bf16.mxu0 0
        %4709 = vmatpush1.bf16.xpose.msra.mxu0 %v4706
        %4710 = vmatprep.subr.bf16.mxu0 0
        %4711 = vmatpush1.bf16.xpose.msra.mxu0 0
        %4712 = vmatprep.subr.bf16.mxu0 0
        %4713 = vmatpush1.bf16.xpose.msra.mxu0 0
        %4714 = vmatprep.subr.bf16.mxu0 0
        %4715 = vmatpush1.bf16.xpose.msra.mxu0 0
        %4716 = vmatprep.subr.bf16.mxu0 0
        %4717 = vmatpush1.bf16.xpose.msra.mxu0 0
        %4718 = vmatprep.subr.bf16.mxu0 0
        %4719 = vmatpush1.bf16.xpose.msra.mxu0 0
        %4720 = vmatprep.subr.bf16.mxu0 0
        %4721 = vmatpush1.bf16.xpose.msra.mxu0 0
        %4722 = vmatprep.subr.bf16.mxu0 0
        %4723 = vmatpush1.bf16.xpose.msra.mxu0 0
        %4724 = vmatprep.subr.bf16.mxu0 0
        %4725 = vmatpush1.bf16.xpose.msra.mxu0 0
        %4726 = vmatprep.subr.bf16.mxu0 0
        %4727 = vmatpush1.bf16.xpose.msra.mxu0 0
        %4728 = vmatprep.subr.bf16.mxu0 0
        %4729 = vmatpush1.bf16.xpose.msra.mxu0 0
        %4730 = vmatprep.subr.bf16.mxu0 0
        %4731 = vmatpush1.bf16.xpose.msra.mxu0 0
        %4732 = vmatprep.subr.bf16.mxu0 0
        %4733 = vmatpush1.bf16.xpose.msra.mxu0 0
        %4734 = vmatprep.subr.bf16.mxu0 0
        %4735 = vmatpush1.bf16.xpose.msra.mxu0 0
        %4736 = vmatprep.subr.bf16.mxu0 0
        %4737 = vmatpush1.bf16.xpose.msra.mxu0 0
        %4738 = vmatprep.subr.bf16.mxu0 0
        %4739 = vmatpush1.bf16.xpose.msra.mxu0 0
        %4740 = vmatprep.mubr.bf16.mxu0 0
        %4741 = vmatmul.mubr.bf16.gmra.mrb[0].mxu0 %v4703
        %v4742 = vpop.f32.mrb[0].mxu0
        %v4743 = vadd.f32 0.0, %v4742
        %v4744 = vpop.f32.mrb[0].mxu0
        %v4745 = vpop.f32.mrb[0].mxu0
        %v4746 = vpop.f32.mrb[0].mxu0
        %4747 = vdwg.mxu0
        %4748 = vrot.lane.b32.xlu0 %v4304, 32
        %v4749 = vpop.permute.xlu0 %4748
        %4750 = vrot.lane.b32.xlu0 %v4307, 32
        %v4751 = vpop.permute.xlu0 %4750
        %v4753 = vsel %vm1122, %v4749, 0
        %v4756 = vsel %vm1122, %v4751, 0
        %4758 = vmatprep.subr.bf16.mxu0 0
        %4759 = vmatpush1.bf16.xpose.msra.mxu0 %v4756
        %4760 = vmatprep.subr.bf16.mxu0 0
        %4761 = vmatpush1.bf16.xpose.msra.mxu0 0
        %4762 = vmatprep.subr.bf16.mxu0 0
        %4763 = vmatpush1.bf16.xpose.msra.mxu0 0
        %4764 = vmatprep.subr.bf16.mxu0 0
        %4765 = vmatpush1.bf16.xpose.msra.mxu0 0
        %4766 = vmatprep.subr.bf16.mxu0 0
        %4767 = vmatpush1.bf16.xpose.msra.mxu0 0
        %4768 = vmatprep.subr.bf16.mxu0 0
        %4769 = vmatpush1.bf16.xpose.msra.mxu0 0
        %4770 = vmatprep.subr.bf16.mxu0 0
        %4771 = vmatpush1.bf16.xpose.msra.mxu0 0
        %4772 = vmatprep.subr.bf16.mxu0 0
        %4773 = vmatpush1.bf16.xpose.msra.mxu0 0
        %4774 = vmatprep.subr.bf16.mxu0 0
        %4775 = vmatpush1.bf16.xpose.msra.mxu0 0
        %4776 = vmatprep.subr.bf16.mxu0 0
        %4777 = vmatpush1.bf16.xpose.msra.mxu0 0
        %4778 = vmatprep.subr.bf16.mxu0 0
        %4779 = vmatpush1.bf16.xpose.msra.mxu0 0
        %4780 = vmatprep.subr.bf16.mxu0 0
        %4781 = vmatpush1.bf16.xpose.msra.mxu0 0
        %4782 = vmatprep.subr.bf16.mxu0 0
        %4783 = vmatpush1.bf16.xpose.msra.mxu0 0
        %4784 = vmatprep.subr.bf16.mxu0 0
        %4785 = vmatpush1.bf16.xpose.msra.mxu0 0
        %4786 = vmatprep.subr.bf16.mxu0 0
        %4787 = vmatpush1.bf16.xpose.msra.mxu0 0
        %4788 = vmatprep.subr.bf16.mxu0 0
        %4789 = vmatpush1.bf16.xpose.msra.mxu0 0
        %4790 = vmatprep.mubr.bf16.mxu0 0
        %4791 = vmatmul.mubr.bf16.gmra.mrb[0].mxu0 %v4753
        %v4792 = vpop.f32.mrb[0].mxu0
        %v4793 = vadd.f32 0.0, %v4792
        %v4794 = vpop.f32.mrb[0].mxu0
        %v4795 = vpop.f32.mrb[0].mxu0
        %v4796 = vpop.f32.mrb[0].mxu0
        %4797 = vdwg.mxu0
        %v4798 = vsel %vm1215, %v4743, -inf
        %4799 = vmax.xlane.f32.xlu0 %v4798
        %v4800 = vpop.xlane.xlu0 %4799
        %v4801 = vsel %vm1215, %v4793, -inf
        %4802 = vmax.xlane.f32.xlu0 %v4801
        %v4803 = vpop.xlane.xlu0 %4802
        %v4804 = vsub.f32 %v4743, %v4800
        %v4805 = vsub.f32 %v4793, %v4803
        %v4806 = vmul.f32 %v4804, 1.442695
        %v4807 = vpow.pop %v4806
        %v4808 = vmul.f32 %v4805, 1.442695
        %v4809 = vpow.pop %v4808
        %v4810 = vsel %vm1215, %v4807, 0.0
        %4811 = vadd.xlane.f32.xlu0 %v4810
        %v4812 = vpop.xlane.xlu0 %4811
        %v4813 = vsel %vm1215, %v4809, 0.0
        %4814 = vadd.xlane.f32.xlu0 %v4813
        %v4815 = vpop.xlane.xlu0 %4814
        %v4816 = vrcp.pop %v4812
        %v4817 = vmul.f32 %v4807, %v4816
        %v4818 = vrcp.pop %v4815
        %v4819 = vmul.f32 %v4809, %v4818
        %v4820 = vpack.c.bf16 %v4817, %v4817
        %v4821 = vpack.c.bf16 %v4819, %v4819
        %4822 = vrot.lane.b32.xlu0 %v4380, 32
        %v4823 = vpop.permute.xlu0 %4822
        %v4825 = vsel %vm1215, %v4820, 0
        %v4828 = vsel %vm1243, %v4823, 0
        %4830 = vmatprep.subr.bf16.mxu0 0
        %4831 = vmatpush1.bf16.msra.mxu0 %v4828
        %4832 = vmatprep.subr.bf16.mxu0 0
        %4833 = vmatpush1.bf16.msra.mxu0 0
        %4834 = vmatprep.subr.bf16.mxu0 0
        %4835 = vmatpush1.bf16.msra.mxu0 0
        %4836 = vmatprep.subr.bf16.mxu0 0
        %4837 = vmatpush1.bf16.msra.mxu0 0
        %4838 = vmatprep.subr.bf16.mxu0 0
        %4839 = vmatpush1.bf16.msra.mxu0 0
        %4840 = vmatprep.subr.bf16.mxu0 0
        %4841 = vmatpush1.bf16.msra.mxu0 0
        %4842 = vmatprep.subr.bf16.mxu0 0
        %4843 = vmatpush1.bf16.msra.mxu0 0
        %4844 = vmatprep.subr.bf16.mxu0 0
        %4845 = vmatpush1.bf16.msra.mxu0 0
        %4846 = vmatprep.subr.bf16.mxu0 0
        %4847 = vmatpush1.bf16.msra.mxu0 0
        %4848 = vmatprep.subr.bf16.mxu0 0
        %4849 = vmatpush1.bf16.msra.mxu0 0
        %4850 = vmatprep.subr.bf16.mxu0 0
        %4851 = vmatpush1.bf16.msra.mxu0 0
        %4852 = vmatprep.subr.bf16.mxu0 0
        %4853 = vmatpush1.bf16.msra.mxu0 0
        %4854 = vmatprep.subr.bf16.mxu0 0
        %4855 = vmatpush1.bf16.msra.mxu0 0
        %4856 = vmatprep.subr.bf16.mxu0 0
        %4857 = vmatpush1.bf16.msra.mxu0 0
        %4858 = vmatprep.subr.bf16.mxu0 0
        %4859 = vmatpush1.bf16.msra.mxu0 0
        %4860 = vmatprep.subr.bf16.mxu0 0
        %4861 = vmatpush1.bf16.msra.mxu0 0
        %4862 = vmatprep.mubr.bf16.mxu0 0
        %4863 = vmatmul.mubr.bf16.gmra.mrb[0].mxu0 %v4825
        %v4864 = vpop.f32.mrb[0].mxu0
        %v4865 = vadd.f32 0.0, %v4864
        %v4866 = vpop.f32.mrb[0].mxu0
        %v4867 = vpop.f32.mrb[0].mxu0
        %v4868 = vpop.f32.mrb[0].mxu0
        %4869 = vdwg.mxu0
        %4870 = vrot.lane.b32.xlu0 %v4429, 32
        %v4871 = vpop.permute.xlu0 %4870
        %v4873 = vsel %vm1215, %v4821, 0
        %v4876 = vsel %vm1243, %v4871, 0
        %4878 = vmatprep.subr.bf16.mxu0 0
        %4879 = vmatpush1.bf16.msra.mxu0 %v4876
        %4880 = vmatprep.subr.bf16.mxu0 0
        %4881 = vmatpush1.bf16.msra.mxu0 0
        %4882 = vmatprep.subr.bf16.mxu0 0
        %4883 = vmatpush1.bf16.msra.mxu0 0
        %4884 = vmatprep.subr.bf16.mxu0 0
        %4885 = vmatpush1.bf16.msra.mxu0 0
        %4886 = vmatprep.subr.bf16.mxu0 0
        %4887 = vmatpush1.bf16.msra.mxu0 0
        %4888 = vmatprep.subr.bf16.mxu0 0
        %4889 = vmatpush1.bf16.msra.mxu0 0
        %4890 = vmatprep.subr.bf16.mxu0 0
        %4891 = vmatpush1.bf16.msra.mxu0 0
        %4892 = vmatprep.subr.bf16.mxu0 0
        %4893 = vmatpush1.bf16.msra.mxu0 0
        %4894 = vmatprep.subr.bf16.mxu0 0
        %4895 = vmatpush1.bf16.msra.mxu0 0
        %4896 = vmatprep.subr.bf16.mxu0 0
        %4897 = vmatpush1.bf16.msra.mxu0 0
        %4898 = vmatprep.subr.bf16.mxu0 0
        %4899 = vmatpush1.bf16.msra.mxu0 0
        %4900 = vmatprep.subr.bf16.mxu0 0
        %4901 = vmatpush1.bf16.msra.mxu0 0
        %4902 = vmatprep.subr.bf16.mxu0 0
        %4903 = vmatpush1.bf16.msra.mxu0 0
        %4904 = vmatprep.subr.bf16.mxu0 0
        %4905 = vmatpush1.bf16.msra.mxu0 0
        %4906 = vmatprep.subr.bf16.mxu0 0
        %4907 = vmatpush1.bf16.msra.mxu0 0
        %4908 = vmatprep.subr.bf16.mxu0 0
        %4909 = vmatpush1.bf16.msra.mxu0 0
        %4910 = vmatprep.mubr.bf16.mxu0 0
        %4911 = vmatmul.mubr.bf16.gmra.mrb[0].mxu0 %v4873
        %v4912 = vpop.f32.mrb[0].mxu0
        %v4913 = vadd.f32 0.0, %v4912
        %v4914 = vpop.f32.mrb[0].mxu0
        %v4915 = vpop.f32.mrb[0].mxu0
        %v4916 = vpop.f32.mrb[0].mxu0
        %4917 = vdwg.mxu0
        %v4918 = vrot.slane %v4022, 4
        %v4919 = vrot.slane %v4032, 4
        %v4921 = vsel %vm1122, %v4918, 0
        %v4924 = vsel %vm1122, %v4919, 0
        %4926 = vmatprep.subr.bf16.mxu0 0
        %4927 = vmatpush1.bf16.xpose.msra.mxu0 %v4924
        %4928 = vmatprep.subr.bf16.mxu0 0
        %4929 = vmatpush1.bf16.xpose.msra.mxu0 0
        %4930 = vmatprep.subr.bf16.mxu0 0
        %4931 = vmatpush1.bf16.xpose.msra.mxu0 0
        %4932 = vmatprep.subr.bf16.mxu0 0
        %4933 = vmatpush1.bf16.xpose.msra.mxu0 0
        %4934 = vmatprep.subr.bf16.mxu0 0
        %4935 = vmatpush1.bf16.xpose.msra.mxu0 0
        %4936 = vmatprep.subr.bf16.mxu0 0
        %4937 = vmatpush1.bf16.xpose.msra.mxu0 0
        %4938 = vmatprep.subr.bf16.mxu0 0
        %4939 = vmatpush1.bf16.xpose.msra.mxu0 0
        %4940 = vmatprep.subr.bf16.mxu0 0
        %4941 = vmatpush1.bf16.xpose.msra.mxu0 0
        %4942 = vmatprep.subr.bf16.mxu0 0
        %4943 = vmatpush1.bf16.xpose.msra.mxu0 0
        %4944 = vmatprep.subr.bf16.mxu0 0
        %4945 = vmatpush1.bf16.xpose.msra.mxu0 0
        %4946 = vmatprep.subr.bf16.mxu0 0
        %4947 = vmatpush1.bf16.xpose.msra.mxu0 0
        %4948 = vmatprep.subr.bf16.mxu0 0
        %4949 = vmatpush1.bf16.xpose.msra.mxu0 0
        %4950 = vmatprep.subr.bf16.mxu0 0
        %4951 = vmatpush1.bf16.xpose.msra.mxu0 0
        %4952 = vmatprep.subr.bf16.mxu0 0
        %4953 = vmatpush1.bf16.xpose.msra.mxu0 0
        %4954 = vmatprep.subr.bf16.mxu0 0
        %4955 = vmatpush1.bf16.xpose.msra.mxu0 0
        %4956 = vmatprep.subr.bf16.mxu0 0
        %4957 = vmatpush1.bf16.xpose.msra.mxu0 0
        %4958 = vmatprep.mubr.bf16.mxu0 0
        %4959 = vmatmul.mubr.bf16.gmra.mrb[0].mxu0 %v4921
        %v4960 = vpop.f32.mrb[0].mxu0
        %v4961 = vadd.f32 0.0, %v4960
        %v4962 = vpop.f32.mrb[0].mxu0
        %v4963 = vpop.f32.mrb[0].mxu0
        %v4964 = vpop.f32.mrb[0].mxu0
        %4965 = vdwg.mxu0
        %v4966 = vrot.slane %v4023, 4
        %v4967 = vrot.slane %v4033, 4
        %v4969 = vsel %vm1122, %v4966, 0
        %v4972 = vsel %vm1122, %v4967, 0
        %4974 = vmatprep.subr.bf16.mxu0 0
        %4975 = vmatpush1.bf16.xpose.msra.mxu0 %v4972
        %4976 = vmatprep.subr.bf16.mxu0 0
        %4977 = vmatpush1.bf16.xpose.msra.mxu0 0
        %4978 = vmatprep.subr.bf16.mxu0 0
        %4979 = vmatpush1.bf16.xpose.msra.mxu0 0
        %4980 = vmatprep.subr.bf16.mxu0 0
        %4981 = vmatpush1.bf16.xpose.msra.mxu0 0
        %4982 = vmatprep.subr.bf16.mxu0 0
        %4983 = vmatpush1.bf16.xpose.msra.mxu0 0
        %4984 = vmatprep.subr.bf16.mxu0 0
        %4985 = vmatpush1.bf16.xpose.msra.mxu0 0
        %4986 = vmatprep.subr.bf16.mxu0 0
        %4987 = vmatpush1.bf16.xpose.msra.mxu0 0
        %4988 = vmatprep.subr.bf16.mxu0 0
        %4989 = vmatpush1.bf16.xpose.msra.mxu0 0
        %4990 = vmatprep.subr.bf16.mxu0 0
        %4991 = vmatpush1.bf16.xpose.msra.mxu0 0
        %4992 = vmatprep.subr.bf16.mxu0 0
        %4993 = vmatpush1.bf16.xpose.msra.mxu0 0
        %4994 = vmatprep.subr.bf16.mxu0 0
        %4995 = vmatpush1.bf16.xpose.msra.mxu0 0
        %4996 = vmatprep.subr.bf16.mxu0 0
        %4997 = vmatpush1.bf16.xpose.msra.mxu0 0
        %4998 = vmatprep.subr.bf16.mxu0 0
        %4999 = vmatpush1.bf16.xpose.msra.mxu0 0
        %5000 = vmatprep.subr.bf16.mxu0 0
        %5001 = vmatpush1.bf16.xpose.msra.mxu0 0
        %5002 = vmatprep.subr.bf16.mxu0 0
        %5003 = vmatpush1.bf16.xpose.msra.mxu0 0
        %5004 = vmatprep.subr.bf16.mxu0 0
        %5005 = vmatpush1.bf16.xpose.msra.mxu0 0
        %5006 = vmatprep.mubr.bf16.mxu0 0
        %5007 = vmatmul.mubr.bf16.gmra.mrb[0].mxu0 %v4969
        %v5008 = vpop.f32.mrb[0].mxu0
        %v5009 = vadd.f32 0.0, %v5008
        %v5010 = vpop.f32.mrb[0].mxu0
        %v5011 = vpop.f32.mrb[0].mxu0
        %v5012 = vpop.f32.mrb[0].mxu0
        %5013 = vdwg.mxu0
        %v5014 = vsel %vm1215, %v4961, -inf
        %5015 = vmax.xlane.f32.xlu0 %v5014
        %v5016 = vpop.xlane.xlu0 %5015
        %v5017 = vsel %vm1215, %v5009, -inf
        %5018 = vmax.xlane.f32.xlu0 %v5017
        %v5019 = vpop.xlane.xlu0 %5018
        %v5020 = vsub.f32 %v4961, %v5016
        %v5021 = vsub.f32 %v5009, %v5019
        %v5022 = vmul.f32 %v5020, 1.442695
        %v5023 = vpow.pop %v5022
        %v5024 = vmul.f32 %v5021, 1.442695
        %v5025 = vpow.pop %v5024
        %v5026 = vsel %vm1215, %v5023, 0.0
        %5027 = vadd.xlane.f32.xlu0 %v5026
        %v5028 = vpop.xlane.xlu0 %5027
        %v5029 = vsel %vm1215, %v5025, 0.0
        %5030 = vadd.xlane.f32.xlu0 %v5029
        %v5031 = vpop.xlane.xlu0 %5030
        %v5032 = vrcp.pop %v5028
        %v5033 = vmul.f32 %v5023, %v5032
        %v5034 = vrcp.pop %v5031
        %v5035 = vmul.f32 %v5025, %v5034
        %v5036 = vpack.c.bf16 %v5033, %v5033
        %v5037 = vpack.c.bf16 %v5035, %v5035
        %v5038 = vrot.slane %v4042, 4
        %v5040 = vsel %vm1215, %v5036, 0
        %v5043 = vsel %vm1243, %v5038, 0
        %5045 = vmatprep.subr.bf16.mxu0 0
        %5046 = vmatpush1.bf16.msra.mxu0 %v5043
        %5047 = vmatprep.subr.bf16.mxu0 0
        %5048 = vmatpush1.bf16.msra.mxu0 0
        %5049 = vmatprep.subr.bf16.mxu0 0
        %5050 = vmatpush1.bf16.msra.mxu0 0
        %5051 = vmatprep.subr.bf16.mxu0 0
        %5052 = vmatpush1.bf16.msra.mxu0 0
        %5053 = vmatprep.subr.bf16.mxu0 0
        %5054 = vmatpush1.bf16.msra.mxu0 0
        %5055 = vmatprep.subr.bf16.mxu0 0
        %5056 = vmatpush1.bf16.msra.mxu0 0
        %5057 = vmatprep.subr.bf16.mxu0 0
        %5058 = vmatpush1.bf16.msra.mxu0 0
        %5059 = vmatprep.subr.bf16.mxu0 0
        %5060 = vmatpush1.bf16.msra.mxu0 0
        %5061 = vmatprep.subr.bf16.mxu0 0
        %5062 = vmatpush1.bf16.msra.mxu0 0
        %5063 = vmatprep.subr.bf16.mxu0 0
        %5064 = vmatpush1.bf16.msra.mxu0 0
        %5065 = vmatprep.subr.bf16.mxu0 0
        %5066 = vmatpush1.bf16.msra.mxu0 0
        %5067 = vmatprep.subr.bf16.mxu0 0
        %5068 = vmatpush1.bf16.msra.mxu0 0
        %5069 = vmatprep.subr.bf16.mxu0 0
        %5070 = vmatpush1.bf16.msra.mxu0 0
        %5071 = vmatprep.subr.bf16.mxu0 0
        %5072 = vmatpush1.bf16.msra.mxu0 0
        %5073 = vmatprep.subr.bf16.mxu0 0
        %5074 = vmatpush1.bf16.msra.mxu0 0
        %5075 = vmatprep.subr.bf16.mxu0 0
        %5076 = vmatpush1.bf16.msra.mxu0 0
        %5077 = vmatprep.mubr.bf16.mxu0 0
        %5078 = vmatmul.mubr.bf16.gmra.mrb[0].mxu0 %v5040
        %v5079 = vpop.f32.mrb[0].mxu0
        %v5080 = vadd.f32 0.0, %v5079
        %v5081 = vpop.f32.mrb[0].mxu0
        %v5082 = vpop.f32.mrb[0].mxu0
        %v5083 = vpop.f32.mrb[0].mxu0
        %5084 = vdwg.mxu0
        %v5085 = vrot.slane %v4043, 4
        %v5087 = vsel %vm1215, %v5037, 0
        %v5090 = vsel %vm1243, %v5085, 0
        %5092 = vmatprep.subr.bf16.mxu0 0
        %5093 = vmatpush1.bf16.msra.mxu0 %v5090
        %5094 = vmatprep.subr.bf16.mxu0 0
        %5095 = vmatpush1.bf16.msra.mxu0 0
        %5096 = vmatprep.subr.bf16.mxu0 0
        %5097 = vmatpush1.bf16.msra.mxu0 0
        %5098 = vmatprep.subr.bf16.mxu0 0
        %5099 = vmatpush1.bf16.msra.mxu0 0
        %5100 = vmatprep.subr.bf16.mxu0 0
        %5101 = vmatpush1.bf16.msra.mxu0 0
        %5102 = vmatprep.subr.bf16.mxu0 0
        %5103 = vmatpush1.bf16.msra.mxu0 0
        %5104 = vmatprep.subr.bf16.mxu0 0
        %5105 = vmatpush1.bf16.msra.mxu0 0
        %5106 = vmatprep.subr.bf16.mxu0 0
        %5107 = vmatpush1.bf16.msra.mxu0 0
        %5108 = vmatprep.subr.bf16.mxu0 0
        %5109 = vmatpush1.bf16.msra.mxu0 0
        %5110 = vmatprep.subr.bf16.mxu0 0
        %5111 = vmatpush1.bf16.msra.mxu0 0
        %5112 = vmatprep.subr.bf16.mxu0 0
        %5113 = vmatpush1.bf16.msra.mxu0 0
        %5114 = vmatprep.subr.bf16.mxu0 0
        %5115 = vmatpush1.bf16.msra.mxu0 0
        %5116 = vmatprep.subr.bf16.mxu0 0
        %5117 = vmatpush1.bf16.msra.mxu0 0
        %5118 = vmatprep.subr.bf16.mxu0 0
        %5119 = vmatpush1.bf16.msra.mxu0 0
        %5120 = vmatprep.subr.bf16.mxu0 0
        %5121 = vmatpush1.bf16.msra.mxu0 0
        %5122 = vmatprep.subr.bf16.mxu0 0
        %5123 = vmatpush1.bf16.msra.mxu0 0
        %5124 = vmatprep.mubr.bf16.mxu0 0
        %5125 = vmatmul.mubr.bf16.gmra.mrb[0].mxu0 %v5087
        %v5126 = vpop.f32.mrb[0].mxu0
        %v5127 = vadd.f32 0.0, %v5126
        %v5128 = vpop.f32.mrb[0].mxu0
        %v5129 = vpop.f32.mrb[0].mxu0
        %v5130 = vpop.f32.mrb[0].mxu0
        %5131 = vdwg.mxu0
        %5132 = vrot.lane.b32.xlu0 %v4022, 96
        %v5133 = vpop.permute.xlu0 %5132
        %v5134 = vrot.slane %v5133, 4
        %5135 = vrot.lane.b32.xlu0 %v4032, 96
        %v5136 = vpop.permute.xlu0 %5135
        %v5137 = vrot.slane %v5136, 4
        %v5139 = vsel %vm1122, %v5134, 0
        %v5142 = vsel %vm1122, %v5137, 0
        %5144 = vmatprep.subr.bf16.mxu0 0
        %5145 = vmatpush1.bf16.xpose.msra.mxu0 %v5142
        %5146 = vmatprep.subr.bf16.mxu0 0
        %5147 = vmatpush1.bf16.xpose.msra.mxu0 0
        %5148 = vmatprep.subr.bf16.mxu0 0
        %5149 = vmatpush1.bf16.xpose.msra.mxu0 0
        %5150 = vmatprep.subr.bf16.mxu0 0
        %5151 = vmatpush1.bf16.xpose.msra.mxu0 0
        %5152 = vmatprep.subr.bf16.mxu0 0
        %5153 = vmatpush1.bf16.xpose.msra.mxu0 0
        %5154 = vmatprep.subr.bf16.mxu0 0
        %5155 = vmatpush1.bf16.xpose.msra.mxu0 0
        %5156 = vmatprep.subr.bf16.mxu0 0
        %5157 = vmatpush1.bf16.xpose.msra.mxu0 0
        %5158 = vmatprep.subr.bf16.mxu0 0
        %5159 = vmatpush1.bf16.xpose.msra.mxu0 0
        %5160 = vmatprep.subr.bf16.mxu0 0
        %5161 = vmatpush1.bf16.xpose.msra.mxu0 0
        %5162 = vmatprep.subr.bf16.mxu0 0
        %5163 = vmatpush1.bf16.xpose.msra.mxu0 0
        %5164 = vmatprep.subr.bf16.mxu0 0
        %5165 = vmatpush1.bf16.xpose.msra.mxu0 0
        %5166 = vmatprep.subr.bf16.mxu0 0
        %5167 = vmatpush1.bf16.xpose.msra.mxu0 0
        %5168 = vmatprep.subr.bf16.mxu0 0
        %5169 = vmatpush1.bf16.xpose.msra.mxu0 0
        %5170 = vmatprep.subr.bf16.mxu0 0
        %5171 = vmatpush1.bf16.xpose.msra.mxu0 0
        %5172 = vmatprep.subr.bf16.mxu0 0
        %5173 = vmatpush1.bf16.xpose.msra.mxu0 0
        %5174 = vmatprep.subr.bf16.mxu0 0
        %5175 = vmatpush1.bf16.xpose.msra.mxu0 0
        %5176 = vmatprep.mubr.bf16.mxu0 0
        %5177 = vmatmul.mubr.bf16.gmra.mrb[0].mxu0 %v5139
        %v5178 = vpop.f32.mrb[0].mxu0
        %v5179 = vadd.f32 0.0, %v5178
        %v5180 = vpop.f32.mrb[0].mxu0
        %v5181 = vpop.f32.mrb[0].mxu0
        %v5182 = vpop.f32.mrb[0].mxu0
        %5183 = vdwg.mxu0
        %5184 = vrot.lane.b32.xlu0 %v4023, 96
        %v5185 = vpop.permute.xlu0 %5184
        %v5186 = vrot.slane %v5185, 4
        %5187 = vrot.lane.b32.xlu0 %v4033, 96
        %v5188 = vpop.permute.xlu0 %5187
        %v5189 = vrot.slane %v5188, 4
        %v5191 = vsel %vm1122, %v5186, 0
        %v5194 = vsel %vm1122, %v5189, 0
        %5196 = vmatprep.subr.bf16.mxu0 0
        %5197 = vmatpush1.bf16.xpose.msra.mxu0 %v5194
        %5198 = vmatprep.subr.bf16.mxu0 0
        %5199 = vmatpush1.bf16.xpose.msra.mxu0 0
        %5200 = vmatprep.subr.bf16.mxu0 0
        %5201 = vmatpush1.bf16.xpose.msra.mxu0 0
        %5202 = vmatprep.subr.bf16.mxu0 0
        %5203 = vmatpush1.bf16.xpose.msra.mxu0 0
        %5204 = vmatprep.subr.bf16.mxu0 0
        %5205 = vmatpush1.bf16.xpose.msra.mxu0 0
        %5206 = vmatprep.subr.bf16.mxu0 0
        %5207 = vmatpush1.bf16.xpose.msra.mxu0 0
        %5208 = vmatprep.subr.bf16.mxu0 0
        %5209 = vmatpush1.bf16.xpose.msra.mxu0 0
        %5210 = vmatprep.subr.bf16.mxu0 0
        %5211 = vmatpush1.bf16.xpose.msra.mxu0 0
        %5212 = vmatprep.subr.bf16.mxu0 0
        %5213 = vmatpush1.bf16.xpose.msra.mxu0 0
        %5214 = vmatprep.subr.bf16.mxu0 0
        %5215 = vmatpush1.bf16.xpose.msra.mxu0 0
        %5216 = vmatprep.subr.bf16.mxu0 0
        %5217 = vmatpush1.bf16.xpose.msra.mxu0 0
        %5218 = vmatprep.subr.bf16.mxu0 0
        %5219 = vmatpush1.bf16.xpose.msra.mxu0 0
        %5220 = vmatprep.subr.bf16.mxu0 0
        %5221 = vmatpush1.bf16.xpose.msra.mxu0 0
        %5222 = vmatprep.subr.bf16.mxu0 0
        %5223 = vmatpush1.bf16.xpose.msra.mxu0 0
        %5224 = vmatprep.subr.bf16.mxu0 0
        %5225 = vmatpush1.bf16.xpose.msra.mxu0 0
        %5226 = vmatprep.subr.bf16.mxu0 0
        %5227 = vmatpush1.bf16.xpose.msra.mxu0 0
        %5228 = vmatprep.mubr.bf16.mxu0 0
        %5229 = vmatmul.mubr.bf16.gmra.mrb[0].mxu0 %v5191
        %v5230 = vpop.f32.mrb[0].mxu0
        %v5231 = vadd.f32 0.0, %v5230
        %v5232 = vpop.f32.mrb[0].mxu0
        %v5233 = vpop.f32.mrb[0].mxu0
        %v5234 = vpop.f32.mrb[0].mxu0
        %5235 = vdwg.mxu0
        %v5236 = vsel %vm1215, %v5179, -inf
        %5237 = vmax.xlane.f32.xlu0 %v5236
        %v5238 = vpop.xlane.xlu0 %5237
        %v5239 = vsel %vm1215, %v5231, -inf
        %5240 = vmax.xlane.f32.xlu0 %v5239
        %v5241 = vpop.xlane.xlu0 %5240
        %v5242 = vsub.f32 %v5179, %v5238
        %v5243 = vsub.f32 %v5231, %v5241
        %v5244 = vmul.f32 %v5242, 1.442695
        %v5245 = vpow.pop %v5244
        %v5246 = vmul.f32 %v5243, 1.442695
        %v5247 = vpow.pop %v5246
        %v5248 = vsel %vm1215, %v5245, 0.0
        %5249 = vadd.xlane.f32.xlu0 %v5248
        %v5250 = vpop.xlane.xlu0 %5249
        %v5251 = vsel %vm1215, %v5247, 0.0
        %5252 = vadd.xlane.f32.xlu0 %v5251
        %v5253 = vpop.xlane.xlu0 %5252
        %v5254 = vrcp.pop %v5250
        %v5255 = vmul.f32 %v5245, %v5254
        %v5256 = vrcp.pop %v5253
        %v5257 = vmul.f32 %v5247, %v5256
        %v5258 = vpack.c.bf16 %v5255, %v5255
        %v5259 = vpack.c.bf16 %v5257, %v5257
        %5260 = vrot.lane.b32.xlu0 %v4042, 96
        %v5261 = vpop.permute.xlu0 %5260
        %v5262 = vrot.slane %v5261, 4
        %v5264 = vsel %vm1215, %v5258, 0
        %v5267 = vsel %vm1243, %v5262, 0
        %5269 = vmatprep.subr.bf16.mxu0 0
        %5270 = vmatpush1.bf16.msra.mxu0 %v5267
        %5271 = vmatprep.subr.bf16.mxu0 0
        %5272 = vmatpush1.bf16.msra.mxu0 0
        %5273 = vmatprep.subr.bf16.mxu0 0
        %5274 = vmatpush1.bf16.msra.mxu0 0
        %5275 = vmatprep.subr.bf16.mxu0 0
        %5276 = vmatpush1.bf16.msra.mxu0 0
        %5277 = vmatprep.subr.bf16.mxu0 0
        %5278 = vmatpush1.bf16.msra.mxu0 0
        %5279 = vmatprep.subr.bf16.mxu0 0
        %5280 = vmatpush1.bf16.msra.mxu0 0
        %5281 = vmatprep.subr.bf16.mxu0 0
        %5282 = vmatpush1.bf16.msra.mxu0 0
        %5283 = vmatprep.subr.bf16.mxu0 0
        %5284 = vmatpush1.bf16.msra.mxu0 0
        %5285 = vmatprep.subr.bf16.mxu0 0
        %5286 = vmatpush1.bf16.msra.mxu0 0
        %5287 = vmatprep.subr.bf16.mxu0 0
        %5288 = vmatpush1.bf16.msra.mxu0 0
        %5289 = vmatprep.subr.bf16.mxu0 0
        %5290 = vmatpush1.bf16.msra.mxu0 0
        %5291 = vmatprep.subr.bf16.mxu0 0
        %5292 = vmatpush1.bf16.msra.mxu0 0
        %5293 = vmatprep.subr.bf16.mxu0 0
        %5294 = vmatpush1.bf16.msra.mxu0 0
        %5295 = vmatprep.subr.bf16.mxu0 0
        %5296 = vmatpush1.bf16.msra.mxu0 0
        %5297 = vmatprep.subr.bf16.mxu0 0
        %5298 = vmatpush1.bf16.msra.mxu0 0
        %5299 = vmatprep.subr.bf16.mxu0 0
        %5300 = vmatpush1.bf16.msra.mxu0 0
        %5301 = vmatprep.mubr.bf16.mxu0 0
        %5302 = vmatmul.mubr.bf16.gmra.mrb[0].mxu0 %v5264
        %v5303 = vpop.f32.mrb[0].mxu0
        %v5304 = vadd.f32 0.0, %v5303
        %v5305 = vpop.f32.mrb[0].mxu0
        %v5306 = vpop.f32.mrb[0].mxu0
        %v5307 = vpop.f32.mrb[0].mxu0
        %5308 = vdwg.mxu0
        %5309 = vrot.lane.b32.xlu0 %v4043, 96
        %v5310 = vpop.permute.xlu0 %5309
        %v5311 = vrot.slane %v5310, 4
        %v5313 = vsel %vm1215, %v5259, 0
        %v5316 = vsel %vm1243, %v5311, 0
        %5318 = vmatprep.subr.bf16.mxu0 0
        %5319 = vmatpush1.bf16.msra.mxu0 %v5316
        %5320 = vmatprep.subr.bf16.mxu0 0
        %5321 = vmatpush1.bf16.msra.mxu0 0
        %5322 = vmatprep.subr.bf16.mxu0 0
        %5323 = vmatpush1.bf16.msra.mxu0 0
        %5324 = vmatprep.subr.bf16.mxu0 0
        %5325 = vmatpush1.bf16.msra.mxu0 0
        %5326 = vmatprep.subr.bf16.mxu0 0
        %5327 = vmatpush1.bf16.msra.mxu0 0
        %5328 = vmatprep.subr.bf16.mxu0 0
        %5329 = vmatpush1.bf16.msra.mxu0 0
        %5330 = vmatprep.subr.bf16.mxu0 0
        %5331 = vmatpush1.bf16.msra.mxu0 0
        %5332 = vmatprep.subr.bf16.mxu0 0
        %5333 = vmatpush1.bf16.msra.mxu0 0
        %5334 = vmatprep.subr.bf16.mxu0 0
        %5335 = vmatpush1.bf16.msra.mxu0 0
        %5336 = vmatprep.subr.bf16.mxu0 0
        %5337 = vmatpush1.bf16.msra.mxu0 0
        %5338 = vmatprep.subr.bf16.mxu0 0
        %5339 = vmatpush1.bf16.msra.mxu0 0
        %5340 = vmatprep.subr.bf16.mxu0 0
        %5341 = vmatpush1.bf16.msra.mxu0 0
        %5342 = vmatprep.subr.bf16.mxu0 0
        %5343 = vmatpush1.bf16.msra.mxu0 0
        %5344 = vmatprep.subr.bf16.mxu0 0
        %5345 = vmatpush1.bf16.msra.mxu0 0
        %5346 = vmatprep.subr.bf16.mxu0 0
        %5347 = vmatpush1.bf16.msra.mxu0 0
        %5348 = vmatprep.subr.bf16.mxu0 0
        %5349 = vmatpush1.bf16.msra.mxu0 0
        %5350 = vmatprep.mubr.bf16.mxu0 0
        %5351 = vmatmul.mubr.bf16.gmra.mrb[0].mxu0 %v5313
        %v5352 = vpop.f32.mrb[0].mxu0
        %v5353 = vadd.f32 0.0, %v5352
        %v5354 = vpop.f32.mrb[0].mxu0
        %v5355 = vpop.f32.mrb[0].mxu0
        %v5356 = vpop.f32.mrb[0].mxu0
        %5357 = vdwg.mxu0
        %5358 = vrot.lane.b32.xlu0 %v4022, 64
        %v5359 = vpop.permute.xlu0 %5358
        %v5360 = vrot.slane %v5359, 4
        %5361 = vrot.lane.b32.xlu0 %v4032, 64
        %v5362 = vpop.permute.xlu0 %5361
        %v5363 = vrot.slane %v5362, 4
        %v5365 = vsel %vm1122, %v5360, 0
        %v5368 = vsel %vm1122, %v5363, 0
        %5370 = vmatprep.subr.bf16.mxu0 0
        %5371 = vmatpush1.bf16.xpose.msra.mxu0 %v5368
        %5372 = vmatprep.subr.bf16.mxu0 0
        %5373 = vmatpush1.bf16.xpose.msra.mxu0 0
        %5374 = vmatprep.subr.bf16.mxu0 0
        %5375 = vmatpush1.bf16.xpose.msra.mxu0 0
        %5376 = vmatprep.subr.bf16.mxu0 0
        %5377 = vmatpush1.bf16.xpose.msra.mxu0 0
        %5378 = vmatprep.subr.bf16.mxu0 0
        %5379 = vmatpush1.bf16.xpose.msra.mxu0 0
        %5380 = vmatprep.subr.bf16.mxu0 0
        %5381 = vmatpush1.bf16.xpose.msra.mxu0 0
        %5382 = vmatprep.subr.bf16.mxu0 0
        %5383 = vmatpush1.bf16.xpose.msra.mxu0 0
        %5384 = vmatprep.subr.bf16.mxu0 0
        %5385 = vmatpush1.bf16.xpose.msra.mxu0 0
        %5386 = vmatprep.subr.bf16.mxu0 0
        %5387 = vmatpush1.bf16.xpose.msra.mxu0 0
        %5388 = vmatprep.subr.bf16.mxu0 0
        %5389 = vmatpush1.bf16.xpose.msra.mxu0 0
        %5390 = vmatprep.subr.bf16.mxu0 0
        %5391 = vmatpush1.bf16.xpose.msra.mxu0 0
        %5392 = vmatprep.subr.bf16.mxu0 0
        %5393 = vmatpush1.bf16.xpose.msra.mxu0 0
        %5394 = vmatprep.subr.bf16.mxu0 0
        %5395 = vmatpush1.bf16.xpose.msra.mxu0 0
        %5396 = vmatprep.subr.bf16.mxu0 0
        %5397 = vmatpush1.bf16.xpose.msra.mxu0 0
        %5398 = vmatprep.subr.bf16.mxu0 0
        %5399 = vmatpush1.bf16.xpose.msra.mxu0 0
        %5400 = vmatprep.subr.bf16.mxu0 0
        %5401 = vmatpush1.bf16.xpose.msra.mxu0 0
        %5402 = vmatprep.mubr.bf16.mxu0 0
        %5403 = vmatmul.mubr.bf16.gmra.mrb[0].mxu0 %v5365
        %v5404 = vpop.f32.mrb[0].mxu0
        %v5405 = vadd.f32 0.0, %v5404
        %v5406 = vpop.f32.mrb[0].mxu0
        %v5407 = vpop.f32.mrb[0].mxu0
        %v5408 = vpop.f32.mrb[0].mxu0
        %5409 = vdwg.mxu0
        %5410 = vrot.lane.b32.xlu0 %v4023, 64
        %v5411 = vpop.permute.xlu0 %5410
        %v5412 = vrot.slane %v5411, 4
        %5413 = vrot.lane.b32.xlu0 %v4033, 64
        %v5414 = vpop.permute.xlu0 %5413
        %v5415 = vrot.slane %v5414, 4
        %v5417 = vsel %vm1122, %v5412, 0
        %v5420 = vsel %vm1122, %v5415, 0
        %5422 = vmatprep.subr.bf16.mxu0 0
        %5423 = vmatpush1.bf16.xpose.msra.mxu0 %v5420
        %5424 = vmatprep.subr.bf16.mxu0 0
        %5425 = vmatpush1.bf16.xpose.msra.mxu0 0
        %5426 = vmatprep.subr.bf16.mxu0 0
        %5427 = vmatpush1.bf16.xpose.msra.mxu0 0
        %5428 = vmatprep.subr.bf16.mxu0 0
        %5429 = vmatpush1.bf16.xpose.msra.mxu0 0
        %5430 = vmatprep.subr.bf16.mxu0 0
        %5431 = vmatpush1.bf16.xpose.msra.mxu0 0
        %5432 = vmatprep.subr.bf16.mxu0 0
        %5433 = vmatpush1.bf16.xpose.msra.mxu0 0
        %5434 = vmatprep.subr.bf16.mxu0 0
        %5435 = vmatpush1.bf16.xpose.msra.mxu0 0
        %5436 = vmatprep.subr.bf16.mxu0 0
        %5437 = vmatpush1.bf16.xpose.msra.mxu0 0
        %5438 = vmatprep.subr.bf16.mxu0 0
        %5439 = vmatpush1.bf16.xpose.msra.mxu0 0
        %5440 = vmatprep.subr.bf16.mxu0 0
        %5441 = vmatpush1.bf16.xpose.msra.mxu0 0
        %5442 = vmatprep.subr.bf16.mxu0 0
        %5443 = vmatpush1.bf16.xpose.msra.mxu0 0
        %5444 = vmatprep.subr.bf16.mxu0 0
        %5445 = vmatpush1.bf16.xpose.msra.mxu0 0
        %5446 = vmatprep.subr.bf16.mxu0 0
        %5447 = vmatpush1.bf16.xpose.msra.mxu0 0
        %5448 = vmatprep.subr.bf16.mxu0 0
        %5449 = vmatpush1.bf16.xpose.msra.mxu0 0
        %5450 = vmatprep.subr.bf16.mxu0 0
        %5451 = vmatpush1.bf16.xpose.msra.mxu0 0
        %5452 = vmatprep.subr.bf16.mxu0 0
        %5453 = vmatpush1.bf16.xpose.msra.mxu0 0
        %5454 = vmatprep.mubr.bf16.mxu0 0
        %5455 = vmatmul.mubr.bf16.gmra.mrb[0].mxu0 %v5417
        %v5456 = vpop.f32.mrb[0].mxu0
        %v5457 = vadd.f32 0.0, %v5456
        %v5458 = vpop.f32.mrb[0].mxu0
        %v5459 = vpop.f32.mrb[0].mxu0
        %v5460 = vpop.f32.mrb[0].mxu0
        %5461 = vdwg.mxu0
        %v5462 = vsel %vm1215, %v5405, -inf
        %5463 = vmax.xlane.f32.xlu0 %v5462
        %v5464 = vpop.xlane.xlu0 %5463
        %v5465 = vsel %vm1215, %v5457, -inf
        %5466 = vmax.xlane.f32.xlu0 %v5465
        %v5467 = vpop.xlane.xlu0 %5466
        %v5468 = vsub.f32 %v5405, %v5464
        %v5469 = vsub.f32 %v5457, %v5467
        %v5470 = vmul.f32 %v5468, 1.442695
        %v5471 = vpow.pop %v5470
        %v5472 = vmul.f32 %v5469, 1.442695
        %v5473 = vpow.pop %v5472
        %v5474 = vsel %vm1215, %v5471, 0.0
        %5475 = vadd.xlane.f32.xlu0 %v5474
        %v5476 = vpop.xlane.xlu0 %5475
        %v5477 = vsel %vm1215, %v5473, 0.0
        %5478 = vadd.xlane.f32.xlu0 %v5477
        %v5479 = vpop.xlane.xlu0 %5478
        %v5480 = vrcp.pop %v5476
        %v5481 = vmul.f32 %v5471, %v5480
        %v5482 = vrcp.pop %v5479
        %v5483 = vmul.f32 %v5473, %v5482
        %v5484 = vpack.c.bf16 %v5481, %v5481
        %v5485 = vpack.c.bf16 %v5483, %v5483
        %5486 = vrot.lane.b32.xlu0 %v4042, 64
        %v5487 = vpop.permute.xlu0 %5486
        %v5488 = vrot.slane %v5487, 4
        %v5490 = vsel %vm1215, %v5484, 0
        %v5493 = vsel %vm1243, %v5488, 0
        %5495 = vmatprep.subr.bf16.mxu0 0
        %5496 = vmatpush1.bf16.msra.mxu0 %v5493
        %5497 = vmatprep.subr.bf16.mxu0 0
        %5498 = vmatpush1.bf16.msra.mxu0 0
        %5499 = vmatprep.subr.bf16.mxu0 0
        %5500 = vmatpush1.bf16.msra.mxu0 0
        %5501 = vmatprep.subr.bf16.mxu0 0
        %5502 = vmatpush1.bf16.msra.mxu0 0
        %5503 = vmatprep.subr.bf16.mxu0 0
        %5504 = vmatpush1.bf16.msra.mxu0 0
        %5505 = vmatprep.subr.bf16.mxu0 0
        %5506 = vmatpush1.bf16.msra.mxu0 0
        %5507 = vmatprep.subr.bf16.mxu0 0
        %5508 = vmatpush1.bf16.msra.mxu0 0
        %5509 = vmatprep.subr.bf16.mxu0 0
        %5510 = vmatpush1.bf16.msra.mxu0 0
        %5511 = vmatprep.subr.bf16.mxu0 0
        %5512 = vmatpush1.bf16.msra.mxu0 0
        %5513 = vmatprep.subr.bf16.mxu0 0
        %5514 = vmatpush1.bf16.msra.mxu0 0
        %5515 = vmatprep.subr.bf16.mxu0 0
        %5516 = vmatpush1.bf16.msra.mxu0 0
        %5517 = vmatprep.subr.bf16.mxu0 0
        %5518 = vmatpush1.bf16.msra.mxu0 0
        %5519 = vmatprep.subr.bf16.mxu0 0
        %5520 = vmatpush1.bf16.msra.mxu0 0
        %5521 = vmatprep.subr.bf16.mxu0 0
        %5522 = vmatpush1.bf16.msra.mxu0 0
        %5523 = vmatprep.subr.bf16.mxu0 0
        %5524 = vmatpush1.bf16.msra.mxu0 0
        %5525 = vmatprep.subr.bf16.mxu0 0
        %5526 = vmatpush1.bf16.msra.mxu0 0
        %5527 = vmatprep.mubr.bf16.mxu0 0
        %5528 = vmatmul.mubr.bf16.gmra.mrb[0].mxu0 %v5490
        %v5529 = vpop.f32.mrb[0].mxu0
        %v5530 = vadd.f32 0.0, %v5529
        %v5531 = vpop.f32.mrb[0].mxu0
        %v5532 = vpop.f32.mrb[0].mxu0
        %v5533 = vpop.f32.mrb[0].mxu0
        %5534 = vdwg.mxu0
        %5535 = vrot.lane.b32.xlu0 %v4043, 64
        %v5536 = vpop.permute.xlu0 %5535
        %v5537 = vrot.slane %v5536, 4
        %v5539 = vsel %vm1215, %v5485, 0
        %v5542 = vsel %vm1243, %v5537, 0
        %5544 = vmatprep.subr.bf16.mxu0 0
        %5545 = vmatpush1.bf16.msra.mxu0 %v5542
        %5546 = vmatprep.subr.bf16.mxu0 0
        %5547 = vmatpush1.bf16.msra.mxu0 0
        %5548 = vmatprep.subr.bf16.mxu0 0
        %5549 = vmatpush1.bf16.msra.mxu0 0
        %5550 = vmatprep.subr.bf16.mxu0 0
        %5551 = vmatpush1.bf16.msra.mxu0 0
        %5552 = vmatprep.subr.bf16.mxu0 0
        %5553 = vmatpush1.bf16.msra.mxu0 0
        %5554 = vmatprep.subr.bf16.mxu0 0
        %5555 = vmatpush1.bf16.msra.mxu0 0
        %5556 = vmatprep.subr.bf16.mxu0 0
        %5557 = vmatpush1.bf16.msra.mxu0 0
        %5558 = vmatprep.subr.bf16.mxu0 0
        %5559 = vmatpush1.bf16.msra.mxu0 0
        %5560 = vmatprep.subr.bf16.mxu0 0
        %5561 = vmatpush1.bf16.msra.mxu0 0
        %5562 = vmatprep.subr.bf16.mxu0 0
        %5563 = vmatpush1.bf16.msra.mxu0 0
        %5564 = vmatprep.subr.bf16.mxu0 0
        %5565 = vmatpush1.bf16.msra.mxu0 0
        %5566 = vmatprep.subr.bf16.mxu0 0
        %5567 = vmatpush1.bf16.msra.mxu0 0
        %5568 = vmatprep.subr.bf16.mxu0 0
        %5569 = vmatpush1.bf16.msra.mxu0 0
        %5570 = vmatprep.subr.bf16.mxu0 0
        %5571 = vmatpush1.bf16.msra.mxu0 0
        %5572 = vmatprep.subr.bf16.mxu0 0
        %5573 = vmatpush1.bf16.msra.mxu0 0
        %5574 = vmatprep.subr.bf16.mxu0 0
        %5575 = vmatpush1.bf16.msra.mxu0 0
        %5576 = vmatprep.mubr.bf16.mxu0 0
        %5577 = vmatmul.mubr.bf16.gmra.mrb[0].mxu0 %v5539
        %v5578 = vpop.f32.mrb[0].mxu0
        %v5579 = vadd.f32 0.0, %v5578
        %v5580 = vpop.f32.mrb[0].mxu0
        %v5581 = vpop.f32.mrb[0].mxu0
        %v5582 = vpop.f32.mrb[0].mxu0
        %5583 = vdwg.mxu0
        %5584 = vrot.lane.b32.xlu0 %v4022, 32
        %v5585 = vpop.permute.xlu0 %5584
        %v5586 = vrot.slane %v5585, 4
        %5587 = vrot.lane.b32.xlu0 %v4032, 32
        %v5588 = vpop.permute.xlu0 %5587
        %v5589 = vrot.slane %v5588, 4
        %v5591 = vsel %vm1122, %v5586, 0
        %v5594 = vsel %vm1122, %v5589, 0
        %5596 = vmatprep.subr.bf16.mxu0 0
        %5597 = vmatpush1.bf16.xpose.msra.mxu0 %v5594
        %5598 = vmatprep.subr.bf16.mxu0 0
        %5599 = vmatpush1.bf16.xpose.msra.mxu0 0
        %5600 = vmatprep.subr.bf16.mxu0 0
        %5601 = vmatpush1.bf16.xpose.msra.mxu0 0
        %5602 = vmatprep.subr.bf16.mxu0 0
        %5603 = vmatpush1.bf16.xpose.msra.mxu0 0
        %5604 = vmatprep.subr.bf16.mxu0 0
        %5605 = vmatpush1.bf16.xpose.msra.mxu0 0
        %5606 = vmatprep.subr.bf16.mxu0 0
        %5607 = vmatpush1.bf16.xpose.msra.mxu0 0
        %5608 = vmatprep.subr.bf16.mxu0 0
        %5609 = vmatpush1.bf16.xpose.msra.mxu0 0
        %5610 = vmatprep.subr.bf16.mxu0 0
        %5611 = vmatpush1.bf16.xpose.msra.mxu0 0
        %5612 = vmatprep.subr.bf16.mxu0 0
        %5613 = vmatpush1.bf16.xpose.msra.mxu0 0
        %5614 = vmatprep.subr.bf16.mxu0 0
        %5615 = vmatpush1.bf16.xpose.msra.mxu0 0
        %5616 = vmatprep.subr.bf16.mxu0 0
        %5617 = vmatpush1.bf16.xpose.msra.mxu0 0
        %5618 = vmatprep.subr.bf16.mxu0 0
        %5619 = vmatpush1.bf16.xpose.msra.mxu0 0
        %5620 = vmatprep.subr.bf16.mxu0 0
        %5621 = vmatpush1.bf16.xpose.msra.mxu0 0
        %5622 = vmatprep.subr.bf16.mxu0 0
        %5623 = vmatpush1.bf16.xpose.msra.mxu0 0
        %5624 = vmatprep.subr.bf16.mxu0 0
        %5625 = vmatpush1.bf16.xpose.msra.mxu0 0
        %5626 = vmatprep.subr.bf16.mxu0 0
        %5627 = vmatpush1.bf16.xpose.msra.mxu0 0
        %5628 = vmatprep.mubr.bf16.mxu0 0
        %5629 = vmatmul.mubr.bf16.gmra.mrb[0].mxu0 %v5591
        %v5630 = vpop.f32.mrb[0].mxu0
        %v5631 = vadd.f32 0.0, %v5630
        %v5632 = vpop.f32.mrb[0].mxu0
        %v5633 = vpop.f32.mrb[0].mxu0
        %v5634 = vpop.f32.mrb[0].mxu0
        %5635 = vdwg.mxu0
        %5636 = vrot.lane.b32.xlu0 %v4023, 32
        %v5637 = vpop.permute.xlu0 %5636
        %v5638 = vrot.slane %v5637, 4
        %5639 = vrot.lane.b32.xlu0 %v4033, 32
        %v5640 = vpop.permute.xlu0 %5639
        %v5641 = vrot.slane %v5640, 4
        %v5643 = vsel %vm1122, %v5638, 0
        %v5646 = vsel %vm1122, %v5641, 0
        %5648 = vmatprep.subr.bf16.mxu0 0
        %5649 = vmatpush1.bf16.xpose.msra.mxu0 %v5646
        %5650 = vmatprep.subr.bf16.mxu0 0
        %5651 = vmatpush1.bf16.xpose.msra.mxu0 0
        %5652 = vmatprep.subr.bf16.mxu0 0
        %5653 = vmatpush1.bf16.xpose.msra.mxu0 0
        %5654 = vmatprep.subr.bf16.mxu0 0
        %5655 = vmatpush1.bf16.xpose.msra.mxu0 0
        %5656 = vmatprep.subr.bf16.mxu0 0
        %5657 = vmatpush1.bf16.xpose.msra.mxu0 0
        %5658 = vmatprep.subr.bf16.mxu0 0
        %5659 = vmatpush1.bf16.xpose.msra.mxu0 0
        %5660 = vmatprep.subr.bf16.mxu0 0
        %5661 = vmatpush1.bf16.xpose.msra.mxu0 0
        %5662 = vmatprep.subr.bf16.mxu0 0
        %5663 = vmatpush1.bf16.xpose.msra.mxu0 0
        %5664 = vmatprep.subr.bf16.mxu0 0
        %5665 = vmatpush1.bf16.xpose.msra.mxu0 0
        %5666 = vmatprep.subr.bf16.mxu0 0
        %5667 = vmatpush1.bf16.xpose.msra.mxu0 0
        %5668 = vmatprep.subr.bf16.mxu0 0
        %5669 = vmatpush1.bf16.xpose.msra.mxu0 0
        %5670 = vmatprep.subr.bf16.mxu0 0
        %5671 = vmatpush1.bf16.xpose.msra.mxu0 0
        %5672 = vmatprep.subr.bf16.mxu0 0
        %5673 = vmatpush1.bf16.xpose.msra.mxu0 0
        %5674 = vmatprep.subr.bf16.mxu0 0
        %5675 = vmatpush1.bf16.xpose.msra.mxu0 0
        %5676 = vmatprep.subr.bf16.mxu0 0
        %5677 = vmatpush1.bf16.xpose.msra.mxu0 0
        %5678 = vmatprep.subr.bf16.mxu0 0
        %5679 = vmatpush1.bf16.xpose.msra.mxu0 0
        %5680 = vmatprep.mubr.bf16.mxu0 0
        %5681 = vmatmul.mubr.bf16.gmra.mrb[0].mxu0 %v5643
        %v5682 = vpop.f32.mrb[0].mxu0
        %v5683 = vadd.f32 0.0, %v5682
        %v5684 = vpop.f32.mrb[0].mxu0
        %v5685 = vpop.f32.mrb[0].mxu0
        %v5686 = vpop.f32.mrb[0].mxu0
        %5687 = vdwg.mxu0
        %v5688 = vsel %vm1215, %v5631, -inf
        %5689 = vmax.xlane.f32.xlu0 %v5688
        %v5690 = vpop.xlane.xlu0 %5689
        %v5691 = vsel %vm1215, %v5683, -inf
        %5692 = vmax.xlane.f32.xlu0 %v5691
        %v5693 = vpop.xlane.xlu0 %5692
        %v5694 = vsub.f32 %v5631, %v5690
        %v5695 = vsub.f32 %v5683, %v5693
        %v5696 = vmul.f32 %v5694, 1.442695
        %v5697 = vpow.pop %v5696
        %v5698 = vmul.f32 %v5695, 1.442695
        %v5699 = vpow.pop %v5698
        %v5700 = vsel %vm1215, %v5697, 0.0
        %5701 = vadd.xlane.f32.xlu0 %v5700
        %v5702 = vpop.xlane.xlu0 %5701
        %v5703 = vsel %vm1215, %v5699, 0.0
        %5704 = vadd.xlane.f32.xlu0 %v5703
        %v5705 = vpop.xlane.xlu0 %5704
        %v5706 = vrcp.pop %v5702
        %v5707 = vmul.f32 %v5697, %v5706
        %v5708 = vrcp.pop %v5705
        %v5709 = vmul.f32 %v5699, %v5708
        %v5710 = vpack.c.bf16 %v5707, %v5707
        %v5711 = vpack.c.bf16 %v5709, %v5709
        %5712 = vrot.lane.b32.xlu0 %v4042, 32
        %v5713 = vpop.permute.xlu0 %5712
        %v5714 = vrot.slane %v5713, 4
        %v5716 = vsel %vm1215, %v5710, 0
        %v5719 = vsel %vm1243, %v5714, 0
        %5721 = vmatprep.subr.bf16.mxu0 0
        %5722 = vmatpush1.bf16.msra.mxu0 %v5719
        %5723 = vmatprep.subr.bf16.mxu0 0
        %5724 = vmatpush1.bf16.msra.mxu0 0
        %5725 = vmatprep.subr.bf16.mxu0 0
        %5726 = vmatpush1.bf16.msra.mxu0 0
        %5727 = vmatprep.subr.bf16.mxu0 0
        %5728 = vmatpush1.bf16.msra.mxu0 0
        %5729 = vmatprep.subr.bf16.mxu0 0
        %5730 = vmatpush1.bf16.msra.mxu0 0
        %5731 = vmatprep.subr.bf16.mxu0 0
        %5732 = vmatpush1.bf16.msra.mxu0 0
        %5733 = vmatprep.subr.bf16.mxu0 0
        %5734 = vmatpush1.bf16.msra.mxu0 0
        %5735 = vmatprep.subr.bf16.mxu0 0
        %5736 = vmatpush1.bf16.msra.mxu0 0
        %5737 = vmatprep.subr.bf16.mxu0 0
        %5738 = vmatpush1.bf16.msra.mxu0 0
        %5739 = vmatprep.subr.bf16.mxu0 0
        %5740 = vmatpush1.bf16.msra.mxu0 0
        %5741 = vmatprep.subr.bf16.mxu0 0
        %5742 = vmatpush1.bf16.msra.mxu0 0
        %5743 = vmatprep.subr.bf16.mxu0 0
        %5744 = vmatpush1.bf16.msra.mxu0 0
        %5745 = vmatprep.subr.bf16.mxu0 0
        %5746 = vmatpush1.bf16.msra.mxu0 0
        %5747 = vmatprep.subr.bf16.mxu0 0
        %5748 = vmatpush1.bf16.msra.mxu0 0
        %5749 = vmatprep.subr.bf16.mxu0 0
        %5750 = vmatpush1.bf16.msra.mxu0 0
        %5751 = vmatprep.subr.bf16.mxu0 0
        %5752 = vmatpush1.bf16.msra.mxu0 0
        %5753 = vmatprep.mubr.bf16.mxu0 0
        %5754 = vmatmul.mubr.bf16.gmra.mrb[0].mxu0 %v5716
        %v5755 = vpop.f32.mrb[0].mxu0
        %v5756 = vadd.f32 0.0, %v5755
        %v5757 = vpop.f32.mrb[0].mxu0
        %v5758 = vpop.f32.mrb[0].mxu0
        %v5759 = vpop.f32.mrb[0].mxu0
        %5760 = vdwg.mxu0
        %5761 = vrot.lane.b32.xlu0 %v4043, 32
        %v5762 = vpop.permute.xlu0 %5761
        %v5763 = vrot.slane %v5762, 4
        %v5765 = vsel %vm1215, %v5711, 0
        %v5768 = vsel %vm1243, %v5763, 0
        %5770 = vmatprep.subr.bf16.mxu0 0
        %5771 = vmatpush1.bf16.msra.mxu0 %v5768
        %5772 = vmatprep.subr.bf16.mxu0 0
        %5773 = vmatpush1.bf16.msra.mxu0 0
        %5774 = vmatprep.subr.bf16.mxu0 0
        %5775 = vmatpush1.bf16.msra.mxu0 0
        %5776 = vmatprep.subr.bf16.mxu0 0
        %5777 = vmatpush1.bf16.msra.mxu0 0
        %5778 = vmatprep.subr.bf16.mxu0 0
        %5779 = vmatpush1.bf16.msra.mxu0 0
        %5780 = vmatprep.subr.bf16.mxu0 0
        %5781 = vmatpush1.bf16.msra.mxu0 0
        %5782 = vmatprep.subr.bf16.mxu0 0
        %5783 = vmatpush1.bf16.msra.mxu0 0
        %5784 = vmatprep.subr.bf16.mxu0 0
        %5785 = vmatpush1.bf16.msra.mxu0 0
        %5786 = vmatprep.subr.bf16.mxu0 0
        %5787 = vmatpush1.bf16.msra.mxu0 0
        %5788 = vmatprep.subr.bf16.mxu0 0
        %5789 = vmatpush1.bf16.msra.mxu0 0
        %5790 = vmatprep.subr.bf16.mxu0 0
        %5791 = vmatpush1.bf16.msra.mxu0 0
        %5792 = vmatprep.subr.bf16.mxu0 0
        %5793 = vmatpush1.bf16.msra.mxu0 0
        %5794 = vmatprep.subr.bf16.mxu0 0
        %5795 = vmatpush1.bf16.msra.mxu0 0
        %5796 = vmatprep.subr.bf16.mxu0 0
        %5797 = vmatpush1.bf16.msra.mxu0 0
        %5798 = vmatprep.subr.bf16.mxu0 0
        %5799 = vmatpush1.bf16.msra.mxu0 0
        %5800 = vmatprep.subr.bf16.mxu0 0
        %5801 = vmatpush1.bf16.msra.mxu0 0
        %5802 = vmatprep.mubr.bf16.mxu0 0
        %5803 = vmatmul.mubr.bf16.gmra.mrb[0].mxu0 %v5765
        %v5804 = vpop.f32.mrb[0].mxu0
        %v5805 = vadd.f32 0.0, %v5804
        %v5806 = vpop.f32.mrb[0].mxu0
        %v5807 = vpop.f32.mrb[0].mxu0
        %v5808 = vpop.f32.mrb[0].mxu0
        %5809 = vdwg.mxu0
        %5812 = vrot.lane.b32.xlu0 %v4424, 32
        %v5813 = vpop.permute.xlu0 %5812
        %5814 = vrot.lane.b32.xlu0 %v4473, 32
        %v5815 = vpop.permute.xlu0 %5814
        %5820 = vrot.lane.b32.xlu0 %v4645, 64
        %v5821 = vpop.permute.xlu0 %5820
        %5822 = vrot.lane.b32.xlu0 %v4693, 64
        %v5823 = vpop.permute.xlu0 %5822
        %5828 = vrot.lane.b32.xlu0 %v4865, 96
        %v5829 = vpop.permute.xlu0 %5828
        %5830 = vrot.lane.b32.xlu0 %v4913, 96
        %v5831 = vpop.permute.xlu0 %5830
        %5836 = vrot.lane.b32.xlu0 %v5304, 32
        %v5837 = vpop.permute.xlu0 %5836
        %5838 = vrot.lane.b32.xlu0 %v5353, 32
        %v5839 = vpop.permute.xlu0 %5838
        %5844 = vrot.lane.b32.xlu0 %v5530, 64
        %v5845 = vpop.permute.xlu0 %5844
        %5846 = vrot.lane.b32.xlu0 %v5579, 64
        %v5847 = vpop.permute.xlu0 %5846
        %5852 = vrot.lane.b32.xlu0 %v5756, 96
        %v5853 = vpop.permute.xlu0 %5852
        %5854 = vrot.lane.b32.xlu0 %v5805, 96
        %v5855 = vpop.permute.xlu0 %5854
        %v5858 = vsel %vm1122, %v4201, %v5813
        %v5859 = vsel %vm1122, %v4247, %v5815
        %v5860 = vsel %vm2941, %v5858, %v5821
        %v5861 = vsel %vm2941, %v5859, %v5823
        %v5862 = vsel %vm2944, %v5860, %v5829
        %v5863 = vsel %vm2944, %v5861, %v5831
        %v5864 = vsel %vm1122, %v5080, %v5837
        %v5865 = vsel %vm1122, %v5127, %v5839
        %v5866 = vsel %vm2941, %v5864, %v5845
        %v5867 = vsel %vm2941, %v5865, %v5847
        %v5868 = vsel %vm2944, %v5866, %v5853
        %v5869 = vsel %vm2944, %v5867, %v5855
        %v5870 = vpack.c.bf16 %v5863, %v5862
        %v5871 = vpack.c.bf16 %v5869, %v5868
        %v5872 = vld [vmem:[%s270 + $0x38] sm:$0xff]
        %v5873 = vld [vmem:[%s270 + $0x98] sm:$0xff]
        %v5874 = vld [vmem:[%s270 + $0xf8] sm:$0xff]
        %v5875 = vld [vmem:[%s270 + $0x158] sm:$0xff]
        %v5876 = vld [vmem:[%s270 + $0x1b8] sm:$0xff]
        %v5877 = vld [vmem:[%s270 + $0x218] sm:$0xff]
        %v5878 = vld [vmem:[%s270 + $0x278] sm:$0xff]
        %v5879 = vld [vmem:[%s270 + $0x2d8] sm:$0xff]
        %v5880 = vld [vmem:[%s270 + $0x338] sm:$0xff]
        %v5881 = vld [vmem:[%s270 + $0x398] sm:$0xff]
        %v5882 = vld [vmem:[%s270 + $0x3f8] sm:$0xff]
        %v5883 = vld [vmem:[%s270 + $0x458] sm:$0xff]
        %v5884 = vld [vmem:[%s270 + $0x4b8] sm:$0xff]
        %v5885 = vld [vmem:[%s270 + $0x518] sm:$0xff]
        %v5886 = vld [vmem:[%s270 + $0x578] sm:$0xff]
        %v5887 = vld [vmem:[%s270 + $0x5d8] sm:$0xff]
        %v5888 = vld [vmem:[%s270 + $0x638] sm:$0xff]
        %v5889 = vld [vmem:[%s270 + $0x698] sm:$0xff]
        %v5890 = vld [vmem:[%s270 + $0x6f8] sm:$0xff]
        %v5891 = vld [vmem:[%s270 + $0x758] sm:$0xff]
        %v5892 = vld [vmem:[%s270 + $0x7b8] sm:$0xff]
        %v5893 = vld [vmem:[%s270 + $0x818] sm:$0xff]
        %v5894 = vld [vmem:[%s270 + $0x878] sm:$0xff]
        %v5895 = vld [vmem:[%s270 + $0x8d8] sm:$0xff]
        %v5896 = vld [vmem:[%s270 + $0x938] sm:$0xff]
        %v5897 = vld [vmem:[%s270 + $0x998] sm:$0xff]
        %v5898 = vld [vmem:[%s270 + $0x9f8] sm:$0xff]
        %v5899 = vld [vmem:[%s270 + $0xa58] sm:$0xff]
        %v5900 = vld [vmem:[%s270 + $0xab8] sm:$0xff]
        %v5901 = vld [vmem:[%s270 + $0xb18] sm:$0xff]
        %v5902 = vld [vmem:[%s270 + $0xb78] sm:$0xff]
        %v5903 = vld [vmem:[%s270 + $0xbd8] sm:$0xff]
        %v5904 = vld [vmem:[%s288 + $0x12] sm:$0x3]
        %v5906 = vlaneseq
        %v5907 = vshrl.u32 %v5906, 7
        %v5908 = vsub.s32 0, %v5907
        %v5909 = vrot.slane %v5904, %v5908
        %v5910 = vlaneseq
        %v5911 = vshrl.u32 %v5910, 7
        %v5912 = vsub.s32 1, %v5911
        %v5913 = vrot.slane %v5904, %v5912
        %v5948 = vunpack.c.l.b16 %v5872
        %v5949 = vunpack.c.h.b16 %v5872
        %v5950 = vunpack.c.l.b16 %v5873
        %v5951 = vunpack.c.h.b16 %v5873
        %v5952 = vunpack.c.l.b16 %v5874
        %v5953 = vunpack.c.h.b16 %v5874
        %v5954 = vunpack.c.l.b16 %v5875
        %v5955 = vunpack.c.h.b16 %v5875
        %v5956 = vunpack.c.l.b16 %v5876
        %v5957 = vunpack.c.h.b16 %v5876
        %v5958 = vunpack.c.l.b16 %v5877
        %v5959 = vunpack.c.h.b16 %v5877
        %v5960 = vunpack.c.l.b16 %v5878
        %v5961 = vunpack.c.h.b16 %v5878
        %v5962 = vunpack.c.l.b16 %v5879
        %v5963 = vunpack.c.h.b16 %v5879
        %v5964 = vunpack.c.l.b16 %v5880
        %v5965 = vunpack.c.h.b16 %v5880
        %v5966 = vunpack.c.l.b16 %v5881
        %v5967 = vunpack.c.h.b16 %v5881
        %v5968 = vunpack.c.l.b16 %v5882
        %v5969 = vunpack.c.h.b16 %v5882
        %v5970 = vunpack.c.l.b16 %v5883
        %v5971 = vunpack.c.h.b16 %v5883
        %v5972 = vunpack.c.l.b16 %v5884
        %v5973 = vunpack.c.h.b16 %v5884
        %v5974 = vunpack.c.l.b16 %v5885
        %v5975 = vunpack.c.h.b16 %v5885
        %v5976 = vunpack.c.l.b16 %v5886
        %v5977 = vunpack.c.h.b16 %v5886
        %v5978 = vunpack.c.l.b16 %v5887
        %v5979 = vunpack.c.h.b16 %v5887
        %v5980 = vunpack.c.l.b16 %v5888
        %v5981 = vunpack.c.h.b16 %v5888
        %v5982 = vunpack.c.l.b16 %v5889
        %v5983 = vunpack.c.h.b16 %v5889
        %v5984 = vunpack.c.l.b16 %v5890
        %v5985 = vunpack.c.h.b16 %v5890
        %v5986 = vunpack.c.l.b16 %v5891
        %v5987 = vunpack.c.h.b16 %v5891
        %v5988 = vunpack.c.l.b16 %v5892
        %v5989 = vunpack.c.h.b16 %v5892
        %v5990 = vunpack.c.l.b16 %v5893
        %v5991 = vunpack.c.h.b16 %v5893
        %v5992 = vunpack.c.l.b16 %v5894
        %v5993 = vunpack.c.h.b16 %v5894
        %v5994 = vunpack.c.l.b16 %v5895
        %v5995 = vunpack.c.h.b16 %v5895
        %v5996 = vunpack.c.l.b16 %v5896
        %v5997 = vunpack.c.h.b16 %v5896
        %v5998 = vunpack.c.l.b16 %v5897
        %v5999 = vunpack.c.h.b16 %v5897
        %v6000 = vunpack.c.l.b16 %v5898
        %v6001 = vunpack.c.h.b16 %v5898
        %v6002 = vunpack.c.l.b16 %v5899
        %v6003 = vunpack.c.h.b16 %v5899
        %v6004 = vunpack.c.l.b16 %v5900
        %v6005 = vunpack.c.h.b16 %v5900
        %v6006 = vunpack.c.l.b16 %v5901
        %v6007 = vunpack.c.h.b16 %v5901
        %v6008 = vunpack.c.l.b16 %v5902
        %v6009 = vunpack.c.h.b16 %v5902
        %v6010 = vunpack.c.l.b16 %v5903
        %v6011 = vunpack.c.h.b16 %v5903
        %v6012 = vpack.c.b16 %v5950, %v5948
        %v6013 = vpack.c.b16 %v5951, %v5949
        %v6014 = vpack.c.b16 %v5954, %v5952
        %v6015 = vpack.c.b16 %v5955, %v5953
        %v6016 = vpack.c.b16 %v5958, %v5956
        %v6017 = vpack.c.b16 %v5959, %v5957
        %v6018 = vpack.c.b16 %v5962, %v5960
        %v6019 = vpack.c.b16 %v5963, %v5961
        %v6020 = vpack.c.b16 %v5966, %v5964
        %v6021 = vpack.c.b16 %v5967, %v5965
        %v6022 = vpack.c.b16 %v5970, %v5968
        %v6023 = vpack.c.b16 %v5971, %v5969
        %v6024 = vpack.c.b16 %v5974, %v5972
        %v6025 = vpack.c.b16 %v5975, %v5973
        %v6026 = vpack.c.b16 %v5978, %v5976
        %v6027 = vpack.c.b16 %v5979, %v5977
        %v6028 = vpack.c.b16 %v5982, %v5980
        %v6029 = vpack.c.b16 %v5983, %v5981
        %v6030 = vpack.c.b16 %v5986, %v5984
        %v6031 = vpack.c.b16 %v5987, %v5985
        %v6032 = vpack.c.b16 %v5990, %v5988
        %v6033 = vpack.c.b16 %v5991, %v5989
        %v6034 = vpack.c.b16 %v5994, %v5992
        %v6035 = vpack.c.b16 %v5995, %v5993
        %v6036 = vpack.c.b16 %v5998, %v5996
        %v6037 = vpack.c.b16 %v5999, %v5997
        %v6038 = vpack.c.b16 %v6002, %v6000
        %v6039 = vpack.c.b16 %v6003, %v6001
        %v6040 = vpack.c.b16 %v6006, %v6004
        %v6041 = vpack.c.b16 %v6007, %v6005
        %v6042 = vpack.c.b16 %v6010, %v6008
        %v6043 = vpack.c.b16 %v6011, %v6009
        %6076 = vmatprep.subr.bf16.mxu0 %v6013
        %6077 = vmatpush1.bf16.msra.mxu0 %v6012
        %6078 = vmatprep.subr.bf16.mxu0 %v6015
        %6079 = vmatpush1.bf16.msra.mxu0 %v6014
        %6080 = vmatprep.subr.bf16.mxu0 %v6017
        %6081 = vmatpush1.bf16.msra.mxu0 %v6016
        %6082 = vmatprep.subr.bf16.mxu0 %v6019
        %6083 = vmatpush1.bf16.msra.mxu0 %v6018
        %6084 = vmatprep.subr.bf16.mxu0 %v6021
        %6085 = vmatpush1.bf16.msra.mxu0 %v6020
        %6086 = vmatprep.subr.bf16.mxu0 %v6023
        %6087 = vmatpush1.bf16.msra.mxu0 %v6022
        %6088 = vmatprep.subr.bf16.mxu0 %v6025
        %6089 = vmatpush1.bf16.msra.mxu0 %v6024
        %6090 = vmatprep.subr.bf16.mxu0 %v6027
        %6091 = vmatpush1.bf16.msra.mxu0 %v6026
        %6092 = vmatprep.subr.bf16.mxu0 %v6029
        %6093 = vmatpush1.bf16.msra.mxu0 %v6028
        %6094 = vmatprep.subr.bf16.mxu0 %v6031
        %6095 = vmatpush1.bf16.msra.mxu0 %v6030
        %6096 = vmatprep.subr.bf16.mxu0 %v6033
        %6097 = vmatpush1.bf16.msra.mxu0 %v6032
        %6098 = vmatprep.subr.bf16.mxu0 %v6035
        %6099 = vmatpush1.bf16.msra.mxu0 %v6034
        %6100 = vmatprep.subr.bf16.mxu0 %v6037
        %6101 = vmatpush1.bf16.msra.mxu0 %v6036
        %6102 = vmatprep.subr.bf16.mxu0 %v6039
        %6103 = vmatpush1.bf16.msra.mxu0 %v6038
        %6104 = vmatprep.subr.bf16.mxu0 %v6041
        %6105 = vmatpush1.bf16.msra.mxu0 %v6040
        %6106 = vmatprep.subr.bf16.mxu0 %v6043
        %6107 = vmatpush1.bf16.msra.mxu0 %v6042
        %6108 = vmatprep.mubr.bf16.mxu0 %v5871
        %6109 = vmatmul.mubr.bf16.gmra.mrb[0].mxu0 %v5870
        %v6110 = vpop.f32.mrb[0].mxu0
        %v6111 = vadd.f32 %v5909, %v6110
        %v6112 = vpop.f32.mrb[0].mxu0
        %v6113 = vadd.f32 %v5913, %v6112
        %v6114 = vpop.f32.mrb[0].mxu0
        %v6115 = vadd.f32 %v5909, %v6114
        %v6116 = vpop.f32.mrb[0].mxu0
        %v6117 = vadd.f32 %v5913, %v6116
        %6118 = vdwg.mxu0
        %v6119 = vadd.f32 %v3267, %v6111
        %v6120 = vadd.f32 %v3268, %v6113
        %v6121 = vadd.f32 %v3269, %v6115
        %v6122 = vadd.f32 %v3270, %v6117
        %v6123 = vld [vmem:[%s288 + $0x14] sm:$0x3]
        %v6124 = vld [vmem:[%s288 + $0x16] sm:$0x3]
        %v6125 = vadd.f32 %v6119, %v6120
        %6126 = vadd.xlane.f32.xlu0 %v6125
        %v6127 = vpop.xlane.xlu0 %6126
        %v6128 = vadd.f32 %v6121, %v6122
        %6129 = vadd.xlane.f32.xlu0 %v6128
        %v6130 = vpop.xlane.xlu0 %6129
        %v6131 = vmul.f32 %v6127, %v3214
        %v6132 = vmul.f32 %v6130, %v3214
        %v6133 = vsub.f32 %v6119, %v6131
        %v6134 = vsub.f32 %v6120, %v6131
        %v6135 = vsub.f32 %v6121, %v6132
        %v6136 = vsub.f32 %v6122, %v6132
        %v6137 = vmul.f32 %v6133, %v6133
        %v6138 = vmul.f32 %v6134, %v6134
        %v6139 = vmul.f32 %v6135, %v6135
        %v6140 = vmul.f32 %v6136, %v6136
        %v6141 = vadd.f32 %v6137, %v6138
        %6142 = vadd.xlane.f32.xlu0 %v6141
        %v6143 = vpop.xlane.xlu0 %6142
        %v6144 = vadd.f32 %v6139, %v6140
        %6145 = vadd.xlane.f32.xlu0 %v6144
        %v6146 = vpop.xlane.xlu0 %6145
        %v6147 = vmul.f32 %v6143, %v3214
        %v6148 = vmul.f32 %v6146, %v3214
        %v6149 = vadd.f32 %v6147, 1e-05
        %v6150 = vadd.f32 %v6148, 1e-05
        %v6151 = vrsqrt.pop %v6149
        %v6152 = vrsqrt.pop %v6150
        %v6153 = vmul.f32 %v6133, %v6151
        %v6154 = vmul.f32 %v6134, %v6151
        %v6155 = vmul.f32 %v6135, %v6152
        %v6156 = vmul.f32 %v6136, %v6152
        %v6158 = vlaneseq
        %v6159 = vshrl.u32 %v6158, 7
        %v6160 = vsub.s32 0, %v6159
        %v6161 = vrot.slane %v6123, %v6160
        %v6162 = vlaneseq
        %v6163 = vshrl.u32 %v6162, 7
        %v6164 = vsub.s32 1, %v6163
        %v6165 = vrot.slane %v6123, %v6164
        %v6168 = vmul.f32 %v6153, %v6161
        %v6169 = vmul.f32 %v6154, %v6165
        %v6170 = vmul.f32 %v6155, %v6161
        %v6171 = vmul.f32 %v6156, %v6165
        %v6173 = vlaneseq
        %v6174 = vshrl.u32 %v6173, 7
        %v6175 = vsub.s32 0, %v6174
        %v6176 = vrot.slane %v6124, %v6175
        %v6177 = vlaneseq
        %v6178 = vshrl.u32 %v6177, 7
        %v6179 = vsub.s32 1, %v6178
        %v6180 = vrot.slane %v6124, %v6179
        %v6183 = vadd.f32 %v6168, %v6176
        %v6184 = vadd.f32 %v6169, %v6180
        %v6185 = vadd.f32 %v6170, %v6176
        %v6186 = vadd.f32 %v6171, %v6180
        %v6187 = vpack.c.bf16 %v6185, %v6183
        %v6188 = vpack.c.bf16 %v6186, %v6184
        %v6189 = vld [vmem:[%s270 + $0x40] sm:$0xff]
        %v6190 = vld [vmem:[%s270 + $0x48] sm:$0xff]
        %v6191 = vld [vmem:[%s270 + $0x50] sm:$0xff]
        %v6192 = vld [vmem:[%s270 + $0x58] sm:$0xff]
        %v6193 = vld [vmem:[%s270 + $0xa0] sm:$0xff]
        %v6194 = vld [vmem:[%s270 + $0xa8] sm:$0xff]
        %v6195 = vld [vmem:[%s270 + $0xb0] sm:$0xff]
        %v6196 = vld [vmem:[%s270 + $0xb8] sm:$0xff]
        %v6197 = vld [vmem:[%s270 + $0x100] sm:$0xff]
        %v6198 = vld [vmem:[%s270 + $0x108] sm:$0xff]
        %v6199 = vld [vmem:[%s270 + $0x110] sm:$0xff]
        %v6200 = vld [vmem:[%s270 + $0x118] sm:$0xff]
        %v6201 = vld [vmem:[%s270 + $0x160] sm:$0xff]
        %v6202 = vld [vmem:[%s270 + $0x168] sm:$0xff]
        %v6203 = vld [vmem:[%s270 + $0x170] sm:$0xff]
        %v6204 = vld [vmem:[%s270 + $0x178] sm:$0xff]
        %v6205 = vld [vmem:[%s270 + $0x1c0] sm:$0xff]
        %v6206 = vld [vmem:[%s270 + $0x1c8] sm:$0xff]
        %v6207 = vld [vmem:[%s270 + $0x1d0] sm:$0xff]
        %v6208 = vld [vmem:[%s270 + $0x1d8] sm:$0xff]
        %v6209 = vld [vmem:[%s270 + $0x220] sm:$0xff]
        %v6210 = vld [vmem:[%s270 + $0x228] sm:$0xff]
        %v6211 = vld [vmem:[%s270 + $0x230] sm:$0xff]
        %v6212 = vld [vmem:[%s270 + $0x238] sm:$0xff]
        %v6213 = vld [vmem:[%s270 + $0x280] sm:$0xff]
        %v6214 = vld [vmem:[%s270 + $0x288] sm:$0xff]
        %v6215 = vld [vmem:[%s270 + $0x290] sm:$0xff]
        %v6216 = vld [vmem:[%s270 + $0x298] sm:$0xff]
        %v6217 = vld [vmem:[%s270 + $0x2e0] sm:$0xff]
        %v6218 = vld [vmem:[%s270 + $0x2e8] sm:$0xff]
        %v6219 = vld [vmem:[%s270 + $0x2f0] sm:$0xff]
        %v6220 = vld [vmem:[%s270 + $0x2f8] sm:$0xff]
        %v6221 = vld [vmem:[%s270 + $0x340] sm:$0xff]
        %v6222 = vld [vmem:[%s270 + $0x348] sm:$0xff]
        %v6223 = vld [vmem:[%s270 + $0x350] sm:$0xff]
        %v6224 = vld [vmem:[%s270 + $0x358] sm:$0xff]
        %v6225 = vld [vmem:[%s270 + $0x3a0] sm:$0xff]
        %v6226 = vld [vmem:[%s270 + $0x3a8] sm:$0xff]
        %v6227 = vld [vmem:[%s270 + $0x3b0] sm:$0xff]
        %v6228 = vld [vmem:[%s270 + $0x3b8] sm:$0xff]
        %v6229 = vld [vmem:[%s270 + $0x400] sm:$0xff]
        %v6230 = vld [vmem:[%s270 + $0x408] sm:$0xff]
        %v6231 = vld [vmem:[%s270 + $0x410] sm:$0xff]
        %v6232 = vld [vmem:[%s270 + $0x418] sm:$0xff]
        %v6233 = vld [vmem:[%s270 + $0x460] sm:$0xff]
        %v6234 = vld [vmem:[%s270 + $0x468] sm:$0xff]
        %v6235 = vld [vmem:[%s270 + $0x470] sm:$0xff]
        %v6236 = vld [vmem:[%s270 + $0x478] sm:$0xff]
        %v6237 = vld [vmem:[%s270 + $0x4c0] sm:$0xff]
        %v6238 = vld [vmem:[%s270 + $0x4c8] sm:$0xff]
        %v6239 = vld [vmem:[%s270 + $0x4d0] sm:$0xff]
        %v6240 = vld [vmem:[%s270 + $0x4d8] sm:$0xff]
        %v6241 = vld [vmem:[%s270 + $0x520] sm:$0xff]
        %v6242 = vld [vmem:[%s270 + $0x528] sm:$0xff]
        %v6243 = vld [vmem:[%s270 + $0x530] sm:$0xff]
        %v6244 = vld [vmem:[%s270 + $0x538] sm:$0xff]
        %v6245 = vld [vmem:[%s270 + $0x580] sm:$0xff]
        %v6246 = vld [vmem:[%s270 + $0x588] sm:$0xff]
        %v6247 = vld [vmem:[%s270 + $0x590] sm:$0xff]
        %v6248 = vld [vmem:[%s270 + $0x598] sm:$0xff]
        %v6249 = vld [vmem:[%s270 + $0x5e0] sm:$0xff]
        %v6250 = vld [vmem:[%s270 + $0x5e8] sm:$0xff]
        %v6251 = vld [vmem:[%s270 + $0x5f0] sm:$0xff]
        %v6252 = vld [vmem:[%s270 + $0x5f8] sm:$0xff]
        %v6253 = vld [vmem:[%s270 + $0x640] sm:$0xff]
        %v6254 = vld [vmem:[%s270 + $0x648] sm:$0xff]
        %v6255 = vld [vmem:[%s270 + $0x650] sm:$0xff]
        %v6256 = vld [vmem:[%s270 + $0x658] sm:$0xff]
        %v6257 = vld [vmem:[%s270 + $0x6a0] sm:$0xff]
        %v6258 = vld [vmem:[%s270 + $0x6a8] sm:$0xff]
        %v6259 = vld [vmem:[%s270 + $0x6b0] sm:$0xff]
        %v6260 = vld [vmem:[%s270 + $0x6b8] sm:$0xff]
        %v6261 = vld [vmem:[%s270 + $0x700] sm:$0xff]
        %v6262 = vld [vmem:[%s270 + $0x708] sm:$0xff]
        %v6263 = vld [vmem:[%s270 + $0x710] sm:$0xff]
        %v6264 = vld [vmem:[%s270 + $0x718] sm:$0xff]
        %v6265 = vld [vmem:[%s270 + $0x760] sm:$0xff]
        %v6266 = vld [vmem:[%s270 + $0x768] sm:$0xff]
        %v6267 = vld [vmem:[%s270 + $0x770] sm:$0xff]
        %v6268 = vld [vmem:[%s270 + $0x778] sm:$0xff]
        %v6269 = vld [vmem:[%s270 + $0x7c0] sm:$0xff]
        %v6270 = vld [vmem:[%s270 + $0x7c8] sm:$0xff]
        %v6271 = vld [vmem:[%s270 + $0x7d0] sm:$0xff]
        %v6272 = vld [vmem:[%s270 + $0x7d8] sm:$0xff]
        %v6273 = vld [vmem:[%s270 + $0x820] sm:$0xff]
        %v6274 = vld [vmem:[%s270 + $0x828] sm:$0xff]
        %v6275 = vld [vmem:[%s270 + $0x830] sm:$0xff]
        %v6276 = vld [vmem:[%s270 + $0x838] sm:$0xff]
        %v6277 = vld [vmem:[%s270 + $0x880] sm:$0xff]
        %v6278 = vld [vmem:[%s270 + $0x888] sm:$0xff]
        %v6279 = vld [vmem:[%s270 + $0x890] sm:$0xff]
        %v6280 = vld [vmem:[%s270 + $0x898] sm:$0xff]
        %v6281 = vld [vmem:[%s270 + $0x8e0] sm:$0xff]
        %v6282 = vld [vmem:[%s270 + $0x8e8] sm:$0xff]
        %v6283 = vld [vmem:[%s270 + $0x8f0] sm:$0xff]
        %v6284 = vld [vmem:[%s270 + $0x8f8] sm:$0xff]
        %v6285 = vld [vmem:[%s270 + $0x940] sm:$0xff]
        %v6286 = vld [vmem:[%s270 + $0x948] sm:$0xff]
        %v6287 = vld [vmem:[%s270 + $0x950] sm:$0xff]
        %v6288 = vld [vmem:[%s270 + $0x958] sm:$0xff]
        %v6289 = vld [vmem:[%s270 + $0x9a0] sm:$0xff]
        %v6290 = vld [vmem:[%s270 + $0x9a8] sm:$0xff]
        %v6291 = vld [vmem:[%s270 + $0x9b0] sm:$0xff]
        %v6292 = vld [vmem:[%s270 + $0x9b8] sm:$0xff]
        %v6293 = vld [vmem:[%s270 + $0xa00] sm:$0xff]
        %v6294 = vld [vmem:[%s270 + $0xa08] sm:$0xff]
        %v6295 = vld [vmem:[%s270 + $0xa10] sm:$0xff]
        %v6296 = vld [vmem:[%s270 + $0xa18] sm:$0xff]
        %v6297 = vld [vmem:[%s270 + $0xa60] sm:$0xff]
        %v6298 = vld [vmem:[%s270 + $0xa68] sm:$0xff]
        %v6299 = vld [vmem:[%s270 + $0xa70] sm:$0xff]
        %v6300 = vld [vmem:[%s270 + $0xa78] sm:$0xff]
        %v6301 = vld [vmem:[%s270 + $0xac0] sm:$0xff]
        %v6302 = vld [vmem:[%s270 + $0xac8] sm:$0xff]
        %v6303 = vld [vmem:[%s270 + $0xad0] sm:$0xff]
        %v6304 = vld [vmem:[%s270 + $0xad8] sm:$0xff]
        %v6305 = vld [vmem:[%s270 + $0xb20] sm:$0xff]
        %v6306 = vld [vmem:[%s270 + $0xb28] sm:$0xff]
        %v6307 = vld [vmem:[%s270 + $0xb30] sm:$0xff]
        %v6308 = vld [vmem:[%s270 + $0xb38] sm:$0xff]
        %v6309 = vld [vmem:[%s270 + $0xb80] sm:$0xff]
        %v6310 = vld [vmem:[%s270 + $0xb88] sm:$0xff]
        %v6311 = vld [vmem:[%s270 + $0xb90] sm:$0xff]
        %v6312 = vld [vmem:[%s270 + $0xb98] sm:$0xff]
        %v6313 = vld [vmem:[%s270 + $0xbe0] sm:$0xff]
        %v6314 = vld [vmem:[%s270 + $0xbe8] sm:$0xff]
        %v6315 = vld [vmem:[%s270 + $0xbf0] sm:$0xff]
        %v6316 = vld [vmem:[%s270 + $0xbf8] sm:$0xff]
        %v6317 = vld [vmem:[%s288 + $0x18] sm:$0xff]
        %v6319 = vlaneseq
        %v6320 = vshrl.u32 %v6319, 7
        %v6321 = vsub.s32 0, %v6320
        %v6322 = vrot.slane %v6317, %v6321
        %v6323 = vlaneseq
        %v6324 = vshrl.u32 %v6323, 7
        %v6325 = vsub.s32 1, %v6324
        %v6326 = vrot.slane %v6317, %v6325
        %v6327 = vlaneseq
        %v6328 = vshrl.u32 %v6327, 7
        %v6329 = vsub.s32 2, %v6328
        %v6330 = vrot.slane %v6317, %v6329
        %v6331 = vlaneseq
        %v6332 = vshrl.u32 %v6331, 7
        %v6333 = vsub.s32 3, %v6332
        %v6334 = vrot.slane %v6317, %v6333
        %v6335 = vlaneseq
        %v6336 = vshrl.u32 %v6335, 7
        %v6337 = vsub.s32 4, %v6336
        %v6338 = vrot.slane %v6317, %v6337
        %v6339 = vlaneseq
        %v6340 = vshrl.u32 %v6339, 7
        %v6341 = vsub.s32 5, %v6340
        %v6342 = vrot.slane %v6317, %v6341
        %v6343 = vlaneseq
        %v6344 = vshrl.u32 %v6343, 7
        %v6345 = vsub.s32 6, %v6344
        %v6346 = vrot.slane %v6317, %v6345
        %v6347 = vlaneseq
        %v6348 = vshrl.u32 %v6347, 7
        %v6349 = vsub.s32 7, %v6348
        %v6350 = vrot.slane %v6317, %v6349
        %v6487 = vunpack.c.l.b16 %v6189
        %v6488 = vunpack.c.h.b16 %v6189
        %v6489 = vunpack.c.l.b16 %v6190
        %v6490 = vunpack.c.h.b16 %v6190
        %v6491 = vunpack.c.l.b16 %v6191
        %v6492 = vunpack.c.h.b16 %v6191
        %v6493 = vunpack.c.l.b16 %v6192
        %v6494 = vunpack.c.h.b16 %v6192
        %v6495 = vunpack.c.l.b16 %v6193
        %v6496 = vunpack.c.h.b16 %v6193
        %v6497 = vunpack.c.l.b16 %v6194
        %v6498 = vunpack.c.h.b16 %v6194
        %v6499 = vunpack.c.l.b16 %v6195
        %v6500 = vunpack.c.h.b16 %v6195
        %v6501 = vunpack.c.l.b16 %v6196
        %v6502 = vunpack.c.h.b16 %v6196
        %v6503 = vunpack.c.l.b16 %v6197
        %v6504 = vunpack.c.h.b16 %v6197
        %v6505 = vunpack.c.l.b16 %v6198
        %v6506 = vunpack.c.h.b16 %v6198
        %v6507 = vunpack.c.l.b16 %v6199
        %v6508 = vunpack.c.h.b16 %v6199
        %v6509 = vunpack.c.l.b16 %v6200
        %v6510 = vunpack.c.h.b16 %v6200
        %v6511 = vunpack.c.l.b16 %v6201
        %v6512 = vunpack.c.h.b16 %v6201
        %v6513 = vunpack.c.l.b16 %v6202
        %v6514 = vunpack.c.h.b16 %v6202
        %v6515 = vunpack.c.l.b16 %v6203
        %v6516 = vunpack.c.h.b16 %v6203
        %v6517 = vunpack.c.l.b16 %v6204
        %v6518 = vunpack.c.h.b16 %v6204
        %v6519 = vunpack.c.l.b16 %v6205
        %v6520 = vunpack.c.h.b16 %v6205
        %v6521 = vunpack.c.l.b16 %v6206
        %v6522 = vunpack.c.h.b16 %v6206
        %v6523 = vunpack.c.l.b16 %v6207
        %v6524 = vunpack.c.h.b16 %v6207
        %v6525 = vunpack.c.l.b16 %v6208
        %v6526 = vunpack.c.h.b16 %v6208
        %v6527 = vunpack.c.l.b16 %v6209
        %v6528 = vunpack.c.h.b16 %v6209
        %v6529 = vunpack.c.l.b16 %v6210
        %v6530 = vunpack.c.h.b16 %v6210
        %v6531 = vunpack.c.l.b16 %v6211
        %v6532 = vunpack.c.h.b16 %v6211
        %v6533 = vunpack.c.l.b16 %v6212
        %v6534 = vunpack.c.h.b16 %v6212
        %v6535 = vunpack.c.l.b16 %v6213
        %v6536 = vunpack.c.h.b16 %v6213
        %v6537 = vunpack.c.l.b16 %v6214
        %v6538 = vunpack.c.h.b16 %v6214
        %v6539 = vunpack.c.l.b16 %v6215
        %v6540 = vunpack.c.h.b16 %v6215
        %v6541 = vunpack.c.l.b16 %v6216
        %v6542 = vunpack.c.h.b16 %v6216
        %v6543 = vunpack.c.l.b16 %v6217
        %v6544 = vunpack.c.h.b16 %v6217
        %v6545 = vunpack.c.l.b16 %v6218
        %v6546 = vunpack.c.h.b16 %v6218
        %v6547 = vunpack.c.l.b16 %v6219
        %v6548 = vunpack.c.h.b16 %v6219
        %v6549 = vunpack.c.l.b16 %v6220
        %v6550 = vunpack.c.h.b16 %v6220
        %v6551 = vunpack.c.l.b16 %v6221
        %v6552 = vunpack.c.h.b16 %v6221
        %v6553 = vunpack.c.l.b16 %v6222
        %v6554 = vunpack.c.h.b16 %v6222
        %v6555 = vunpack.c.l.b16 %v6223
        %v6556 = vunpack.c.h.b16 %v6223
        %v6557 = vunpack.c.l.b16 %v6224
        %v6558 = vunpack.c.h.b16 %v6224
        %v6559 = vunpack.c.l.b16 %v6225
        %v6560 = vunpack.c.h.b16 %v6225
        %v6561 = vunpack.c.l.b16 %v6226
        %v6562 = vunpack.c.h.b16 %v6226
        %v6563 = vunpack.c.l.b16 %v6227
        %v6564 = vunpack.c.h.b16 %v6227
        %v6565 = vunpack.c.l.b16 %v6228
        %v6566 = vunpack.c.h.b16 %v6228
        %v6567 = vunpack.c.l.b16 %v6229
        %v6568 = vunpack.c.h.b16 %v6229
        %v6569 = vunpack.c.l.b16 %v6230
        %v6570 = vunpack.c.h.b16 %v6230
        %v6571 = vunpack.c.l.b16 %v6231
        %v6572 = vunpack.c.h.b16 %v6231
        %v6573 = vunpack.c.l.b16 %v6232
        %v6574 = vunpack.c.h.b16 %v6232
        %v6575 = vunpack.c.l.b16 %v6233
        %v6576 = vunpack.c.h.b16 %v6233
        %v6577 = vunpack.c.l.b16 %v6234
        %v6578 = vunpack.c.h.b16 %v6234
        %v6579 = vunpack.c.l.b16 %v6235
        %v6580 = vunpack.c.h.b16 %v6235
        %v6581 = vunpack.c.l.b16 %v6236
        %v6582 = vunpack.c.h.b16 %v6236
        %v6583 = vunpack.c.l.b16 %v6237
        %v6584 = vunpack.c.h.b16 %v6237
        %v6585 = vunpack.c.l.b16 %v6238
        %v6586 = vunpack.c.h.b16 %v6238
        %v6587 = vunpack.c.l.b16 %v6239
        %v6588 = vunpack.c.h.b16 %v6239
        %v6589 = vunpack.c.l.b16 %v6240
        %v6590 = vunpack.c.h.b16 %v6240
        %v6591 = vunpack.c.l.b16 %v6241
        %v6592 = vunpack.c.h.b16 %v6241
        %v6593 = vunpack.c.l.b16 %v6242
        %v6594 = vunpack.c.h.b16 %v6242
        %v6595 = vunpack.c.l.b16 %v6243
        %v6596 = vunpack.c.h.b16 %v6243
        %v6597 = vunpack.c.l.b16 %v6244
        %v6598 = vunpack.c.h.b16 %v6244
        %v6599 = vunpack.c.l.b16 %v6245
        %v6600 = vunpack.c.h.b16 %v6245
        %v6601 = vunpack.c.l.b16 %v6246
        %v6602 = vunpack.c.h.b16 %v6246
        %v6603 = vunpack.c.l.b16 %v6247
        %v6604 = vunpack.c.h.b16 %v6247
        %v6605 = vunpack.c.l.b16 %v6248
        %v6606 = vunpack.c.h.b16 %v6248
        %v6607 = vunpack.c.l.b16 %v6249
        %v6608 = vunpack.c.h.b16 %v6249
        %v6609 = vunpack.c.l.b16 %v6250
        %v6610 = vunpack.c.h.b16 %v6250
        %v6611 = vunpack.c.l.b16 %v6251
        %v6612 = vunpack.c.h.b16 %v6251
        %v6613 = vunpack.c.l.b16 %v6252
        %v6614 = vunpack.c.h.b16 %v6252
        %v6615 = vunpack.c.l.b16 %v6253
        %v6616 = vunpack.c.h.b16 %v6253
        %v6617 = vunpack.c.l.b16 %v6254
        %v6618 = vunpack.c.h.b16 %v6254
        %v6619 = vunpack.c.l.b16 %v6255
        %v6620 = vunpack.c.h.b16 %v6255
        %v6621 = vunpack.c.l.b16 %v6256
        %v6622 = vunpack.c.h.b16 %v6256
        %v6623 = vunpack.c.l.b16 %v6257
        %v6624 = vunpack.c.h.b16 %v6257
        %v6625 = vunpack.c.l.b16 %v6258
        %v6626 = vunpack.c.h.b16 %v6258
        %v6627 = vunpack.c.l.b16 %v6259
        %v6628 = vunpack.c.h.b16 %v6259
        %v6629 = vunpack.c.l.b16 %v6260
        %v6630 = vunpack.c.h.b16 %v6260
        %v6631 = vunpack.c.l.b16 %v6261
        %v6632 = vunpack.c.h.b16 %v6261
        %v6633 = vunpack.c.l.b16 %v6262
        %v6634 = vunpack.c.h.b16 %v6262
        %v6635 = vunpack.c.l.b16 %v6263
        %v6636 = vunpack.c.h.b16 %v6263
        %v6637 = vunpack.c.l.b16 %v6264
        %v6638 = vunpack.c.h.b16 %v6264
        %v6639 = vunpack.c.l.b16 %v6265
        %v6640 = vunpack.c.h.b16 %v6265
        %v6641 = vunpack.c.l.b16 %v6266
        %v6642 = vunpack.c.h.b16 %v6266
        %v6643 = vunpack.c.l.b16 %v6267
        %v6644 = vunpack.c.h.b16 %v6267
        %v6645 = vunpack.c.l.b16 %v6268
        %v6646 = vunpack.c.h.b16 %v6268
        %v6647 = vunpack.c.l.b16 %v6269
        %v6648 = vunpack.c.h.b16 %v6269
        %v6649 = vunpack.c.l.b16 %v6270
        %v6650 = vunpack.c.h.b16 %v6270
        %v6651 = vunpack.c.l.b16 %v6271
        %v6652 = vunpack.c.h.b16 %v6271
        %v6653 = vunpack.c.l.b16 %v6272
        %v6654 = vunpack.c.h.b16 %v6272
        %v6655 = vunpack.c.l.b16 %v6273
        %v6656 = vunpack.c.h.b16 %v6273
        %v6657 = vunpack.c.l.b16 %v6274
        %v6658 = vunpack.c.h.b16 %v6274
        %v6659 = vunpack.c.l.b16 %v6275
        %v6660 = vunpack.c.h.b16 %v6275
        %v6661 = vunpack.c.l.b16 %v6276
        %v6662 = vunpack.c.h.b16 %v6276
        %v6663 = vunpack.c.l.b16 %v6277
        %v6664 = vunpack.c.h.b16 %v6277
        %v6665 = vunpack.c.l.b16 %v6278
        %v6666 = vunpack.c.h.b16 %v6278
        %v6667 = vunpack.c.l.b16 %v6279
        %v6668 = vunpack.c.h.b16 %v6279
        %v6669 = vunpack.c.l.b16 %v6280
        %v6670 = vunpack.c.h.b16 %v6280
        %v6671 = vunpack.c.l.b16 %v6281
        %v6672 = vunpack.c.h.b16 %v6281
        %v6673 = vunpack.c.l.b16 %v6282
        %v6674 = vunpack.c.h.b16 %v6282
        %v6675 = vunpack.c.l.b16 %v6283
        %v6676 = vunpack.c.h.b16 %v6283
        %v6677 = vunpack.c.l.b16 %v6284
        %v6678 = vunpack.c.h.b16 %v6284
        %v6679 = vunpack.c.l.b16 %v6285
        %v6680 = vunpack.c.h.b16 %v6285
        %v6681 = vunpack.c.l.b16 %v6286
        %v6682 = vunpack.c.h.b16 %v6286
        %v6683 = vunpack.c.l.b16 %v6287
        %v6684 = vunpack.c.h.b16 %v6287
        %v6685 = vunpack.c.l.b16 %v6288
        %v6686 = vunpack.c.h.b16 %v6288
        %v6687 = vunpack.c.l.b16 %v6289
        %v6688 = vunpack.c.h.b16 %v6289
        %v6689 = vunpack.c.l.b16 %v6290
        %v6690 = vunpack.c.h.b16 %v6290
        %v6691 = vunpack.c.l.b16 %v6291
        %v6692 = vunpack.c.h.b16 %v6291
        %v6693 = vunpack.c.l.b16 %v6292
        %v6694 = vunpack.c.h.b16 %v6292
        %v6695 = vunpack.c.l.b16 %v6293
        %v6696 = vunpack.c.h.b16 %v6293
        %v6697 = vunpack.c.l.b16 %v6294
        %v6698 = vunpack.c.h.b16 %v6294
        %v6699 = vunpack.c.l.b16 %v6295
        %v6700 = vunpack.c.h.b16 %v6295
        %v6701 = vunpack.c.l.b16 %v6296
        %v6702 = vunpack.c.h.b16 %v6296
        %v6703 = vunpack.c.l.b16 %v6297
        %v6704 = vunpack.c.h.b16 %v6297
        %v6705 = vunpack.c.l.b16 %v6298
        %v6706 = vunpack.c.h.b16 %v6298
        %v6707 = vunpack.c.l.b16 %v6299
        %v6708 = vunpack.c.h.b16 %v6299
        %v6709 = vunpack.c.l.b16 %v6300
        %v6710 = vunpack.c.h.b16 %v6300
        %v6711 = vunpack.c.l.b16 %v6301
        %v6712 = vunpack.c.h.b16 %v6301
        %v6713 = vunpack.c.l.b16 %v6302
        %v6714 = vunpack.c.h.b16 %v6302
        %v6715 = vunpack.c.l.b16 %v6303
        %v6716 = vunpack.c.h.b16 %v6303
        %v6717 = vunpack.c.l.b16 %v6304
        %v6718 = vunpack.c.h.b16 %v6304
        %v6719 = vunpack.c.l.b16 %v6305
        %v6720 = vunpack.c.h.b16 %v6305
        %v6721 = vunpack.c.l.b16 %v6306
        %v6722 = vunpack.c.h.b16 %v6306
        %v6723 = vunpack.c.l.b16 %v6307
        %v6724 = vunpack.c.h.b16 %v6307
        %v6725 = vunpack.c.l.b16 %v6308
        %v6726 = vunpack.c.h.b16 %v6308
        %v6727 = vunpack.c.l.b16 %v6309
        %v6728 = vunpack.c.h.b16 %v6309
        %v6729 = vunpack.c.l.b16 %v6310
        %v6730 = vunpack.c.h.b16 %v6310
        %v6731 = vunpack.c.l.b16 %v6311
        %v6732 = vunpack.c.h.b16 %v6311
        %v6733 = vunpack.c.l.b16 %v6312
        %v6734 = vunpack.c.h.b16 %v6312
        %v6735 = vunpack.c.l.b16 %v6313
        %v6736 = vunpack.c.h.b16 %v6313
        %v6737 = vunpack.c.l.b16 %v6314
        %v6738 = vunpack.c.h.b16 %v6314
        %v6739 = vunpack.c.l.b16 %v6315
        %v6740 = vunpack.c.h.b16 %v6315
        %v6741 = vunpack.c.l.b16 %v6316
        %v6742 = vunpack.c.h.b16 %v6316
        %v6743 = vpack.c.b16 %v6495, %v6487
        %v6744 = vpack.c.b16 %v6496, %v6488
        %v6745 = vpack.c.b16 %v6497, %v6489
        %v6746 = vpack.c.b16 %v6498, %v6490
        %v6747 = vpack.c.b16 %v6499, %v6491
        %v6748 = vpack.c.b16 %v6500, %v6492
        %v6749 = vpack.c.b16 %v6501, %v6493
        %v6750 = vpack.c.b16 %v6502, %v6494
        %v6751 = vpack.c.b16 %v6511, %v6503
        %v6752 = vpack.c.b16 %v6512, %v6504
        %v6753 = vpack.c.b16 %v6513, %v6505
        %v6754 = vpack.c.b16 %v6514, %v6506
        %v6755 = vpack.c.b16 %v6515, %v6507
        %v6756 = vpack.c.b16 %v6516, %v6508
        %v6757 = vpack.c.b16 %v6517, %v6509
        %v6758 = vpack.c.b16 %v6518, %v6510
        %v6759 = vpack.c.b16 %v6527, %v6519
        %v6760 = vpack.c.b16 %v6528, %v6520
        %v6761 = vpack.c.b16 %v6529, %v6521
        %v6762 = vpack.c.b16 %v6530, %v6522
        %v6763 = vpack.c.b16 %v6531, %v6523
        %v6764 = vpack.c.b16 %v6532, %v6524
        %v6765 = vpack.c.b16 %v6533, %v6525
        %v6766 = vpack.c.b16 %v6534, %v6526
        %v6767 = vpack.c.b16 %v6543, %v6535
        %v6768 = vpack.c.b16 %v6544, %v6536
        %v6769 = vpack.c.b16 %v6545, %v6537
        %v6770 = vpack.c.b16 %v6546, %v6538
        %v6771 = vpack.c.b16 %v6547, %v6539
        %v6772 = vpack.c.b16 %v6548, %v6540
        %v6773 = vpack.c.b16 %v6549, %v6541
        %v6774 = vpack.c.b16 %v6550, %v6542
        %v6775 = vpack.c.b16 %v6559, %v6551
        %v6776 = vpack.c.b16 %v6560, %v6552
        %v6777 = vpack.c.b16 %v6561, %v6553
        %v6778 = vpack.c.b16 %v6562, %v6554
        %v6779 = vpack.c.b16 %v6563, %v6555
        %v6780 = vpack.c.b16 %v6564, %v6556
        %v6781 = vpack.c.b16 %v6565, %v6557
        %v6782 = vpack.c.b16 %v6566, %v6558
        %v6783 = vpack.c.b16 %v6575, %v6567
        %v6784 = vpack.c.b16 %v6576, %v6568
        %v6785 = vpack.c.b16 %v6577, %v6569
        %v6786 = vpack.c.b16 %v6578, %v6570
        %v6787 = vpack.c.b16 %v6579, %v6571
        %v6788 = vpack.c.b16 %v6580, %v6572
        %v6789 = vpack.c.b16 %v6581, %v6573
        %v6790 = vpack.c.b16 %v6582, %v6574
        %v6791 = vpack.c.b16 %v6591, %v6583
        %v6792 = vpack.c.b16 %v6592, %v6584
        %v6793 = vpack.c.b16 %v6593, %v6585
        %v6794 = vpack.c.b16 %v6594, %v6586
        %v6795 = vpack.c.b16 %v6595, %v6587
        %v6796 = vpack.c.b16 %v6596, %v6588
        %v6797 = vpack.c.b16 %v6597, %v6589
        %v6798 = vpack.c.b16 %v6598, %v6590
        %v6799 = vpack.c.b16 %v6607, %v6599
        %v6800 = vpack.c.b16 %v6608, %v6600
        %v6801 = vpack.c.b16 %v6609, %v6601
        %v6802 = vpack.c.b16 %v6610, %v6602
        %v6803 = vpack.c.b16 %v6611, %v6603
        %v6804 = vpack.c.b16 %v6612, %v6604
        %v6805 = vpack.c.b16 %v6613, %v6605
        %v6806 = vpack.c.b16 %v6614, %v6606
        %v6807 = vpack.c.b16 %v6623, %v6615
        %v6808 = vpack.c.b16 %v6624, %v6616
        %v6809 = vpack.c.b16 %v6625, %v6617
        %v6810 = vpack.c.b16 %v6626, %v6618
        %v6811 = vpack.c.b16 %v6627, %v6619
        %v6812 = vpack.c.b16 %v6628, %v6620
        %v6813 = vpack.c.b16 %v6629, %v6621
        %v6814 = vpack.c.b16 %v6630, %v6622
        %v6815 = vpack.c.b16 %v6639, %v6631
        %v6816 = vpack.c.b16 %v6640, %v6632
        %v6817 = vpack.c.b16 %v6641, %v6633
        %v6818 = vpack.c.b16 %v6642, %v6634
        %v6819 = vpack.c.b16 %v6643, %v6635
        %v6820 = vpack.c.b16 %v6644, %v6636
        %v6821 = vpack.c.b16 %v6645, %v6637
        %v6822 = vpack.c.b16 %v6646, %v6638
        %v6823 = vpack.c.b16 %v6655, %v6647
        %v6824 = vpack.c.b16 %v6656, %v6648
        %v6825 = vpack.c.b16 %v6657, %v6649
        %v6826 = vpack.c.b16 %v6658, %v6650
        %v6827 = vpack.c.b16 %v6659, %v6651
        %v6828 = vpack.c.b16 %v6660, %v6652
        %v6829 = vpack.c.b16 %v6661, %v6653
        %v6830 = vpack.c.b16 %v6662, %v6654
        %v6831 = vpack.c.b16 %v6671, %v6663
        %v6832 = vpack.c.b16 %v6672, %v6664
        %v6833 = vpack.c.b16 %v6673, %v6665
        %v6834 = vpack.c.b16 %v6674, %v6666
        %v6835 = vpack.c.b16 %v6675, %v6667
        %v6836 = vpack.c.b16 %v6676, %v6668
        %v6837 = vpack.c.b16 %v6677, %v6669
        %v6838 = vpack.c.b16 %v6678, %v6670
        %v6839 = vpack.c.b16 %v6687, %v6679
        %v6840 = vpack.c.b16 %v6688, %v6680
        %v6841 = vpack.c.b16 %v6689, %v6681
        %v6842 = vpack.c.b16 %v6690, %v6682
        %v6843 = vpack.c.b16 %v6691, %v6683
        %v6844 = vpack.c.b16 %v6692, %v6684
        %v6845 = vpack.c.b16 %v6693, %v6685
        %v6846 = vpack.c.b16 %v6694, %v6686
        %v6847 = vpack.c.b16 %v6703, %v6695
        %v6848 = vpack.c.b16 %v6704, %v6696
        %v6849 = vpack.c.b16 %v6705, %v6697
        %v6850 = vpack.c.b16 %v6706, %v6698
        %v6851 = vpack.c.b16 %v6707, %v6699
        %v6852 = vpack.c.b16 %v6708, %v6700
        %v6853 = vpack.c.b16 %v6709, %v6701
        %v6854 = vpack.c.b16 %v6710, %v6702
        %v6855 = vpack.c.b16 %v6719, %v6711
        %v6856 = vpack.c.b16 %v6720, %v6712
        %v6857 = vpack.c.b16 %v6721, %v6713
        %v6858 = vpack.c.b16 %v6722, %v6714
        %v6859 = vpack.c.b16 %v6723, %v6715
        %v6860 = vpack.c.b16 %v6724, %v6716
        %v6861 = vpack.c.b16 %v6725, %v6717
        %v6862 = vpack.c.b16 %v6726, %v6718
        %v6863 = vpack.c.b16 %v6735, %v6727
        %v6864 = vpack.c.b16 %v6736, %v6728
        %v6865 = vpack.c.b16 %v6737, %v6729
        %v6866 = vpack.c.b16 %v6738, %v6730
        %v6867 = vpack.c.b16 %v6739, %v6731
        %v6868 = vpack.c.b16 %v6740, %v6732
        %v6869 = vpack.c.b16 %v6741, %v6733
        %v6870 = vpack.c.b16 %v6742, %v6734
        %6999 = vmatprep.subr.bf16.mxu0 %v6744
        %7000 = vmatpush1.bf16.msra.mxu0 %v6743
        %7001 = vmatprep.subr.bf16.mxu0 %v6752
        %7002 = vmatpush1.bf16.msra.mxu0 %v6751
        %7003 = vmatprep.subr.bf16.mxu0 %v6760
        %7004 = vmatpush1.bf16.msra.mxu0 %v6759
        %7005 = vmatprep.subr.bf16.mxu0 %v6768
        %7006 = vmatpush1.bf16.msra.mxu0 %v6767
        %7007 = vmatprep.subr.bf16.mxu0 %v6776
        %7008 = vmatpush1.bf16.msra.mxu0 %v6775
        %7009 = vmatprep.subr.bf16.mxu0 %v6784
        %7010 = vmatpush1.bf16.msra.mxu0 %v6783
        %7011 = vmatprep.subr.bf16.mxu0 %v6792
        %7012 = vmatpush1.bf16.msra.mxu0 %v6791
        %7013 = vmatprep.subr.bf16.mxu0 %v6800
        %7014 = vmatpush1.bf16.msra.mxu0 %v6799
        %7015 = vmatprep.subr.bf16.mxu0 %v6808
        %7016 = vmatpush1.bf16.msra.mxu0 %v6807
        %7017 = vmatprep.subr.bf16.mxu0 %v6816
        %7018 = vmatpush1.bf16.msra.mxu0 %v6815
        %7019 = vmatprep.subr.bf16.mxu0 %v6824
        %7020 = vmatpush1.bf16.msra.mxu0 %v6823
        %7021 = vmatprep.subr.bf16.mxu0 %v6832
        %7022 = vmatpush1.bf16.msra.mxu0 %v6831
        %7023 = vmatprep.subr.bf16.mxu0 %v6840
        %7024 = vmatpush1.bf16.msra.mxu0 %v6839
        %7025 = vmatprep.subr.bf16.mxu0 %v6848
        %7026 = vmatpush1.bf16.msra.mxu0 %v6847
        %7027 = vmatprep.subr.bf16.mxu0 %v6856
        %7028 = vmatpush1.bf16.msra.mxu0 %v6855
        %7029 = vmatprep.subr.bf16.mxu0 %v6864
        %7030 = vmatpush1.bf16.msra.mxu0 %v6863
        %7031 = vmatprep.mubr.bf16.mxu0 %v6188
        %7032 = vmatmul.mubr.bf16.gmra.mrb[0].mxu0 %v6187
        %v7033 = vpop.f32.mrb[0].mxu0
        %v7034 = vadd.f32 %v6322, %v7033
        %v7035 = vpop.f32.mrb[0].mxu0
        %v7036 = vadd.f32 %v6326, %v7035
        %v7037 = vpop.f32.mrb[0].mxu0
        %v7038 = vadd.f32 %v6322, %v7037
        %v7039 = vpop.f32.mrb[0].mxu0
        %v7040 = vadd.f32 %v6326, %v7039
        %7041 = vdwg.mxu0
        %7042 = vmatprep.subr.bf16.mxu0 %v6746
        %7043 = vmatpush1.bf16.msra.mxu0 %v6745
        %7044 = vmatprep.subr.bf16.mxu0 %v6754
        %7045 = vmatpush1.bf16.msra.mxu0 %v6753
        %7046 = vmatprep.subr.bf16.mxu0 %v6762
        %7047 = vmatpush1.bf16.msra.mxu0 %v6761
        %7048 = vmatprep.subr.bf16.mxu0 %v6770
        %7049 = vmatpush1.bf16.msra.mxu0 %v6769
        %7050 = vmatprep.subr.bf16.mxu0 %v6778
        %7051 = vmatpush1.bf16.msra.mxu0 %v6777
        %7052 = vmatprep.subr.bf16.mxu0 %v6786
        %7053 = vmatpush1.bf16.msra.mxu0 %v6785
        %7054 = vmatprep.subr.bf16.mxu0 %v6794
        %7055 = vmatpush1.bf16.msra.mxu0 %v6793
        %7056 = vmatprep.subr.bf16.mxu0 %v6802
        %7057 = vmatpush1.bf16.msra.mxu0 %v6801
        %7058 = vmatprep.subr.bf16.mxu0 %v6810
        %7059 = vmatpush1.bf16.msra.mxu0 %v6809
        %7060 = vmatprep.subr.bf16.mxu0 %v6818
        %7061 = vmatpush1.bf16.msra.mxu0 %v6817
        %7062 = vmatprep.subr.bf16.mxu0 %v6826
        %7063 = vmatpush1.bf16.msra.mxu0 %v6825
        %7064 = vmatprep.subr.bf16.mxu0 %v6834
        %7065 = vmatpush1.bf16.msra.mxu0 %v6833
        %7066 = vmatprep.subr.bf16.mxu0 %v6842
        %7067 = vmatpush1.bf16.msra.mxu0 %v6841
        %7068 = vmatprep.subr.bf16.mxu0 %v6850
        %7069 = vmatpush1.bf16.msra.mxu0 %v6849
        %7070 = vmatprep.subr.bf16.mxu0 %v6858
        %7071 = vmatpush1.bf16.msra.mxu0 %v6857
        %7072 = vmatprep.subr.bf16.mxu0 %v6866
        %7073 = vmatpush1.bf16.msra.mxu0 %v6865
        %7074 = vmatprep.mubr.bf16.mxu0 %v6188
        %7075 = vmatmul.mubr.bf16.gmra.mrb[0].mxu0 %v6187
        %v7076 = vpop.f32.mrb[0].mxu0
        %v7077 = vadd.f32 %v6330, %v7076
        %v7078 = vpop.f32.mrb[0].mxu0
        %v7079 = vadd.f32 %v6334, %v7078
        %v7080 = vpop.f32.mrb[0].mxu0
        %v7081 = vadd.f32 %v6330, %v7080
        %v7082 = vpop.f32.mrb[0].mxu0
        %v7083 = vadd.f32 %v6334, %v7082
        %7084 = vdwg.mxu0
        %7085 = vmatprep.subr.bf16.mxu0 %v6748
        %7086 = vmatpush1.bf16.msra.mxu0 %v6747
        %7087 = vmatprep.subr.bf16.mxu0 %v6756
        %7088 = vmatpush1.bf16.msra.mxu0 %v6755
        %7089 = vmatprep.subr.bf16.mxu0 %v6764
        %7090 = vmatpush1.bf16.msra.mxu0 %v6763
        %7091 = vmatprep.subr.bf16.mxu0 %v6772
        %7092 = vmatpush1.bf16.msra.mxu0 %v6771
        %7093 = vmatprep.subr.bf16.mxu0 %v6780
        %7094 = vmatpush1.bf16.msra.mxu0 %v6779
        %7095 = vmatprep.subr.bf16.mxu0 %v6788
        %7096 = vmatpush1.bf16.msra.mxu0 %v6787
        %7097 = vmatprep.subr.bf16.mxu0 %v6796
        %7098 = vmatpush1.bf16.msra.mxu0 %v6795
        %7099 = vmatprep.subr.bf16.mxu0 %v6804
        %7100 = vmatpush1.bf16.msra.mxu0 %v6803
        %7101 = vmatprep.subr.bf16.mxu0 %v6812
        %7102 = vmatpush1.bf16.msra.mxu0 %v6811
        %7103 = vmatprep.subr.bf16.mxu0 %v6820
        %7104 = vmatpush1.bf16.msra.mxu0 %v6819
        %7105 = vmatprep.subr.bf16.mxu0 %v6828
        %7106 = vmatpush1.bf16.msra.mxu0 %v6827
        %7107 = vmatprep.subr.bf16.mxu0 %v6836
        %7108 = vmatpush1.bf16.msra.mxu0 %v6835
        %7109 = vmatprep.subr.bf16.mxu0 %v6844
        %7110 = vmatpush1.bf16.msra.mxu0 %v6843
        %7111 = vmatprep.subr.bf16.mxu0 %v6852
        %7112 = vmatpush1.bf16.msra.mxu0 %v6851
        %7113 = vmatprep.subr.bf16.mxu0 %v6860
        %7114 = vmatpush1.bf16.msra.mxu0 %v6859
        %7115 = vmatprep.subr.bf16.mxu0 %v6868
        %7116 = vmatpush1.bf16.msra.mxu0 %v6867
        %7117 = vmatprep.mubr.bf16.mxu0 %v6188
        %7118 = vmatmul.mubr.bf16.gmra.mrb[0].mxu0 %v6187
        %v7119 = vpop.f32.mrb[0].mxu0
        %v7120 = vadd.f32 %v6338, %v7119
        %v7121 = vpop.f32.mrb[0].mxu0
        %v7122 = vadd.f32 %v6342, %v7121
        %v7123 = vpop.f32.mrb[0].mxu0
        %v7124 = vadd.f32 %v6338, %v7123
        %v7125 = vpop.f32.mrb[0].mxu0
        %v7126 = vadd.f32 %v6342, %v7125
        %7127 = vdwg.mxu0
        %7128 = vmatprep.subr.bf16.mxu0 %v6750
        %7129 = vmatpush1.bf16.msra.mxu0 %v6749
        %7130 = vmatprep.subr.bf16.mxu0 %v6758
        %7131 = vmatpush1.bf16.msra.mxu0 %v6757
        %7132 = vmatprep.subr.bf16.mxu0 %v6766
        %7133 = vmatpush1.bf16.msra.mxu0 %v6765
        %7134 = vmatprep.subr.bf16.mxu0 %v6774
        %7135 = vmatpush1.bf16.msra.mxu0 %v6773
        %7136 = vmatprep.subr.bf16.mxu0 %v6782
        %7137 = vmatpush1.bf16.msra.mxu0 %v6781
        %7138 = vmatprep.subr.bf16.mxu0 %v6790
        %7139 = vmatpush1.bf16.msra.mxu0 %v6789
        %7140 = vmatprep.subr.bf16.mxu0 %v6798
        %7141 = vmatpush1.bf16.msra.mxu0 %v6797
        %7142 = vmatprep.subr.bf16.mxu0 %v6806
        %7143 = vmatpush1.bf16.msra.mxu0 %v6805
        %7144 = vmatprep.subr.bf16.mxu0 %v6814
        %7145 = vmatpush1.bf16.msra.mxu0 %v6813
        %7146 = vmatprep.subr.bf16.mxu0 %v6822
        %7147 = vmatpush1.bf16.msra.mxu0 %v6821
        %7148 = vmatprep.subr.bf16.mxu0 %v6830
        %7149 = vmatpush1.bf16.msra.mxu0 %v6829
        %7150 = vmatprep.subr.bf16.mxu0 %v6838
        %7151 = vmatpush1.bf16.msra.mxu0 %v6837
        %7152 = vmatprep.subr.bf16.mxu0 %v6846
        %7153 = vmatpush1.bf16.msra.mxu0 %v6845
        %7154 = vmatprep.subr.bf16.mxu0 %v6854
        %7155 = vmatpush1.bf16.msra.mxu0 %v6853
        %7156 = vmatprep.subr.bf16.mxu0 %v6862
        %7157 = vmatpush1.bf16.msra.mxu0 %v6861
        %7158 = vmatprep.subr.bf16.mxu0 %v6870
        %7159 = vmatpush1.bf16.msra.mxu0 %v6869
        %7160 = vmatprep.mubr.bf16.mxu0 %v6188
        %7161 = vmatmul.mubr.bf16.gmra.mrb[0].mxu0 %v6187
        %v7162 = vpop.f32.mrb[0].mxu0
        %v7163 = vadd.f32 %v6346, %v7162
        %v7164 = vpop.f32.mrb[0].mxu0
        %v7165 = vadd.f32 %v6350, %v7164
        %v7166 = vpop.f32.mrb[0].mxu0
        %v7167 = vadd.f32 %v6346, %v7166
        %v7168 = vpop.f32.mrb[0].mxu0
        %v7169 = vadd.f32 %v6350, %v7168
        %7170 = vdwg.mxu0
        %v7171 = vmax.f32 %v7034, 0.0
        %v7172 = vmax.f32 %v7036, 0.0
        %v7173 = vmax.f32 %v7077, 0.0
        %v7174 = vmax.f32 %v7079, 0.0
        %v7175 = vmax.f32 %v7120, 0.0
        %v7176 = vmax.f32 %v7122, 0.0
        %v7177 = vmax.f32 %v7163, 0.0
        %v7178 = vmax.f32 %v7165, 0.0
        %v7179 = vmax.f32 %v7038, 0.0
        %v7180 = vmax.f32 %v7040, 0.0
        %v7181 = vmax.f32 %v7081, 0.0
        %v7182 = vmax.f32 %v7083, 0.0
        %v7183 = vmax.f32 %v7124, 0.0
        %v7184 = vmax.f32 %v7126, 0.0
        %v7185 = vmax.f32 %v7167, 0.0
        %v7186 = vmax.f32 %v7169, 0.0
        %v7187 = vpack.c.bf16 %v7179, %v7171
        %v7188 = vpack.c.bf16 %v7180, %v7172
        %v7189 = vpack.c.bf16 %v7181, %v7173
        %v7190 = vpack.c.bf16 %v7182, %v7174
        %v7191 = vpack.c.bf16 %v7183, %v7175
        %v7192 = vpack.c.bf16 %v7184, %v7176
        %v7193 = vpack.c.bf16 %v7185, %v7177
        %v7194 = vpack.c.bf16 %v7186, %v7178
        %v7195 = vld [vmem:[%s279] sm:$0xff]
        %v7196 = vld [vmem:[%s279 + $0x8] sm:$0xff]
        %v7197 = vld [vmem:[%s279 + $0x10] sm:$0xff]
        %v7198 = vld [vmem:[%s279 + $0x18] sm:$0xff]
        %v7199 = vld [vmem:[%s279 + $0x20] sm:$0xff]
        %v7200 = vld [vmem:[%s279 + $0x28] sm:$0xff]
        %v7201 = vld [vmem:[%s279 + $0x30] sm:$0xff]
        %v7202 = vld [vmem:[%s279 + $0x38] sm:$0xff]
        %v7203 = vld [vmem:[%s279 + $0x40] sm:$0xff]
        %v7204 = vld [vmem:[%s279 + $0x48] sm:$0xff]
        %v7205 = vld [vmem:[%s279 + $0x50] sm:$0xff]
        %v7206 = vld [vmem:[%s279 + $0x58] sm:$0xff]
        %v7207 = vld [vmem:[%s279 + $0x60] sm:$0xff]
        %v7208 = vld [vmem:[%s279 + $0x68] sm:$0xff]
        %v7209 = vld [vmem:[%s279 + $0x70] sm:$0xff]
        %v7210 = vld [vmem:[%s279 + $0x78] sm:$0xff]
        %v7211 = vld [vmem:[%s279 + $0x80] sm:$0xff]
        %v7212 = vld [vmem:[%s279 + $0x88] sm:$0xff]
        %v7213 = vld [vmem:[%s279 + $0x90] sm:$0xff]
        %v7214 = vld [vmem:[%s279 + $0x98] sm:$0xff]
        %v7215 = vld [vmem:[%s279 + $0xa0] sm:$0xff]
        %v7216 = vld [vmem:[%s279 + $0xa8] sm:$0xff]
        %v7217 = vld [vmem:[%s279 + $0xb0] sm:$0xff]
        %v7218 = vld [vmem:[%s279 + $0xb8] sm:$0xff]
        %v7219 = vld [vmem:[%s279 + $0xc0] sm:$0xff]
        %v7220 = vld [vmem:[%s279 + $0xc8] sm:$0xff]
        %v7221 = vld [vmem:[%s279 + $0xd0] sm:$0xff]
        %v7222 = vld [vmem:[%s279 + $0xd8] sm:$0xff]
        %v7223 = vld [vmem:[%s279 + $0xe0] sm:$0xff]
        %v7224 = vld [vmem:[%s279 + $0xe8] sm:$0xff]
        %v7225 = vld [vmem:[%s279 + $0xf0] sm:$0xff]
        %v7226 = vld [vmem:[%s279 + $0xf8] sm:$0xff]
        %v7227 = vld [vmem:[%s279 + $0x100] sm:$0xff]
        %v7228 = vld [vmem:[%s279 + $0x108] sm:$0xff]
        %v7229 = vld [vmem:[%s279 + $0x110] sm:$0xff]
        %v7230 = vld [vmem:[%s279 + $0x118] sm:$0xff]
        %v7231 = vld [vmem:[%s279 + $0x120] sm:$0xff]
        %v7232 = vld [vmem:[%s279 + $0x128] sm:$0xff]
        %v7233 = vld [vmem:[%s279 + $0x130] sm:$0xff]
        %v7234 = vld [vmem:[%s279 + $0x138] sm:$0xff]
        %v7235 = vld [vmem:[%s279 + $0x140] sm:$0xff]
        %v7236 = vld [vmem:[%s279 + $0x148] sm:$0xff]
        %v7237 = vld [vmem:[%s279 + $0x150] sm:$0xff]
        %v7238 = vld [vmem:[%s279 + $0x158] sm:$0xff]
        %v7239 = vld [vmem:[%s279 + $0x160] sm:$0xff]
        %v7240 = vld [vmem:[%s279 + $0x168] sm:$0xff]
        %v7241 = vld [vmem:[%s279 + $0x170] sm:$0xff]
        %v7242 = vld [vmem:[%s279 + $0x178] sm:$0xff]
        %v7243 = vld [vmem:[%s279 + $0x180] sm:$0xff]
        %v7244 = vld [vmem:[%s279 + $0x188] sm:$0xff]
        %v7245 = vld [vmem:[%s279 + $0x190] sm:$0xff]
        %v7246 = vld [vmem:[%s279 + $0x198] sm:$0xff]
        %v7247 = vld [vmem:[%s279 + $0x1a0] sm:$0xff]
        %v7248 = vld [vmem:[%s279 + $0x1a8] sm:$0xff]
        %v7249 = vld [vmem:[%s279 + $0x1b0] sm:$0xff]
        %v7250 = vld [vmem:[%s279 + $0x1b8] sm:$0xff]
        %v7251 = vld [vmem:[%s279 + $0x1c0] sm:$0xff]
        %v7252 = vld [vmem:[%s279 + $0x1c8] sm:$0xff]
        %v7253 = vld [vmem:[%s279 + $0x1d0] sm:$0xff]
        %v7254 = vld [vmem:[%s279 + $0x1d8] sm:$0xff]
        %v7255 = vld [vmem:[%s279 + $0x1e0] sm:$0xff]
        %v7256 = vld [vmem:[%s279 + $0x1e8] sm:$0xff]
        %v7257 = vld [vmem:[%s279 + $0x1f0] sm:$0xff]
        %v7258 = vld [vmem:[%s279 + $0x1f8] sm:$0xff]
        %v7259 = vld [vmem:[%s279 + $0x200] sm:$0xff]
        %v7260 = vld [vmem:[%s279 + $0x208] sm:$0xff]
        %v7261 = vld [vmem:[%s279 + $0x210] sm:$0xff]
        %v7262 = vld [vmem:[%s279 + $0x218] sm:$0xff]
        %v7263 = vld [vmem:[%s279 + $0x220] sm:$0xff]
        %v7264 = vld [vmem:[%s279 + $0x228] sm:$0xff]
        %v7265 = vld [vmem:[%s279 + $0x230] sm:$0xff]
        %v7266 = vld [vmem:[%s279 + $0x238] sm:$0xff]
        %v7267 = vld [vmem:[%s279 + $0x240] sm:$0xff]
        %v7268 = vld [vmem:[%s279 + $0x248] sm:$0xff]
        %v7269 = vld [vmem:[%s279 + $0x250] sm:$0xff]
        %v7270 = vld [vmem:[%s279 + $0x258] sm:$0xff]
        %v7271 = vld [vmem:[%s279 + $0x260] sm:$0xff]
        %v7272 = vld [vmem:[%s279 + $0x268] sm:$0xff]
        %v7273 = vld [vmem:[%s279 + $0x270] sm:$0xff]
        %v7274 = vld [vmem:[%s279 + $0x278] sm:$0xff]
        %v7275 = vld [vmem:[%s279 + $0x280] sm:$0xff]
        %v7276 = vld [vmem:[%s279 + $0x288] sm:$0xff]
        %v7277 = vld [vmem:[%s279 + $0x290] sm:$0xff]
        %v7278 = vld [vmem:[%s279 + $0x298] sm:$0xff]
        %v7279 = vld [vmem:[%s279 + $0x2a0] sm:$0xff]
        %v7280 = vld [vmem:[%s279 + $0x2a8] sm:$0xff]
        %v7281 = vld [vmem:[%s279 + $0x2b0] sm:$0xff]
        %v7282 = vld [vmem:[%s279 + $0x2b8] sm:$0xff]
        %v7283 = vld [vmem:[%s279 + $0x2c0] sm:$0xff]
        %v7284 = vld [vmem:[%s279 + $0x2c8] sm:$0xff]
        %v7285 = vld [vmem:[%s279 + $0x2d0] sm:$0xff]
        %v7286 = vld [vmem:[%s279 + $0x2d8] sm:$0xff]
        %v7287 = vld [vmem:[%s279 + $0x2e0] sm:$0xff]
        %v7288 = vld [vmem:[%s279 + $0x2e8] sm:$0xff]
        %v7289 = vld [vmem:[%s279 + $0x2f0] sm:$0xff]
        %v7290 = vld [vmem:[%s279 + $0x2f8] sm:$0xff]
        %v7291 = vld [vmem:[%s279 + $0x300] sm:$0xff]
        %v7292 = vld [vmem:[%s279 + $0x308] sm:$0xff]
        %v7293 = vld [vmem:[%s279 + $0x310] sm:$0xff]
        %v7294 = vld [vmem:[%s279 + $0x318] sm:$0xff]
        %v7295 = vld [vmem:[%s279 + $0x320] sm:$0xff]
        %v7296 = vld [vmem:[%s279 + $0x328] sm:$0xff]
        %v7297 = vld [vmem:[%s279 + $0x330] sm:$0xff]
        %v7298 = vld [vmem:[%s279 + $0x338] sm:$0xff]
        %v7299 = vld [vmem:[%s279 + $0x340] sm:$0xff]
        %v7300 = vld [vmem:[%s279 + $0x348] sm:$0xff]
        %v7301 = vld [vmem:[%s279 + $0x350] sm:$0xff]
        %v7302 = vld [vmem:[%s279 + $0x358] sm:$0xff]
        %v7303 = vld [vmem:[%s279 + $0x360] sm:$0xff]
        %v7304 = vld [vmem:[%s279 + $0x368] sm:$0xff]
        %v7305 = vld [vmem:[%s279 + $0x370] sm:$0xff]
        %v7306 = vld [vmem:[%s279 + $0x378] sm:$0xff]
        %v7307 = vld [vmem:[%s279 + $0x380] sm:$0xff]
        %v7308 = vld [vmem:[%s279 + $0x388] sm:$0xff]
        %v7309 = vld [vmem:[%s279 + $0x390] sm:$0xff]
        %v7310 = vld [vmem:[%s279 + $0x398] sm:$0xff]
        %v7311 = vld [vmem:[%s279 + $0x3a0] sm:$0xff]
        %v7312 = vld [vmem:[%s279 + $0x3a8] sm:$0xff]
        %v7313 = vld [vmem:[%s279 + $0x3b0] sm:$0xff]
        %v7314 = vld [vmem:[%s279 + $0x3b8] sm:$0xff]
        %v7315 = vld [vmem:[%s279 + $0x3c0] sm:$0xff]
        %v7316 = vld [vmem:[%s279 + $0x3c8] sm:$0xff]
        %v7317 = vld [vmem:[%s279 + $0x3d0] sm:$0xff]
        %v7318 = vld [vmem:[%s279 + $0x3d8] sm:$0xff]
        %v7319 = vld [vmem:[%s279 + $0x3e0] sm:$0xff]
        %v7320 = vld [vmem:[%s279 + $0x3e8] sm:$0xff]
        %v7321 = vld [vmem:[%s279 + $0x3f0] sm:$0xff]
        %v7322 = vld [vmem:[%s279 + $0x3f8] sm:$0xff]
        %v7323 = vld [vmem:[%s288 + $0x20] sm:$0x3]
        %v7325 = vlaneseq
        %v7326 = vshrl.u32 %v7325, 7
        %v7327 = vsub.s32 0, %v7326
        %v7328 = vrot.slane %v7323, %v7327
        %v7329 = vlaneseq
        %v7330 = vshrl.u32 %v7329, 7
        %v7331 = vsub.s32 1, %v7330
        %v7332 = vrot.slane %v7323, %v7331
        %v7463 = vunpack.c.l.b16 %v7195
        %v7464 = vunpack.c.h.b16 %v7195
        %v7465 = vunpack.c.l.b16 %v7196
        %v7466 = vunpack.c.h.b16 %v7196
        %v7467 = vunpack.c.l.b16 %v7197
        %v7468 = vunpack.c.h.b16 %v7197
        %v7469 = vunpack.c.l.b16 %v7198
        %v7470 = vunpack.c.h.b16 %v7198
        %v7471 = vunpack.c.l.b16 %v7199
        %v7472 = vunpack.c.h.b16 %v7199
        %v7473 = vunpack.c.l.b16 %v7200
        %v7474 = vunpack.c.h.b16 %v7200
        %v7475 = vunpack.c.l.b16 %v7201
        %v7476 = vunpack.c.h.b16 %v7201
        %v7477 = vunpack.c.l.b16 %v7202
        %v7478 = vunpack.c.h.b16 %v7202
        %v7479 = vunpack.c.l.b16 %v7203
        %v7480 = vunpack.c.h.b16 %v7203
        %v7481 = vunpack.c.l.b16 %v7204
        %v7482 = vunpack.c.h.b16 %v7204
        %v7483 = vunpack.c.l.b16 %v7205
        %v7484 = vunpack.c.h.b16 %v7205
        %v7485 = vunpack.c.l.b16 %v7206
        %v7486 = vunpack.c.h.b16 %v7206
        %v7487 = vunpack.c.l.b16 %v7207
        %v7488 = vunpack.c.h.b16 %v7207
        %v7489 = vunpack.c.l.b16 %v7208
        %v7490 = vunpack.c.h.b16 %v7208
        %v7491 = vunpack.c.l.b16 %v7209
        %v7492 = vunpack.c.h.b16 %v7209
        %v7493 = vunpack.c.l.b16 %v7210
        %v7494 = vunpack.c.h.b16 %v7210
        %v7495 = vunpack.c.l.b16 %v7211
        %v7496 = vunpack.c.h.b16 %v7211
        %v7497 = vunpack.c.l.b16 %v7212
        %v7498 = vunpack.c.h.b16 %v7212
        %v7499 = vunpack.c.l.b16 %v7213
        %v7500 = vunpack.c.h.b16 %v7213
        %v7501 = vunpack.c.l.b16 %v7214
        %v7502 = vunpack.c.h.b16 %v7214
        %v7503 = vunpack.c.l.b16 %v7215
        %v7504 = vunpack.c.h.b16 %v7215
        %v7505 = vunpack.c.l.b16 %v7216
        %v7506 = vunpack.c.h.b16 %v7216
        %v7507 = vunpack.c.l.b16 %v7217
        %v7508 = vunpack.c.h.b16 %v7217
        %v7509 = vunpack.c.l.b16 %v7218
        %v7510 = vunpack.c.h.b16 %v7218
        %v7511 = vunpack.c.l.b16 %v7219
        %v7512 = vunpack.c.h.b16 %v7219
        %v7513 = vunpack.c.l.b16 %v7220
        %v7514 = vunpack.c.h.b16 %v7220
        %v7515 = vunpack.c.l.b16 %v7221
        %v7516 = vunpack.c.h.b16 %v7221
        %v7517 = vunpack.c.l.b16 %v7222
        %v7518 = vunpack.c.h.b16 %v7222
        %v7519 = vunpack.c.l.b16 %v7223
        %v7520 = vunpack.c.h.b16 %v7223
        %v7521 = vunpack.c.l.b16 %v7224
        %v7522 = vunpack.c.h.b16 %v7224
        %v7523 = vunpack.c.l.b16 %v7225
        %v7524 = vunpack.c.h.b16 %v7225
        %v7525 = vunpack.c.l.b16 %v7226
        %v7526 = vunpack.c.h.b16 %v7226
        %v7527 = vunpack.c.l.b16 %v7227
        %v7528 = vunpack.c.h.b16 %v7227
        %v7529 = vunpack.c.l.b16 %v7228
        %v7530 = vunpack.c.h.b16 %v7228
        %v7531 = vunpack.c.l.b16 %v7229
        %v7532 = vunpack.c.h.b16 %v7229
        %v7533 = vunpack.c.l.b16 %v7230
        %v7534 = vunpack.c.h.b16 %v7230
        %v7535 = vunpack.c.l.b16 %v7231
        %v7536 = vunpack.c.h.b16 %v7231
        %v7537 = vunpack.c.l.b16 %v7232
        %v7538 = vunpack.c.h.b16 %v7232
        %v7539 = vunpack.c.l.b16 %v7233
        %v7540 = vunpack.c.h.b16 %v7233
        %v7541 = vunpack.c.l.b16 %v7234
        %v7542 = vunpack.c.h.b16 %v7234
        %v7543 = vunpack.c.l.b16 %v7235
        %v7544 = vunpack.c.h.b16 %v7235
        %v7545 = vunpack.c.l.b16 %v7236
        %v7546 = vunpack.c.h.b16 %v7236
        %v7547 = vunpack.c.l.b16 %v7237
        %v7548 = vunpack.c.h.b16 %v7237
        %v7549 = vunpack.c.l.b16 %v7238
        %v7550 = vunpack.c.h.b16 %v7238
        %v7551 = vunpack.c.l.b16 %v7239
        %v7552 = vunpack.c.h.b16 %v7239
        %v7553 = vunpack.c.l.b16 %v7240
        %v7554 = vunpack.c.h.b16 %v7240
        %v7555 = vunpack.c.l.b16 %v7241
        %v7556 = vunpack.c.h.b16 %v7241
        %v7557 = vunpack.c.l.b16 %v7242
        %v7558 = vunpack.c.h.b16 %v7242
        %v7559 = vunpack.c.l.b16 %v7243
        %v7560 = vunpack.c.h.b16 %v7243
        %v7561 = vunpack.c.l.b16 %v7244
        %v7562 = vunpack.c.h.b16 %v7244
        %v7563 = vunpack.c.l.b16 %v7245
        %v7564 = vunpack.c.h.b16 %v7245
        %v7565 = vunpack.c.l.b16 %v7246
        %v7566 = vunpack.c.h.b16 %v7246
        %v7567 = vunpack.c.l.b16 %v7247
        %v7568 = vunpack.c.h.b16 %v7247
        %v7569 = vunpack.c.l.b16 %v7248
        %v7570 = vunpack.c.h.b16 %v7248
        %v7571 = vunpack.c.l.b16 %v7249
        %v7572 = vunpack.c.h.b16 %v7249
        %v7573 = vunpack.c.l.b16 %v7250
        %v7574 = vunpack.c.h.b16 %v7250
        %v7575 = vunpack.c.l.b16 %v7251
        %v7576 = vunpack.c.h.b16 %v7251
        %v7577 = vunpack.c.l.b16 %v7252
        %v7578 = vunpack.c.h.b16 %v7252
        %v7579 = vunpack.c.l.b16 %v7253
        %v7580 = vunpack.c.h.b16 %v7253
        %v7581 = vunpack.c.l.b16 %v7254
        %v7582 = vunpack.c.h.b16 %v7254
        %v7583 = vunpack.c.l.b16 %v7255
        %v7584 = vunpack.c.h.b16 %v7255
        %v7585 = vunpack.c.l.b16 %v7256
        %v7586 = vunpack.c.h.b16 %v7256
        %v7587 = vunpack.c.l.b16 %v7257
        %v7588 = vunpack.c.h.b16 %v7257
        %v7589 = vunpack.c.l.b16 %v7258
        %v7590 = vunpack.c.h.b16 %v7258
        %v7591 = vunpack.c.l.b16 %v7259
        %v7592 = vunpack.c.h.b16 %v7259
        %v7593 = vunpack.c.l.b16 %v7260
        %v7594 = vunpack.c.h.b16 %v7260
        %v7595 = vunpack.c.l.b16 %v7261
        %v7596 = vunpack.c.h.b16 %v7261
        %v7597 = vunpack.c.l.b16 %v7262
        %v7598 = vunpack.c.h.b16 %v7262
        %v7599 = vunpack.c.l.b16 %v7263
        %v7600 = vunpack.c.h.b16 %v7263
        %v7601 = vunpack.c.l.b16 %v7264
        %v7602 = vunpack.c.h.b16 %v7264
        %v7603 = vunpack.c.l.b16 %v7265
        %v7604 = vunpack.c.h.b16 %v7265
        %v7605 = vunpack.c.l.b16 %v7266
        %v7606 = vunpack.c.h.b16 %v7266
        %v7607 = vunpack.c.l.b16 %v7267
        %v7608 = vunpack.c.h.b16 %v7267
        %v7609 = vunpack.c.l.b16 %v7268
        %v7610 = vunpack.c.h.b16 %v7268
        %v7611 = vunpack.c.l.b16 %v7269
        %v7612 = vunpack.c.h.b16 %v7269
        %v7613 = vunpack.c.l.b16 %v7270
        %v7614 = vunpack.c.h.b16 %v7270
        %v7615 = vunpack.c.l.b16 %v7271
        %v7616 = vunpack.c.h.b16 %v7271
        %v7617 = vunpack.c.l.b16 %v7272
        %v7618 = vunpack.c.h.b16 %v7272
        %v7619 = vunpack.c.l.b16 %v7273
        %v7620 = vunpack.c.h.b16 %v7273
        %v7621 = vunpack.c.l.b16 %v7274
        %v7622 = vunpack.c.h.b16 %v7274
        %v7623 = vunpack.c.l.b16 %v7275
        %v7624 = vunpack.c.h.b16 %v7275
        %v7625 = vunpack.c.l.b16 %v7276
        %v7626 = vunpack.c.h.b16 %v7276
        %v7627 = vunpack.c.l.b16 %v7277
        %v7628 = vunpack.c.h.b16 %v7277
        %v7629 = vunpack.c.l.b16 %v7278
        %v7630 = vunpack.c.h.b16 %v7278
        %v7631 = vunpack.c.l.b16 %v7279
        %v7632 = vunpack.c.h.b16 %v7279
        %v7633 = vunpack.c.l.b16 %v7280
        %v7634 = vunpack.c.h.b16 %v7280
        %v7635 = vunpack.c.l.b16 %v7281
        %v7636 = vunpack.c.h.b16 %v7281
        %v7637 = vunpack.c.l.b16 %v7282
        %v7638 = vunpack.c.h.b16 %v7282
        %v7639 = vunpack.c.l.b16 %v7283
        %v7640 = vunpack.c.h.b16 %v7283
        %v7641 = vunpack.c.l.b16 %v7284
        %v7642 = vunpack.c.h.b16 %v7284
        %v7643 = vunpack.c.l.b16 %v7285
        %v7644 = vunpack.c.h.b16 %v7285
        %v7645 = vunpack.c.l.b16 %v7286
        %v7646 = vunpack.c.h.b16 %v7286
        %v7647 = vunpack.c.l.b16 %v7287
        %v7648 = vunpack.c.h.b16 %v7287
        %v7649 = vunpack.c.l.b16 %v7288
        %v7650 = vunpack.c.h.b16 %v7288
        %v7651 = vunpack.c.l.b16 %v7289
        %v7652 = vunpack.c.h.b16 %v7289
        %v7653 = vunpack.c.l.b16 %v7290
        %v7654 = vunpack.c.h.b16 %v7290
        %v7655 = vunpack.c.l.b16 %v7291
        %v7656 = vunpack.c.h.b16 %v7291
        %v7657 = vunpack.c.l.b16 %v7292
        %v7658 = vunpack.c.h.b16 %v7292
        %v7659 = vunpack.c.l.b16 %v7293
        %v7660 = vunpack.c.h.b16 %v7293
        %v7661 = vunpack.c.l.b16 %v7294
        %v7662 = vunpack.c.h.b16 %v7294
        %v7663 = vunpack.c.l.b16 %v7295
        %v7664 = vunpack.c.h.b16 %v7295
        %v7665 = vunpack.c.l.b16 %v7296
        %v7666 = vunpack.c.h.b16 %v7296
        %v7667 = vunpack.c.l.b16 %v7297
        %v7668 = vunpack.c.h.b16 %v7297
        %v7669 = vunpack.c.l.b16 %v7298
        %v7670 = vunpack.c.h.b16 %v7298
        %v7671 = vunpack.c.l.b16 %v7299
        %v7672 = vunpack.c.h.b16 %v7299
        %v7673 = vunpack.c.l.b16 %v7300
        %v7674 = vunpack.c.h.b16 %v7300
        %v7675 = vunpack.c.l.b16 %v7301
        %v7676 = vunpack.c.h.b16 %v7301
        %v7677 = vunpack.c.l.b16 %v7302
        %v7678 = vunpack.c.h.b16 %v7302
        %v7679 = vunpack.c.l.b16 %v7303
        %v7680 = vunpack.c.h.b16 %v7303
        %v7681 = vunpack.c.l.b16 %v7304
        %v7682 = vunpack.c.h.b16 %v7304
        %v7683 = vunpack.c.l.b16 %v7305
        %v7684 = vunpack.c.h.b16 %v7305
        %v7685 = vunpack.c.l.b16 %v7306
        %v7686 = vunpack.c.h.b16 %v7306
        %v7687 = vunpack.c.l.b16 %v7307
        %v7688 = vunpack.c.h.b16 %v7307
        %v7689 = vunpack.c.l.b16 %v7308
        %v7690 = vunpack.c.h.b16 %v7308
        %v7691 = vunpack.c.l.b16 %v7309
        %v7692 = vunpack.c.h.b16 %v7309
        %v7693 = vunpack.c.l.b16 %v7310
        %v7694 = vunpack.c.h.b16 %v7310
        %v7695 = vunpack.c.l.b16 %v7311
        %v7696 = vunpack.c.h.b16 %v7311
        %v7697 = vunpack.c.l.b16 %v7312
        %v7698 = vunpack.c.h.b16 %v7312
        %v7699 = vunpack.c.l.b16 %v7313
        %v7700 = vunpack.c.h.b16 %v7313
        %v7701 = vunpack.c.l.b16 %v7314
        %v7702 = vunpack.c.h.b16 %v7314
        %v7703 = vunpack.c.l.b16 %v7315
        %v7704 = vunpack.c.h.b16 %v7315
        %v7705 = vunpack.c.l.b16 %v7316
        %v7706 = vunpack.c.h.b16 %v7316
        %v7707 = vunpack.c.l.b16 %v7317
        %v7708 = vunpack.c.h.b16 %v7317
        %v7709 = vunpack.c.l.b16 %v7318
        %v7710 = vunpack.c.h.b16 %v7318
        %v7711 = vunpack.c.l.b16 %v7319
        %v7712 = vunpack.c.h.b16 %v7319
        %v7713 = vunpack.c.l.b16 %v7320
        %v7714 = vunpack.c.h.b16 %v7320
        %v7715 = vunpack.c.l.b16 %v7321
        %v7716 = vunpack.c.h.b16 %v7321
        %v7717 = vunpack.c.l.b16 %v7322
        %v7718 = vunpack.c.h.b16 %v7322
        %v7719 = vpack.c.b16 %v7465, %v7463
        %v7720 = vpack.c.b16 %v7466, %v7464
        %v7721 = vpack.c.b16 %v7469, %v7467
        %v7722 = vpack.c.b16 %v7470, %v7468
        %v7723 = vpack.c.b16 %v7473, %v7471
        %v7724 = vpack.c.b16 %v7474, %v7472
        %v7725 = vpack.c.b16 %v7477, %v7475
        %v7726 = vpack.c.b16 %v7478, %v7476
        %v7727 = vpack.c.b16 %v7481, %v7479
        %v7728 = vpack.c.b16 %v7482, %v7480
        %v7729 = vpack.c.b16 %v7485, %v7483
        %v7730 = vpack.c.b16 %v7486, %v7484
        %v7731 = vpack.c.b16 %v7489, %v7487
        %v7732 = vpack.c.b16 %v7490, %v7488
        %v7733 = vpack.c.b16 %v7493, %v7491
        %v7734 = vpack.c.b16 %v7494, %v7492
        %v7735 = vpack.c.b16 %v7497, %v7495
        %v7736 = vpack.c.b16 %v7498, %v7496
        %v7737 = vpack.c.b16 %v7501, %v7499
        %v7738 = vpack.c.b16 %v7502, %v7500
        %v7739 = vpack.c.b16 %v7505, %v7503
        %v7740 = vpack.c.b16 %v7506, %v7504
        %v7741 = vpack.c.b16 %v7509, %v7507
        %v7742 = vpack.c.b16 %v7510, %v7508
        %v7743 = vpack.c.b16 %v7513, %v7511
        %v7744 = vpack.c.b16 %v7514, %v7512
        %v7745 = vpack.c.b16 %v7517, %v7515
        %v7746 = vpack.c.b16 %v7518, %v7516
        %v7747 = vpack.c.b16 %v7521, %v7519
        %v7748 = vpack.c.b16 %v7522, %v7520
        %v7749 = vpack.c.b16 %v7525, %v7523
        %v7750 = vpack.c.b16 %v7526, %v7524
        %v7751 = vpack.c.b16 %v7529, %v7527
        %v7752 = vpack.c.b16 %v7530, %v7528
        %v7753 = vpack.c.b16 %v7533, %v7531
        %v7754 = vpack.c.b16 %v7534, %v7532
        %v7755 = vpack.c.b16 %v7537, %v7535
        %v7756 = vpack.c.b16 %v7538, %v7536
        %v7757 = vpack.c.b16 %v7541, %v7539
        %v7758 = vpack.c.b16 %v7542, %v7540
        %v7759 = vpack.c.b16 %v7545, %v7543
        %v7760 = vpack.c.b16 %v7546, %v7544
        %v7761 = vpack.c.b16 %v7549, %v7547
        %v7762 = vpack.c.b16 %v7550, %v7548
        %v7763 = vpack.c.b16 %v7553, %v7551
        %v7764 = vpack.c.b16 %v7554, %v7552
        %v7765 = vpack.c.b16 %v7557, %v7555
        %v7766 = vpack.c.b16 %v7558, %v7556
        %v7767 = vpack.c.b16 %v7561, %v7559
        %v7768 = vpack.c.b16 %v7562, %v7560
        %v7769 = vpack.c.b16 %v7565, %v7563
        %v7770 = vpack.c.b16 %v7566, %v7564
        %v7771 = vpack.c.b16 %v7569, %v7567
        %v7772 = vpack.c.b16 %v7570, %v7568
        %v7773 = vpack.c.b16 %v7573, %v7571
        %v7774 = vpack.c.b16 %v7574, %v7572
        %v7775 = vpack.c.b16 %v7577, %v7575
        %v7776 = vpack.c.b16 %v7578, %v7576
        %v7777 = vpack.c.b16 %v7581, %v7579
        %v7778 = vpack.c.b16 %v7582, %v7580
        %v7779 = vpack.c.b16 %v7585, %v7583
        %v7780 = vpack.c.b16 %v7586, %v7584
        %v7781 = vpack.c.b16 %v7589, %v7587
        %v7782 = vpack.c.b16 %v7590, %v7588
        %v7783 = vpack.c.b16 %v7593, %v7591
        %v7784 = vpack.c.b16 %v7594, %v7592
        %v7785 = vpack.c.b16 %v7597, %v7595
        %v7786 = vpack.c.b16 %v7598, %v7596
        %v7787 = vpack.c.b16 %v7601, %v7599
        %v7788 = vpack.c.b16 %v7602, %v7600
        %v7789 = vpack.c.b16 %v7605, %v7603
        %v7790 = vpack.c.b16 %v7606, %v7604
        %v7791 = vpack.c.b16 %v7609, %v7607
        %v7792 = vpack.c.b16 %v7610, %v7608
        %v7793 = vpack.c.b16 %v7613, %v7611
        %v7794 = vpack.c.b16 %v7614, %v7612
        %v7795 = vpack.c.b16 %v7617, %v7615
        %v7796 = vpack.c.b16 %v7618, %v7616
        %v7797 = vpack.c.b16 %v7621, %v7619
        %v7798 = vpack.c.b16 %v7622, %v7620
        %v7799 = vpack.c.b16 %v7625, %v7623
        %v7800 = vpack.c.b16 %v7626, %v7624
        %v7801 = vpack.c.b16 %v7629, %v7627
        %v7802 = vpack.c.b16 %v7630, %v7628
        %v7803 = vpack.c.b16 %v7633, %v7631
        %v7804 = vpack.c.b16 %v7634, %v7632
        %v7805 = vpack.c.b16 %v7637, %v7635
        %v7806 = vpack.c.b16 %v7638, %v7636
        %v7807 = vpack.c.b16 %v7641, %v7639
        %v7808 = vpack.c.b16 %v7642, %v7640
        %v7809 = vpack.c.b16 %v7645, %v7643
        %v7810 = vpack.c.b16 %v7646, %v7644
        %v7811 = vpack.c.b16 %v7649, %v7647
        %v7812 = vpack.c.b16 %v7650, %v7648
        %v7813 = vpack.c.b16 %v7653, %v7651
        %v7814 = vpack.c.b16 %v7654, %v7652
        %v7815 = vpack.c.b16 %v7657, %v7655
        %v7816 = vpack.c.b16 %v7658, %v7656
        %v7817 = vpack.c.b16 %v7661, %v7659
        %v7818 = vpack.c.b16 %v7662, %v7660
        %v7819 = vpack.c.b16 %v7665, %v7663
        %v7820 = vpack.c.b16 %v7666, %v7664
        %v7821 = vpack.c.b16 %v7669, %v7667
        %v7822 = vpack.c.b16 %v7670, %v7668
        %v7823 = vpack.c.b16 %v7673, %v7671
        %v7824 = vpack.c.b16 %v7674, %v7672
        %v7825 = vpack.c.b16 %v7677, %v7675
        %v7826 = vpack.c.b16 %v7678, %v7676
        %v7827 = vpack.c.b16 %v7681, %v7679
        %v7828 = vpack.c.b16 %v7682, %v7680
        %v7829 = vpack.c.b16 %v7685, %v7683
        %v7830 = vpack.c.b16 %v7686, %v7684
        %v7831 = vpack.c.b16 %v7689, %v7687
        %v7832 = vpack.c.b16 %v7690, %v7688
        %v7833 = vpack.c.b16 %v7693, %v7691
        %v7834 = vpack.c.b16 %v7694, %v7692
        %v7835 = vpack.c.b16 %v7697, %v7695
        %v7836 = vpack.c.b16 %v7698, %v7696
        %v7837 = vpack.c.b16 %v7701, %v7699
        %v7838 = vpack.c.b16 %v7702, %v7700
        %v7839 = vpack.c.b16 %v7705, %v7703
        %v7840 = vpack.c.b16 %v7706, %v7704
        %v7841 = vpack.c.b16 %v7709, %v7707
        %v7842 = vpack.c.b16 %v7710, %v7708
        %v7843 = vpack.c.b16 %v7713, %v7711
        %v7844 = vpack.c.b16 %v7714, %v7712
        %v7845 = vpack.c.b16 %v7717, %v7715
        %v7846 = vpack.c.b16 %v7718, %v7716
        %7975 = vmatprep.subr.bf16.mxu0 %v7720
        %7976 = vmatpush1.bf16.msra.mxu0 %v7719
        %7977 = vmatprep.subr.bf16.mxu0 %v7722
        %7978 = vmatpush1.bf16.msra.mxu0 %v7721
        %7979 = vmatprep.subr.bf16.mxu0 %v7724
        %7980 = vmatpush1.bf16.msra.mxu0 %v7723
        %7981 = vmatprep.subr.bf16.mxu0 %v7726
        %7982 = vmatpush1.bf16.msra.mxu0 %v7725
        %7983 = vmatprep.subr.bf16.mxu0 %v7728
        %7984 = vmatpush1.bf16.msra.mxu0 %v7727
        %7985 = vmatprep.subr.bf16.mxu0 %v7730
        %7986 = vmatpush1.bf16.msra.mxu0 %v7729
        %7987 = vmatprep.subr.bf16.mxu0 %v7732
        %7988 = vmatpush1.bf16.msra.mxu0 %v7731
        %7989 = vmatprep.subr.bf16.mxu0 %v7734
        %7990 = vmatpush1.bf16.msra.mxu0 %v7733
        %7991 = vmatprep.subr.bf16.mxu0 %v7736
        %7992 = vmatpush1.bf16.msra.mxu0 %v7735
        %7993 = vmatprep.subr.bf16.mxu0 %v7738
        %7994 = vmatpush1.bf16.msra.mxu0 %v7737
        %7995 = vmatprep.subr.bf16.mxu0 %v7740
        %7996 = vmatpush1.bf16.msra.mxu0 %v7739
        %7997 = vmatprep.subr.bf16.mxu0 %v7742
        %7998 = vmatpush1.bf16.msra.mxu0 %v7741
        %7999 = vmatprep.subr.bf16.mxu0 %v7744
        %8000 = vmatpush1.bf16.msra.mxu0 %v7743
        %8001 = vmatprep.subr.bf16.mxu0 %v7746
        %8002 = vmatpush1.bf16.msra.mxu0 %v7745
        %8003 = vmatprep.subr.bf16.mxu0 %v7748
        %8004 = vmatpush1.bf16.msra.mxu0 %v7747
        %8005 = vmatprep.subr.bf16.mxu0 %v7750
        %8006 = vmatpush1.bf16.msra.mxu0 %v7749
        %8007 = vmatprep.mubr.bf16.mxu0 %v7188
        %8008 = vmatmul.mubr.bf16.gmra.mrb[0].mxu0 %v7187
        %v8009 = vpop.f32.mrb[0].mxu0
        %v8010 = vadd.f32 %v7328, %v8009
        %v8011 = vpop.f32.mrb[0].mxu0
        %v8012 = vadd.f32 %v7332, %v8011
        %v8013 = vpop.f32.mrb[0].mxu0
        %v8014 = vadd.f32 %v7328, %v8013
        %v8015 = vpop.f32.mrb[0].mxu0
        %v8016 = vadd.f32 %v7332, %v8015
        %8017 = vdwg.mxu0
        %8018 = vmatprep.subr.bf16.mxu0 %v7752
        %8019 = vmatpush1.bf16.msra.mxu0 %v7751
        %8020 = vmatprep.subr.bf16.mxu0 %v7754
        %8021 = vmatpush1.bf16.msra.mxu0 %v7753
        %8022 = vmatprep.subr.bf16.mxu0 %v7756
        %8023 = vmatpush1.bf16.msra.mxu0 %v7755
        %8024 = vmatprep.subr.bf16.mxu0 %v7758
        %8025 = vmatpush1.bf16.msra.mxu0 %v7757
        %8026 = vmatprep.subr.bf16.mxu0 %v7760
        %8027 = vmatpush1.bf16.msra.mxu0 %v7759
        %8028 = vmatprep.subr.bf16.mxu0 %v7762
        %8029 = vmatpush1.bf16.msra.mxu0 %v7761
        %8030 = vmatprep.subr.bf16.mxu0 %v7764
        %8031 = vmatpush1.bf16.msra.mxu0 %v7763
        %8032 = vmatprep.subr.bf16.mxu0 %v7766
        %8033 = vmatpush1.bf16.msra.mxu0 %v7765
        %8034 = vmatprep.subr.bf16.mxu0 %v7768
        %8035 = vmatpush1.bf16.msra.mxu0 %v7767
        %8036 = vmatprep.subr.bf16.mxu0 %v7770
        %8037 = vmatpush1.bf16.msra.mxu0 %v7769
        %8038 = vmatprep.subr.bf16.mxu0 %v7772
        %8039 = vmatpush1.bf16.msra.mxu0 %v7771
        %8040 = vmatprep.subr.bf16.mxu0 %v7774
        %8041 = vmatpush1.bf16.msra.mxu0 %v7773
        %8042 = vmatprep.subr.bf16.mxu0 %v7776
        %8043 = vmatpush1.bf16.msra.mxu0 %v7775
        %8044 = vmatprep.subr.bf16.mxu0 %v7778
        %8045 = vmatpush1.bf16.msra.mxu0 %v7777
        %8046 = vmatprep.subr.bf16.mxu0 %v7780
        %8047 = vmatpush1.bf16.msra.mxu0 %v7779
        %8048 = vmatprep.subr.bf16.mxu0 %v7782
        %8049 = vmatpush1.bf16.msra.mxu0 %v7781
        %8050 = vmatprep.mubr.bf16.mxu0 %v7190
        %8051 = vmatmul.mubr.bf16.gmra.mrb[0].mxu0 %v7189
        %v8052 = vpop.f32.mrb[0].mxu0
        %v8053 = vadd.f32 %v8010, %v8052
        %v8054 = vpop.f32.mrb[0].mxu0
        %v8055 = vadd.f32 %v8012, %v8054
        %v8056 = vpop.f32.mrb[0].mxu0
        %v8057 = vadd.f32 %v8014, %v8056
        %v8058 = vpop.f32.mrb[0].mxu0
        %v8059 = vadd.f32 %v8016, %v8058
        %8060 = vdwg.mxu0
        %8061 = vmatprep.subr.bf16.mxu0 %v7784
        %8062 = vmatpush1.bf16.msra.mxu0 %v7783
        %8063 = vmatprep.subr.bf16.mxu0 %v7786
        %8064 = vmatpush1.bf16.msra.mxu0 %v7785
        %8065 = vmatprep.subr.bf16.mxu0 %v7788
        %8066 = vmatpush1.bf16.msra.mxu0 %v7787
        %8067 = vmatprep.subr.bf16.mxu0 %v7790
        %8068 = vmatpush1.bf16.msra.mxu0 %v7789
        %8069 = vmatprep.subr.bf16.mxu0 %v7792
        %8070 = vmatpush1.bf16.msra.mxu0 %v7791
        %8071 = vmatprep.subr.bf16.mxu0 %v7794
        %8072 = vmatpush1.bf16.msra.mxu0 %v7793
        %8073 = vmatprep.subr.bf16.mxu0 %v7796
        %8074 = vmatpush1.bf16.msra.mxu0 %v7795
        %8075 = vmatprep.subr.bf16.mxu0 %v7798
        %8076 = vmatpush1.bf16.msra.mxu0 %v7797
        %8077 = vmatprep.subr.bf16.mxu0 %v7800
        %8078 = vmatpush1.bf16.msra.mxu0 %v7799
        %8079 = vmatprep.subr.bf16.mxu0 %v7802
        %8080 = vmatpush1.bf16.msra.mxu0 %v7801
        %8081 = vmatprep.subr.bf16.mxu0 %v7804
        %8082 = vmatpush1.bf16.msra.mxu0 %v7803
        %8083 = vmatprep.subr.bf16.mxu0 %v7806
        %8084 = vmatpush1.bf16.msra.mxu0 %v7805
        %8085 = vmatprep.subr.bf16.mxu0 %v7808
        %8086 = vmatpush1.bf16.msra.mxu0 %v7807
        %8087 = vmatprep.subr.bf16.mxu0 %v7810
        %8088 = vmatpush1.bf16.msra.mxu0 %v7809
        %8089 = vmatprep.subr.bf16.mxu0 %v7812
        %8090 = vmatpush1.bf16.msra.mxu0 %v7811
        %8091 = vmatprep.subr.bf16.mxu0 %v7814
        %8092 = vmatpush1.bf16.msra.mxu0 %v7813
        %8093 = vmatprep.mubr.bf16.mxu0 %v7192
        %8094 = vmatmul.mubr.bf16.gmra.mrb[0].mxu0 %v7191
        %v8095 = vpop.f32.mrb[0].mxu0
        %v8096 = vadd.f32 %v8053, %v8095
        %v8097 = vpop.f32.mrb[0].mxu0
        %v8098 = vadd.f32 %v8055, %v8097
        %v8099 = vpop.f32.mrb[0].mxu0
        %v8100 = vadd.f32 %v8057, %v8099
        %v8101 = vpop.f32.mrb[0].mxu0
        %v8102 = vadd.f32 %v8059, %v8101
        %8103 = vdwg.mxu0
        %8104 = vmatprep.subr.bf16.mxu0 %v7816
        %8105 = vmatpush1.bf16.msra.mxu0 %v7815
        %8106 = vmatprep.subr.bf16.mxu0 %v7818
        %8107 = vmatpush1.bf16.msra.mxu0 %v7817
        %8108 = vmatprep.subr.bf16.mxu0 %v7820
        %8109 = vmatpush1.bf16.msra.mxu0 %v7819
        %8110 = vmatprep.subr.bf16.mxu0 %v7822
        %8111 = vmatpush1.bf16.msra.mxu0 %v7821
        %8112 = vmatprep.subr.bf16.mxu0 %v7824
        %8113 = vmatpush1.bf16.msra.mxu0 %v7823
        %8114 = vmatprep.subr.bf16.mxu0 %v7826
        %8115 = vmatpush1.bf16.msra.mxu0 %v7825
        %8116 = vmatprep.subr.bf16.mxu0 %v7828
        %8117 = vmatpush1.bf16.msra.mxu0 %v7827
        %8118 = vmatprep.subr.bf16.mxu0 %v7830
        %8119 = vmatpush1.bf16.msra.mxu0 %v7829
        %8120 = vmatprep.subr.bf16.mxu0 %v7832
        %8121 = vmatpush1.bf16.msra.mxu0 %v7831
        %8122 = vmatprep.subr.bf16.mxu0 %v7834
        %8123 = vmatpush1.bf16.msra.mxu0 %v7833
        %8124 = vmatprep.subr.bf16.mxu0 %v7836
        %8125 = vmatpush1.bf16.msra.mxu0 %v7835
        %8126 = vmatprep.subr.bf16.mxu0 %v7838
        %8127 = vmatpush1.bf16.msra.mxu0 %v7837
        %8128 = vmatprep.subr.bf16.mxu0 %v7840
        %8129 = vmatpush1.bf16.msra.mxu0 %v7839
        %8130 = vmatprep.subr.bf16.mxu0 %v7842
        %8131 = vmatpush1.bf16.msra.mxu0 %v7841
        %8132 = vmatprep.subr.bf16.mxu0 %v7844
        %8133 = vmatpush1.bf16.msra.mxu0 %v7843
        %8134 = vmatprep.subr.bf16.mxu0 %v7846
        %8135 = vmatpush1.bf16.msra.mxu0 %v7845
        %8136 = vmatprep.mubr.bf16.mxu0 %v7194
        %8137 = vmatmul.mubr.bf16.gmra.mrb[0].mxu0 %v7193
        %v8138 = vpop.f32.mrb[0].mxu0
        %v8139 = vadd.f32 %v8096, %v8138
        %v8140 = vpop.f32.mrb[0].mxu0
        %v8141 = vadd.f32 %v8098, %v8140
        %v8142 = vpop.f32.mrb[0].mxu0
        %v8143 = vadd.f32 %v8100, %v8142
        %v8144 = vpop.f32.mrb[0].mxu0
        %v8145 = vadd.f32 %v8102, %v8144
        %8146 = vdwg.mxu0
        %v8147 = vadd.f32 %v6183, %v8139
        %v8148 = vadd.f32 %v6184, %v8141
        %v8149 = vadd.f32 %v6185, %v8143
        %v8150 = vadd.f32 %v6186, %v8145
        %v8151 = vld [vmem:[%s288 + $0x22] sm:$0x3]
        %v8152 = vld [vmem:[%s288 + $0x24] sm:$0x3]
        %v8153 = vadd.f32 %v8147, %v8148
        %8154 = vadd.xlane.f32.xlu0 %v8153
        %v8155 = vpop.xlane.xlu0 %8154
        %v8156 = vadd.f32 %v8149, %v8150
        %8157 = vadd.xlane.f32.xlu0 %v8156
        %v8158 = vpop.xlane.xlu0 %8157
        %v8159 = vmul.f32 %v8155, %v3214
        %v8160 = vmul.f32 %v8158, %v3214
        %v8161 = vsub.f32 %v8147, %v8159
        %v8162 = vsub.f32 %v8148, %v8159
        %v8163 = vsub.f32 %v8149, %v8160
        %v8164 = vsub.f32 %v8150, %v8160
        %v8165 = vmul.f32 %v8161, %v8161
        %v8166 = vmul.f32 %v8162, %v8162
        %v8167 = vmul.f32 %v8163, %v8163
        %v8168 = vmul.f32 %v8164, %v8164
        %v8169 = vadd.f32 %v8165, %v8166
        %8170 = vadd.xlane.f32.xlu0 %v8169
        %v8171 = vpop.xlane.xlu0 %8170
        %v8172 = vadd.f32 %v8167, %v8168
        %8173 = vadd.xlane.f32.xlu0 %v8172
        %v8174 = vpop.xlane.xlu0 %8173
        %v8175 = vmul.f32 %v8171, %v3214
        %v8176 = vmul.f32 %v8174, %v3214
        %v8177 = vadd.f32 %v8175, 1e-05
        %v8178 = vadd.f32 %v8176, 1e-05
        %v8179 = vrsqrt.pop %v8177
        %v8180 = vrsqrt.pop %v8178
        %v8181 = vmul.f32 %v8161, %v8179
        %v8182 = vmul.f32 %v8162, %v8179
        %v8183 = vmul.f32 %v8163, %v8180
        %v8184 = vmul.f32 %v8164, %v8180
        %v8186 = vlaneseq
        %v8187 = vshrl.u32 %v8186, 7
        %v8188 = vsub.s32 0, %v8187
        %v8189 = vrot.slane %v8151, %v8188
        %v8190 = vlaneseq
        %v8191 = vshrl.u32 %v8190, 7
        %v8192 = vsub.s32 1, %v8191
        %v8193 = vrot.slane %v8151, %v8192
        %v8196 = vmul.f32 %v8181, %v8189
        %v8197 = vmul.f32 %v8182, %v8193
        %v8198 = vmul.f32 %v8183, %v8189
        %v8199 = vmul.f32 %v8184, %v8193
        %v8201 = vlaneseq
        %v8202 = vshrl.u32 %v8201, 7
        %v8203 = vsub.s32 0, %v8202
        %v8204 = vrot.slane %v8152, %v8203
        %v8205 = vlaneseq
        %v8206 = vshrl.u32 %v8205, 7
        %v8207 = vsub.s32 1, %v8206
        %v8208 = vrot.slane %v8152, %v8207
        %v8211 = vadd.f32 %v8196, %v8204
        %v8212 = vadd.f32 %v8197, %v8208
        %v8213 = vadd.f32 %v8198, %v8204
        %v8214 = vadd.f32 %v8199, %v8208
        %8215 = vst [vmem:[#allocation2] sm:$0xff] %v8211
        %8216 = vst [vmem:[#allocation2 + $0x8] sm:$0xff] %v8212
        %8217 = vst [vmem:[#allocation2 + $0x10] sm:$0xff] %v8213
        %8218 = vst [vmem:[#allocation2 + $0x18] sm:$0xff] %v8214
        %p8219 = scmp.eq.s32.totalorder %s23, 2
        // Predicated region
        $region61: #{tracker_forward.1} parent=39 // pred_check
          %p8220 = pneg %p8219
        $region62: #{tracker_forward.1} parent=39 // pred_check_branch
          %8222 = sbr.rel (%p8220) target = $region64
        $region63: #{tracker_forward.1} parent=39 // pred_region
          %8223 = vst [vmem:[%s5] sm:$0xff] %v8211
          %8224 = vst [vmem:[%s5 + $0x8] sm:$0xff] %v8212
          %8225 = vst [vmem:[%s5 + $0x10] sm:$0xff] %v8213
          %8226 = vst [vmem:[%s5 + $0x18] sm:$0xff] %v8214
        $region64: #{tracker_forward.1} parent=39 // pred_fallthru
          _
        // Predicated region
        $region65: #{tracker_forward.1} parent=39 // pred_check
          %p8227 = pneg %p156
        $region66: #{tracker_forward.1} parent=39 // pred_check_branch
          %8229 = sbr.rel (%p8227) target = $region68
        $region67: #{tracker_forward.1} parent=39 // pred_region
          _
        $region68: #{tracker_forward.1} parent=39 // pred_fallthru
          _
        // Predicated region
        $region69: #{tracker_forward.1} parent=39 // pred_check
          %p8230 = pneg %p156
        $region70: #{tracker_forward.1} parent=39 // pred_check_branch
          %8232 = sbr.rel (%p8230) target = $region72
        $region71: #{tracker_forward.1} parent=39 // pred_region
          _
        $region72: #{tracker_forward.1} parent=39 // pred_fallthru
          _
      $region40: #{tracker_forward.1} parent=5 // pred_fallthru
        _
      %p8233 = scmp.le.s32.totalorder 2, %s18
      // Predicated region
      $region73: #{tracker_forward.1} parent=5 // pred_check
        %p8234 = pneg %p8233
      $region74: #{tracker_forward.1} parent=5 // pred_check_branch
        %8236 = sbr.rel (%p8234) target = $region76
      $region75: #{tracker_forward.1} parent=5 // pred_region
        %s8237 = ssub.s32 %s18, 2
      $region76: #{tracker_forward.1} parent=5 // pred_fallthru
        _
    $region6: #{tracker_forward.1} parent=1 // loop_footer
      %s22 = sadd.s32 1, %s18
    $region7: #{tracker_forward.1} parent=1 // loop_footer_branch
      %17 = sbr.rel target = $region3
    $region8: #{tracker_forward.1} parent=1 // loop_exit
      _
    %8238 = vsyncpa [#allocation4], 1
    %s8239 = scalar_lea.sflag [#allocation4], 1
    %8240 = vsyncpa %s8239, 1
    %8241 = vsyncpa [#allocation6], 1
    %s8242 = scalar_lea.sflag [#allocation6], 1
    %8243 = vsyncpa %s8242, 1
    %8244 = vsyncpa [#allocation9], 1
    %s8245 = scalar_lea.sflag [#allocation9], 1
    %8246 = vsyncpa %s8245, 1

</llo_original>
